<compile_context>
chip_gen: v6e
topology: v6e:2x2x1
jax: 0.10.0
libtpu: 0.0.40
codegen_flags: <defaults>
</compile_context>

<pallas_src>
import functools
import math

import numpy as np
import jax
import jax.numpy as jnp
from jax import lax
from jax.experimental import pallas as pl
from jax.experimental.pallas import tpu as pltpu  # noqa: F401  (TPU backend)

# ---------------- small config consistent with the module ----------------
N = 2
PATCH_BLOCK = (4, 4, 8)          # (T, H, W)
PATCH = (2, 2, 2)                # patch_size
C_IN = 4                         # in_channels
HIDDEN = 64                      # hidden_size (divisible by sum(grid)=8 and by C_IN)
NUM_HEADS = 4
MLP_RATIO = 4.0
FREQ_DIM = 256                   # frequency_embedding_size
LEARN_SIGMA = True
RK4_STEPS = 16
EPS = 1e-6

GRID3 = tuple(PATCH_BLOCK[i] // PATCH[i] for i in range(3))     # (2, 2, 4)
S = GRID3[0] * GRID3[1] * GRID3[2]                              # 16 tokens
P = PATCH[0] * PATCH[1] * PATCH[2]                              # 8
C_OUT = C_IN * 2 if LEARN_SIGMA else C_IN                       # 8
OUT_DIM = P * C_OUT                                             # 64
MLP_HID = int(HIDDEN * MLP_RATIO)                               # 256
HEAD_DIM = HIDDEN // NUM_HEADS                                  # 16
NS = N * S                                                      # 32


# ---------------- host-side constants (pos embed, same math as reference) ----------------
def _get_sincos_pos_embed_from_grid(embed_dim, pos):
    omega = np.arange(embed_dim // 2, dtype=np.float64)
    omega /= embed_dim / 2.0
    omega = 1.0 / 10000 ** omega
    out = np.einsum('...,d->...d', pos, omega)
    return np.concatenate([np.sin(out), np.cos(out)], axis=-1)


def _get_3d_pos_embed(embed_dim, grid_num):
    d = embed_dim // sum(grid_num)
    g0 = np.arange(grid_num[0], dtype=np.float32)
    g1 = np.arange(grid_num[1], dtype=np.float32)
    g2 = np.arange(grid_num[2], dtype=np.float32)
    grid = np.meshgrid(g1, g0, g2)
    grid = np.stack([grid[1], grid[0], grid[2]], axis=0)
    emb0 = _get_sincos_pos_embed_from_grid(d * grid_num[0], grid[0])
    emb1 = _get_sincos_pos_embed_from_grid(d * grid_num[1], grid[1])
    emb2 = _get_sincos_pos_embed_from_grid(d * grid_num[2], grid[2])
    return np.concatenate([emb0, emb1, emb2], axis=-1)        # (g0, g1, g2, embed_dim)


# ---------------- fused kernel: patchify-proj + RK4(DiT block) + final layer ----------------
def _layernorm(x, eps):
    mean = jnp.mean(x, axis=-1, keepdims=True)
    xc = x - mean
    var = jnp.mean(xc * xc, axis=-1, keepdims=True)
    return xc * lax.rsqrt(var + eps)


def _fused_dit_ode_kernel(
        patches_ref, pos_ref, mask_ref, mod6_ref, modf_ref,
        w_patch_ref, b_patch_ref,
        w_q_ref, b_q_ref, w_k_ref, b_k_ref, w_v_ref, b_v_ref,
        w_proj_ref, b_proj_ref,
        w_m1_ref, b_m1_ref, w_m2_ref, b_m2_ref,
        w_fin_ref, b_fin_ref,
        out_ref,
        *, num_heads, rk4_steps, eps):
    hd = w_q_ref.shape[1] // num_heads
    scale = 1.0 / math.sqrt(hd)

    # Additive block-diagonal mask so flattened-batch attention equals per-batch attention.
    mask = mask_ref[...]                                           # (NS, NS)

    # adaLN modulation rows (already expanded to (NS, H)); constant during the
    # integration because time_invariant=True (dc/dt = 0).
    shift_msa = mod6_ref[0]
    one_p_scale_msa = 1.0 + mod6_ref[1]
    gate_msa = mod6_ref[2]
    shift_mlp = mod6_ref[3]
    one_p_scale_mlp = 1.0 + mod6_ref[4]
    gate_mlp = mod6_ref[5]

    # --- patch embedding (grouped Conv3d lowered to block-diagonal matmul) + pos embed ---
    tok0 = (jnp.dot(patches_ref[...], w_patch_ref[...],
                    preferred_element_type=jnp.float32)
            + b_patch_ref[...] + pos_ref[...])                     # (NS, H)

    def deriv(x):
        # attention branch: x + gate_msa * attn(modulate(norm1(x)))
        xm = _layernorm(x, eps) * one_p_scale_msa + shift_msa
        q = jnp.dot(xm, w_q_ref[...], preferred_element_type=jnp.float32) + b_q_ref[...]
        k = jnp.dot(xm, w_k_ref[...], preferred_element_type=jnp.float32) + b_k_ref[...]
        v = jnp.dot(xm, w_v_ref[...], preferred_element_type=jnp.float32) + b_v_ref[...]

        attn = None
        for h in range(num_heads):                  # static unroll over 4 heads
            sl = slice(h * hd, (h + 1) * hd)
            qh, kh, vh = q[:, sl], k[:, sl], v[:, sl]
            s = jnp.einsum('qd,kd->qk', qh, kh,
                           preferred_element_type=jnp.float32) * scale + mask
            s = s - jnp.max(s, axis=-1, keepdims=True)
            p = jnp.exp(s)
            p = p / jnp.sum(p, axis=-1, keepdims=True)
            oh = jnp.dot(p, vh, preferred_element_type=jnp.float32)        # (NS, hd)
            # fold this head's slice of the output projection: no lane-axis concat.
            ph = jnp.dot(oh, w_proj_ref[sl, :], preferred_element_type=jnp.float32)
            attn = ph if attn is None else attn + ph
        attn = attn + b_proj_ref[...]
        x1 = x + gate_msa * attn

        # MLP branch: x1 + gate_mlp * mlp(modulate(norm2(x1)))
        xm2 = _layernorm(x1, eps) * one_p_scale_mlp + shift_mlp
        h1 = jnp.dot(xm2, w_m1_ref[...], preferred_element_type=jnp.float32) + b_m1_ref[...]
        h1 = 0.5 * h1 * (1.0 + jnp.tanh(0.7978845608028654 *
                                        (h1 + 0.044715 * h1 * h1 * h1)))
        mlp = jnp.dot(h1, w_m2_ref[...], preferred_element_type=jnp.float32) + b_m2_ref[...]
        return x1 + gate_mlp * mlp

    # Fixed-step RK4 over dx/dt = deriv(x) from t=0 to t=1, entirely in VMEM.
    # TODO(synk): adaptive dopri5 (odeint_adjoint) has no clean Pallas equivalent.
    dt = 1.0 / rk4_steps

    def rk4_body(_, y):
        k1 = deriv(y)
        k2 = deriv(y + (0.5 * dt) * k1)
        k3 = deriv(y + (0.5 * dt) * k2)
        k4 = deriv(y + dt * k3)
        return y + (dt / 6.0) * (k1 + 2.0 * k2 + 2.0 * k3 + k4)

    tok = lax.fori_loop(0, rk4_steps, rk4_body, tok0)

    # Final layer: linear(modulate(norm_final(tok)))
    xf = _layernorm(tok, eps) * (1.0 + modf_ref[1]) + modf_ref[0]
    out_ref[...] = (jnp.dot(xf, w_fin_ref[...], preferred_element_type=jnp.float32)
                    + b_fin_ref[...])


def _cost_estimate(nbatch):
    ns = nbatch * S
    deriv_mm = (2 * ns * HIDDEN * 3 * HIDDEN                                   # qkv
                + NUM_HEADS * (2 * ns * ns * HEAD_DIM * 2                      # scores + p@v
                               + 2 * ns * HEAD_DIM * HIDDEN)                   # per-head proj
                + 2 * 2 * ns * HIDDEN * MLP_HID)                               # mlp
    flops = (RK4_STEPS * 4 * deriv_mm
             + 2 * ns * (C_IN * P) * HIDDEN                                    # patchify
             + 2 * ns * HIDDEN * OUT_DIM)                                      # final layer
    trans = RK4_STEPS * 4 * (NUM_HEADS * ns * ns + ns * MLP_HID + 2 * ns) + ns
    weight_bytes = 4 * (C_IN * P * HIDDEN + 3 * HIDDEN * HIDDEN + HIDDEN * HIDDEN
                        + 2 * HIDDEN * MLP_HID + HIDDEN * OUT_DIM + 8 * MLP_HID)
    act_bytes = 4 * (ns * C_IN * P + ns * HIDDEN + ns * ns
                     + 8 * ns * HIDDEN + ns * OUT_DIM)
    return pl.CostEstimate(flops=flops, transcendentals=trans,
                           bytes_accessed=weight_bytes + act_bytes)


def fused_dit_ode(patches, pos_tiled, mask, mod6_full, modf_full, wts):
    ns = patches.shape[0]
    kern = functools.partial(_fused_dit_ode_kernel, num_heads=NUM_HEADS,
                             rk4_steps=RK4_STEPS, eps=EPS)
    # No grid: every operand is a whole-array VMEM block, loaded exactly once.
    return pl.pallas_call(
        kern,
        out_shape=jax.ShapeDtypeStruct((ns, OUT_DIM), jnp.float32),
        cost_estimate=_cost_estimate(ns // S),
    )(patches, pos_tiled, mask, mod6_full, modf_full,
      wts["w_patch_full"], wts["b_patch"].reshape(1, -1),
      wts["w_q"], wts["b_q"].reshape(1, -1),
      wts["w_k"], wts["b_k"].reshape(1, -1),
      wts["w_v"], wts["b_v"].reshape(1, -1),
      wts["w_proj"], wts["b_proj"].reshape(1, -1),
      wts["w_m1"], wts["b_m1"].reshape(1, -1),
      wts["w_m2"], wts["b_m2"].reshape(1, -1),
      wts["w_fin"], wts["b_fin"].reshape(1, -1))


# ---------------- glue: patch extraction, grouped-conv-as-matmul, forward ----------------
def patchify_tokens(x):
    # x: (N, T, C, H, W)  ->  (N, S, C*P)  in the Conv3d(stride=patch) token order.
    x = jnp.einsum('ntchw->ncthw', x)                             # (N, C, T, H, W)
    n = x.shape[0]
    x = x.reshape(n, C_IN, GRID3[0], PATCH[0], GRID3[1], PATCH[1], GRID3[2], PATCH[2])
    x = jnp.transpose(x, (0, 2, 4, 6, 1, 3, 5, 7))                # (N, g0, g1, g2, C, p0, p1, p2)
    return x.reshape(n, S, C_IN * P)


def make_grouped_conv_matrix(w_conv):
    # Grouped Conv3d (groups=C_IN, kernel=stride=patch) as a block-diagonal matmul.
    # w_conv: (HIDDEN, P) (the (HIDDEN, 1, p0, p1, p2) PyTorch weight, flattened).
    per_group = HIDDEN // C_IN
    w_full = np.zeros((C_IN * P, HIDDEN), dtype=np.float32)
    wc = np.asarray(w_conv)
    for h in range(HIDDEN):
        g = h // per_group
        w_full[g * P:(g + 1) * P, h] = wc[h]
    return jnp.asarray(w_full)


def dit_ode_3d_forward(t, x, wts):
    n = x.shape[0]
    ns = n * S

    # Patch extraction (pure layout) + tiled pos embed.
    patches = patchify_tokens(x).reshape(ns, C_IN * P)
    pos_tiled = jnp.tile(wts["pos_embed"], (n, 1))                 # (NS, H)

    # Block-diagonal additive attention mask (0 within a batch element, -1e30 across).
    mask = jnp.asarray(
        np.where(np.arange(ns)[:, None] // S == np.arange(ns)[None, :] // S,
                 0.0, -1e30).astype(np.float32))

    # Conditioning prolog in plain XLA (runs once, outside the ODE loop).
    half = FREQ_DIM // 2
    freqs = jnp.exp(-math.log(10000.0) * jnp.arange(half, dtype=jnp.float32) / half)
    args = t[:, None].astype(jnp.float32) * freqs[None, :]
    t_freq = jnp.concatenate([jnp.cos(args), jnp.sin(args)], axis=-1)
    h = t_freq @ wts["w_t1"] + wts["b_t1"]
    h = h * jax.nn.sigmoid(h)
    c = h @ wts["w_t2"] + wts["b_t2"]                              # condition=None -> c = t_emb
    cs = c * jax.nn.sigmoid(c)                                     # adaLN = Sequential(SiLU, Linear)
    mod6 = (cs @ wts["w_ada"] + wts["b_ada"]).reshape(n, 6, HIDDEN)
    modf = (cs @ wts["w_fada"] + wts["b_fada"]).reshape(n, 2, HIDDEN)
    mod6_full = jnp.repeat(jnp.transpose(mod6, (1, 0, 2)), S, axis=1)   # (6, NS, H)
    modf_full = jnp.repeat(jnp.transpose(modf, (1, 0, 2)), S, axis=1)   # (2, NS, H)

    # Single fused Pallas call: patchify-proj + RK4(DiT block) + final layer.
    out = fused_dit_ode(patches, pos_tiled, mask, mod6_full, modf_full, wts)
    out = out.reshape(n, S, OUT_DIM)

    # Unpatchify: (N, S, p0*p1*p2*C_out) -> (N, T, C_out, H, W)
    out = out.reshape(n, GRID3[0], GRID3[1], GRID3[2], PATCH[0], PATCH[1], PATCH[2], C_OUT)
    out = jnp.transpose(out, (0, 1, 4, 7, 2, 5, 3, 6))             # n t p c h q w r
    out = out.reshape(n, GRID3[0] * PATCH[0], C_OUT,
                      GRID3[1] * PATCH[1], GRID3[2] * PATCH[2])
    return out


def init_weights(key):
    ks = jax.random.split(key, 20)

    def w(k, shape, s=0.02):
        return (s * jax.random.normal(k, shape)).astype(jnp.float32)

    wts = {}
    w_conv = w(ks[0], (HIDDEN, P))
    wts["w_patch_full"] = make_grouped_conv_matrix(w_conv)
    wts["b_patch"] = w(ks[1], (HIDDEN,), 0.01)
    wts["w_t1"] = w(ks[2], (FREQ_DIM, HIDDEN)); wts["b_t1"] = w(ks[3], (HIDDEN,), 0.01)
    wts["w_t2"] = w(ks[4], (HIDDEN, HIDDEN));   wts["b_t2"] = w(ks[5], (HIDDEN,), 0.01)
    wts["w_ada"] = w(ks[6], (HIDDEN, 6 * HIDDEN)); wts["b_ada"] = w(ks[7], (6 * HIDDEN,), 0.01)
    w_qkv = w(ks[8], (HIDDEN, 3 * HIDDEN)); b_qkv = w(ks[9], (3 * HIDDEN,), 0.01)
    wts["w_q"] = w_qkv[:, 0:HIDDEN]
    wts["w_k"] = w_qkv[:, HIDDEN:2 * HIDDEN]
    wts["w_v"] = w_qkv[:, 2 * HIDDEN:3 * HIDDEN]
    wts["b_q"] = b_qkv[0:HIDDEN]
    wts["b_k"] = b_qkv[HIDDEN:2 * HIDDEN]
    wts["b_v"] = b_qkv[2 * HIDDEN:3 * HIDDEN]
    wts["w_proj"] = w(ks[10], (HIDDEN, HIDDEN));   wts["b_proj"] = w(ks[11], (HIDDEN,), 0.01)
    wts["w_m1"] = w(ks[12], (HIDDEN, MLP_HID));    wts["b_m1"] = w(ks[13], (MLP_HID,), 0.01)
    wts["w_m2"] = w(ks[14], (MLP_HID, HIDDEN));    wts["b_m2"] = w(ks[15], (HIDDEN,), 0.01)
    wts["w_fada"] = w(ks[16], (HIDDEN, 2 * HIDDEN)); wts["b_fada"] = w(ks[17], (2 * HIDDEN,), 0.01)
    wts["w_fin"] = w(ks[18], (HIDDEN, OUT_DIM));   wts["b_fin"] = w(ks[19], (OUT_DIM,), 0.01)
    wts["pos_embed"] = jnp.asarray(
        _get_3d_pos_embed(HIDDEN, list(GRID3)).reshape(S, HIDDEN), dtype=jnp.float32)
    return wts


if __name__ == "__main__":
    key = jax.random.PRNGKey(0)
    k_w, k_x, k_t = jax.random.split(key, 3)
    wts = init_weights(k_w)

    # x: (N, T, C, H, W), t: (N,)
    x = jax.random.normal(k_x, (N, PATCH_BLOCK[0], C_IN, PATCH_BLOCK[1], PATCH_BLOCK[2]),
                          dtype=jnp.float32)
    t = jax.random.uniform(k_t, (N,), dtype=jnp.float32) * 1000.0

    fwd = jax.jit(lambda tt, xx: dit_ode_3d_forward(tt, xx, wts))
    out = jax.block_until_ready(fwd(t, x))

    assert out.shape == (N, PATCH_BLOCK[0], C_OUT, PATCH_BLOCK[1], PATCH_BLOCK[2]), out.shape
    assert bool(jnp.all(jnp.isfinite(out)))
    print("KERNEL_OK")
</pallas_src>

<mosaic_0001>
module attributes {stable_mosaic.version = 11 : i64} {
  func.func @_fused_dit_ode_kernel(%arg0: memref<32x32xf32, #tpu.memory_space<vmem>>, %arg1: memref<32x64xf32, #tpu.memory_space<vmem>>, %arg2: memref<32x32xf32, #tpu.memory_space<vmem>>, %arg3: memref<6x32x64xf32, #tpu.memory_space<vmem>>, %arg4: memref<2x32x64xf32, #tpu.memory_space<vmem>>, %arg5: memref<32x64xf32, #tpu.memory_space<vmem>>, %arg6: memref<1x64xf32, #tpu.memory_space<vmem>>, %arg7: memref<64x64xf32, #tpu.memory_space<vmem>>, %arg8: memref<1x64xf32, #tpu.memory_space<vmem>>, %arg9: memref<64x64xf32, #tpu.memory_space<vmem>>, %arg10: memref<1x64xf32, #tpu.memory_space<vmem>>, %arg11: memref<64x64xf32, #tpu.memory_space<vmem>>, %arg12: memref<1x64xf32, #tpu.memory_space<vmem>>, %arg13: memref<64x64xf32, #tpu.memory_space<vmem>>, %arg14: memref<1x64xf32, #tpu.memory_space<vmem>>, %arg15: memref<64x256xf32, #tpu.memory_space<vmem>>, %arg16: memref<1x256xf32, #tpu.memory_space<vmem>>, %arg17: memref<256x64xf32, #tpu.memory_space<vmem>>, %arg18: memref<1x64xf32, #tpu.memory_space<vmem>>, %arg19: memref<64x64xf32, #tpu.memory_space<vmem>>, %arg20: memref<1x64xf32, #tpu.memory_space<vmem>>, %arg21: memref<32x64xf32, #tpu.memory_space<vmem>>) attributes {dimension_semantics = [], scalar_prefetch = 0 : i64, scratch_operands = 0 : i64, tpu.core_type = #tpu.core_type<tc>} {
    %c0 = arith.constant 0 : index
    %c0_0 = arith.constant 0 : index
    %0 = vector.load %arg2[%c0, %c0_0] : memref<32x32xf32, #tpu.memory_space<vmem>>, vector<32x32xf32>
    %c0_1 = arith.constant 0 : index
    %c0_2 = arith.constant 0 : index
    %c0_3 = arith.constant 0 : index
    %1 = vector.load %arg3[%c0_1, %c0_2, %c0_3] : memref<6x32x64xf32, #tpu.memory_space<vmem>>, vector<1x32x64xf32>
    %2 = vector.shape_cast %1 : vector<1x32x64xf32> to vector<32x64xf32>
    %c1 = arith.constant 1 : index
    %c0_4 = arith.constant 0 : index
    %c0_5 = arith.constant 0 : index
    %3 = vector.load %arg3[%c1, %c0_4, %c0_5] : memref<6x32x64xf32, #tpu.memory_space<vmem>>, vector<1x32x64xf32>
    %4 = vector.shape_cast %3 : vector<1x32x64xf32> to vector<32x64xf32>
    %cst = arith.constant 1.000000e+00 : f32
    %5 = vector.broadcast %cst : f32 to vector<32x64xf32>
    %6 = arith.addf %5, %4 : vector<32x64xf32>
    %c2 = arith.constant 2 : index
    %c0_6 = arith.constant 0 : index
    %c0_7 = arith.constant 0 : index
    %7 = vector.load %arg3[%c2, %c0_6, %c0_7] : memref<6x32x64xf32, #tpu.memory_space<vmem>>, vector<1x32x64xf32>
    %8 = vector.shape_cast %7 : vector<1x32x64xf32> to vector<32x64xf32>
    %c3 = arith.constant 3 : index
    %c0_8 = arith.constant 0 : index
    %c0_9 = arith.constant 0 : index
    %9 = vector.load %arg3[%c3, %c0_8, %c0_9] : memref<6x32x64xf32, #tpu.memory_space<vmem>>, vector<1x32x64xf32>
    %10 = vector.shape_cast %9 : vector<1x32x64xf32> to vector<32x64xf32>
    %c4 = arith.constant 4 : index
    %c0_10 = arith.constant 0 : index
    %c0_11 = arith.constant 0 : index
    %11 = vector.load %arg3[%c4, %c0_10, %c0_11] : memref<6x32x64xf32, #tpu.memory_space<vmem>>, vector<1x32x64xf32>
    %12 = vector.shape_cast %11 : vector<1x32x64xf32> to vector<32x64xf32>
    %cst_12 = arith.constant 1.000000e+00 : f32
    %13 = vector.broadcast %cst_12 : f32 to vector<32x64xf32>
    %14 = arith.addf %13, %12 : vector<32x64xf32>
    %c5 = arith.constant 5 : index
    %c0_13 = arith.constant 0 : index
    %c0_14 = arith.constant 0 : index
    %15 = vector.load %arg3[%c5, %c0_13, %c0_14] : memref<6x32x64xf32, #tpu.memory_space<vmem>>, vector<1x32x64xf32>
    %16 = vector.shape_cast %15 : vector<1x32x64xf32> to vector<32x64xf32>
    %c0_15 = arith.constant 0 : index
    %c0_16 = arith.constant 0 : index
    %17 = vector.load %arg0[%c0_15, %c0_16] : memref<32x32xf32, #tpu.memory_space<vmem>>, vector<32x32xf32>
    %c0_17 = arith.constant 0 : index
    %c0_18 = arith.constant 0 : index
    %18 = vector.load %arg5[%c0_17, %c0_18] : memref<32x64xf32, #tpu.memory_space<vmem>>, vector<32x64xf32>
    %cst_19 = arith.constant dense<0.000000e+00> : vector<32x64xf32>
    %19 = tpu.matmul %17, %18, %cst_19 {dimension_numbers = #tpu.dot_dimension_numbers<[1], [0], [0], [1], [0, 0, 1, 1], [], []>} : vector<32x32xf32>, vector<32x64xf32>, vector<32x64xf32> -> vector<32x64xf32>
    %c0_20 = arith.constant 0 : index
    %c0_21 = arith.constant 0 : index
    %20 = vector.load %arg6[%c0_20, %c0_21] : memref<1x64xf32, #tpu.memory_space<vmem>>, vector<1x64xf32>
    %21 = vector.broadcast %20 : vector<1x64xf32> to vector<32x64xf32>
    %22 = arith.addf %19, %21 : vector<32x64xf32>
    %c0_22 = arith.constant 0 : index
    %c0_23 = arith.constant 0 : index
    %23 = vector.load %arg1[%c0_22, %c0_23] : memref<32x64xf32, #tpu.memory_space<vmem>>, vector<32x64xf32>
    %24 = arith.addf %22, %23 : vector<32x64xf32>
    %c0_i32 = arith.constant 0 : i32
    %c16_i32 = arith.constant 16 : i32
    %25 = arith.addi %c0_i32, %c16_i32 : i32
    %c1_i32 = arith.constant 1 : i32
    %26 = scf.for %arg22 = %c0_i32 to %25 step %c1_i32 iter_args(%arg23 = %24) -> (vector<32x64xf32>)  : i32 {
      %cst_43 = arith.constant dense<0.000000e+00> : vector<32xf32>
      %57 = vector.multi_reduction <add>, %arg23, %cst_43 [1] : vector<32x64xf32> to vector<32xf32>
      %58 = vector.shape_cast %57 : vector<32xf32> to vector<32x1xf32>
      %cst_44 = arith.constant 6.400000e+01 : f32
      %59 = vector.broadcast %cst_44 : f32 to vector<32x1xf32>
      %60 = arith.divf %58, %59 : vector<32x1xf32>
      %61 = vector.broadcast %60 : vector<32x1xf32> to vector<32x64xf32>
      %62 = arith.subf %arg23, %61 : vector<32x64xf32>
      %63 = arith.mulf %62, %62 : vector<32x64xf32>
      %cst_45 = arith.constant dense<0.000000e+00> : vector<32xf32>
      %64 = vector.multi_reduction <add>, %63, %cst_45 [1] : vector<32x64xf32> to vector<32xf32>
      %65 = vector.shape_cast %64 : vector<32xf32> to vector<32x1xf32>
      %cst_46 = arith.constant 6.400000e+01 : f32
      %66 = vector.broadcast %cst_46 : f32 to vector<32x1xf32>
      %67 = arith.divf %65, %66 : vector<32x1xf32>
      %cst_47 = arith.constant 9.99999997E-7 : f32
      %68 = vector.broadcast %cst_47 : f32 to vector<32x1xf32>
      %69 = arith.addf %67, %68 : vector<32x1xf32>
      %70 = math.rsqrt %69 : vector<32x1xf32>
      %71 = vector.broadcast %70 : vector<32x1xf32> to vector<32x64xf32>
      %72 = arith.mulf %62, %71 : vector<32x64xf32>
      %73 = arith.mulf %72, %6 : vector<32x64xf32>
      %74 = arith.addf %73, %2 : vector<32x64xf32>
      %c0_48 = arith.constant 0 : index
      %c0_49 = arith.constant 0 : index
      %75 = vector.load %arg7[%c0_48, %c0_49] : memref<64x64xf32, #tpu.memory_space<vmem>>, vector<64x64xf32>
      %cst_50 = arith.constant dense<0.000000e+00> : vector<32x64xf32>
      %76 = tpu.matmul %74, %75, %cst_50 {dimension_numbers = #tpu.dot_dimension_numbers<[1], [0], [0], [1], [0, 0, 1, 1], [], []>} : vector<32x64xf32>, vector<64x64xf32>, vector<32x64xf32> -> vector<32x64xf32>
      %c0_51 = arith.constant 0 : index
      %c0_52 = arith.constant 0 : index
      %77 = vector.load %arg8[%c0_51, %c0_52] : memref<1x64xf32, #tpu.memory_space<vmem>>, vector<1x64xf32>
      %78 = vector.broadcast %77 : vector<1x64xf32> to vector<32x64xf32>
      %79 = arith.addf %76, %78 : vector<32x64xf32>
      %c0_53 = arith.constant 0 : index
      %c0_54 = arith.constant 0 : index
      %80 = vector.load %arg9[%c0_53, %c0_54] : memref<64x64xf32, #tpu.memory_space<vmem>>, vector<64x64xf32>
      %cst_55 = arith.constant dense<0.000000e+00> : vector<32x64xf32>
      %81 = tpu.matmul %74, %80, %cst_55 {dimension_numbers = #tpu.dot_dimension_numbers<[1], [0], [0], [1], [0, 0, 1, 1], [], []>} : vector<32x64xf32>, vector<64x64xf32>, vector<32x64xf32> -> vector<32x64xf32>
      %c0_56 = arith.constant 0 : index
      %c0_57 = arith.constant 0 : index
      %82 = vector.load %arg10[%c0_56, %c0_57] : memref<1x64xf32, #tpu.memory_space<vmem>>, vector<1x64xf32>
      %83 = vector.broadcast %82 : vector<1x64xf32> to vector<32x64xf32>
      %84 = arith.addf %81, %83 : vector<32x64xf32>
      %c0_58 = arith.constant 0 : index
      %c0_59 = arith.constant 0 : index
      %85 = vector.load %arg11[%c0_58, %c0_59] : memref<64x64xf32, #tpu.memory_space<vmem>>, vector<64x64xf32>
      %cst_60 = arith.constant dense<0.000000e+00> : vector<32x64xf32>
      %86 = tpu.matmul %74, %85, %cst_60 {dimension_numbers = #tpu.dot_dimension_numbers<[1], [0], [0], [1], [0, 0, 1, 1], [], []>} : vector<32x64xf32>, vector<64x64xf32>, vector<32x64xf32> -> vector<32x64xf32>
      %c0_61 = arith.constant 0 : index
      %c0_62 = arith.constant 0 : index
      %87 = vector.load %arg12[%c0_61, %c0_62] : memref<1x64xf32, #tpu.memory_space<vmem>>, vector<1x64xf32>
      %88 = vector.broadcast %87 : vector<1x64xf32> to vector<32x64xf32>
      %89 = arith.addf %86, %88 : vector<32x64xf32>
      %90 = vector.extract_strided_slice %79 {offsets = [0, 0], sizes = [32, 16], strides = [1, 1]} : vector<32x64xf32> to vector<32x16xf32>
      %91 = vector.extract_strided_slice %84 {offsets = [0, 0], sizes = [32, 16], strides = [1, 1]} : vector<32x64xf32> to vector<32x16xf32>
      %92 = vector.extract_strided_slice %89 {offsets = [0, 0], sizes = [32, 16], strides = [1, 1]} : vector<32x64xf32> to vector<32x16xf32>
      "tpu.trace_start"() <{level = 10 : i32, message = "qd,kd->qk"}> : () -> ()
      %cst_63 = arith.constant dense<0.000000e+00> : vector<32x32xf32>
      %93 = tpu.matmul %90, %91, %cst_63 {dimension_numbers = #tpu.dot_dimension_numbers<[1], [1], [0], [0], [0, 0, 1, 0], [], []>} : vector<32x16xf32>, vector<32x16xf32>, vector<32x32xf32> -> vector<32x32xf32>
      "tpu.trace_stop"() : () -> ()
      %cst_64 = arith.constant 2.500000e-01 : f32
      %94 = vector.broadcast %cst_64 : f32 to vector<32x32xf32>
      %95 = arith.mulf %93, %94 : vector<32x32xf32>
      %96 = arith.addf %95, %0 : vector<32x32xf32>
      %cst_65 = arith.constant dense<0xFF800000> : vector<32xf32>
      %97 = vector.multi_reduction <maximumf>, %96, %cst_65 [1] : vector<32x32xf32> to vector<32xf32>
      %98 = vector.shape_cast %97 : vector<32xf32> to vector<32x1xf32>
      %99 = vector.broadcast %98 : vector<32x1xf32> to vector<32x32xf32>
      %100 = arith.subf %96, %99 : vector<32x32xf32>
      %101 = math.exp %100 : vector<32x32xf32>
      %cst_66 = arith.constant dense<0.000000e+00> : vector<32xf32>
      %102 = vector.multi_reduction <add>, %101, %cst_66 [1] : vector<32x32xf32> to vector<32xf32>
      %103 = vector.shape_cast %102 : vector<32xf32> to vector<32x1xf32>
      %104 = vector.broadcast %103 : vector<32x1xf32> to vector<32x32xf32>
      %105 = arith.divf %101, %104 : vector<32x32xf32>
      %cst_67 = arith.constant dense<0.000000e+00> : vector<32x16xf32>
      %106 = tpu.matmul %105, %92, %cst_67 {dimension_numbers = #tpu.dot_dimension_numbers<[1], [0], [0], [1], [0, 0, 1, 1], [], []>} : vector<32x32xf32>, vector<32x16xf32>, vector<32x16xf32> -> vector<32x16xf32>
      %c0_68 = arith.constant 0 : index
      %c0_69 = arith.constant 0 : index
      %107 = vector.load %arg13[%c0_68, %c0_69] : memref<64x64xf32, #tpu.memory_space<vmem>>, vector<16x64xf32>
      %cst_70 = arith.constant dense<0.000000e+00> : vector<32x64xf32>
      %108 = tpu.matmul %106, %107, %cst_70 {dimension_numbers = #tpu.dot_dimension_numbers<[1], [0], [0], [1], [0, 0, 1, 1], [], []>} : vector<32x16xf32>, vector<16x64xf32>, vector<32x64xf32> -> vector<32x64xf32>
      %109 = vector.extract_strided_slice %79 {offsets = [0, 16], sizes = [32, 16], strides = [1, 1]} : vector<32x64xf32> to vector<32x16xf32>
      %110 = vector.extract_strided_slice %84 {offsets = [0, 16], sizes = [32, 16], strides = [1, 1]} : vector<32x64xf32> to vector<32x16xf32>
      %111 = vector.extract_strided_slice %89 {offsets = [0, 16], sizes = [32, 16], strides = [1, 1]} : vector<32x64xf32> to vector<32x16xf32>
      "tpu.trace_start"() <{level = 10 : i32, message = "qd,kd->qk"}> : () -> ()
      %cst_71 = arith.constant dense<0.000000e+00> : vector<32x32xf32>
      %112 = tpu.matmul %109, %110, %cst_71 {dimension_numbers = #tpu.dot_dimension_numbers<[1], [1], [0], [0], [0, 0, 1, 0], [], []>} : vector<32x16xf32>, vector<32x16xf32>, vector<32x32xf32> -> vector<32x32xf32>
      "tpu.trace_stop"() : () -> ()
      %cst_72 = arith.constant 2.500000e-01 : f32
      %113 = vector.broadcast %cst_72 : f32 to vector<32x32xf32>
      %114 = arith.mulf %112, %113 : vector<32x32xf32>
      %115 = arith.addf %114, %0 : vector<32x32xf32>
      %cst_73 = arith.constant dense<0xFF800000> : vector<32xf32>
      %116 = vector.multi_reduction <maximumf>, %115, %cst_73 [1] : vector<32x32xf32> to vector<32xf32>
      %117 = vector.shape_cast %116 : vector<32xf32> to vector<32x1xf32>
      %118 = vector.broadcast %117 : vector<32x1xf32> to vector<32x32xf32>
      %119 = arith.subf %115, %118 : vector<32x32xf32>
      %120 = math.exp %119 : vector<32x32xf32>
      %cst_74 = arith.constant dense<0.000000e+00> : vector<32xf32>
      %121 = vector.multi_reduction <add>, %120, %cst_74 [1] : vector<32x32xf32> to vector<32xf32>
      %122 = vector.shape_cast %121 : vector<32xf32> to vector<32x1xf32>
      %123 = vector.broadcast %122 : vector<32x1xf32> to vector<32x32xf32>
      %124 = arith.divf %120, %123 : vector<32x32xf32>
      %cst_75 = arith.constant dense<0.000000e+00> : vector<32x16xf32>
      %125 = tpu.matmul %124, %111, %cst_75 {dimension_numbers = #tpu.dot_dimension_numbers<[1], [0], [0], [1], [0, 0, 1, 1], [], []>} : vector<32x32xf32>, vector<32x16xf32>, vector<32x16xf32> -> vector<32x16xf32>
      %c16 = arith.constant 16 : index
      %c0_76 = arith.constant 0 : index
      %126 = vector.load %arg13[%c16, %c0_76] : memref<64x64xf32, #tpu.memory_space<vmem>>, vector<16x64xf32>
      %cst_77 = arith.constant dense<0.000000e+00> : vector<32x64xf32>
      %127 = tpu.matmul %125, %126, %cst_77 {dimension_numbers = #tpu.dot_dimension_numbers<[1], [0], [0], [1], [0, 0, 1, 1], [], []>} : vector<32x16xf32>, vector<16x64xf32>, vector<32x64xf32> -> vector<32x64xf32>
      %128 = arith.addf %108, %127 : vector<32x64xf32>
      %129 = vector.extract_strided_slice %79 {offsets = [0, 32], sizes = [32, 16], strides = [1, 1]} : vector<32x64xf32> to vector<32x16xf32>
      %130 = vector.extract_strided_slice %84 {offsets = [0, 32], sizes = [32, 16], strides = [1, 1]} : vector<32x64xf32> to vector<32x16xf32>
      %131 = vector.extract_strided_slice %89 {offsets = [0, 32], sizes = [32, 16], strides = [1, 1]} : vector<32x64xf32> to vector<32x16xf32>
      "tpu.trace_start"() <{level = 10 : i32, message = "qd,kd->qk"}> : () -> ()
      %cst_78 = arith.constant dense<0.000000e+00> : vector<32x32xf32>
      %132 = tpu.matmul %129, %130, %cst_78 {dimension_numbers = #tpu.dot_dimension_numbers<[1], [1], [0], [0], [0, 0, 1, 0], [], []>} : vector<32x16xf32>, vector<32x16xf32>, vector<32x32xf32> -> vector<32x32xf32>
      "tpu.trace_stop"() : () -> ()
      %cst_79 = arith.constant 2.500000e-01 : f32
      %133 = vector.broadcast %cst_79 : f32 to vector<32x32xf32>
      %134 = arith.mulf %132, %133 : vector<32x32xf32>
      %135 = arith.addf %134, %0 : vector<32x32xf32>
      %cst_80 = arith.constant dense<0xFF800000> : vector<32xf32>
      %136 = vector.multi_reduction <maximumf>, %135, %cst_80 [1] : vector<32x32xf32> to vector<32xf32>
      %137 = vector.shape_cast %136 : vector<32xf32> to vector<32x1xf32>
      %138 = vector.broadcast %137 : vector<32x1xf32> to vector<32x32xf32>
      %139 = arith.subf %135, %138 : vector<32x32xf32>
      %140 = math.exp %139 : vector<32x32xf32>
      %cst_81 = arith.constant dense<0.000000e+00> : vector<32xf32>
      %141 = vector.multi_reduction <add>, %140, %cst_81 [1] : vector<32x32xf32> to vector<32xf32>
      %142 = vector.shape_cast %141 : vector<32xf32> to vector<32x1xf32>
      %143 = vector.broadcast %142 : vector<32x1xf32> to vector<32x32xf32>
      %144 = arith.divf %140, %143 : vector<32x32xf32>
      %cst_82 = arith.constant dense<0.000000e+00> : vector<32x16xf32>
      %145 = tpu.matmul %144, %131, %cst_82 {dimension_numbers = #tpu.dot_dimension_numbers<[1], [0], [0], [1], [0, 0, 1, 1], [], []>} : vector<32x32xf32>, vector<32x16xf32>, vector<32x16xf32> -> vector<32x16xf32>
      %c32 = arith.constant 32 : index
      %c0_83 = arith.constant 0 : index
      %146 = vector.load %arg13[%c32, %c0_83] : memref<64x64xf32, #tpu.memory_space<vmem>>, vector<16x64xf32>
      %cst_84 = arith.constant dense<0.000000e+00> : vector<32x64xf32>
      %147 = tpu.matmul %145, %146, %cst_84 {dimension_numbers = #tpu.dot_dimension_numbers<[1], [0], [0], [1], [0, 0, 1, 1], [], []>} : vector<32x16xf32>, vector<16x64xf32>, vector<32x64xf32> -> vector<32x64xf32>
      %148 = arith.addf %128, %147 : vector<32x64xf32>
      %149 = vector.extract_strided_slice %79 {offsets = [0, 48], sizes = [32, 16], strides = [1, 1]} : vector<32x64xf32> to vector<32x16xf32>
      %150 = vector.extract_strided_slice %84 {offsets = [0, 48], sizes = [32, 16], strides = [1, 1]} : vector<32x64xf32> to vector<32x16xf32>
      %151 = vector.extract_strided_slice %89 {offsets = [0, 48], sizes = [32, 16], strides = [1, 1]} : vector<32x64xf32> to vector<32x16xf32>
      "tpu.trace_start"() <{level = 10 : i32, message = "qd,kd->qk"}> : () -> ()
      %cst_85 = arith.constant dense<0.000000e+00> : vector<32x32xf32>
      %152 = tpu.matmul %149, %150, %cst_85 {dimension_numbers = #tpu.dot_dimension_numbers<[1], [1], [0], [0], [0, 0, 1, 0], [], []>} : vector<32x16xf32>, vector<32x16xf32>, vector<32x32xf32> -> vector<32x32xf32>
      "tpu.trace_stop"() : () -> ()
      %cst_86 = arith.constant 2.500000e-01 : f32
      %153 = vector.broadcast %cst_86 : f32 to vector<32x32xf32>
      %154 = arith.mulf %152, %153 : vector<32x32xf32>
      %155 = arith.addf %154, %0 : vector<32x32xf32>
      %cst_87 = arith.constant dense<0xFF800000> : vector<32xf32>
      %156 = vector.multi_reduction <maximumf>, %155, %cst_87 [1] : vector<32x32xf32> to vector<32xf32>
      %157 = vector.shape_cast %156 : vector<32xf32> to vector<32x1xf32>
      %158 = vector.broadcast %157 : vector<32x1xf32> to vector<32x32xf32>
      %159 = arith.subf %155, %158 : vector<32x32xf32>
      %160 = math.exp %159 : vector<32x32xf32>
      %cst_88 = arith.constant dense<0.000000e+00> : vector<32xf32>
      %161 = vector.multi_reduction <add>, %160, %cst_88 [1] : vector<32x32xf32> to vector<32xf32>
      %162 = vector.shape_cast %161 : vector<32xf32> to vector<32x1xf32>
      %163 = vector.broadcast %162 : vector<32x1xf32> to vector<32x32xf32>
      %164 = arith.divf %160, %163 : vector<32x32xf32>
      %cst_89 = arith.constant dense<0.000000e+00> : vector<32x16xf32>
      %165 = tpu.matmul %164, %151, %cst_89 {dimension_numbers = #tpu.dot_dimension_numbers<[1], [0], [0], [1], [0, 0, 1, 1], [], []>} : vector<32x32xf32>, vector<32x16xf32>, vector<32x16xf32> -> vector<32x16xf32>
      %c48 = arith.constant 48 : index
      %c0_90 = arith.constant 0 : index
      %166 = vector.load %arg13[%c48, %c0_90] : memref<64x64xf32, #tpu.memory_space<vmem>>, vector<16x64xf32>
      %cst_91 = arith.constant dense<0.000000e+00> : vector<32x64xf32>
      %167 = tpu.matmul %165, %166, %cst_91 {dimension_numbers = #tpu.dot_dimension_numbers<[1], [0], [0], [1], [0, 0, 1, 1], [], []>} : vector<32x16xf32>, vector<16x64xf32>, vector<32x64xf32> -> vector<32x64xf32>
      %168 = arith.addf %148, %167 : vector<32x64xf32>
      %c0_92 = arith.constant 0 : index
      %c0_93 = arith.constant 0 : index
      %169 = vector.load %arg14[%c0_92, %c0_93] : memref<1x64xf32, #tpu.memory_space<vmem>>, vector<1x64xf32>
      %170 = vector.broadcast %169 : vector<1x64xf32> to vector<32x64xf32>
      %171 = arith.addf %168, %170 : vector<32x64xf32>
      %172 = arith.mulf %8, %171 : vector<32x64xf32>
      %173 = arith.addf %arg23, %172 : vector<32x64xf32>
      %cst_94 = arith.constant dense<0.000000e+00> : vector<32xf32>
      %174 = vector.multi_reduction <add>, %173, %cst_94 [1] : vector<32x64xf32> to vector<32xf32>
      %175 = vector.shape_cast %174 : vector<32xf32> to vector<32x1xf32>
      %cst_95 = arith.constant 6.400000e+01 : f32
      %176 = vector.broadcast %cst_95 : f32 to vector<32x1xf32>
      %177 = arith.divf %175, %176 : vector<32x1xf32>
      %178 = vector.broadcast %177 : vector<32x1xf32> to vector<32x64xf32>
      %179 = arith.subf %173, %178 : vector<32x64xf32>
      %180 = arith.mulf %179, %179 : vector<32x64xf32>
      %cst_96 = arith.constant dense<0.000000e+00> : vector<32xf32>
      %181 = vector.multi_reduction <add>, %180, %cst_96 [1] : vector<32x64xf32> to vector<32xf32>
      %182 = vector.shape_cast %181 : vector<32xf32> to vector<32x1xf32>
      %cst_97 = arith.constant 6.400000e+01 : f32
      %183 = vector.broadcast %cst_97 : f32 to vector<32x1xf32>
      %184 = arith.divf %182, %183 : vector<32x1xf32>
      %cst_98 = arith.constant 9.99999997E-7 : f32
      %185 = vector.broadcast %cst_98 : f32 to vector<32x1xf32>
      %186 = arith.addf %184, %185 : vector<32x1xf32>
      %187 = math.rsqrt %186 : vector<32x1xf32>
      %188 = vector.broadcast %187 : vector<32x1xf32> to vector<32x64xf32>
      %189 = arith.mulf %179, %188 : vector<32x64xf32>
      %190 = arith.mulf %189, %14 : vector<32x64xf32>
      %191 = arith.addf %190, %10 : vector<32x64xf32>
      %c0_99 = arith.constant 0 : index
      %c0_100 = arith.constant 0 : index
      %192 = vector.load %arg15[%c0_99, %c0_100] : memref<64x256xf32, #tpu.memory_space<vmem>>, vector<64x256xf32>
      %cst_101 = arith.constant dense<0.000000e+00> : vector<32x256xf32>
      %193 = tpu.matmul %191, %192, %cst_101 {dimension_numbers = #tpu.dot_dimension_numbers<[1], [0], [0], [1], [0, 0, 1, 1], [], []>} : vector<32x64xf32>, vector<64x256xf32>, vector<32x256xf32> -> vector<32x256xf32>
      %c0_102 = arith.constant 0 : index
      %c0_103 = arith.constant 0 : index
      %194 = vector.load %arg16[%c0_102, %c0_103] : memref<1x256xf32, #tpu.memory_space<vmem>>, vector<1x256xf32>
      %195 = vector.broadcast %194 : vector<1x256xf32> to vector<32x256xf32>
      %196 = arith.addf %193, %195 : vector<32x256xf32>
      %cst_104 = arith.constant 5.000000e-01 : f32
      %197 = vector.broadcast %cst_104 : f32 to vector<32x256xf32>
      %198 = arith.mulf %197, %196 : vector<32x256xf32>
      %cst_105 = arith.constant 4.471500e-02 : f32
      %199 = vector.broadcast %cst_105 : f32 to vector<32x256xf32>
      %200 = arith.mulf %199, %196 : vector<32x256xf32>
      %201 = arith.mulf %200, %196 : vector<32x256xf32>
      %202 = arith.mulf %201, %196 : vector<32x256xf32>
      %203 = arith.addf %196, %202 : vector<32x256xf32>
      %cst_106 = arith.constant 0.797884583 : f32
      %204 = vector.broadcast %cst_106 : f32 to vector<32x256xf32>
      %205 = arith.mulf %204, %203 : vector<32x256xf32>
      %206 = math.tanh %205 : vector<32x256xf32>
      %cst_107 = arith.constant 1.000000e+00 : f32
      %207 = vector.broadcast %cst_107 : f32 to vector<32x256xf32>
      %208 = arith.addf %207, %206 : vector<32x256xf32>
      %209 = arith.mulf %198, %208 : vector<32x256xf32>
      %c0_108 = arith.constant 0 : index
      %c0_109 = arith.constant 0 : index
      %210 = vector.load %arg17[%c0_108, %c0_109] : memref<256x64xf32, #tpu.memory_space<vmem>>, vector<256x64xf32>
      %cst_110 = arith.constant dense<0.000000e+00> : vector<32x64xf32>
      %211 = tpu.matmul %209, %210, %cst_110 {dimension_numbers = #tpu.dot_dimension_numbers<[1], [0], [0], [1], [0, 0, 1, 1], [], []>} : vector<32x256xf32>, vector<256x64xf32>, vector<32x64xf32> -> vector<32x64xf32>
      %c0_111 = arith.constant 0 : index
      %c0_112 = arith.constant 0 : index
      %212 = vector.load %arg18[%c0_111, %c0_112] : memref<1x64xf32, #tpu.memory_space<vmem>>, vector<1x64xf32>
      %213 = vector.broadcast %212 : vector<1x64xf32> to vector<32x64xf32>
      %214 = arith.addf %211, %213 : vector<32x64xf32>
      %215 = arith.mulf %16, %214 : vector<32x64xf32>
      %216 = arith.addf %173, %215 : vector<32x64xf32>
      %cst_113 = arith.constant 3.125000e-02 : f32
      %217 = vector.broadcast %cst_113 : f32 to vector<32x64xf32>
      %218 = arith.mulf %217, %216 : vector<32x64xf32>
      %219 = arith.addf %arg23, %218 : vector<32x64xf32>
      %cst_114 = arith.constant dense<0.000000e+00> : vector<32xf32>
      %220 = vector.multi_reduction <add>, %219, %cst_114 [1] : vector<32x64xf32> to vector<32xf32>
      %221 = vector.shape_cast %220 : vector<32xf32> to vector<32x1xf32>
      %cst_115 = arith.constant 6.400000e+01 : f32
      %222 = vector.broadcast %cst_115 : f32 to vector<32x1xf32>
      %223 = arith.divf %221, %222 : vector<32x1xf32>
      %224 = vector.broadcast %223 : vector<32x1xf32> to vector<32x64xf32>
      %225 = arith.subf %219, %224 : vector<32x64xf32>
      %226 = arith.mulf %225, %225 : vector<32x64xf32>
      %cst_116 = arith.constant dense<0.000000e+00> : vector<32xf32>
      %227 = vector.multi_reduction <add>, %226, %cst_116 [1] : vector<32x64xf32> to vector<32xf32>
      %228 = vector.shape_cast %227 : vector<32xf32> to vector<32x1xf32>
      %cst_117 = arith.constant 6.400000e+01 : f32
      %229 = vector.broadcast %cst_117 : f32 to vector<32x1xf32>
      %230 = arith.divf %228, %229 : vector<32x1xf32>
      %cst_118 = arith.constant 9.99999997E-7 : f32
      %231 = vector.broadcast %cst_118 : f32 to vector<32x1xf32>
      %232 = arith.addf %230, %231 : vector<32x1xf32>
      %233 = math.rsqrt %232 : vector<32x1xf32>
      %234 = vector.broadcast %233 : vector<32x1xf32> to vector<32x64xf32>
      %235 = arith.mulf %225, %234 : vector<32x64xf32>
      %236 = arith.mulf %235, %6 : vector<32x64xf32>
      %237 = arith.addf %236, %2 : vector<32x64xf32>
      %c0_119 = arith.constant 0 : index
      %c0_120 = arith.constant 0 : index
      %238 = vector.load %arg7[%c0_119, %c0_120] : memref<64x64xf32, #tpu.memory_space<vmem>>, vector<64x64xf32>
      %cst_121 = arith.constant dense<0.000000e+00> : vector<32x64xf32>
      %239 = tpu.matmul %237, %238, %cst_121 {dimension_numbers = #tpu.dot_dimension_numbers<[1], [0], [0], [1], [0, 0, 1, 1], [], []>} : vector<32x64xf32>, vector<64x64xf32>, vector<32x64xf32> -> vector<32x64xf32>
      %c0_122 = arith.constant 0 : index
      %c0_123 = arith.constant 0 : index
      %240 = vector.load %arg8[%c0_122, %c0_123] : memref<1x64xf32, #tpu.memory_space<vmem>>, vector<1x64xf32>
      %241 = vector.broadcast %240 : vector<1x64xf32> to vector<32x64xf32>
      %242 = arith.addf %239, %241 : vector<32x64xf32>
      %c0_124 = arith.constant 0 : index
      %c0_125 = arith.constant 0 : index
      %243 = vector.load %arg9[%c0_124, %c0_125] : memref<64x64xf32, #tpu.memory_space<vmem>>, vector<64x64xf32>
      %cst_126 = arith.constant dense<0.000000e+00> : vector<32x64xf32>
      %244 = tpu.matmul %237, %243, %cst_126 {dimension_numbers = #tpu.dot_dimension_numbers<[1], [0], [0], [1], [0, 0, 1, 1], [], []>} : vector<32x64xf32>, vector<64x64xf32>, vector<32x64xf32> -> vector<32x64xf32>
      %c0_127 = arith.constant 0 : index
      %c0_128 = arith.constant 0 : index
      %245 = vector.load %arg10[%c0_127, %c0_128] : memref<1x64xf32, #tpu.memory_space<vmem>>, vector<1x64xf32>
      %246 = vector.broadcast %245 : vector<1x64xf32> to vector<32x64xf32>
      %247 = arith.addf %244, %246 : vector<32x64xf32>
      %c0_129 = arith.constant 0 : index
      %c0_130 = arith.constant 0 : index
      %248 = vector.load %arg11[%c0_129, %c0_130] : memref<64x64xf32, #tpu.memory_space<vmem>>, vector<64x64xf32>
      %cst_131 = arith.constant dense<0.000000e+00> : vector<32x64xf32>
      %249 = tpu.matmul %237, %248, %cst_131 {dimension_numbers = #tpu.dot_dimension_numbers<[1], [0], [0], [1], [0, 0, 1, 1], [], []>} : vector<32x64xf32>, vector<64x64xf32>, vector<32x64xf32> -> vector<32x64xf32>
      %c0_132 = arith.constant 0 : index
      %c0_133 = arith.constant 0 : index
      %250 = vector.load %arg12[%c0_132, %c0_133] : memref<1x64xf32, #tpu.memory_space<vmem>>, vector<1x64xf32>
      %251 = vector.broadcast %250 : vector<1x64xf32> to vector<32x64xf32>
      %252 = arith.addf %249, %251 : vector<32x64xf32>
      %253 = vector.extract_strided_slice %242 {offsets = [0, 0], sizes = [32, 16], strides = [1, 1]} : vector<32x64xf32> to vector<32x16xf32>
      %254 = vector.extract_strided_slice %247 {offsets = [0, 0], sizes = [32, 16], strides = [1, 1]} : vector<32x64xf32> to vector<32x16xf32>
      %255 = vector.extract_strided_slice %252 {offsets = [0, 0], sizes = [32, 16], strides = [1, 1]} : vector<32x64xf32> to vector<32x16xf32>
      "tpu.trace_start"() <{level = 10 : i32, message = "qd,kd->qk"}> : () -> ()
      %cst_134 = arith.constant dense<0.000000e+00> : vector<32x32xf32>
      %256 = tpu.matmul %253, %254, %cst_134 {dimension_numbers = #tpu.dot_dimension_numbers<[1], [1], [0], [0], [0, 0, 1, 0], [], []>} : vector<32x16xf32>, vector<32x16xf32>, vector<32x32xf32> -> vector<32x32xf32>
      "tpu.trace_stop"() : () -> ()
      %cst_135 = arith.constant 2.500000e-01 : f32
      %257 = vector.broadcast %cst_135 : f32 to vector<32x32xf32>
      %258 = arith.mulf %256, %257 : vector<32x32xf32>
      %259 = arith.addf %258, %0 : vector<32x32xf32>
      %cst_136 = arith.constant dense<0xFF800000> : vector<32xf32>
      %260 = vector.multi_reduction <maximumf>, %259, %cst_136 [1] : vector<32x32xf32> to vector<32xf32>
      %261 = vector.shape_cast %260 : vector<32xf32> to vector<32x1xf32>
      %262 = vector.broadcast %261 : vector<32x1xf32> to vector<32x32xf32>
      %263 = arith.subf %259, %262 : vector<32x32xf32>
      %264 = math.exp %263 : vector<32x32xf32>
      %cst_137 = arith.constant dense<0.000000e+00> : vector<32xf32>
      %265 = vector.multi_reduction <add>, %264, %cst_137 [1] : vector<32x32xf32> to vector<32xf32>
      %266 = vector.shape_cast %265 : vector<32xf32> to vector<32x1xf32>
      %267 = vector.broadcast %266 : vector<32x1xf32> to vector<32x32xf32>
      %268 = arith.divf %264, %267 : vector<32x32xf32>
      %cst_138 = arith.constant dense<0.000000e+00> : vector<32x16xf32>
      %269 = tpu.matmul %268, %255, %cst_138 {dimension_numbers = #tpu.dot_dimension_numbers<[1], [0], [0], [1], [0, 0, 1, 1], [], []>} : vector<32x32xf32>, vector<32x16xf32>, vector<32x16xf32> -> vector<32x16xf32>
      %c0_139 = arith.constant 0 : index
      %c0_140 = arith.constant 0 : index
      %270 = vector.load %arg13[%c0_139, %c0_140] : memref<64x64xf32, #tpu.memory_space<vmem>>, vector<16x64xf32>
      %cst_141 = arith.constant dense<0.000000e+00> : vector<32x64xf32>
      %271 = tpu.matmul %269, %270, %cst_141 {dimension_numbers = #tpu.dot_dimension_numbers<[1], [0], [0], [1], [0, 0, 1, 1], [], []>} : vector<32x16xf32>, vector<16x64xf32>, vector<32x64xf32> -> vector<32x64xf32>
      %272 = vector.extract_strided_slice %242 {offsets = [0, 16], sizes = [32, 16], strides = [1, 1]} : vector<32x64xf32> to vector<32x16xf32>
      %273 = vector.extract_strided_slice %247 {offsets = [0, 16], sizes = [32, 16], strides = [1, 1]} : vector<32x64xf32> to vector<32x16xf32>
      %274 = vector.extract_strided_slice %252 {offsets = [0, 16], sizes = [32, 16], strides = [1, 1]} : vector<32x64xf32> to vector<32x16xf32>
      "tpu.trace_start"() <{level = 10 : i32, message = "qd,kd->qk"}> : () -> ()
      %cst_142 = arith.constant dense<0.000000e+00> : vector<32x32xf32>
      %275 = tpu.matmul %272, %273, %cst_142 {dimension_numbers = #tpu.dot_dimension_numbers<[1], [1], [0], [0], [0, 0, 1, 0], [], []>} : vector<32x16xf32>, vector<32x16xf32>, vector<32x32xf32> -> vector<32x32xf32>
      "tpu.trace_stop"() : () -> ()
      %cst_143 = arith.constant 2.500000e-01 : f32
      %276 = vector.broadcast %cst_143 : f32 to vector<32x32xf32>
      %277 = arith.mulf %275, %276 : vector<32x32xf32>
      %278 = arith.addf %277, %0 : vector<32x32xf32>
      %cst_144 = arith.constant dense<0xFF800000> : vector<32xf32>
      %279 = vector.multi_reduction <maximumf>, %278, %cst_144 [1] : vector<32x32xf32> to vector<32xf32>
      %280 = vector.shape_cast %279 : vector<32xf32> to vector<32x1xf32>
      %281 = vector.broadcast %280 : vector<32x1xf32> to vector<32x32xf32>
      %282 = arith.subf %278, %281 : vector<32x32xf32>
      %283 = math.exp %282 : vector<32x32xf32>
      %cst_145 = arith.constant dense<0.000000e+00> : vector<32xf32>
      %284 = vector.multi_reduction <add>, %283, %cst_145 [1] : vector<32x32xf32> to vector<32xf32>
      %285 = vector.shape_cast %284 : vector<32xf32> to vector<32x1xf32>
      %286 = vector.broadcast %285 : vector<32x1xf32> to vector<32x32xf32>
      %287 = arith.divf %283, %286 : vector<32x32xf32>
      %cst_146 = arith.constant dense<0.000000e+00> : vector<32x16xf32>
      %288 = tpu.matmul %287, %274, %cst_146 {dimension_numbers = #tpu.dot_dimension_numbers<[1], [0], [0], [1], [0, 0, 1, 1], [], []>} : vector<32x32xf32>, vector<32x16xf32>, vector<32x16xf32> -> vector<32x16xf32>
      %c16_147 = arith.constant 16 : index
      %c0_148 = arith.constant 0 : index
      %289 = vector.load %arg13[%c16_147, %c0_148] : memref<64x64xf32, #tpu.memory_space<vmem>>, vector<16x64xf32>
      %cst_149 = arith.constant dense<0.000000e+00> : vector<32x64xf32>
      %290 = tpu.matmul %288, %289, %cst_149 {dimension_numbers = #tpu.dot_dimension_numbers<[1], [0], [0], [1], [0, 0, 1, 1], [], []>} : vector<32x16xf32>, vector<16x64xf32>, vector<32x64xf32> -> vector<32x64xf32>
      %291 = arith.addf %271, %290 : vector<32x64xf32>
      %292 = vector.extract_strided_slice %242 {offsets = [0, 32], sizes = [32, 16], strides = [1, 1]} : vector<32x64xf32> to vector<32x16xf32>
      %293 = vector.extract_strided_slice %247 {offsets = [0, 32], sizes = [32, 16], strides = [1, 1]} : vector<32x64xf32> to vector<32x16xf32>
      %294 = vector.extract_strided_slice %252 {offsets = [0, 32], sizes = [32, 16], strides = [1, 1]} : vector<32x64xf32> to vector<32x16xf32>
      "tpu.trace_start"() <{level = 10 : i32, message = "qd,kd->qk"}> : () -> ()
      %cst_150 = arith.constant dense<0.000000e+00> : vector<32x32xf32>
      %295 = tpu.matmul %292, %293, %cst_150 {dimension_numbers = #tpu.dot_dimension_numbers<[1], [1], [0], [0], [0, 0, 1, 0], [], []>} : vector<32x16xf32>, vector<32x16xf32>, vector<32x32xf32> -> vector<32x32xf32>
      "tpu.trace_stop"() : () -> ()
      %cst_151 = arith.constant 2.500000e-01 : f32
      %296 = vector.broadcast %cst_151 : f32 to vector<32x32xf32>
      %297 = arith.mulf %295, %296 : vector<32x32xf32>
      %298 = arith.addf %297, %0 : vector<32x32xf32>
      %cst_152 = arith.constant dense<0xFF800000> : vector<32xf32>
      %299 = vector.multi_reduction <maximumf>, %298, %cst_152 [1] : vector<32x32xf32> to vector<32xf32>
      %300 = vector.shape_cast %299 : vector<32xf32> to vector<32x1xf32>
      %301 = vector.broadcast %300 : vector<32x1xf32> to vector<32x32xf32>
      %302 = arith.subf %298, %301 : vector<32x32xf32>
      %303 = math.exp %302 : vector<32x32xf32>
      %cst_153 = arith.constant dense<0.000000e+00> : vector<32xf32>
      %304 = vector.multi_reduction <add>, %303, %cst_153 [1] : vector<32x32xf32> to vector<32xf32>
      %305 = vector.shape_cast %304 : vector<32xf32> to vector<32x1xf32>
      %306 = vector.broadcast %305 : vector<32x1xf32> to vector<32x32xf32>
      %307 = arith.divf %303, %306 : vector<32x32xf32>
      %cst_154 = arith.constant dense<0.000000e+00> : vector<32x16xf32>
      %308 = tpu.matmul %307, %294, %cst_154 {dimension_numbers = #tpu.dot_dimension_numbers<[1], [0], [0], [1], [0, 0, 1, 1], [], []>} : vector<32x32xf32>, vector<32x16xf32>, vector<32x16xf32> -> vector<32x16xf32>
      %c32_155 = arith.constant 32 : index
      %c0_156 = arith.constant 0 : index
      %309 = vector.load %arg13[%c32_155, %c0_156] : memref<64x64xf32, #tpu.memory_space<vmem>>, vector<16x64xf32>
      %cst_157 = arith.constant dense<0.000000e+00> : vector<32x64xf32>
      %310 = tpu.matmul %308, %309, %cst_157 {dimension_numbers = #tpu.dot_dimension_numbers<[1], [0], [0], [1], [0, 0, 1, 1], [], []>} : vector<32x16xf32>, vector<16x64xf32>, vector<32x64xf32> -> vector<32x64xf32>
      %311 = arith.addf %291, %310 : vector<32x64xf32>
      %312 = vector.extract_strided_slice %242 {offsets = [0, 48], sizes = [32, 16], strides = [1, 1]} : vector<32x64xf32> to vector<32x16xf32>
      %313 = vector.extract_strided_slice %247 {offsets = [0, 48], sizes = [32, 16], strides = [1, 1]} : vector<32x64xf32> to vector<32x16xf32>
      %314 = vector.extract_strided_slice %252 {offsets = [0, 48], sizes = [32, 16], strides = [1, 1]} : vector<32x64xf32> to vector<32x16xf32>
      "tpu.trace_start"() <{level = 10 : i32, message = "qd,kd->qk"}> : () -> ()
      %cst_158 = arith.constant dense<0.000000e+00> : vector<32x32xf32>
      %315 = tpu.matmul %312, %313, %cst_158 {dimension_numbers = #tpu.dot_dimension_numbers<[1], [1], [0], [0], [0, 0, 1, 0], [], []>} : vector<32x16xf32>, vector<32x16xf32>, vector<32x32xf32> -> vector<32x32xf32>
      "tpu.trace_stop"() : () -> ()
      %cst_159 = arith.constant 2.500000e-01 : f32
      %316 = vector.broadcast %cst_159 : f32 to vector<32x32xf32>
      %317 = arith.mulf %315, %316 : vector<32x32xf32>
      %318 = arith.addf %317, %0 : vector<32x32xf32>
      %cst_160 = arith.constant dense<0xFF800000> : vector<32xf32>
      %319 = vector.multi_reduction <maximumf>, %318, %cst_160 [1] : vector<32x32xf32> to vector<32xf32>
      %320 = vector.shape_cast %319 : vector<32xf32> to vector<32x1xf32>
      %321 = vector.broadcast %320 : vector<32x1xf32> to vector<32x32xf32>
      %322 = arith.subf %318, %321 : vector<32x32xf32>
      %323 = math.exp %322 : vector<32x32xf32>
      %cst_161 = arith.constant dense<0.000000e+00> : vector<32xf32>
      %324 = vector.multi_reduction <add>, %323, %cst_161 [1] : vector<32x32xf32> to vector<32xf32>
      %325 = vector.shape_cast %324 : vector<32xf32> to vector<32x1xf32>
      %326 = vector.broadcast %325 : vector<32x1xf32> to vector<32x32xf32>
      %327 = arith.divf %323, %326 : vector<32x32xf32>
      %cst_162 = arith.constant dense<0.000000e+00> : vector<32x16xf32>
      %328 = tpu.matmul %327, %314, %cst_162 {dimension_numbers = #tpu.dot_dimension_numbers<[1], [0], [0], [1], [0, 0, 1, 1], [], []>} : vector<32x32xf32>, vector<32x16xf32>, vector<32x16xf32> -> vector<32x16xf32>
      %c48_163 = arith.constant 48 : index
      %c0_164 = arith.constant 0 : index
      %329 = vector.load %arg13[%c48_163, %c0_164] : memref<64x64xf32, #tpu.memory_space<vmem>>, vector<16x64xf32>
      %cst_165 = arith.constant dense<0.000000e+00> : vector<32x64xf32>
      %330 = tpu.matmul %328, %329, %cst_165 {dimension_numbers = #tpu.dot_dimension_numbers<[1], [0], [0], [1], [0, 0, 1, 1], [], []>} : vector<32x16xf32>, vector<16x64xf32>, vector<32x64xf32> -> vector<32x64xf32>
      %331 = arith.addf %311, %330 : vector<32x64xf32>
      %c0_166 = arith.constant 0 : index
      %c0_167 = arith.constant 0 : index
      %332 = vector.load %arg14[%c0_166, %c0_167] : memref<1x64xf32, #tpu.memory_space<vmem>>, vector<1x64xf32>
      %333 = vector.broadcast %332 : vector<1x64xf32> to vector<32x64xf32>
      %334 = arith.addf %331, %333 : vector<32x64xf32>
      %335 = arith.mulf %8, %334 : vector<32x64xf32>
      %336 = arith.addf %219, %335 : vector<32x64xf32>
      %cst_168 = arith.constant dense<0.000000e+00> : vector<32xf32>
      %337 = vector.multi_reduction <add>, %336, %cst_168 [1] : vector<32x64xf32> to vector<32xf32>
      %338 = vector.shape_cast %337 : vector<32xf32> to vector<32x1xf32>
      %cst_169 = arith.constant 6.400000e+01 : f32
      %339 = vector.broadcast %cst_169 : f32 to vector<32x1xf32>
      %340 = arith.divf %338, %339 : vector<32x1xf32>
      %341 = vector.broadcast %340 : vector<32x1xf32> to vector<32x64xf32>
      %342 = arith.subf %336, %341 : vector<32x64xf32>
      %343 = arith.mulf %342, %342 : vector<32x64xf32>
      %cst_170 = arith.constant dense<0.000000e+00> : vector<32xf32>
      %344 = vector.multi_reduction <add>, %343, %cst_170 [1] : vector<32x64xf32> to vector<32xf32>
      %345 = vector.shape_cast %344 : vector<32xf32> to vector<32x1xf32>
      %cst_171 = arith.constant 6.400000e+01 : f32
      %346 = vector.broadcast %cst_171 : f32 to vector<32x1xf32>
      %347 = arith.divf %345, %346 : vector<32x1xf32>
      %cst_172 = arith.constant 9.99999997E-7 : f32
      %348 = vector.broadcast %cst_172 : f32 to vector<32x1xf32>
      %349 = arith.addf %347, %348 : vector<32x1xf32>
      %350 = math.rsqrt %349 : vector<32x1xf32>
      %351 = vector.broadcast %350 : vector<32x1xf32> to vector<32x64xf32>
      %352 = arith.mulf %342, %351 : vector<32x64xf32>
      %353 = arith.mulf %352, %14 : vector<32x64xf32>
      %354 = arith.addf %353, %10 : vector<32x64xf32>
      %c0_173 = arith.constant 0 : index
      %c0_174 = arith.constant 0 : index
      %355 = vector.load %arg15[%c0_173, %c0_174] : memref<64x256xf32, #tpu.memory_space<vmem>>, vector<64x256xf32>
      %cst_175 = arith.constant dense<0.000000e+00> : vector<32x256xf32>
      %356 = tpu.matmul %354, %355, %cst_175 {dimension_numbers = #tpu.dot_dimension_numbers<[1], [0], [0], [1], [0, 0, 1, 1], [], []>} : vector<32x64xf32>, vector<64x256xf32>, vector<32x256xf32> -> vector<32x256xf32>
      %c0_176 = arith.constant 0 : index
      %c0_177 = arith.constant 0 : index
      %357 = vector.load %arg16[%c0_176, %c0_177] : memref<1x256xf32, #tpu.memory_space<vmem>>, vector<1x256xf32>
      %358 = vector.broadcast %357 : vector<1x256xf32> to vector<32x256xf32>
      %359 = arith.addf %356, %358 : vector<32x256xf32>
      %cst_178 = arith.constant 5.000000e-01 : f32
      %360 = vector.broadcast %cst_178 : f32 to vector<32x256xf32>
      %361 = arith.mulf %360, %359 : vector<32x256xf32>
      %cst_179 = arith.constant 4.471500e-02 : f32
      %362 = vector.broadcast %cst_179 : f32 to vector<32x256xf32>
      %363 = arith.mulf %362, %359 : vector<32x256xf32>
      %364 = arith.mulf %363, %359 : vector<32x256xf32>
      %365 = arith.mulf %364, %359 : vector<32x256xf32>
      %366 = arith.addf %359, %365 : vector<32x256xf32>
      %cst_180 = arith.constant 0.797884583 : f32
      %367 = vector.broadcast %cst_180 : f32 to vector<32x256xf32>
      %368 = arith.mulf %367, %366 : vector<32x256xf32>
      %369 = math.tanh %368 : vector<32x256xf32>
      %cst_181 = arith.constant 1.000000e+00 : f32
      %370 = vector.broadcast %cst_181 : f32 to vector<32x256xf32>
      %371 = arith.addf %370, %369 : vector<32x256xf32>
      %372 = arith.mulf %361, %371 : vector<32x256xf32>
      %c0_182 = arith.constant 0 : index
      %c0_183 = arith.constant 0 : index
      %373 = vector.load %arg17[%c0_182, %c0_183] : memref<256x64xf32, #tpu.memory_space<vmem>>, vector<256x64xf32>
      %cst_184 = arith.constant dense<0.000000e+00> : vector<32x64xf32>
      %374 = tpu.matmul %372, %373, %cst_184 {dimension_numbers = #tpu.dot_dimension_numbers<[1], [0], [0], [1], [0, 0, 1, 1], [], []>} : vector<32x256xf32>, vector<256x64xf32>, vector<32x64xf32> -> vector<32x64xf32>
      %c0_185 = arith.constant 0 : index
      %c0_186 = arith.constant 0 : index
      %375 = vector.load %arg18[%c0_185, %c0_186] : memref<1x64xf32, #tpu.memory_space<vmem>>, vector<1x64xf32>
      %376 = vector.broadcast %375 : vector<1x64xf32> to vector<32x64xf32>
      %377 = arith.addf %374, %376 : vector<32x64xf32>
      %378 = arith.mulf %16, %377 : vector<32x64xf32>
      %379 = arith.addf %336, %378 : vector<32x64xf32>
      %cst_187 = arith.constant 3.125000e-02 : f32
      %380 = vector.broadcast %cst_187 : f32 to vector<32x64xf32>
      %381 = arith.mulf %380, %379 : vector<32x64xf32>
      %382 = arith.addf %arg23, %381 : vector<32x64xf32>
      %cst_188 = arith.constant dense<0.000000e+00> : vector<32xf32>
      %383 = vector.multi_reduction <add>, %382, %cst_188 [1] : vector<32x64xf32> to vector<32xf32>
      %384 = vector.shape_cast %383 : vector<32xf32> to vector<32x1xf32>
      %cst_189 = arith.constant 6.400000e+01 : f32
      %385 = vector.broadcast %cst_189 : f32 to vector<32x1xf32>
      %386 = arith.divf %384, %385 : vector<32x1xf32>
      %387 = vector.broadcast %386 : vector<32x1xf32> to vector<32x64xf32>
      %388 = arith.subf %382, %387 : vector<32x64xf32>
      %389 = arith.mulf %388, %388 : vector<32x64xf32>
      %cst_190 = arith.constant dense<0.000000e+00> : vector<32xf32>
      %390 = vector.multi_reduction <add>, %389, %cst_190 [1] : vector<32x64xf32> to vector<32xf32>
      %391 = vector.shape_cast %390 : vector<32xf32> to vector<32x1xf32>
      %cst_191 = arith.constant 6.400000e+01 : f32
      %392 = vector.broadcast %cst_191 : f32 to vector<32x1xf32>
      %393 = arith.divf %391, %392 : vector<32x1xf32>
      %cst_192 = arith.constant 9.99999997E-7 : f32
      %394 = vector.broadcast %cst_192 : f32 to vector<32x1xf32>
      %395 = arith.addf %393, %394 : vector<32x1xf32>
      %396 = math.rsqrt %395 : vector<32x1xf32>
      %397 = vector.broadcast %396 : vector<32x1xf32> to vector<32x64xf32>
      %398 = arith.mulf %388, %397 : vector<32x64xf32>
      %399 = arith.mulf %398, %6 : vector<32x64xf32>
      %400 = arith.addf %399, %2 : vector<32x64xf32>
      %c0_193 = arith.constant 0 : index
      %c0_194 = arith.constant 0 : index
      %401 = vector.load %arg7[%c0_193, %c0_194] : memref<64x64xf32, #tpu.memory_space<vmem>>, vector<64x64xf32>
      %cst_195 = arith.constant dense<0.000000e+00> : vector<32x64xf32>
      %402 = tpu.matmul %400, %401, %cst_195 {dimension_numbers = #tpu.dot_dimension_numbers<[1], [0], [0], [1], [0, 0, 1, 1], [], []>} : vector<32x64xf32>, vector<64x64xf32>, vector<32x64xf32> -> vector<32x64xf32>
      %c0_196 = arith.constant 0 : index
      %c0_197 = arith.constant 0 : index
      %403 = vector.load %arg8[%c0_196, %c0_197] : memref<1x64xf32, #tpu.memory_space<vmem>>, vector<1x64xf32>
      %404 = vector.broadcast %403 : vector<1x64xf32> to vector<32x64xf32>
      %405 = arith.addf %402, %404 : vector<32x64xf32>
      %c0_198 = arith.constant 0 : index
      %c0_199 = arith.constant 0 : index
      %406 = vector.load %arg9[%c0_198, %c0_199] : memref<64x64xf32, #tpu.memory_space<vmem>>, vector<64x64xf32>
      %cst_200 = arith.constant dense<0.000000e+00> : vector<32x64xf32>
      %407 = tpu.matmul %400, %406, %cst_200 {dimension_numbers = #tpu.dot_dimension_numbers<[1], [0], [0], [1], [0, 0, 1, 1], [], []>} : vector<32x64xf32>, vector<64x64xf32>, vector<32x64xf32> -> vector<32x64xf32>
      %c0_201 = arith.constant 0 : index
      %c0_202 = arith.constant 0 : index
      %408 = vector.load %arg10[%c0_201, %c0_202] : memref<1x64xf32, #tpu.memory_space<vmem>>, vector<1x64xf32>
      %409 = vector.broadcast %408 : vector<1x64xf32> to vector<32x64xf32>
      %410 = arith.addf %407, %409 : vector<32x64xf32>
      %c0_203 = arith.constant 0 : index
      %c0_204 = arith.constant 0 : index
      %411 = vector.load %arg11[%c0_203, %c0_204] : memref<64x64xf32, #tpu.memory_space<vmem>>, vector<64x64xf32>
      %cst_205 = arith.constant dense<0.000000e+00> : vector<32x64xf32>
      %412 = tpu.matmul %400, %411, %cst_205 {dimension_numbers = #tpu.dot_dimension_numbers<[1], [0], [0], [1], [0, 0, 1, 1], [], []>} : vector<32x64xf32>, vector<64x64xf32>, vector<32x64xf32> -> vector<32x64xf32>
      %c0_206 = arith.constant 0 : index
      %c0_207 = arith.constant 0 : index
      %413 = vector.load %arg12[%c0_206, %c0_207] : memref<1x64xf32, #tpu.memory_space<vmem>>, vector<1x64xf32>
      %414 = vector.broadcast %413 : vector<1x64xf32> to vector<32x64xf32>
      %415 = arith.addf %412, %414 : vector<32x64xf32>
      %416 = vector.extract_strided_slice %405 {offsets = [0, 0], sizes = [32, 16], strides = [1, 1]} : vector<32x64xf32> to vector<32x16xf32>
      %417 = vector.extract_strided_slice %410 {offsets = [0, 0], sizes = [32, 16], strides = [1, 1]} : vector<32x64xf32> to vector<32x16xf32>
      %418 = vector.extract_strided_slice %415 {offsets = [0, 0], sizes = [32, 16], strides = [1, 1]} : vector<32x64xf32> to vector<32x16xf32>
      "tpu.trace_start"() <{level = 10 : i32, message = "qd,kd->qk"}> : () -> ()
      %cst_208 = arith.constant dense<0.000000e+00> : vector<32x32xf32>
      %419 = tpu.matmul %416, %417, %cst_208 {dimension_numbers = #tpu.dot_dimension_numbers<[1], [1], [0], [0], [0, 0, 1, 0], [], []>} : vector<32x16xf32>, vector<32x16xf32>, vector<32x32xf32> -> vector<32x32xf32>
      "tpu.trace_stop"() : () -> ()
      %cst_209 = arith.constant 2.500000e-01 : f32
      %420 = vector.broadcast %cst_209 : f32 to vector<32x32xf32>
      %421 = arith.mulf %419, %420 : vector<32x32xf32>
      %422 = arith.addf %421, %0 : vector<32x32xf32>
      %cst_210 = arith.constant dense<0xFF800000> : vector<32xf32>
      %423 = vector.multi_reduction <maximumf>, %422, %cst_210 [1] : vector<32x32xf32> to vector<32xf32>
      %424 = vector.shape_cast %423 : vector<32xf32> to vector<32x1xf32>
      %425 = vector.broadcast %424 : vector<32x1xf32> to vector<32x32xf32>
      %426 = arith.subf %422, %425 : vector<32x32xf32>
      %427 = math.exp %426 : vector<32x32xf32>
      %cst_211 = arith.constant dense<0.000000e+00> : vector<32xf32>
      %428 = vector.multi_reduction <add>, %427, %cst_211 [1] : vector<32x32xf32> to vector<32xf32>
      %429 = vector.shape_cast %428 : vector<32xf32> to vector<32x1xf32>
      %430 = vector.broadcast %429 : vector<32x1xf32> to vector<32x32xf32>
      %431 = arith.divf %427, %430 : vector<32x32xf32>
      %cst_212 = arith.constant dense<0.000000e+00> : vector<32x16xf32>
      %432 = tpu.matmul %431, %418, %cst_212 {dimension_numbers = #tpu.dot_dimension_numbers<[1], [0], [0], [1], [0, 0, 1, 1], [], []>} : vector<32x32xf32>, vector<32x16xf32>, vector<32x16xf32> -> vector<32x16xf32>
      %c0_213 = arith.constant 0 : index
      %c0_214 = arith.constant 0 : index
      %433 = vector.load %arg13[%c0_213, %c0_214] : memref<64x64xf32, #tpu.memory_space<vmem>>, vector<16x64xf32>
      %cst_215 = arith.constant dense<0.000000e+00> : vector<32x64xf32>
      %434 = tpu.matmul %432, %433, %cst_215 {dimension_numbers = #tpu.dot_dimension_numbers<[1], [0], [0], [1], [0, 0, 1, 1], [], []>} : vector<32x16xf32>, vector<16x64xf32>, vector<32x64xf32> -> vector<32x64xf32>
      %435 = vector.extract_strided_slice %405 {offsets = [0, 16], sizes = [32, 16], strides = [1, 1]} : vector<32x64xf32> to vector<32x16xf32>
      %436 = vector.extract_strided_slice %410 {offsets = [0, 16], sizes = [32, 16], strides = [1, 1]} : vector<32x64xf32> to vector<32x16xf32>
      %437 = vector.extract_strided_slice %415 {offsets = [0, 16], sizes = [32, 16], strides = [1, 1]} : vector<32x64xf32> to vector<32x16xf32>
      "tpu.trace_start"() <{level = 10 : i32, message = "qd,kd->qk"}> : () -> ()
      %cst_216 = arith.constant dense<0.000000e+00> : vector<32x32xf32>
      %438 = tpu.matmul %435, %436, %cst_216 {dimension_numbers = #tpu.dot_dimension_numbers<[1], [1], [0], [0], [0, 0, 1, 0], [], []>} : vector<32x16xf32>, vector<32x16xf32>, vector<32x32xf32> -> vector<32x32xf32>
      "tpu.trace_stop"() : () -> ()
      %cst_217 = arith.constant 2.500000e-01 : f32
      %439 = vector.broadcast %cst_217 : f32 to vector<32x32xf32>
      %440 = arith.mulf %438, %439 : vector<32x32xf32>
      %441 = arith.addf %440, %0 : vector<32x32xf32>
      %cst_218 = arith.constant dense<0xFF800000> : vector<32xf32>
      %442 = vector.multi_reduction <maximumf>, %441, %cst_218 [1] : vector<32x32xf32> to vector<32xf32>
      %443 = vector.shape_cast %442 : vector<32xf32> to vector<32x1xf32>
      %444 = vector.broadcast %443 : vector<32x1xf32> to vector<32x32xf32>
      %445 = arith.subf %441, %444 : vector<32x32xf32>
      %446 = math.exp %445 : vector<32x32xf32>
      %cst_219 = arith.constant dense<0.000000e+00> : vector<32xf32>
      %447 = vector.multi_reduction <add>, %446, %cst_219 [1] : vector<32x32xf32> to vector<32xf32>
      %448 = vector.shape_cast %447 : vector<32xf32> to vector<32x1xf32>
      %449 = vector.broadcast %448 : vector<32x1xf32> to vector<32x32xf32>
      %450 = arith.divf %446, %449 : vector<32x32xf32>
      %cst_220 = arith.constant dense<0.000000e+00> : vector<32x16xf32>
      %451 = tpu.matmul %450, %437, %cst_220 {dimension_numbers = #tpu.dot_dimension_numbers<[1], [0], [0], [1], [0, 0, 1, 1], [], []>} : vector<32x32xf32>, vector<32x16xf32>, vector<32x16xf32> -> vector<32x16xf32>
      %c16_221 = arith.constant 16 : index
      %c0_222 = arith.constant 0 : index
      %452 = vector.load %arg13[%c16_221, %c0_222] : memref<64x64xf32, #tpu.memory_space<vmem>>, vector<16x64xf32>
      %cst_223 = arith.constant dense<0.000000e+00> : vector<32x64xf32>
      %453 = tpu.matmul %451, %452, %cst_223 {dimension_numbers = #tpu.dot_dimension_numbers<[1], [0], [0], [1], [0, 0, 1, 1], [], []>} : vector<32x16xf32>, vector<16x64xf32>, vector<32x64xf32> -> vector<32x64xf32>
      %454 = arith.addf %434, %453 : vector<32x64xf32>
      %455 = vector.extract_strided_slice %405 {offsets = [0, 32], sizes = [32, 16], strides = [1, 1]} : vector<32x64xf32> to vector<32x16xf32>
      %456 = vector.extract_strided_slice %410 {offsets = [0, 32], sizes = [32, 16], strides = [1, 1]} : vector<32x64xf32> to vector<32x16xf32>
      %457 = vector.extract_strided_slice %415 {offsets = [0, 32], sizes = [32, 16], strides = [1, 1]} : vector<32x64xf32> to vector<32x16xf32>
      "tpu.trace_start"() <{level = 10 : i32, message = "qd,kd->qk"}> : () -> ()
      %cst_224 = arith.constant dense<0.000000e+00> : vector<32x32xf32>
      %458 = tpu.matmul %455, %456, %cst_224 {dimension_numbers = #tpu.dot_dimension_numbers<[1], [1], [0], [0], [0, 0, 1, 0], [], []>} : vector<32x16xf32>, vector<32x16xf32>, vector<32x32xf32> -> vector<32x32xf32>
      "tpu.trace_stop"() : () -> ()
      %cst_225 = arith.constant 2.500000e-01 : f32
      %459 = vector.broadcast %cst_225 : f32 to vector<32x32xf32>
      %460 = arith.mulf %458, %459 : vector<32x32xf32>
      %461 = arith.addf %460, %0 : vector<32x32xf32>
      %cst_226 = arith.constant dense<0xFF800000> : vector<32xf32>
      %462 = vector.multi_reduction <maximumf>, %461, %cst_226 [1] : vector<32x32xf32> to vector<32xf32>
      %463 = vector.shape_cast %462 : vector<32xf32> to vector<32x1xf32>
      %464 = vector.broadcast %463 : vector<32x1xf32> to vector<32x32xf32>
      %465 = arith.subf %461, %464 : vector<32x32xf32>
      %466 = math.exp %465 : vector<32x32xf32>
      %cst_227 = arith.constant dense<0.000000e+00> : vector<32xf32>
      %467 = vector.multi_reduction <add>, %466, %cst_227 [1] : vector<32x32xf32> to vector<32xf32>
      %468 = vector.shape_cast %467 : vector<32xf32> to vector<32x1xf32>
      %469 = vector.broadcast %468 : vector<32x1xf32> to vector<32x32xf32>
      %470 = arith.divf %466, %469 : vector<32x32xf32>
      %cst_228 = arith.constant dense<0.000000e+00> : vector<32x16xf32>
      %471 = tpu.matmul %470, %457, %cst_228 {dimension_numbers = #tpu.dot_dimension_numbers<[1], [0], [0], [1], [0, 0, 1, 1], [], []>} : vector<32x32xf32>, vector<32x16xf32>, vector<32x16xf32> -> vector<32x16xf32>
      %c32_229 = arith.constant 32 : index
      %c0_230 = arith.constant 0 : index
      %472 = vector.load %arg13[%c32_229, %c0_230] : memref<64x64xf32, #tpu.memory_space<vmem>>, vector<16x64xf32>
      %cst_231 = arith.constant dense<0.000000e+00> : vector<32x64xf32>
      %473 = tpu.matmul %471, %472, %cst_231 {dimension_numbers = #tpu.dot_dimension_numbers<[1], [0], [0], [1], [0, 0, 1, 1], [], []>} : vector<32x16xf32>, vector<16x64xf32>, vector<32x64xf32> -> vector<32x64xf32>
      %474 = arith.addf %454, %473 : vector<32x64xf32>
      %475 = vector.extract_strided_slice %405 {offsets = [0, 48], sizes = [32, 16], strides = [1, 1]} : vector<32x64xf32> to vector<32x16xf32>
      %476 = vector.extract_strided_slice %410 {offsets = [0, 48], sizes = [32, 16], strides = [1, 1]} : vector<32x64xf32> to vector<32x16xf32>
      %477 = vector.extract_strided_slice %415 {offsets = [0, 48], sizes = [32, 16], strides = [1, 1]} : vector<32x64xf32> to vector<32x16xf32>
      "tpu.trace_start"() <{level = 10 : i32, message = "qd,kd->qk"}> : () -> ()
      %cst_232 = arith.constant dense<0.000000e+00> : vector<32x32xf32>
      %478 = tpu.matmul %475, %476, %cst_232 {dimension_numbers = #tpu.dot_dimension_numbers<[1], [1], [0], [0], [0, 0, 1, 0], [], []>} : vector<32x16xf32>, vector<32x16xf32>, vector<32x32xf32> -> vector<32x32xf32>
      "tpu.trace_stop"() : () -> ()
      %cst_233 = arith.constant 2.500000e-01 : f32
      %479 = vector.broadcast %cst_233 : f32 to vector<32x32xf32>
      %480 = arith.mulf %478, %479 : vector<32x32xf32>
      %481 = arith.addf %480, %0 : vector<32x32xf32>
      %cst_234 = arith.constant dense<0xFF800000> : vector<32xf32>
      %482 = vector.multi_reduction <maximumf>, %481, %cst_234 [1] : vector<32x32xf32> to vector<32xf32>
      %483 = vector.shape_cast %482 : vector<32xf32> to vector<32x1xf32>
      %484 = vector.broadcast %483 : vector<32x1xf32> to vector<32x32xf32>
      %485 = arith.subf %481, %484 : vector<32x32xf32>
      %486 = math.exp %485 : vector<32x32xf32>
      %cst_235 = arith.constant dense<0.000000e+00> : vector<32xf32>
      %487 = vector.multi_reduction <add>, %486, %cst_235 [1] : vector<32x32xf32> to vector<32xf32>
      %488 = vector.shape_cast %487 : vector<32xf32> to vector<32x1xf32>
      %489 = vector.broadcast %488 : vector<32x1xf32> to vector<32x32xf32>
      %490 = arith.divf %486, %489 : vector<32x32xf32>
      %cst_236 = arith.constant dense<0.000000e+00> : vector<32x16xf32>
      %491 = tpu.matmul %490, %477, %cst_236 {dimension_numbers = #tpu.dot_dimension_numbers<[1], [0], [0], [1], [0, 0, 1, 1], [], []>} : vector<32x32xf32>, vector<32x16xf32>, vector<32x16xf32> -> vector<32x16xf32>
      %c48_237 = arith.constant 48 : index
      %c0_238 = arith.constant 0 : index
      %492 = vector.load %arg13[%c48_237, %c0_238] : memref<64x64xf32, #tpu.memory_space<vmem>>, vector<16x64xf32>
      %cst_239 = arith.constant dense<0.000000e+00> : vector<32x64xf32>
      %493 = tpu.matmul %491, %492, %cst_239 {dimension_numbers = #tpu.dot_dimension_numbers<[1], [0], [0], [1], [0, 0, 1, 1], [], []>} : vector<32x16xf32>, vector<16x64xf32>, vector<32x64xf32> -> vector<32x64xf32>
      %494 = arith.addf %474, %493 : vector<32x64xf32>
      %c0_240 = arith.constant 0 : index
      %c0_241 = arith.constant 0 : index
      %495 = vector.load %arg14[%c0_240, %c0_241] : memref<1x64xf32, #tpu.memory_space<vmem>>, vector<1x64xf32>
      %496 = vector.broadcast %495 : vector<1x64xf32> to vector<32x64xf32>
      %497 = arith.addf %494, %496 : vector<32x64xf32>
      %498 = arith.mulf %8, %497 : vector<32x64xf32>
      %499 = arith.addf %382, %498 : vector<32x64xf32>
      %cst_242 = arith.constant dense<0.000000e+00> : vector<32xf32>
      %500 = vector.multi_reduction <add>, %499, %cst_242 [1] : vector<32x64xf32> to vector<32xf32>
      %501 = vector.shape_cast %500 : vector<32xf32> to vector<32x1xf32>
      %cst_243 = arith.constant 6.400000e+01 : f32
      %502 = vector.broadcast %cst_243 : f32 to vector<32x1xf32>
      %503 = arith.divf %501, %502 : vector<32x1xf32>
      %504 = vector.broadcast %503 : vector<32x1xf32> to vector<32x64xf32>
      %505 = arith.subf %499, %504 : vector<32x64xf32>
      %506 = arith.mulf %505, %505 : vector<32x64xf32>
      %cst_244 = arith.constant dense<0.000000e+00> : vector<32xf32>
      %507 = vector.multi_reduction <add>, %506, %cst_244 [1] : vector<32x64xf32> to vector<32xf32>
      %508 = vector.shape_cast %507 : vector<32xf32> to vector<32x1xf32>
      %cst_245 = arith.constant 6.400000e+01 : f32
      %509 = vector.broadcast %cst_245 : f32 to vector<32x1xf32>
      %510 = arith.divf %508, %509 : vector<32x1xf32>
      %cst_246 = arith.constant 9.99999997E-7 : f32
      %511 = vector.broadcast %cst_246 : f32 to vector<32x1xf32>
      %512 = arith.addf %510, %511 : vector<32x1xf32>
      %513 = math.rsqrt %512 : vector<32x1xf32>
      %514 = vector.broadcast %513 : vector<32x1xf32> to vector<32x64xf32>
      %515 = arith.mulf %505, %514 : vector<32x64xf32>
      %516 = arith.mulf %515, %14 : vector<32x64xf32>
      %517 = arith.addf %516, %10 : vector<32x64xf32>
      %c0_247 = arith.constant 0 : index
      %c0_248 = arith.constant 0 : index
      %518 = vector.load %arg15[%c0_247, %c0_248] : memref<64x256xf32, #tpu.memory_space<vmem>>, vector<64x256xf32>
      %cst_249 = arith.constant dense<0.000000e+00> : vector<32x256xf32>
      %519 = tpu.matmul %517, %518, %cst_249 {dimension_numbers = #tpu.dot_dimension_numbers<[1], [0], [0], [1], [0, 0, 1, 1], [], []>} : vector<32x64xf32>, vector<64x256xf32>, vector<32x256xf32> -> vector<32x256xf32>
      %c0_250 = arith.constant 0 : index
      %c0_251 = arith.constant 0 : index
      %520 = vector.load %arg16[%c0_250, %c0_251] : memref<1x256xf32, #tpu.memory_space<vmem>>, vector<1x256xf32>
      %521 = vector.broadcast %520 : vector<1x256xf32> to vector<32x256xf32>
      %522 = arith.addf %519, %521 : vector<32x256xf32>
      %cst_252 = arith.constant 5.000000e-01 : f32
      %523 = vector.broadcast %cst_252 : f32 to vector<32x256xf32>
      %524 = arith.mulf %523, %522 : vector<32x256xf32>
      %cst_253 = arith.constant 4.471500e-02 : f32
      %525 = vector.broadcast %cst_253 : f32 to vector<32x256xf32>
      %526 = arith.mulf %525, %522 : vector<32x256xf32>
      %527 = arith.mulf %526, %522 : vector<32x256xf32>
      %528 = arith.mulf %527, %522 : vector<32x256xf32>
      %529 = arith.addf %522, %528 : vector<32x256xf32>
      %cst_254 = arith.constant 0.797884583 : f32
      %530 = vector.broadcast %cst_254 : f32 to vector<32x256xf32>
      %531 = arith.mulf %530, %529 : vector<32x256xf32>
      %532 = math.tanh %531 : vector<32x256xf32>
      %cst_255 = arith.constant 1.000000e+00 : f32
      %533 = vector.broadcast %cst_255 : f32 to vector<32x256xf32>
      %534 = arith.addf %533, %532 : vector<32x256xf32>
      %535 = arith.mulf %524, %534 : vector<32x256xf32>
      %c0_256 = arith.constant 0 : index
      %c0_257 = arith.constant 0 : index
      %536 = vector.load %arg17[%c0_256, %c0_257] : memref<256x64xf32, #tpu.memory_space<vmem>>, vector<256x64xf32>
      %cst_258 = arith.constant dense<0.000000e+00> : vector<32x64xf32>
      %537 = tpu.matmul %535, %536, %cst_258 {dimension_numbers = #tpu.dot_dimension_numbers<[1], [0], [0], [1], [0, 0, 1, 1], [], []>} : vector<32x256xf32>, vector<256x64xf32>, vector<32x64xf32> -> vector<32x64xf32>
      %c0_259 = arith.constant 0 : index
      %c0_260 = arith.constant 0 : index
      %538 = vector.load %arg18[%c0_259, %c0_260] : memref<1x64xf32, #tpu.memory_space<vmem>>, vector<1x64xf32>
      %539 = vector.broadcast %538 : vector<1x64xf32> to vector<32x64xf32>
      %540 = arith.addf %537, %539 : vector<32x64xf32>
      %541 = arith.mulf %16, %540 : vector<32x64xf32>
      %542 = arith.addf %499, %541 : vector<32x64xf32>
      %cst_261 = arith.constant 6.250000e-02 : f32
      %543 = vector.broadcast %cst_261 : f32 to vector<32x64xf32>
      %544 = arith.mulf %543, %542 : vector<32x64xf32>
      %545 = arith.addf %arg23, %544 : vector<32x64xf32>
      %cst_262 = arith.constant dense<0.000000e+00> : vector<32xf32>
      %546 = vector.multi_reduction <add>, %545, %cst_262 [1] : vector<32x64xf32> to vector<32xf32>
      %547 = vector.shape_cast %546 : vector<32xf32> to vector<32x1xf32>
      %cst_263 = arith.constant 6.400000e+01 : f32
      %548 = vector.broadcast %cst_263 : f32 to vector<32x1xf32>
      %549 = arith.divf %547, %548 : vector<32x1xf32>
      %550 = vector.broadcast %549 : vector<32x1xf32> to vector<32x64xf32>
      %551 = arith.subf %545, %550 : vector<32x64xf32>
      %552 = arith.mulf %551, %551 : vector<32x64xf32>
      %cst_264 = arith.constant dense<0.000000e+00> : vector<32xf32>
      %553 = vector.multi_reduction <add>, %552, %cst_264 [1] : vector<32x64xf32> to vector<32xf32>
      %554 = vector.shape_cast %553 : vector<32xf32> to vector<32x1xf32>
      %cst_265 = arith.constant 6.400000e+01 : f32
      %555 = vector.broadcast %cst_265 : f32 to vector<32x1xf32>
      %556 = arith.divf %554, %555 : vector<32x1xf32>
      %cst_266 = arith.constant 9.99999997E-7 : f32
      %557 = vector.broadcast %cst_266 : f32 to vector<32x1xf32>
      %558 = arith.addf %556, %557 : vector<32x1xf32>
      %559 = math.rsqrt %558 : vector<32x1xf32>
      %560 = vector.broadcast %559 : vector<32x1xf32> to vector<32x64xf32>
      %561 = arith.mulf %551, %560 : vector<32x64xf32>
      %562 = arith.mulf %561, %6 : vector<32x64xf32>
      %563 = arith.addf %562, %2 : vector<32x64xf32>
      %c0_267 = arith.constant 0 : index
      %c0_268 = arith.constant 0 : index
      %564 = vector.load %arg7[%c0_267, %c0_268] : memref<64x64xf32, #tpu.memory_space<vmem>>, vector<64x64xf32>
      %cst_269 = arith.constant dense<0.000000e+00> : vector<32x64xf32>
      %565 = tpu.matmul %563, %564, %cst_269 {dimension_numbers = #tpu.dot_dimension_numbers<[1], [0], [0], [1], [0, 0, 1, 1], [], []>} : vector<32x64xf32>, vector<64x64xf32>, vector<32x64xf32> -> vector<32x64xf32>
      %c0_270 = arith.constant 0 : index
      %c0_271 = arith.constant 0 : index
      %566 = vector.load %arg8[%c0_270, %c0_271] : memref<1x64xf32, #tpu.memory_space<vmem>>, vector<1x64xf32>
      %567 = vector.broadcast %566 : vector<1x64xf32> to vector<32x64xf32>
      %568 = arith.addf %565, %567 : vector<32x64xf32>
      %c0_272 = arith.constant 0 : index
      %c0_273 = arith.constant 0 : index
      %569 = vector.load %arg9[%c0_272, %c0_273] : memref<64x64xf32, #tpu.memory_space<vmem>>, vector<64x64xf32>
      %cst_274 = arith.constant dense<0.000000e+00> : vector<32x64xf32>
      %570 = tpu.matmul %563, %569, %cst_274 {dimension_numbers = #tpu.dot_dimension_numbers<[1], [0], [0], [1], [0, 0, 1, 1], [], []>} : vector<32x64xf32>, vector<64x64xf32>, vector<32x64xf32> -> vector<32x64xf32>
      %c0_275 = arith.constant 0 : index
      %c0_276 = arith.constant 0 : index
      %571 = vector.load %arg10[%c0_275, %c0_276] : memref<1x64xf32, #tpu.memory_space<vmem>>, vector<1x64xf32>
      %572 = vector.broadcast %571 : vector<1x64xf32> to vector<32x64xf32>
      %573 = arith.addf %570, %572 : vector<32x64xf32>
      %c0_277 = arith.constant 0 : index
      %c0_278 = arith.constant 0 : index
      %574 = vector.load %arg11[%c0_277, %c0_278] : memref<64x64xf32, #tpu.memory_space<vmem>>, vector<64x64xf32>
      %cst_279 = arith.constant dense<0.000000e+00> : vector<32x64xf32>
      %575 = tpu.matmul %563, %574, %cst_279 {dimension_numbers = #tpu.dot_dimension_numbers<[1], [0], [0], [1], [0, 0, 1, 1], [], []>} : vector<32x64xf32>, vector<64x64xf32>, vector<32x64xf32> -> vector<32x64xf32>
      %c0_280 = arith.constant 0 : index
      %c0_281 = arith.constant 0 : index
      %576 = vector.load %arg12[%c0_280, %c0_281] : memref<1x64xf32, #tpu.memory_space<vmem>>, vector<1x64xf32>
      %577 = vector.broadcast %576 : vector<1x64xf32> to vector<32x64xf32>
      %578 = arith.addf %575, %577 : vector<32x64xf32>
      %579 = vector.extract_strided_slice %568 {offsets = [0, 0], sizes = [32, 16], strides = [1, 1]} : vector<32x64xf32> to vector<32x16xf32>
      %580 = vector.extract_strided_slice %573 {offsets = [0, 0], sizes = [32, 16], strides = [1, 1]} : vector<32x64xf32> to vector<32x16xf32>
      %581 = vector.extract_strided_slice %578 {offsets = [0, 0], sizes = [32, 16], strides = [1, 1]} : vector<32x64xf32> to vector<32x16xf32>
      "tpu.trace_start"() <{level = 10 : i32, message = "qd,kd->qk"}> : () -> ()
      %cst_282 = arith.constant dense<0.000000e+00> : vector<32x32xf32>
      %582 = tpu.matmul %579, %580, %cst_282 {dimension_numbers = #tpu.dot_dimension_numbers<[1], [1], [0], [0], [0, 0, 1, 0], [], []>} : vector<32x16xf32>, vector<32x16xf32>, vector<32x32xf32> -> vector<32x32xf32>
      "tpu.trace_stop"() : () -> ()
      %cst_283 = arith.constant 2.500000e-01 : f32
      %583 = vector.broadcast %cst_283 : f32 to vector<32x32xf32>
      %584 = arith.mulf %582, %583 : vector<32x32xf32>
      %585 = arith.addf %584, %0 : vector<32x32xf32>
      %cst_284 = arith.constant dense<0xFF800000> : vector<32xf32>
      %586 = vector.multi_reduction <maximumf>, %585, %cst_284 [1] : vector<32x32xf32> to vector<32xf32>
      %587 = vector.shape_cast %586 : vector<32xf32> to vector<32x1xf32>
      %588 = vector.broadcast %587 : vector<32x1xf32> to vector<32x32xf32>
      %589 = arith.subf %585, %588 : vector<32x32xf32>
      %590 = math.exp %589 : vector<32x32xf32>
      %cst_285 = arith.constant dense<0.000000e+00> : vector<32xf32>
      %591 = vector.multi_reduction <add>, %590, %cst_285 [1] : vector<32x32xf32> to vector<32xf32>
      %592 = vector.shape_cast %591 : vector<32xf32> to vector<32x1xf32>
      %593 = vector.broadcast %592 : vector<32x1xf32> to vector<32x32xf32>
      %594 = arith.divf %590, %593 : vector<32x32xf32>
      %cst_286 = arith.constant dense<0.000000e+00> : vector<32x16xf32>
      %595 = tpu.matmul %594, %581, %cst_286 {dimension_numbers = #tpu.dot_dimension_numbers<[1], [0], [0], [1], [0, 0, 1, 1], [], []>} : vector<32x32xf32>, vector<32x16xf32>, vector<32x16xf32> -> vector<32x16xf32>
      %c0_287 = arith.constant 0 : index
      %c0_288 = arith.constant 0 : index
      %596 = vector.load %arg13[%c0_287, %c0_288] : memref<64x64xf32, #tpu.memory_space<vmem>>, vector<16x64xf32>
      %cst_289 = arith.constant dense<0.000000e+00> : vector<32x64xf32>
      %597 = tpu.matmul %595, %596, %cst_289 {dimension_numbers = #tpu.dot_dimension_numbers<[1], [0], [0], [1], [0, 0, 1, 1], [], []>} : vector<32x16xf32>, vector<16x64xf32>, vector<32x64xf32> -> vector<32x64xf32>
      %598 = vector.extract_strided_slice %568 {offsets = [0, 16], sizes = [32, 16], strides = [1, 1]} : vector<32x64xf32> to vector<32x16xf32>
      %599 = vector.extract_strided_slice %573 {offsets = [0, 16], sizes = [32, 16], strides = [1, 1]} : vector<32x64xf32> to vector<32x16xf32>
      %600 = vector.extract_strided_slice %578 {offsets = [0, 16], sizes = [32, 16], strides = [1, 1]} : vector<32x64xf32> to vector<32x16xf32>
      "tpu.trace_start"() <{level = 10 : i32, message = "qd,kd->qk"}> : () -> ()
      %cst_290 = arith.constant dense<0.000000e+00> : vector<32x32xf32>
      %601 = tpu.matmul %598, %599, %cst_290 {dimension_numbers = #tpu.dot_dimension_numbers<[1], [1], [0], [0], [0, 0, 1, 0], [], []>} : vector<32x16xf32>, vector<32x16xf32>, vector<32x32xf32> -> vector<32x32xf32>
      "tpu.trace_stop"() : () -> ()
      %cst_291 = arith.constant 2.500000e-01 : f32
      %602 = vector.broadcast %cst_291 : f32 to vector<32x32xf32>
      %603 = arith.mulf %601, %602 : vector<32x32xf32>
      %604 = arith.addf %603, %0 : vector<32x32xf32>
      %cst_292 = arith.constant dense<0xFF800000> : vector<32xf32>
      %605 = vector.multi_reduction <maximumf>, %604, %cst_292 [1] : vector<32x32xf32> to vector<32xf32>
      %606 = vector.shape_cast %605 : vector<32xf32> to vector<32x1xf32>
      %607 = vector.broadcast %606 : vector<32x1xf32> to vector<32x32xf32>
      %608 = arith.subf %604, %607 : vector<32x32xf32>
      %609 = math.exp %608 : vector<32x32xf32>
      %cst_293 = arith.constant dense<0.000000e+00> : vector<32xf32>
      %610 = vector.multi_reduction <add>, %609, %cst_293 [1] : vector<32x32xf32> to vector<32xf32>
      %611 = vector.shape_cast %610 : vector<32xf32> to vector<32x1xf32>
      %612 = vector.broadcast %611 : vector<32x1xf32> to vector<32x32xf32>
      %613 = arith.divf %609, %612 : vector<32x32xf32>
      %cst_294 = arith.constant dense<0.000000e+00> : vector<32x16xf32>
      %614 = tpu.matmul %613, %600, %cst_294 {dimension_numbers = #tpu.dot_dimension_numbers<[1], [0], [0], [1], [0, 0, 1, 1], [], []>} : vector<32x32xf32>, vector<32x16xf32>, vector<32x16xf32> -> vector<32x16xf32>
      %c16_295 = arith.constant 16 : index
      %c0_296 = arith.constant 0 : index
      %615 = vector.load %arg13[%c16_295, %c0_296] : memref<64x64xf32, #tpu.memory_space<vmem>>, vector<16x64xf32>
      %cst_297 = arith.constant dense<0.000000e+00> : vector<32x64xf32>
      %616 = tpu.matmul %614, %615, %cst_297 {dimension_numbers = #tpu.dot_dimension_numbers<[1], [0], [0], [1], [0, 0, 1, 1], [], []>} : vector<32x16xf32>, vector<16x64xf32>, vector<32x64xf32> -> vector<32x64xf32>
      %617 = arith.addf %597, %616 : vector<32x64xf32>
      %618 = vector.extract_strided_slice %568 {offsets = [0, 32], sizes = [32, 16], strides = [1, 1]} : vector<32x64xf32> to vector<32x16xf32>
      %619 = vector.extract_strided_slice %573 {offsets = [0, 32], sizes = [32, 16], strides = [1, 1]} : vector<32x64xf32> to vector<32x16xf32>
      %620 = vector.extract_strided_slice %578 {offsets = [0, 32], sizes = [32, 16], strides = [1, 1]} : vector<32x64xf32> to vector<32x16xf32>
      "tpu.trace_start"() <{level = 10 : i32, message = "qd,kd->qk"}> : () -> ()
      %cst_298 = arith.constant dense<0.000000e+00> : vector<32x32xf32>
      %621 = tpu.matmul %618, %619, %cst_298 {dimension_numbers = #tpu.dot_dimension_numbers<[1], [1], [0], [0], [0, 0, 1, 0], [], []>} : vector<32x16xf32>, vector<32x16xf32>, vector<32x32xf32> -> vector<32x32xf32>
      "tpu.trace_stop"() : () -> ()
      %cst_299 = arith.constant 2.500000e-01 : f32
      %622 = vector.broadcast %cst_299 : f32 to vector<32x32xf32>
      %623 = arith.mulf %621, %622 : vector<32x32xf32>
      %624 = arith.addf %623, %0 : vector<32x32xf32>
      %cst_300 = arith.constant dense<0xFF800000> : vector<32xf32>
      %625 = vector.multi_reduction <maximumf>, %624, %cst_300 [1] : vector<32x32xf32> to vector<32xf32>
      %626 = vector.shape_cast %625 : vector<32xf32> to vector<32x1xf32>
      %627 = vector.broadcast %626 : vector<32x1xf32> to vector<32x32xf32>
      %628 = arith.subf %624, %627 : vector<32x32xf32>
      %629 = math.exp %628 : vector<32x32xf32>
      %cst_301 = arith.constant dense<0.000000e+00> : vector<32xf32>
      %630 = vector.multi_reduction <add>, %629, %cst_301 [1] : vector<32x32xf32> to vector<32xf32>
      %631 = vector.shape_cast %630 : vector<32xf32> to vector<32x1xf32>
      %632 = vector.broadcast %631 : vector<32x1xf32> to vector<32x32xf32>
      %633 = arith.divf %629, %632 : vector<32x32xf32>
      %cst_302 = arith.constant dense<0.000000e+00> : vector<32x16xf32>
      %634 = tpu.matmul %633, %620, %cst_302 {dimension_numbers = #tpu.dot_dimension_numbers<[1], [0], [0], [1], [0, 0, 1, 1], [], []>} : vector<32x32xf32>, vector<32x16xf32>, vector<32x16xf32> -> vector<32x16xf32>
      %c32_303 = arith.constant 32 : index
      %c0_304 = arith.constant 0 : index
      %635 = vector.load %arg13[%c32_303, %c0_304] : memref<64x64xf32, #tpu.memory_space<vmem>>, vector<16x64xf32>
      %cst_305 = arith.constant dense<0.000000e+00> : vector<32x64xf32>
      %636 = tpu.matmul %634, %635, %cst_305 {dimension_numbers = #tpu.dot_dimension_numbers<[1], [0], [0], [1], [0, 0, 1, 1], [], []>} : vector<32x16xf32>, vector<16x64xf32>, vector<32x64xf32> -> vector<32x64xf32>
      %637 = arith.addf %617, %636 : vector<32x64xf32>
      %638 = vector.extract_strided_slice %568 {offsets = [0, 48], sizes = [32, 16], strides = [1, 1]} : vector<32x64xf32> to vector<32x16xf32>
      %639 = vector.extract_strided_slice %573 {offsets = [0, 48], sizes = [32, 16], strides = [1, 1]} : vector<32x64xf32> to vector<32x16xf32>
      %640 = vector.extract_strided_slice %578 {offsets = [0, 48], sizes = [32, 16], strides = [1, 1]} : vector<32x64xf32> to vector<32x16xf32>
      "tpu.trace_start"() <{level = 10 : i32, message = "qd,kd->qk"}> : () -> ()
      %cst_306 = arith.constant dense<0.000000e+00> : vector<32x32xf32>
      %641 = tpu.matmul %638, %639, %cst_306 {dimension_numbers = #tpu.dot_dimension_numbers<[1], [1], [0], [0], [0, 0, 1, 0], [], []>} : vector<32x16xf32>, vector<32x16xf32>, vector<32x32xf32> -> vector<32x32xf32>
      "tpu.trace_stop"() : () -> ()
      %cst_307 = arith.constant 2.500000e-01 : f32
      %642 = vector.broadcast %cst_307 : f32 to vector<32x32xf32>
      %643 = arith.mulf %641, %642 : vector<32x32xf32>
      %644 = arith.addf %643, %0 : vector<32x32xf32>
      %cst_308 = arith.constant dense<0xFF800000> : vector<32xf32>
      %645 = vector.multi_reduction <maximumf>, %644, %cst_308 [1] : vector<32x32xf32> to vector<32xf32>
      %646 = vector.shape_cast %645 : vector<32xf32> to vector<32x1xf32>
      %647 = vector.broadcast %646 : vector<32x1xf32> to vector<32x32xf32>
      %648 = arith.subf %644, %647 : vector<32x32xf32>
      %649 = math.exp %648 : vector<32x32xf32>
      %cst_309 = arith.constant dense<0.000000e+00> : vector<32xf32>
      %650 = vector.multi_reduction <add>, %649, %cst_309 [1] : vector<32x32xf32> to vector<32xf32>
      %651 = vector.shape_cast %650 : vector<32xf32> to vector<32x1xf32>
      %652 = vector.broadcast %651 : vector<32x1xf32> to vector<32x32xf32>
      %653 = arith.divf %649, %652 : vector<32x32xf32>
      %cst_310 = arith.constant dense<0.000000e+00> : vector<32x16xf32>
      %654 = tpu.matmul %653, %640, %cst_310 {dimension_numbers = #tpu.dot_dimension_numbers<[1], [0], [0], [1], [0, 0, 1, 1], [], []>} : vector<32x32xf32>, vector<32x16xf32>, vector<32x16xf32> -> vector<32x16xf32>
      %c48_311 = arith.constant 48 : index
      %c0_312 = arith.constant 0 : index
      %655 = vector.load %arg13[%c48_311, %c0_312] : memref<64x64xf32, #tpu.memory_space<vmem>>, vector<16x64xf32>
      %cst_313 = arith.constant dense<0.000000e+00> : vector<32x64xf32>
      %656 = tpu.matmul %654, %655, %cst_313 {dimension_numbers = #tpu.dot_dimension_numbers<[1], [0], [0], [1], [0, 0, 1, 1], [], []>} : vector<32x16xf32>, vector<16x64xf32>, vector<32x64xf32> -> vector<32x64xf32>
      %657 = arith.addf %637, %656 : vector<32x64xf32>
      %c0_314 = arith.constant 0 : index
      %c0_315 = arith.constant 0 : index
      %658 = vector.load %arg14[%c0_314, %c0_315] : memref<1x64xf32, #tpu.memory_space<vmem>>, vector<1x64xf32>
      %659 = vector.broadcast %658 : vector<1x64xf32> to vector<32x64xf32>
      %660 = arith.addf %657, %659 : vector<32x64xf32>
      %661 = arith.mulf %8, %660 : vector<32x64xf32>
      %662 = arith.addf %545, %661 : vector<32x64xf32>
      %cst_316 = arith.constant dense<0.000000e+00> : vector<32xf32>
      %663 = vector.multi_reduction <add>, %662, %cst_316 [1] : vector<32x64xf32> to vector<32xf32>
      %664 = vector.shape_cast %663 : vector<32xf32> to vector<32x1xf32>
      %cst_317 = arith.constant 6.400000e+01 : f32
      %665 = vector.broadcast %cst_317 : f32 to vector<32x1xf32>
      %666 = arith.divf %664, %665 : vector<32x1xf32>
      %667 = vector.broadcast %666 : vector<32x1xf32> to vector<32x64xf32>
      %668 = arith.subf %662, %667 : vector<32x64xf32>
      %669 = arith.mulf %668, %668 : vector<32x64xf32>
      %cst_318 = arith.constant dense<0.000000e+00> : vector<32xf32>
      %670 = vector.multi_reduction <add>, %669, %cst_318 [1] : vector<32x64xf32> to vector<32xf32>
      %671 = vector.shape_cast %670 : vector<32xf32> to vector<32x1xf32>
      %cst_319 = arith.constant 6.400000e+01 : f32
      %672 = vector.broadcast %cst_319 : f32 to vector<32x1xf32>
      %673 = arith.divf %671, %672 : vector<32x1xf32>
      %cst_320 = arith.constant 9.99999997E-7 : f32
      %674 = vector.broadcast %cst_320 : f32 to vector<32x1xf32>
      %675 = arith.addf %673, %674 : vector<32x1xf32>
      %676 = math.rsqrt %675 : vector<32x1xf32>
      %677 = vector.broadcast %676 : vector<32x1xf32> to vector<32x64xf32>
      %678 = arith.mulf %668, %677 : vector<32x64xf32>
      %679 = arith.mulf %678, %14 : vector<32x64xf32>
      %680 = arith.addf %679, %10 : vector<32x64xf32>
      %c0_321 = arith.constant 0 : index
      %c0_322 = arith.constant 0 : index
      %681 = vector.load %arg15[%c0_321, %c0_322] : memref<64x256xf32, #tpu.memory_space<vmem>>, vector<64x256xf32>
      %cst_323 = arith.constant dense<0.000000e+00> : vector<32x256xf32>
      %682 = tpu.matmul %680, %681, %cst_323 {dimension_numbers = #tpu.dot_dimension_numbers<[1], [0], [0], [1], [0, 0, 1, 1], [], []>} : vector<32x64xf32>, vector<64x256xf32>, vector<32x256xf32> -> vector<32x256xf32>
      %c0_324 = arith.constant 0 : index
      %c0_325 = arith.constant 0 : index
      %683 = vector.load %arg16[%c0_324, %c0_325] : memref<1x256xf32, #tpu.memory_space<vmem>>, vector<1x256xf32>
      %684 = vector.broadcast %683 : vector<1x256xf32> to vector<32x256xf32>
      %685 = arith.addf %682, %684 : vector<32x256xf32>
      %cst_326 = arith.constant 5.000000e-01 : f32
      %686 = vector.broadcast %cst_326 : f32 to vector<32x256xf32>
      %687 = arith.mulf %686, %685 : vector<32x256xf32>
      %cst_327 = arith.constant 4.471500e-02 : f32
      %688 = vector.broadcast %cst_327 : f32 to vector<32x256xf32>
      %689 = arith.mulf %688, %685 : vector<32x256xf32>
      %690 = arith.mulf %689, %685 : vector<32x256xf32>
      %691 = arith.mulf %690, %685 : vector<32x256xf32>
      %692 = arith.addf %685, %691 : vector<32x256xf32>
      %cst_328 = arith.constant 0.797884583 : f32
      %693 = vector.broadcast %cst_328 : f32 to vector<32x256xf32>
      %694 = arith.mulf %693, %692 : vector<32x256xf32>
      %695 = math.tanh %694 : vector<32x256xf32>
      %cst_329 = arith.constant 1.000000e+00 : f32
      %696 = vector.broadcast %cst_329 : f32 to vector<32x256xf32>
      %697 = arith.addf %696, %695 : vector<32x256xf32>
      %698 = arith.mulf %687, %697 : vector<32x256xf32>
      %c0_330 = arith.constant 0 : index
      %c0_331 = arith.constant 0 : index
      %699 = vector.load %arg17[%c0_330, %c0_331] : memref<256x64xf32, #tpu.memory_space<vmem>>, vector<256x64xf32>
      %cst_332 = arith.constant dense<0.000000e+00> : vector<32x64xf32>
      %700 = tpu.matmul %698, %699, %cst_332 {dimension_numbers = #tpu.dot_dimension_numbers<[1], [0], [0], [1], [0, 0, 1, 1], [], []>} : vector<32x256xf32>, vector<256x64xf32>, vector<32x64xf32> -> vector<32x64xf32>
      %c0_333 = arith.constant 0 : index
      %c0_334 = arith.constant 0 : index
      %701 = vector.load %arg18[%c0_333, %c0_334] : memref<1x64xf32, #tpu.memory_space<vmem>>, vector<1x64xf32>
      %702 = vector.broadcast %701 : vector<1x64xf32> to vector<32x64xf32>
      %703 = arith.addf %700, %702 : vector<32x64xf32>
      %704 = arith.mulf %16, %703 : vector<32x64xf32>
      %705 = arith.addf %662, %704 : vector<32x64xf32>
      %cst_335 = arith.constant 2.000000e+00 : f32
      %706 = vector.broadcast %cst_335 : f32 to vector<32x64xf32>
      %707 = arith.mulf %706, %379 : vector<32x64xf32>
      %708 = arith.addf %216, %707 : vector<32x64xf32>
      %cst_336 = arith.constant 2.000000e+00 : f32
      %709 = vector.broadcast %cst_336 : f32 to vector<32x64xf32>
      %710 = arith.mulf %709, %542 : vector<32x64xf32>
      %711 = arith.addf %708, %710 : vector<32x64xf32>
      %712 = arith.addf %711, %705 : vector<32x64xf32>
      %cst_337 = arith.constant 0.010416667 : f32
      %713 = vector.broadcast %cst_337 : f32 to vector<32x64xf32>
      %714 = arith.mulf %713, %712 : vector<32x64xf32>
      %715 = arith.addf %arg23, %714 : vector<32x64xf32>
      scf.yield %715 : vector<32x64xf32>
    }
    %cst_24 = arith.constant dense<0.000000e+00> : vector<32xf32>
    %27 = vector.multi_reduction <add>, %26, %cst_24 [1] : vector<32x64xf32> to vector<32xf32>
    %28 = vector.shape_cast %27 : vector<32xf32> to vector<32x1xf32>
    %cst_25 = arith.constant 6.400000e+01 : f32
    %29 = vector.broadcast %cst_25 : f32 to vector<32x1xf32>
    %30 = arith.divf %28, %29 : vector<32x1xf32>
    %31 = vector.broadcast %30 : vector<32x1xf32> to vector<32x64xf32>
    %32 = arith.subf %26, %31 : vector<32x64xf32>
    %33 = arith.mulf %32, %32 : vector<32x64xf32>
    %cst_26 = arith.constant dense<0.000000e+00> : vector<32xf32>
    %34 = vector.multi_reduction <add>, %33, %cst_26 [1] : vector<32x64xf32> to vector<32xf32>
    %35 = vector.shape_cast %34 : vector<32xf32> to vector<32x1xf32>
    %cst_27 = arith.constant 6.400000e+01 : f32
    %36 = vector.broadcast %cst_27 : f32 to vector<32x1xf32>
    %37 = arith.divf %35, %36 : vector<32x1xf32>
    %cst_28 = arith.constant 9.99999997E-7 : f32
    %38 = vector.broadcast %cst_28 : f32 to vector<32x1xf32>
    %39 = arith.addf %37, %38 : vector<32x1xf32>
    %40 = math.rsqrt %39 : vector<32x1xf32>
    %41 = vector.broadcast %40 : vector<32x1xf32> to vector<32x64xf32>
    %42 = arith.mulf %32, %41 : vector<32x64xf32>
    %c1_29 = arith.constant 1 : index
    %c0_30 = arith.constant 0 : index
    %c0_31 = arith.constant 0 : index
    %43 = vector.load %arg4[%c1_29, %c0_30, %c0_31] : memref<2x32x64xf32, #tpu.memory_space<vmem>>, vector<1x32x64xf32>
    %44 = vector.shape_cast %43 : vector<1x32x64xf32> to vector<32x64xf32>
    %cst_32 = arith.constant 1.000000e+00 : f32
    %45 = vector.broadcast %cst_32 : f32 to vector<32x64xf32>
    %46 = arith.addf %45, %44 : vector<32x64xf32>
    %47 = arith.mulf %42, %46 : vector<32x64xf32>
    %c0_33 = arith.constant 0 : index
    %c0_34 = arith.constant 0 : index
    %c0_35 = arith.constant 0 : index
    %48 = vector.load %arg4[%c0_33, %c0_34, %c0_35] : memref<2x32x64xf32, #tpu.memory_space<vmem>>, vector<1x32x64xf32>
    %49 = vector.shape_cast %48 : vector<1x32x64xf32> to vector<32x64xf32>
    %50 = arith.addf %47, %49 : vector<32x64xf32>
    %c0_36 = arith.constant 0 : index
    %c0_37 = arith.constant 0 : index
    %51 = vector.load %arg19[%c0_36, %c0_37] : memref<64x64xf32, #tpu.memory_space<vmem>>, vector<64x64xf32>
    %cst_38 = arith.constant dense<0.000000e+00> : vector<32x64xf32>
    %52 = tpu.matmul %50, %51, %cst_38 {dimension_numbers = #tpu.dot_dimension_numbers<[1], [0], [0], [1], [0, 0, 1, 1], [], []>} : vector<32x64xf32>, vector<64x64xf32>, vector<32x64xf32> -> vector<32x64xf32>
    %c0_39 = arith.constant 0 : index
    %c0_40 = arith.constant 0 : index
    %53 = vector.load %arg20[%c0_39, %c0_40] : memref<1x64xf32, #tpu.memory_space<vmem>>, vector<1x64xf32>
    %54 = vector.broadcast %53 : vector<1x64xf32> to vector<32x64xf32>
    %55 = arith.addf %52, %54 : vector<32x64xf32>
    %c0_41 = arith.constant 0 : index
    %c0_42 = arith.constant 0 : index
    %56 = vector.load %arg21[%c0_41, %c0_42] : memref<32x64xf32, #tpu.memory_space<vmem>>, vector<32x64xf32>
    tpu.vector_store %arg21[%c0_41, %c0_42], %55 {strides = array<i32>} : memref<32x64xf32, #tpu.memory_space<vmem>>, vector<32x64xf32>,
    return
  }
}

</mosaic_0001>

<llo_original>
// kernel: _lambda_.1
$region0: #{_lambda_.1}
  #allocation0 [shape = 'u32[]', space=smem, size = 0x4, offset = 0x4, fixed_abs, tag = 'smem constant byte address 0x4 - core index']
  #allocation1 [shape = 'u32[144,128]{1,0:T(1,128)}', space=vmem, size = 0x12000, scoped, tag = 'internal scratch']
  %s0 = inlined_call_operand.vmem [shape: f32[32,32], index: 0, kind: input, shape index: {}]
  %s1 = inlined_call_operand.vmem [shape: f32[32,64], index: 1, kind: input, shape index: {}]
  %s2 = inlined_call_operand.vmem [shape: f32[32,32], index: 2, kind: input, shape index: {}]
  %s3 = inlined_call_operand.vmem [shape: f32[6,32,64], index: 3, kind: input, shape index: {}]
  %s4 = inlined_call_operand.vmem [shape: f32[2,32,64], index: 4, kind: input, shape index: {}]
  %s5 = inlined_call_operand.vmem [shape: f32[32,64], index: 5, kind: input, shape index: {}]
  %s6 = inlined_call_operand.vmem [shape: f32[1,64], index: 6, kind: input, shape index: {}]
  %s7 = inlined_call_operand.vmem [shape: f32[64,64], index: 7, kind: input, shape index: {}]
  %s8 = inlined_call_operand.vmem [shape: f32[1,64], index: 8, kind: input, shape index: {}]
  %s9 = inlined_call_operand.vmem [shape: f32[64,64], index: 9, kind: input, shape index: {}]
  %s10 = inlined_call_operand.vmem [shape: f32[1,64], index: 10, kind: input, shape index: {}]
  %s11 = inlined_call_operand.vmem [shape: f32[64,64], index: 11, kind: input, shape index: {}]
  %s12 = inlined_call_operand.vmem [shape: f32[1,64], index: 12, kind: input, shape index: {}]
  %s13 = inlined_call_operand.vmem [shape: f32[64,64], index: 13, kind: input, shape index: {}]
  %s14 = inlined_call_operand.vmem [shape: f32[1,64], index: 14, kind: input, shape index: {}]
  %s15 = inlined_call_operand.vmem [shape: f32[64,256], index: 15, kind: input, shape index: {}]
  %s16 = inlined_call_operand.vmem [shape: f32[1,256], index: 16, kind: input, shape index: {}]
  %s17 = inlined_call_operand.vmem [shape: f32[256,64], index: 17, kind: input, shape index: {}]
  %s18 = inlined_call_operand.vmem [shape: f32[1,64], index: 18, kind: input, shape index: {}]
  %s19 = inlined_call_operand.vmem [shape: f32[64,64], index: 19, kind: input, shape index: {}]
  %s20 = inlined_call_operand.vmem [shape: f32[1,64], index: 20, kind: input, shape index: {}]
  %s21 = inlined_call_operand.vmem [shape: f32[32,64], index: 21, kind: output, shape index: {}]
  %s22 = sld [smem:[#allocation0]]
  $region101: #{_lambda_.1} parent=0
    _
  %s24 = ssub.s32 1, %s22
  %s25 = scalar_select 0, %s24, %s22
  // Predicated region
  $region2: #{_lambda_.1} parent=0 // pred_check
    _
  $region3: #{_lambda_.1} parent=0 // pred_check_branch
    %27 = sbr.rel (0) target = $region5
  $region4: #{_lambda_.1} parent=0 // pred_region
    _
  $region5: #{_lambda_.1} parent=0 // pred_fallthru
    _
  // Predicated region
  $region6: #{_lambda_.1} parent=0 // pred_check
    _
  $region7: #{_lambda_.1} parent=0 // pred_check_branch
    %29 = sbr.rel (0) target = $region9
  $region8: #{_lambda_.1} parent=0 // pred_region
    _
  $region9: #{_lambda_.1} parent=0 // pred_fallthru
    _
  // Predicated region
  $region10: #{_lambda_.1} parent=0 // pred_check
    _
  $region11: #{_lambda_.1} parent=0 // pred_check_branch
    %31 = sbr.rel (0) target = $region13
  $region12: #{_lambda_.1} parent=0 // pred_region
    _
  $region13: #{_lambda_.1} parent=0 // pred_fallthru
    _
  // Predicated region
  $region14: #{_lambda_.1} parent=0 // pred_check
    _
  $region15: #{_lambda_.1} parent=0 // pred_check_branch
    %33 = sbr.rel (0) target = $region17
  $region16: #{_lambda_.1} parent=0 // pred_region
    _
  $region17: #{_lambda_.1} parent=0 // pred_fallthru
    _
  // Predicated region
  $region18: #{_lambda_.1} parent=0 // pred_check
    _
  $region19: #{_lambda_.1} parent=0 // pred_check_branch
    %35 = sbr.rel (0) target = $region21
  $region20: #{_lambda_.1} parent=0 // pred_region
    _
  $region21: #{_lambda_.1} parent=0 // pred_fallthru
    _
  // Predicated region
  $region22: #{_lambda_.1} parent=0 // pred_check
    _
  $region23: #{_lambda_.1} parent=0 // pred_check_branch
    %37 = sbr.rel (0) target = $region25
  $region24: #{_lambda_.1} parent=0 // pred_region
    _
  $region25: #{_lambda_.1} parent=0 // pred_fallthru
    _
  // Predicated region
  $region26: #{_lambda_.1} parent=0 // pred_check
    _
  $region27: #{_lambda_.1} parent=0 // pred_check_branch
    %39 = sbr.rel (0) target = $region29
  $region28: #{_lambda_.1} parent=0 // pred_region
    _
  $region29: #{_lambda_.1} parent=0 // pred_fallthru
    _
  // Predicated region
  $region30: #{_lambda_.1} parent=0 // pred_check
    _
  $region31: #{_lambda_.1} parent=0 // pred_check_branch
    %41 = sbr.rel (0) target = $region33
  $region32: #{_lambda_.1} parent=0 // pred_region
    _
  $region33: #{_lambda_.1} parent=0 // pred_fallthru
    _
  // Predicated region
  $region34: #{_lambda_.1} parent=0 // pred_check
    _
  $region35: #{_lambda_.1} parent=0 // pred_check_branch
    %43 = sbr.rel (0) target = $region37
  $region36: #{_lambda_.1} parent=0 // pred_region
    _
  $region37: #{_lambda_.1} parent=0 // pred_fallthru
    _
  // Predicated region
  $region38: #{_lambda_.1} parent=0 // pred_check
    _
  $region39: #{_lambda_.1} parent=0 // pred_check_branch
    %45 = sbr.rel (0) target = $region41
  $region40: #{_lambda_.1} parent=0 // pred_region
    _
  $region41: #{_lambda_.1} parent=0 // pred_fallthru
    _
  // Predicated region
  $region42: #{_lambda_.1} parent=0 // pred_check
    _
  $region43: #{_lambda_.1} parent=0 // pred_check_branch
    %47 = sbr.rel (0) target = $region45
  $region44: #{_lambda_.1} parent=0 // pred_region
    _
  $region45: #{_lambda_.1} parent=0 // pred_fallthru
    _
  // Predicated region
  $region46: #{_lambda_.1} parent=0 // pred_check
    _
  $region47: #{_lambda_.1} parent=0 // pred_check_branch
    %49 = sbr.rel (0) target = $region49
  $region48: #{_lambda_.1} parent=0 // pred_region
    _
  $region49: #{_lambda_.1} parent=0 // pred_fallthru
    _
  // Predicated region
  $region50: #{_lambda_.1} parent=0 // pred_check
    _
  $region51: #{_lambda_.1} parent=0 // pred_check_branch
    %51 = sbr.rel (0) target = $region53
  $region52: #{_lambda_.1} parent=0 // pred_region
    _
  $region53: #{_lambda_.1} parent=0 // pred_fallthru
    _
  // Predicated region
  $region54: #{_lambda_.1} parent=0 // pred_check
    _
  $region55: #{_lambda_.1} parent=0 // pred_check_branch
    %53 = sbr.rel (0) target = $region57
  $region56: #{_lambda_.1} parent=0 // pred_region
    _
  $region57: #{_lambda_.1} parent=0 // pred_fallthru
    _
  // Predicated region
  $region58: #{_lambda_.1} parent=0 // pred_check
    _
  $region59: #{_lambda_.1} parent=0 // pred_check_branch
    %55 = sbr.rel (0) target = $region61
  $region60: #{_lambda_.1} parent=0 // pred_region
    _
  $region61: #{_lambda_.1} parent=0 // pred_fallthru
    _
  // Predicated region
  $region62: #{_lambda_.1} parent=0 // pred_check
    _
  $region63: #{_lambda_.1} parent=0 // pred_check_branch
    %57 = sbr.rel (0) target = $region65
  $region64: #{_lambda_.1} parent=0 // pred_region
    _
  $region65: #{_lambda_.1} parent=0 // pred_fallthru
    _
  // Predicated region
  $region66: #{_lambda_.1} parent=0 // pred_check
    _
  $region67: #{_lambda_.1} parent=0 // pred_check_branch
    %59 = sbr.rel (0) target = $region69
  $region68: #{_lambda_.1} parent=0 // pred_region
    _
  $region69: #{_lambda_.1} parent=0 // pred_fallthru
    _
  // Predicated region
  $region70: #{_lambda_.1} parent=0 // pred_check
    _
  $region71: #{_lambda_.1} parent=0 // pred_check_branch
    %61 = sbr.rel (0) target = $region73
  $region72: #{_lambda_.1} parent=0 // pred_region
    _
  $region73: #{_lambda_.1} parent=0 // pred_fallthru
    _
  // Predicated region
  $region74: #{_lambda_.1} parent=0 // pred_check
    _
  $region75: #{_lambda_.1} parent=0 // pred_check_branch
    %63 = sbr.rel (0) target = $region77
  $region76: #{_lambda_.1} parent=0 // pred_region
    _
  $region77: #{_lambda_.1} parent=0 // pred_fallthru
    _
  // Predicated region
  $region78: #{_lambda_.1} parent=0 // pred_check
    _
  $region79: #{_lambda_.1} parent=0 // pred_check_branch
    %65 = sbr.rel (0) target = $region81
  $region80: #{_lambda_.1} parent=0 // pred_region
    _
  $region81: #{_lambda_.1} parent=0 // pred_fallthru
    _
  // Predicated region
  $region82: #{_lambda_.1} parent=0 // pred_check
    _
  $region83: #{_lambda_.1} parent=0 // pred_check_branch
    %67 = sbr.rel (0) target = $region85
  $region84: #{_lambda_.1} parent=0 // pred_region
    _
  $region85: #{_lambda_.1} parent=0 // pred_fallthru
    _
  %v68 = vld [vmem:[%s2] sm:$0xff]
  %v69 = vld [vmem:[%s2 + $0x8] sm:$0xff]
  %v70 = vld [vmem:[%s2 + $0x10] sm:$0xff]
  %v71 = vld [vmem:[%s2 + $0x18] sm:$0xff]
  %v72 = vld [vmem:[%s3] sm:$0xff]
  %v73 = vld [vmem:[%s3 + $0x8] sm:$0xff]
  %v74 = vld [vmem:[%s3 + $0x10] sm:$0xff]
  %v75 = vld [vmem:[%s3 + $0x18] sm:$0xff]
  %s76 = scalar_lea.vmem %s3, 32
  %v77 = vld [vmem:[%s76] sm:$0xff]
  %v78 = vld [vmem:[%s76 + $0x8] sm:$0xff]
  %v79 = vld [vmem:[%s76 + $0x10] sm:$0xff]
  %v80 = vld [vmem:[%s76 + $0x18] sm:$0xff]
  %v81 = vadd.f32 %v77, 1.0
  %v82 = vadd.f32 %v78, 1.0
  %v83 = vadd.f32 %v79, 1.0
  %v84 = vadd.f32 %v80, 1.0
  %s85 = scalar_lea.vmem %s3, 64
  %v86 = vld [vmem:[%s85] sm:$0xff]
  %v87 = vld [vmem:[%s85 + $0x8] sm:$0xff]
  %v88 = vld [vmem:[%s85 + $0x10] sm:$0xff]
  %v89 = vld [vmem:[%s85 + $0x18] sm:$0xff]
  %s90 = scalar_lea.vmem %s3, 96
  %v91 = vld [vmem:[%s90] sm:$0xff]
  %v92 = vld [vmem:[%s90 + $0x8] sm:$0xff]
  %v93 = vld [vmem:[%s90 + $0x10] sm:$0xff]
  %v94 = vld [vmem:[%s90 + $0x18] sm:$0xff]
  %s95 = scalar_lea.vmem %s3, 128
  %v96 = vld [vmem:[%s95] sm:$0xff]
  %v97 = vld [vmem:[%s95 + $0x8] sm:$0xff]
  %v98 = vld [vmem:[%s95 + $0x10] sm:$0xff]
  %v99 = vld [vmem:[%s95 + $0x18] sm:$0xff]
  %v100 = vadd.f32 %v96, 1.0
  %v101 = vadd.f32 %v97, 1.0
  %v102 = vadd.f32 %v98, 1.0
  %v103 = vadd.f32 %v99, 1.0
  %s104 = scalar_lea.vmem %s3, 160
  %v105 = vld [vmem:[%s104] sm:$0xff]
  %v106 = vld [vmem:[%s104 + $0x8] sm:$0xff]
  %v107 = vld [vmem:[%s104 + $0x10] sm:$0xff]
  %v108 = vld [vmem:[%s104 + $0x18] sm:$0xff]
  %v109 = vld [vmem:[%s0] sm:$0xff]
  %v110 = vld [vmem:[%s0 + $0x8] sm:$0xff]
  %v111 = vld [vmem:[%s0 + $0x10] sm:$0xff]
  %v112 = vld [vmem:[%s0 + $0x18] sm:$0xff]
  %v113 = vld [vmem:[%s5] sm:$0xff]
  %v114 = vld [vmem:[%s5 + $0x8] sm:$0xff]
  %v115 = vld [vmem:[%s5 + $0x10] sm:$0xff]
  %v116 = vld [vmem:[%s5 + $0x18] sm:$0xff]
  %v117 = vld [vmem:[%s6] sm:$0x1]
  %v119 = vlaneseq
  %v120 = vshrl.u32 %v119, 7
  %v121 = vsub.s32 0, %v120
  %v122 = vrot.slane %v117, %v121
  %vm124 = vcmask 261120
  %v126 = vsel %vm124, %v109, 0
  %v129 = vsel %vm124, %v110, 0
  %v132 = vsel %vm124, %v111, 0
  %v135 = vsel %vm124, %v112, 0
  %137 = vmatprep.subr.mxu0 0.0
  %138 = vmatpush1.msra.mxu0 0.0
  %139 = vmatprep.subr.mxu0 0.0
  %140 = vmatpush1.msra.mxu0 0.0
  %141 = vmatprep.subr.mxu0 0.0
  %142 = vmatpush1.msra.mxu0 0.0
  %143 = vmatprep.subr.mxu0 0.0
  %144 = vmatpush1.msra.mxu0 0.0
  %145 = vmatprep.subr.mxu0 0.0
  %146 = vmatpush1.msra.mxu0 0.0
  %147 = vmatprep.subr.mxu0 0.0
  %148 = vmatpush1.msra.mxu0 0.0
  %149 = vmatprep.subr.mxu0 0.0
  %150 = vmatpush1.msra.mxu0 0.0
  %151 = vmatprep.subr.mxu0 0.0
  %152 = vmatpush1.msra.mxu0 0.0
  %153 = vmatprep.subr.mxu0 0.0
  %154 = vmatpush1.msra.mxu0 0.0
  %155 = vmatprep.subr.mxu0 0.0
  %156 = vmatpush1.msra.mxu0 0.0
  %157 = vmatprep.subr.mxu0 0.0
  %158 = vmatpush1.msra.mxu0 0.0
  %159 = vmatprep.subr.mxu0 0.0
  %160 = vmatpush1.msra.mxu0 0.0
  %161 = vmatprep.subr.mxu0 0.0
  %162 = vmatpush1.msra.mxu0 %v116
  %163 = vmatprep.subr.mxu0 0.0
  %164 = vmatpush1.msra.mxu0 %v115
  %165 = vmatprep.subr.mxu0 0.0
  %166 = vmatpush1.msra.mxu0 %v114
  %167 = vmatprep.subr.mxu0 0.0
  %168 = vmatpush1.msra.mxu0 %v113
  %169 = vmatprep.subr.mxu0 0.0
  %170 = vmatpush2.msra.mxu0 0.0
  %171 = vmatprep.subr.mxu0 0.0
  %172 = vmatpush2.msra.mxu0 0.0
  %173 = vmatprep.subr.mxu0 0.0
  %174 = vmatpush2.msra.mxu0 0.0
  %175 = vmatprep.subr.mxu0 0.0
  %176 = vmatpush2.msra.mxu0 0.0
  %177 = vmatprep.subr.mxu0 0.0
  %178 = vmatpush2.msra.mxu0 0.0
  %179 = vmatprep.subr.mxu0 0.0
  %180 = vmatpush2.msra.mxu0 0.0
  %181 = vmatprep.subr.mxu0 0.0
  %182 = vmatpush2.msra.mxu0 0.0
  %183 = vmatprep.subr.mxu0 0.0
  %184 = vmatpush2.msra.mxu0 0.0
  %185 = vmatprep.subr.mxu0 0.0
  %186 = vmatpush2.msra.mxu0 0.0
  %187 = vmatprep.subr.mxu0 0.0
  %188 = vmatpush2.msra.mxu0 0.0
  %189 = vmatprep.subr.mxu0 0.0
  %190 = vmatpush2.msra.mxu0 0.0
  %191 = vmatprep.subr.mxu0 0.0
  %192 = vmatpush2.msra.mxu0 0.0
  %193 = vmatprep.subr.mxu0 0.0
  %194 = vmatpush2.msra.mxu0 0.0
  %195 = vmatprep.subr.mxu0 0.0
  %196 = vmatpush2.msra.mxu0 0.0
  %197 = vmatprep.subr.mxu0 0.0
  %198 = vmatpush2.msra.mxu0 0.0
  %199 = vmatprep.subr.mxu0 0.0
  %200 = vmatpush2.msra.mxu0 0.0
  %201 = vmatprep.mubr.f32.mxu0 0.0
  %202 = vmatmul.mubr.f32.gmra.mxu0 %v126
  %v203 = vpop.f32.mrf.mxu0
  %v204 = vadd.f32 %v122, %v203
  %v205 = vpop.f32.mrf.mxu0
  %206 = vmatprep.mubr.f32.mxu0 0.0
  %207 = vmatmul.mubr.f32.gmra.mxu0 %v129
  %v208 = vpop.f32.mrf.mxu0
  %v209 = vadd.f32 %v122, %v208
  %v210 = vpop.f32.mrf.mxu0
  %211 = vmatprep.mubr.f32.mxu0 0.0
  %212 = vmatmul.mubr.f32.gmra.mxu0 %v132
  %v213 = vpop.f32.mrf.mxu0
  %v214 = vadd.f32 %v122, %v213
  %v215 = vpop.f32.mrf.mxu0
  %216 = vmatprep.mubr.f32.mxu0 0.0
  %217 = vmatmul.mubr.f32.gmra.mxu0 %v135
  %v218 = vpop.f32.mrf.mxu0
  %v219 = vadd.f32 %v122, %v218
  %v220 = vpop.f32.mrf.mxu0
  %221 = vdwg.mxu0
  %v222 = vld [vmem:[%s1] sm:$0xff]
  %v223 = vld [vmem:[%s1 + $0x8] sm:$0xff]
  %v224 = vld [vmem:[%s1 + $0x10] sm:$0xff]
  %v225 = vld [vmem:[%s1 + $0x18] sm:$0xff]
  %v226 = vadd.f32 %v204, %v222
  %v227 = vadd.f32 %v209, %v223
  %v228 = vadd.f32 %v214, %v224
  %v229 = vadd.f32 %v219, %v225
  loop: start=0, step=1, limit=16
  $region86: #{_lambda_.1} parent=0 // loop_pre_header
    _
  $region87: #{_lambda_.1} parent=0 // loop_header
    %s231 = sphi 0, %s235
    %p232 = scmp.ge.s32.totalorder %s231, 16
    %v236 = vphi %v226, %v9427
    %v237 = vphi %v227, %v9428
    %v238 = vphi %v228, %v9429
    %v239 = vphi %v229, %v9430
  $region88: #{_lambda_.1} parent=0 // loop_header_branch
    %234 = sbr.rel (%p232) target = $region92
  $region89: #{_lambda_.1} parent=0 // loop_body
    %vm240 = vcmask 523264
    %v241 = vsel %vm240, %v236, 0.0
    %242 = vadd.xlane.f32.xlu0 %v241
    %v243 = vpop.xlane.xlu0 %242
    %v244 = vsel %vm240, %v237, 0.0
    %245 = vadd.xlane.f32.xlu0 %v244
    %v246 = vpop.xlane.xlu0 %245
    %v247 = vsel %vm240, %v238, 0.0
    %248 = vadd.xlane.f32.xlu0 %v247
    %v249 = vpop.xlane.xlu0 %248
    %v250 = vsel %vm240, %v239, 0.0
    %251 = vadd.xlane.f32.xlu0 %v250
    %v252 = vpop.xlane.xlu0 %251
    %v253 = vrcp.pop 64.0
    %v254 = vmul.f32 %v243, %v253
    %v255 = vmul.f32 %v246, %v253
    %v256 = vmul.f32 %v249, %v253
    %v257 = vmul.f32 %v252, %v253
    %v258 = vsub.f32 %v236, %v254
    %v259 = vsub.f32 %v237, %v255
    %v260 = vsub.f32 %v238, %v256
    %v261 = vsub.f32 %v239, %v257
    %v262 = vmul.f32 %v258, %v258
    %v263 = vmul.f32 %v259, %v259
    %v264 = vmul.f32 %v260, %v260
    %v265 = vmul.f32 %v261, %v261
    %v266 = vsel %vm240, %v262, 0.0
    %267 = vadd.xlane.f32.xlu0 %v266
    %v268 = vpop.xlane.xlu0 %267
    %v269 = vsel %vm240, %v263, 0.0
    %270 = vadd.xlane.f32.xlu0 %v269
    %v271 = vpop.xlane.xlu0 %270
    %v272 = vsel %vm240, %v264, 0.0
    %273 = vadd.xlane.f32.xlu0 %v272
    %v274 = vpop.xlane.xlu0 %273
    %v275 = vsel %vm240, %v265, 0.0
    %276 = vadd.xlane.f32.xlu0 %v275
    %v277 = vpop.xlane.xlu0 %276
    %v278 = vmul.f32 %v268, %v253
    %v279 = vmul.f32 %v271, %v253
    %v280 = vmul.f32 %v274, %v253
    %v281 = vmul.f32 %v277, %v253
    %v282 = vadd.f32 %v278, 1e-06
    %v283 = vadd.f32 %v279, 1e-06
    %v284 = vadd.f32 %v280, 1e-06
    %v285 = vadd.f32 %v281, 1e-06
    %v286 = vrsqrt.pop %v282
    %v287 = vrsqrt.pop %v283
    %v288 = vrsqrt.pop %v284
    %v289 = vrsqrt.pop %v285
    %v290 = vmul.f32 %v258, %v286
    %v291 = vmul.f32 %v259, %v287
    %v292 = vmul.f32 %v260, %v288
    %v293 = vmul.f32 %v261, %v289
    %v294 = vmul.f32 %v290, %v81
    %v295 = vmul.f32 %v291, %v82
    %v296 = vmul.f32 %v292, %v83
    %v297 = vmul.f32 %v293, %v84
    %v298 = vadd.f32 %v294, %v72
    %v299 = vadd.f32 %v295, %v73
    %v300 = vadd.f32 %v296, %v74
    %v301 = vadd.f32 %v297, %v75
    %v302 = vld [vmem:[%s7] sm:$0xff]
    %v303 = vld [vmem:[%s7 + $0x8] sm:$0xff]
    %v304 = vld [vmem:[%s7 + $0x10] sm:$0xff]
    %v305 = vld [vmem:[%s7 + $0x18] sm:$0xff]
    %v306 = vld [vmem:[%s7 + $0x20] sm:$0xff]
    %v307 = vld [vmem:[%s7 + $0x28] sm:$0xff]
    %v308 = vld [vmem:[%s7 + $0x30] sm:$0xff]
    %v309 = vld [vmem:[%s7 + $0x38] sm:$0xff]
    %v310 = vld [vmem:[%s8] sm:$0x1]
    %v312 = vlaneseq
    %v313 = vshrl.u32 %v312, 7
    %v314 = vsub.s32 0, %v313
    %v315 = vrot.slane %v310, %v314
    %v318 = vsel %vm240, %v298, 0
    %v321 = vsel %vm240, %v299, 0
    %v324 = vsel %vm240, %v300, 0
    %v327 = vsel %vm240, %v301, 0
    %329 = vmatprep.subr.mxu0 0.0
    %330 = vmatpush1.msra.mxu0 0.0
    %331 = vmatprep.subr.mxu0 0.0
    %332 = vmatpush1.msra.mxu0 0.0
    %333 = vmatprep.subr.mxu0 0.0
    %334 = vmatpush1.msra.mxu0 0.0
    %335 = vmatprep.subr.mxu0 0.0
    %336 = vmatpush1.msra.mxu0 0.0
    %337 = vmatprep.subr.mxu0 0.0
    %338 = vmatpush1.msra.mxu0 0.0
    %339 = vmatprep.subr.mxu0 0.0
    %340 = vmatpush1.msra.mxu0 0.0
    %341 = vmatprep.subr.mxu0 0.0
    %342 = vmatpush1.msra.mxu0 0.0
    %343 = vmatprep.subr.mxu0 0.0
    %344 = vmatpush1.msra.mxu0 0.0
    %345 = vmatprep.subr.mxu0 0.0
    %346 = vmatpush1.msra.mxu0 %v309
    %347 = vmatprep.subr.mxu0 0.0
    %348 = vmatpush1.msra.mxu0 %v308
    %349 = vmatprep.subr.mxu0 0.0
    %350 = vmatpush1.msra.mxu0 %v307
    %351 = vmatprep.subr.mxu0 0.0
    %352 = vmatpush1.msra.mxu0 %v306
    %353 = vmatprep.subr.mxu0 0.0
    %354 = vmatpush1.msra.mxu0 %v305
    %355 = vmatprep.subr.mxu0 0.0
    %356 = vmatpush1.msra.mxu0 %v304
    %357 = vmatprep.subr.mxu0 0.0
    %358 = vmatpush1.msra.mxu0 %v303
    %359 = vmatprep.subr.mxu0 0.0
    %360 = vmatpush1.msra.mxu0 %v302
    %361 = vmatprep.subr.mxu0 0.0
    %362 = vmatpush2.msra.mxu0 0.0
    %363 = vmatprep.subr.mxu0 0.0
    %364 = vmatpush2.msra.mxu0 0.0
    %365 = vmatprep.subr.mxu0 0.0
    %366 = vmatpush2.msra.mxu0 0.0
    %367 = vmatprep.subr.mxu0 0.0
    %368 = vmatpush2.msra.mxu0 0.0
    %369 = vmatprep.subr.mxu0 0.0
    %370 = vmatpush2.msra.mxu0 0.0
    %371 = vmatprep.subr.mxu0 0.0
    %372 = vmatpush2.msra.mxu0 0.0
    %373 = vmatprep.subr.mxu0 0.0
    %374 = vmatpush2.msra.mxu0 0.0
    %375 = vmatprep.subr.mxu0 0.0
    %376 = vmatpush2.msra.mxu0 0.0
    %377 = vmatprep.subr.mxu0 0.0
    %378 = vmatpush2.msra.mxu0 0.0
    %379 = vmatprep.subr.mxu0 0.0
    %380 = vmatpush2.msra.mxu0 0.0
    %381 = vmatprep.subr.mxu0 0.0
    %382 = vmatpush2.msra.mxu0 0.0
    %383 = vmatprep.subr.mxu0 0.0
    %384 = vmatpush2.msra.mxu0 0.0
    %385 = vmatprep.subr.mxu0 0.0
    %386 = vmatpush2.msra.mxu0 0.0
    %387 = vmatprep.subr.mxu0 0.0
    %388 = vmatpush2.msra.mxu0 0.0
    %389 = vmatprep.subr.mxu0 0.0
    %390 = vmatpush2.msra.mxu0 0.0
    %391 = vmatprep.subr.mxu0 0.0
    %392 = vmatpush2.msra.mxu0 0.0
    %393 = vmatprep.mubr.f32.mxu0 0.0
    %394 = vmatmul.mubr.f32.gmra.mxu0 %v318
    %v395 = vpop.f32.mrf.mxu0
    %v396 = vadd.f32 %v315, %v395
    %v397 = vpop.f32.mrf.mxu0
    %398 = vmatprep.mubr.f32.mxu0 0.0
    %399 = vmatmul.mubr.f32.gmra.mxu0 %v321
    %v400 = vpop.f32.mrf.mxu0
    %v401 = vadd.f32 %v315, %v400
    %v402 = vpop.f32.mrf.mxu0
    %403 = vmatprep.mubr.f32.mxu0 0.0
    %404 = vmatmul.mubr.f32.gmra.mxu0 %v324
    %v405 = vpop.f32.mrf.mxu0
    %v406 = vadd.f32 %v315, %v405
    %v407 = vpop.f32.mrf.mxu0
    %408 = vmatprep.mubr.f32.mxu0 0.0
    %409 = vmatmul.mubr.f32.gmra.mxu0 %v327
    %v410 = vpop.f32.mrf.mxu0
    %v411 = vadd.f32 %v315, %v410
    %v412 = vpop.f32.mrf.mxu0
    %413 = vdwg.mxu0
    %v414 = vld [vmem:[%s9] sm:$0xff]
    %v415 = vld [vmem:[%s9 + $0x8] sm:$0xff]
    %v416 = vld [vmem:[%s9 + $0x10] sm:$0xff]
    %v417 = vld [vmem:[%s9 + $0x18] sm:$0xff]
    %v418 = vld [vmem:[%s9 + $0x20] sm:$0xff]
    %v419 = vld [vmem:[%s9 + $0x28] sm:$0xff]
    %v420 = vld [vmem:[%s9 + $0x30] sm:$0xff]
    %v421 = vld [vmem:[%s9 + $0x38] sm:$0xff]
    %v422 = vld [vmem:[%s10] sm:$0x1]
    %v424 = vlaneseq
    %v425 = vshrl.u32 %v424, 7
    %v426 = vsub.s32 0, %v425
    %v427 = vrot.slane %v422, %v426
    %429 = vmatprep.subr.mxu0 0.0
    %430 = vmatpush1.msra.mxu0 0.0
    %431 = vmatprep.subr.mxu0 0.0
    %432 = vmatpush1.msra.mxu0 0.0
    %433 = vmatprep.subr.mxu0 0.0
    %434 = vmatpush1.msra.mxu0 0.0
    %435 = vmatprep.subr.mxu0 0.0
    %436 = vmatpush1.msra.mxu0 0.0
    %437 = vmatprep.subr.mxu0 0.0
    %438 = vmatpush1.msra.mxu0 0.0
    %439 = vmatprep.subr.mxu0 0.0
    %440 = vmatpush1.msra.mxu0 0.0
    %441 = vmatprep.subr.mxu0 0.0
    %442 = vmatpush1.msra.mxu0 0.0
    %443 = vmatprep.subr.mxu0 0.0
    %444 = vmatpush1.msra.mxu0 0.0
    %445 = vmatprep.subr.mxu0 0.0
    %446 = vmatpush1.msra.mxu0 %v421
    %447 = vmatprep.subr.mxu0 0.0
    %448 = vmatpush1.msra.mxu0 %v420
    %449 = vmatprep.subr.mxu0 0.0
    %450 = vmatpush1.msra.mxu0 %v419
    %451 = vmatprep.subr.mxu0 0.0
    %452 = vmatpush1.msra.mxu0 %v418
    %453 = vmatprep.subr.mxu0 0.0
    %454 = vmatpush1.msra.mxu0 %v417
    %455 = vmatprep.subr.mxu0 0.0
    %456 = vmatpush1.msra.mxu0 %v416
    %457 = vmatprep.subr.mxu0 0.0
    %458 = vmatpush1.msra.mxu0 %v415
    %459 = vmatprep.subr.mxu0 0.0
    %460 = vmatpush1.msra.mxu0 %v414
    %461 = vmatprep.subr.mxu0 0.0
    %462 = vmatpush2.msra.mxu0 0.0
    %463 = vmatprep.subr.mxu0 0.0
    %464 = vmatpush2.msra.mxu0 0.0
    %465 = vmatprep.subr.mxu0 0.0
    %466 = vmatpush2.msra.mxu0 0.0
    %467 = vmatprep.subr.mxu0 0.0
    %468 = vmatpush2.msra.mxu0 0.0
    %469 = vmatprep.subr.mxu0 0.0
    %470 = vmatpush2.msra.mxu0 0.0
    %471 = vmatprep.subr.mxu0 0.0
    %472 = vmatpush2.msra.mxu0 0.0
    %473 = vmatprep.subr.mxu0 0.0
    %474 = vmatpush2.msra.mxu0 0.0
    %475 = vmatprep.subr.mxu0 0.0
    %476 = vmatpush2.msra.mxu0 0.0
    %477 = vmatprep.subr.mxu0 0.0
    %478 = vmatpush2.msra.mxu0 0.0
    %479 = vmatprep.subr.mxu0 0.0
    %480 = vmatpush2.msra.mxu0 0.0
    %481 = vmatprep.subr.mxu0 0.0
    %482 = vmatpush2.msra.mxu0 0.0
    %483 = vmatprep.subr.mxu0 0.0
    %484 = vmatpush2.msra.mxu0 0.0
    %485 = vmatprep.subr.mxu0 0.0
    %486 = vmatpush2.msra.mxu0 0.0
    %487 = vmatprep.subr.mxu0 0.0
    %488 = vmatpush2.msra.mxu0 0.0
    %489 = vmatprep.subr.mxu0 0.0
    %490 = vmatpush2.msra.mxu0 0.0
    %491 = vmatprep.subr.mxu0 0.0
    %492 = vmatpush2.msra.mxu0 0.0
    %493 = vmatprep.mubr.f32.mxu0 0.0
    %494 = vmatmul.mubr.f32.gmra.mxu0 %v318
    %v495 = vpop.f32.mrf.mxu0
    %v496 = vadd.f32 %v427, %v495
    %v497 = vpop.f32.mrf.mxu0
    %498 = vmatprep.mubr.f32.mxu0 0.0
    %499 = vmatmul.mubr.f32.gmra.mxu0 %v321
    %v500 = vpop.f32.mrf.mxu0
    %v501 = vadd.f32 %v427, %v500
    %v502 = vpop.f32.mrf.mxu0
    %503 = vmatprep.mubr.f32.mxu0 0.0
    %504 = vmatmul.mubr.f32.gmra.mxu0 %v324
    %v505 = vpop.f32.mrf.mxu0
    %v506 = vadd.f32 %v427, %v505
    %v507 = vpop.f32.mrf.mxu0
    %508 = vmatprep.mubr.f32.mxu0 0.0
    %509 = vmatmul.mubr.f32.gmra.mxu0 %v327
    %v510 = vpop.f32.mrf.mxu0
    %v511 = vadd.f32 %v427, %v510
    %v512 = vpop.f32.mrf.mxu0
    %513 = vdwg.mxu0
    %v514 = vld [vmem:[%s11] sm:$0xff]
    %v515 = vld [vmem:[%s11 + $0x8] sm:$0xff]
    %v516 = vld [vmem:[%s11 + $0x10] sm:$0xff]
    %v517 = vld [vmem:[%s11 + $0x18] sm:$0xff]
    %v518 = vld [vmem:[%s11 + $0x20] sm:$0xff]
    %v519 = vld [vmem:[%s11 + $0x28] sm:$0xff]
    %v520 = vld [vmem:[%s11 + $0x30] sm:$0xff]
    %v521 = vld [vmem:[%s11 + $0x38] sm:$0xff]
    %v522 = vld [vmem:[%s12] sm:$0x1]
    %v524 = vlaneseq
    %v525 = vshrl.u32 %v524, 7
    %v526 = vsub.s32 0, %v525
    %v527 = vrot.slane %v522, %v526
    %529 = vmatprep.subr.mxu0 0.0
    %530 = vmatpush1.msra.mxu0 0.0
    %531 = vmatprep.subr.mxu0 0.0
    %532 = vmatpush1.msra.mxu0 0.0
    %533 = vmatprep.subr.mxu0 0.0
    %534 = vmatpush1.msra.mxu0 0.0
    %535 = vmatprep.subr.mxu0 0.0
    %536 = vmatpush1.msra.mxu0 0.0
    %537 = vmatprep.subr.mxu0 0.0
    %538 = vmatpush1.msra.mxu0 0.0
    %539 = vmatprep.subr.mxu0 0.0
    %540 = vmatpush1.msra.mxu0 0.0
    %541 = vmatprep.subr.mxu0 0.0
    %542 = vmatpush1.msra.mxu0 0.0
    %543 = vmatprep.subr.mxu0 0.0
    %544 = vmatpush1.msra.mxu0 0.0
    %545 = vmatprep.subr.mxu0 0.0
    %546 = vmatpush1.msra.mxu0 %v521
    %547 = vmatprep.subr.mxu0 0.0
    %548 = vmatpush1.msra.mxu0 %v520
    %549 = vmatprep.subr.mxu0 0.0
    %550 = vmatpush1.msra.mxu0 %v519
    %551 = vmatprep.subr.mxu0 0.0
    %552 = vmatpush1.msra.mxu0 %v518
    %553 = vmatprep.subr.mxu0 0.0
    %554 = vmatpush1.msra.mxu0 %v517
    %555 = vmatprep.subr.mxu0 0.0
    %556 = vmatpush1.msra.mxu0 %v516
    %557 = vmatprep.subr.mxu0 0.0
    %558 = vmatpush1.msra.mxu0 %v515
    %559 = vmatprep.subr.mxu0 0.0
    %560 = vmatpush1.msra.mxu0 %v514
    %561 = vmatprep.subr.mxu0 0.0
    %562 = vmatpush2.msra.mxu0 0.0
    %563 = vmatprep.subr.mxu0 0.0
    %564 = vmatpush2.msra.mxu0 0.0
    %565 = vmatprep.subr.mxu0 0.0
    %566 = vmatpush2.msra.mxu0 0.0
    %567 = vmatprep.subr.mxu0 0.0
    %568 = vmatpush2.msra.mxu0 0.0
    %569 = vmatprep.subr.mxu0 0.0
    %570 = vmatpush2.msra.mxu0 0.0
    %571 = vmatprep.subr.mxu0 0.0
    %572 = vmatpush2.msra.mxu0 0.0
    %573 = vmatprep.subr.mxu0 0.0
    %574 = vmatpush2.msra.mxu0 0.0
    %575 = vmatprep.subr.mxu0 0.0
    %576 = vmatpush2.msra.mxu0 0.0
    %577 = vmatprep.subr.mxu0 0.0
    %578 = vmatpush2.msra.mxu0 0.0
    %579 = vmatprep.subr.mxu0 0.0
    %580 = vmatpush2.msra.mxu0 0.0
    %581 = vmatprep.subr.mxu0 0.0
    %582 = vmatpush2.msra.mxu0 0.0
    %583 = vmatprep.subr.mxu0 0.0
    %584 = vmatpush2.msra.mxu0 0.0
    %585 = vmatprep.subr.mxu0 0.0
    %586 = vmatpush2.msra.mxu0 0.0
    %587 = vmatprep.subr.mxu0 0.0
    %588 = vmatpush2.msra.mxu0 0.0
    %589 = vmatprep.subr.mxu0 0.0
    %590 = vmatpush2.msra.mxu0 0.0
    %591 = vmatprep.subr.mxu0 0.0
    %592 = vmatpush2.msra.mxu0 0.0
    %593 = vmatprep.mubr.f32.mxu0 0.0
    %594 = vmatmul.mubr.f32.gmra.mxu0 %v318
    %v595 = vpop.f32.mrf.mxu0
    %v596 = vadd.f32 %v527, %v595
    %v597 = vpop.f32.mrf.mxu0
    %598 = vmatprep.mubr.f32.mxu0 0.0
    %599 = vmatmul.mubr.f32.gmra.mxu0 %v321
    %v600 = vpop.f32.mrf.mxu0
    %v601 = vadd.f32 %v527, %v600
    %v602 = vpop.f32.mrf.mxu0
    %603 = vmatprep.mubr.f32.mxu0 0.0
    %604 = vmatmul.mubr.f32.gmra.mxu0 %v324
    %v605 = vpop.f32.mrf.mxu0
    %v606 = vadd.f32 %v527, %v605
    %v607 = vpop.f32.mrf.mxu0
    %608 = vmatprep.mubr.f32.mxu0 0.0
    %609 = vmatmul.mubr.f32.gmra.mxu0 %v327
    %v610 = vpop.f32.mrf.mxu0
    %v611 = vadd.f32 %v527, %v610
    %v612 = vpop.f32.mrf.mxu0
    %613 = vdwg.mxu0
    %vm614 = vcmask 130048
    %v616 = vsel %vm614, %v396, 0
    %v619 = vsel %vm614, %v401, 0
    %v622 = vsel %vm614, %v406, 0
    %v625 = vsel %vm614, %v411, 0
    %v628 = vsel %vm614, %v496, 0
    %v631 = vsel %vm614, %v501, 0
    %v634 = vsel %vm614, %v506, 0
    %v637 = vsel %vm614, %v511, 0
    %639 = vmatprep.subr.mxu0 0.0
    %640 = vmatpush1.xpose.msra.mxu0 0.0
    %641 = vmatprep.subr.mxu0 0.0
    %642 = vmatpush1.xpose.msra.mxu0 0.0
    %643 = vmatprep.subr.mxu0 0.0
    %644 = vmatpush1.xpose.msra.mxu0 0.0
    %645 = vmatprep.subr.mxu0 0.0
    %646 = vmatpush1.xpose.msra.mxu0 0.0
    %647 = vmatprep.subr.mxu0 0.0
    %648 = vmatpush1.xpose.msra.mxu0 0.0
    %649 = vmatprep.subr.mxu0 0.0
    %650 = vmatpush1.xpose.msra.mxu0 0.0
    %651 = vmatprep.subr.mxu0 0.0
    %652 = vmatpush1.xpose.msra.mxu0 0.0
    %653 = vmatprep.subr.mxu0 0.0
    %654 = vmatpush1.xpose.msra.mxu0 0.0
    %655 = vmatprep.subr.mxu0 0.0
    %656 = vmatpush1.xpose.msra.mxu0 0.0
    %657 = vmatprep.subr.mxu0 0.0
    %658 = vmatpush1.xpose.msra.mxu0 0.0
    %659 = vmatprep.subr.mxu0 0.0
    %660 = vmatpush1.xpose.msra.mxu0 0.0
    %661 = vmatprep.subr.mxu0 0.0
    %662 = vmatpush1.xpose.msra.mxu0 0.0
    %663 = vmatprep.subr.mxu0 0.0
    %664 = vmatpush1.xpose.msra.mxu0 %v637
    %665 = vmatprep.subr.mxu0 0.0
    %666 = vmatpush1.xpose.msra.mxu0 %v634
    %667 = vmatprep.subr.mxu0 0.0
    %668 = vmatpush1.xpose.msra.mxu0 %v631
    %669 = vmatprep.subr.mxu0 0.0
    %670 = vmatpush1.xpose.msra.mxu0 %v628
    %671 = vmatprep.subr.mxu0 0.0
    %672 = vmatpush2.xpose.msra.mxu0 0.0
    %673 = vmatprep.subr.mxu0 0.0
    %674 = vmatpush2.xpose.msra.mxu0 0.0
    %675 = vmatprep.subr.mxu0 0.0
    %676 = vmatpush2.xpose.msra.mxu0 0.0
    %677 = vmatprep.subr.mxu0 0.0
    %678 = vmatpush2.xpose.msra.mxu0 0.0
    %679 = vmatprep.subr.mxu0 0.0
    %680 = vmatpush2.xpose.msra.mxu0 0.0
    %681 = vmatprep.subr.mxu0 0.0
    %682 = vmatpush2.xpose.msra.mxu0 0.0
    %683 = vmatprep.subr.mxu0 0.0
    %684 = vmatpush2.xpose.msra.mxu0 0.0
    %685 = vmatprep.subr.mxu0 0.0
    %686 = vmatpush2.xpose.msra.mxu0 0.0
    %687 = vmatprep.subr.mxu0 0.0
    %688 = vmatpush2.xpose.msra.mxu0 0.0
    %689 = vmatprep.subr.mxu0 0.0
    %690 = vmatpush2.xpose.msra.mxu0 0.0
    %691 = vmatprep.subr.mxu0 0.0
    %692 = vmatpush2.xpose.msra.mxu0 0.0
    %693 = vmatprep.subr.mxu0 0.0
    %694 = vmatpush2.xpose.msra.mxu0 0.0
    %695 = vmatprep.subr.mxu0 0.0
    %696 = vmatpush2.xpose.msra.mxu0 0.0
    %697 = vmatprep.subr.mxu0 0.0
    %698 = vmatpush2.xpose.msra.mxu0 0.0
    %699 = vmatprep.subr.mxu0 0.0
    %700 = vmatpush2.xpose.msra.mxu0 0.0
    %701 = vmatprep.subr.mxu0 0.0
    %702 = vmatpush2.xpose.msra.mxu0 0.0
    %703 = vmatprep.mubr.f32.mxu0 0.0
    %704 = vmatmul.mubr.f32.gmra.mxu0 %v616
    %v705 = vpop.f32.mrf.mxu0
    %v706 = vadd.f32 0.0, %v705
    %v707 = vpop.f32.mrf.mxu0
    %708 = vmatprep.mubr.f32.mxu0 0.0
    %709 = vmatmul.mubr.f32.gmra.mxu0 %v619
    %v710 = vpop.f32.mrf.mxu0
    %v711 = vadd.f32 0.0, %v710
    %v712 = vpop.f32.mrf.mxu0
    %713 = vmatprep.mubr.f32.mxu0 0.0
    %714 = vmatmul.mubr.f32.gmra.mxu0 %v622
    %v715 = vpop.f32.mrf.mxu0
    %v716 = vadd.f32 0.0, %v715
    %v717 = vpop.f32.mrf.mxu0
    %718 = vmatprep.mubr.f32.mxu0 0.0
    %719 = vmatmul.mubr.f32.gmra.mxu0 %v625
    %v720 = vpop.f32.mrf.mxu0
    %v721 = vadd.f32 0.0, %v720
    %v722 = vpop.f32.mrf.mxu0
    %723 = vdwg.mxu0
    %v724 = vmul.f32 %v706, 0.25
    %v725 = vmul.f32 %v711, 0.25
    %v726 = vmul.f32 %v716, 0.25
    %v727 = vmul.f32 %v721, 0.25
    %v728 = vadd.f32 %v724, %v68
    %v729 = vadd.f32 %v725, %v69
    %v730 = vadd.f32 %v726, %v70
    %v731 = vadd.f32 %v727, %v71
    %v732 = vsel %vm124, %v728, -inf
    %733 = vmax.xlane.f32.xlu0 %v732
    %v734 = vpop.xlane.xlu0 %733
    %v735 = vsel %vm124, %v729, -inf
    %736 = vmax.xlane.f32.xlu0 %v735
    %v737 = vpop.xlane.xlu0 %736
    %v738 = vsel %vm124, %v730, -inf
    %739 = vmax.xlane.f32.xlu0 %v738
    %v740 = vpop.xlane.xlu0 %739
    %v741 = vsel %vm124, %v731, -inf
    %742 = vmax.xlane.f32.xlu0 %v741
    %v743 = vpop.xlane.xlu0 %742
    %v744 = vsub.f32 %v728, %v734
    %v745 = vsub.f32 %v729, %v737
    %v746 = vsub.f32 %v730, %v740
    %v747 = vsub.f32 %v731, %v743
    %v748 = vmul.f32 %v744, 1.442695
    %v749 = vpow.pop %v748
    %v750 = vmul.f32 %v745, 1.442695
    %v751 = vpow.pop %v750
    %v752 = vmul.f32 %v746, 1.442695
    %v753 = vpow.pop %v752
    %v754 = vmul.f32 %v747, 1.442695
    %v755 = vpow.pop %v754
    %v756 = vsel %vm124, %v749, 0.0
    %757 = vadd.xlane.f32.xlu0 %v756
    %v758 = vpop.xlane.xlu0 %757
    %v759 = vsel %vm124, %v751, 0.0
    %760 = vadd.xlane.f32.xlu0 %v759
    %v761 = vpop.xlane.xlu0 %760
    %v762 = vsel %vm124, %v753, 0.0
    %763 = vadd.xlane.f32.xlu0 %v762
    %v764 = vpop.xlane.xlu0 %763
    %v765 = vsel %vm124, %v755, 0.0
    %766 = vadd.xlane.f32.xlu0 %v765
    %v767 = vpop.xlane.xlu0 %766
    %v768 = vrcp.pop %v758
    %v769 = vmul.f32 %v749, %v768
    %v770 = vrcp.pop %v761
    %v771 = vmul.f32 %v751, %v770
    %v772 = vrcp.pop %v764
    %v773 = vmul.f32 %v753, %v772
    %v774 = vrcp.pop %v767
    %v775 = vmul.f32 %v755, %v774
    %v777 = vsel %vm124, %v769, 0
    %v780 = vsel %vm124, %v771, 0
    %v783 = vsel %vm124, %v773, 0
    %v786 = vsel %vm124, %v775, 0
    %788 = vmatprep.subr.mxu0 0.0
    %789 = vmatpush1.msra.mxu0 0.0
    %790 = vmatprep.subr.mxu0 0.0
    %791 = vmatpush1.msra.mxu0 0.0
    %792 = vmatprep.subr.mxu0 0.0
    %793 = vmatpush1.msra.mxu0 0.0
    %794 = vmatprep.subr.mxu0 0.0
    %795 = vmatpush1.msra.mxu0 0.0
    %796 = vmatprep.subr.mxu0 0.0
    %797 = vmatpush1.msra.mxu0 0.0
    %798 = vmatprep.subr.mxu0 0.0
    %799 = vmatpush1.msra.mxu0 0.0
    %800 = vmatprep.subr.mxu0 0.0
    %801 = vmatpush1.msra.mxu0 0.0
    %802 = vmatprep.subr.mxu0 0.0
    %803 = vmatpush1.msra.mxu0 0.0
    %804 = vmatprep.subr.mxu0 0.0
    %805 = vmatpush1.msra.mxu0 0.0
    %806 = vmatprep.subr.mxu0 0.0
    %807 = vmatpush1.msra.mxu0 0.0
    %808 = vmatprep.subr.mxu0 0.0
    %809 = vmatpush1.msra.mxu0 0.0
    %810 = vmatprep.subr.mxu0 0.0
    %811 = vmatpush1.msra.mxu0 0.0
    %812 = vmatprep.subr.mxu0 0.0
    %813 = vmatpush1.msra.mxu0 %v611
    %814 = vmatprep.subr.mxu0 0.0
    %815 = vmatpush1.msra.mxu0 %v606
    %816 = vmatprep.subr.mxu0 0.0
    %817 = vmatpush1.msra.mxu0 %v601
    %818 = vmatprep.subr.mxu0 0.0
    %819 = vmatpush1.msra.mxu0 %v596
    %820 = vmatprep.subr.mxu0 0.0
    %821 = vmatpush2.msra.mxu0 0.0
    %822 = vmatprep.subr.mxu0 0.0
    %823 = vmatpush2.msra.mxu0 0.0
    %824 = vmatprep.subr.mxu0 0.0
    %825 = vmatpush2.msra.mxu0 0.0
    %826 = vmatprep.subr.mxu0 0.0
    %827 = vmatpush2.msra.mxu0 0.0
    %828 = vmatprep.subr.mxu0 0.0
    %829 = vmatpush2.msra.mxu0 0.0
    %830 = vmatprep.subr.mxu0 0.0
    %831 = vmatpush2.msra.mxu0 0.0
    %832 = vmatprep.subr.mxu0 0.0
    %833 = vmatpush2.msra.mxu0 0.0
    %834 = vmatprep.subr.mxu0 0.0
    %835 = vmatpush2.msra.mxu0 0.0
    %836 = vmatprep.subr.mxu0 0.0
    %837 = vmatpush2.msra.mxu0 0.0
    %838 = vmatprep.subr.mxu0 0.0
    %839 = vmatpush2.msra.mxu0 0.0
    %840 = vmatprep.subr.mxu0 0.0
    %841 = vmatpush2.msra.mxu0 0.0
    %842 = vmatprep.subr.mxu0 0.0
    %843 = vmatpush2.msra.mxu0 0.0
    %844 = vmatprep.subr.mxu0 0.0
    %845 = vmatpush2.msra.mxu0 0.0
    %846 = vmatprep.subr.mxu0 0.0
    %847 = vmatpush2.msra.mxu0 0.0
    %848 = vmatprep.subr.mxu0 0.0
    %849 = vmatpush2.msra.mxu0 0.0
    %850 = vmatprep.subr.mxu0 0.0
    %851 = vmatpush2.msra.mxu0 0.0
    %852 = vmatprep.mubr.f32.mxu0 0.0
    %853 = vmatmul.mubr.f32.gmra.mxu0 %v777
    %v854 = vpop.f32.mrf.mxu0
    %v855 = vadd.f32 0.0, %v854
    %v856 = vpop.f32.mrf.mxu0
    %857 = vmatprep.mubr.f32.mxu0 0.0
    %858 = vmatmul.mubr.f32.gmra.mxu0 %v780
    %v859 = vpop.f32.mrf.mxu0
    %v860 = vadd.f32 0.0, %v859
    %v861 = vpop.f32.mrf.mxu0
    %862 = vmatprep.mubr.f32.mxu0 0.0
    %863 = vmatmul.mubr.f32.gmra.mxu0 %v783
    %v864 = vpop.f32.mrf.mxu0
    %v865 = vadd.f32 0.0, %v864
    %v866 = vpop.f32.mrf.mxu0
    %867 = vmatprep.mubr.f32.mxu0 0.0
    %868 = vmatmul.mubr.f32.gmra.mxu0 %v786
    %v869 = vpop.f32.mrf.mxu0
    %v870 = vadd.f32 0.0, %v869
    %v871 = vpop.f32.mrf.mxu0
    %872 = vdwg.mxu0
    %v873 = vld [vmem:[%s13] sm:$0xff]
    %v874 = vld [vmem:[%s13 + $0x8] sm:$0xff]
    %875 = vrot.lane.b32.xlu0 %v396, 112
    %v876 = vpop.permute.xlu0 %875
    %877 = vrot.lane.b32.xlu0 %v401, 112
    %v878 = vpop.permute.xlu0 %877
    %879 = vrot.lane.b32.xlu0 %v406, 112
    %v880 = vpop.permute.xlu0 %879
    %881 = vrot.lane.b32.xlu0 %v411, 112
    %v882 = vpop.permute.xlu0 %881
    %883 = vrot.lane.b32.xlu0 %v496, 112
    %v884 = vpop.permute.xlu0 %883
    %885 = vrot.lane.b32.xlu0 %v501, 112
    %v886 = vpop.permute.xlu0 %885
    %887 = vrot.lane.b32.xlu0 %v506, 112
    %v888 = vpop.permute.xlu0 %887
    %889 = vrot.lane.b32.xlu0 %v511, 112
    %v890 = vpop.permute.xlu0 %889
    %v891 = vsel %vm614, %v876, 0
    %v893 = vsel %vm614, %v878, 0
    %v895 = vsel %vm614, %v880, 0
    %v897 = vsel %vm614, %v882, 0
    %v899 = vsel %vm614, %v884, 0
    %v901 = vsel %vm614, %v886, 0
    %v903 = vsel %vm614, %v888, 0
    %v905 = vsel %vm614, %v890, 0
    %907 = vmatprep.subr.mxu0 0.0
    %908 = vmatpush1.xpose.msra.mxu0 0.0
    %909 = vmatprep.subr.mxu0 0.0
    %910 = vmatpush1.xpose.msra.mxu0 0.0
    %911 = vmatprep.subr.mxu0 0.0
    %912 = vmatpush1.xpose.msra.mxu0 0.0
    %913 = vmatprep.subr.mxu0 0.0
    %914 = vmatpush1.xpose.msra.mxu0 0.0
    %915 = vmatprep.subr.mxu0 0.0
    %916 = vmatpush1.xpose.msra.mxu0 0.0
    %917 = vmatprep.subr.mxu0 0.0
    %918 = vmatpush1.xpose.msra.mxu0 0.0
    %919 = vmatprep.subr.mxu0 0.0
    %920 = vmatpush1.xpose.msra.mxu0 0.0
    %921 = vmatprep.subr.mxu0 0.0
    %922 = vmatpush1.xpose.msra.mxu0 0.0
    %923 = vmatprep.subr.mxu0 0.0
    %924 = vmatpush1.xpose.msra.mxu0 0.0
    %925 = vmatprep.subr.mxu0 0.0
    %926 = vmatpush1.xpose.msra.mxu0 0.0
    %927 = vmatprep.subr.mxu0 0.0
    %928 = vmatpush1.xpose.msra.mxu0 0.0
    %929 = vmatprep.subr.mxu0 0.0
    %930 = vmatpush1.xpose.msra.mxu0 0.0
    %931 = vmatprep.subr.mxu0 0.0
    %932 = vmatpush1.xpose.msra.mxu0 %v905
    %933 = vmatprep.subr.mxu0 0.0
    %934 = vmatpush1.xpose.msra.mxu0 %v903
    %935 = vmatprep.subr.mxu0 0.0
    %936 = vmatpush1.xpose.msra.mxu0 %v901
    %937 = vmatprep.subr.mxu0 0.0
    %938 = vmatpush1.xpose.msra.mxu0 %v899
    %939 = vmatprep.subr.mxu0 0.0
    %940 = vmatpush2.xpose.msra.mxu0 0.0
    %941 = vmatprep.subr.mxu0 0.0
    %942 = vmatpush2.xpose.msra.mxu0 0.0
    %943 = vmatprep.subr.mxu0 0.0
    %944 = vmatpush2.xpose.msra.mxu0 0.0
    %945 = vmatprep.subr.mxu0 0.0
    %946 = vmatpush2.xpose.msra.mxu0 0.0
    %947 = vmatprep.subr.mxu0 0.0
    %948 = vmatpush2.xpose.msra.mxu0 0.0
    %949 = vmatprep.subr.mxu0 0.0
    %950 = vmatpush2.xpose.msra.mxu0 0.0
    %951 = vmatprep.subr.mxu0 0.0
    %952 = vmatpush2.xpose.msra.mxu0 0.0
    %953 = vmatprep.subr.mxu0 0.0
    %954 = vmatpush2.xpose.msra.mxu0 0.0
    %955 = vmatprep.subr.mxu0 0.0
    %956 = vmatpush2.xpose.msra.mxu0 0.0
    %957 = vmatprep.subr.mxu0 0.0
    %958 = vmatpush2.xpose.msra.mxu0 0.0
    %959 = vmatprep.subr.mxu0 0.0
    %960 = vmatpush2.xpose.msra.mxu0 0.0
    %961 = vmatprep.subr.mxu0 0.0
    %962 = vmatpush2.xpose.msra.mxu0 0.0
    %963 = vmatprep.subr.mxu0 0.0
    %964 = vmatpush2.xpose.msra.mxu0 0.0
    %965 = vmatprep.subr.mxu0 0.0
    %966 = vmatpush2.xpose.msra.mxu0 0.0
    %967 = vmatprep.subr.mxu0 0.0
    %968 = vmatpush2.xpose.msra.mxu0 0.0
    %969 = vmatprep.subr.mxu0 0.0
    %970 = vmatpush2.xpose.msra.mxu0 0.0
    %971 = vmatprep.mubr.f32.mxu0 0.0
    %972 = vmatmul.mubr.f32.gmra.mxu0 %v891
    %v973 = vpop.f32.mrf.mxu0
    %v974 = vadd.f32 0.0, %v973
    %v975 = vpop.f32.mrf.mxu0
    %976 = vmatprep.mubr.f32.mxu0 0.0
    %977 = vmatmul.mubr.f32.gmra.mxu0 %v893
    %v978 = vpop.f32.mrf.mxu0
    %v979 = vadd.f32 0.0, %v978
    %v980 = vpop.f32.mrf.mxu0
    %981 = vmatprep.mubr.f32.mxu0 0.0
    %982 = vmatmul.mubr.f32.gmra.mxu0 %v895
    %v983 = vpop.f32.mrf.mxu0
    %v984 = vadd.f32 0.0, %v983
    %v985 = vpop.f32.mrf.mxu0
    %986 = vmatprep.mubr.f32.mxu0 0.0
    %987 = vmatmul.mubr.f32.gmra.mxu0 %v897
    %v988 = vpop.f32.mrf.mxu0
    %v989 = vadd.f32 0.0, %v988
    %v990 = vpop.f32.mrf.mxu0
    %991 = vdwg.mxu0
    %v992 = vmul.f32 %v974, 0.25
    %v993 = vmul.f32 %v979, 0.25
    %v994 = vmul.f32 %v984, 0.25
    %v995 = vmul.f32 %v989, 0.25
    %v996 = vadd.f32 %v992, %v68
    %v997 = vadd.f32 %v993, %v69
    %v998 = vadd.f32 %v994, %v70
    %v999 = vadd.f32 %v995, %v71
    %v1000 = vsel %vm124, %v996, -inf
    %1001 = vmax.xlane.f32.xlu0 %v1000
    %v1002 = vpop.xlane.xlu0 %1001
    %v1003 = vsel %vm124, %v997, -inf
    %1004 = vmax.xlane.f32.xlu0 %v1003
    %v1005 = vpop.xlane.xlu0 %1004
    %v1006 = vsel %vm124, %v998, -inf
    %1007 = vmax.xlane.f32.xlu0 %v1006
    %v1008 = vpop.xlane.xlu0 %1007
    %v1009 = vsel %vm124, %v999, -inf
    %1010 = vmax.xlane.f32.xlu0 %v1009
    %v1011 = vpop.xlane.xlu0 %1010
    %v1012 = vsub.f32 %v996, %v1002
    %v1013 = vsub.f32 %v997, %v1005
    %v1014 = vsub.f32 %v998, %v1008
    %v1015 = vsub.f32 %v999, %v1011
    %v1016 = vmul.f32 %v1012, 1.442695
    %v1017 = vpow.pop %v1016
    %v1018 = vmul.f32 %v1013, 1.442695
    %v1019 = vpow.pop %v1018
    %v1020 = vmul.f32 %v1014, 1.442695
    %v1021 = vpow.pop %v1020
    %v1022 = vmul.f32 %v1015, 1.442695
    %v1023 = vpow.pop %v1022
    %v1024 = vsel %vm124, %v1017, 0.0
    %1025 = vadd.xlane.f32.xlu0 %v1024
    %v1026 = vpop.xlane.xlu0 %1025
    %v1027 = vsel %vm124, %v1019, 0.0
    %1028 = vadd.xlane.f32.xlu0 %v1027
    %v1029 = vpop.xlane.xlu0 %1028
    %v1030 = vsel %vm124, %v1021, 0.0
    %1031 = vadd.xlane.f32.xlu0 %v1030
    %v1032 = vpop.xlane.xlu0 %1031
    %v1033 = vsel %vm124, %v1023, 0.0
    %1034 = vadd.xlane.f32.xlu0 %v1033
    %v1035 = vpop.xlane.xlu0 %1034
    %v1036 = vrcp.pop %v1026
    %v1037 = vmul.f32 %v1017, %v1036
    %v1038 = vrcp.pop %v1029
    %v1039 = vmul.f32 %v1019, %v1038
    %v1040 = vrcp.pop %v1032
    %v1041 = vmul.f32 %v1021, %v1040
    %v1042 = vrcp.pop %v1035
    %v1043 = vmul.f32 %v1023, %v1042
    %1048 = vrot.lane.b32.xlu0 %v596, 112
    %v1049 = vpop.permute.xlu0 %1048
    %1050 = vrot.lane.b32.xlu0 %v601, 112
    %v1051 = vpop.permute.xlu0 %1050
    %1052 = vrot.lane.b32.xlu0 %v606, 112
    %v1053 = vpop.permute.xlu0 %1052
    %1054 = vrot.lane.b32.xlu0 %v611, 112
    %v1055 = vpop.permute.xlu0 %1054
    %v1061 = vsel %vm124, %v1037, 0
    %v1064 = vsel %vm124, %v1039, 0
    %v1067 = vsel %vm124, %v1041, 0
    %v1070 = vsel %vm124, %v1043, 0
    %1072 = vmatprep.subr.mxu0 0.0
    %1073 = vmatpush1.msra.mxu0 0.0
    %1074 = vmatprep.subr.mxu0 0.0
    %1075 = vmatpush1.msra.mxu0 0.0
    %1076 = vmatprep.subr.mxu0 0.0
    %1077 = vmatpush1.msra.mxu0 0.0
    %1078 = vmatprep.subr.mxu0 0.0
    %1079 = vmatpush1.msra.mxu0 0.0
    %1080 = vmatprep.subr.mxu0 0.0
    %1081 = vmatpush1.msra.mxu0 0.0
    %1082 = vmatprep.subr.mxu0 0.0
    %1083 = vmatpush1.msra.mxu0 0.0
    %1084 = vmatprep.subr.mxu0 0.0
    %1085 = vmatpush1.msra.mxu0 0.0
    %1086 = vmatprep.subr.mxu0 0.0
    %1087 = vmatpush1.msra.mxu0 0.0
    %1088 = vmatprep.subr.mxu0 0.0
    %1089 = vmatpush1.msra.mxu0 0.0
    %1090 = vmatprep.subr.mxu0 0.0
    %1091 = vmatpush1.msra.mxu0 0.0
    %1092 = vmatprep.subr.mxu0 0.0
    %1093 = vmatpush1.msra.mxu0 0.0
    %1094 = vmatprep.subr.mxu0 0.0
    %1095 = vmatpush1.msra.mxu0 0.0
    %1096 = vmatprep.subr.mxu0 0.0
    %1097 = vmatpush1.msra.mxu0 %v1055
    %1098 = vmatprep.subr.mxu0 0.0
    %1099 = vmatpush1.msra.mxu0 %v1053
    %1100 = vmatprep.subr.mxu0 0.0
    %1101 = vmatpush1.msra.mxu0 %v1051
    %1102 = vmatprep.subr.mxu0 0.0
    %1103 = vmatpush1.msra.mxu0 %v1049
    %1104 = vmatprep.subr.mxu0 0.0
    %1105 = vmatpush2.msra.mxu0 0.0
    %1106 = vmatprep.subr.mxu0 0.0
    %1107 = vmatpush2.msra.mxu0 0.0
    %1108 = vmatprep.subr.mxu0 0.0
    %1109 = vmatpush2.msra.mxu0 0.0
    %1110 = vmatprep.subr.mxu0 0.0
    %1111 = vmatpush2.msra.mxu0 0.0
    %1112 = vmatprep.subr.mxu0 0.0
    %1113 = vmatpush2.msra.mxu0 0.0
    %1114 = vmatprep.subr.mxu0 0.0
    %1115 = vmatpush2.msra.mxu0 0.0
    %1116 = vmatprep.subr.mxu0 0.0
    %1117 = vmatpush2.msra.mxu0 0.0
    %1118 = vmatprep.subr.mxu0 0.0
    %1119 = vmatpush2.msra.mxu0 0.0
    %1120 = vmatprep.subr.mxu0 0.0
    %1121 = vmatpush2.msra.mxu0 0.0
    %1122 = vmatprep.subr.mxu0 0.0
    %1123 = vmatpush2.msra.mxu0 0.0
    %1124 = vmatprep.subr.mxu0 0.0
    %1125 = vmatpush2.msra.mxu0 0.0
    %1126 = vmatprep.subr.mxu0 0.0
    %1127 = vmatpush2.msra.mxu0 0.0
    %1128 = vmatprep.subr.mxu0 0.0
    %1129 = vmatpush2.msra.mxu0 0.0
    %1130 = vmatprep.subr.mxu0 0.0
    %1131 = vmatpush2.msra.mxu0 0.0
    %1132 = vmatprep.subr.mxu0 0.0
    %1133 = vmatpush2.msra.mxu0 0.0
    %1134 = vmatprep.subr.mxu0 0.0
    %1135 = vmatpush2.msra.mxu0 0.0
    %1136 = vmatprep.mubr.f32.mxu0 0.0
    %1137 = vmatmul.mubr.f32.gmra.mxu0 %v1061
    %v1138 = vpop.f32.mrf.mxu0
    %v1139 = vadd.f32 0.0, %v1138
    %v1140 = vpop.f32.mrf.mxu0
    %1141 = vmatprep.mubr.f32.mxu0 0.0
    %1142 = vmatmul.mubr.f32.gmra.mxu0 %v1064
    %v1143 = vpop.f32.mrf.mxu0
    %v1144 = vadd.f32 0.0, %v1143
    %v1145 = vpop.f32.mrf.mxu0
    %1146 = vmatprep.mubr.f32.mxu0 0.0
    %1147 = vmatmul.mubr.f32.gmra.mxu0 %v1067
    %v1148 = vpop.f32.mrf.mxu0
    %v1149 = vadd.f32 0.0, %v1148
    %v1150 = vpop.f32.mrf.mxu0
    %1151 = vmatprep.mubr.f32.mxu0 0.0
    %1152 = vmatmul.mubr.f32.gmra.mxu0 %v1070
    %v1153 = vpop.f32.mrf.mxu0
    %v1154 = vadd.f32 0.0, %v1153
    %v1155 = vpop.f32.mrf.mxu0
    %1156 = vdwg.mxu0
    %v1157 = vld [vmem:[%s13 + $0x10] sm:$0xff]
    %v1158 = vld [vmem:[%s13 + $0x18] sm:$0xff]
    %v1160 = vsel %vm614, %v1139, 0
    %v1163 = vsel %vm614, %v1144, 0
    %v1166 = vsel %vm614, %v1149, 0
    %v1169 = vsel %vm614, %v1154, 0
    %1171 = vmatprep.subr.mxu0 0.0
    %1172 = vmatpush1.msra.mxu0 0.0
    %1173 = vmatprep.subr.mxu0 0.0
    %1174 = vmatpush1.msra.mxu0 0.0
    %1175 = vmatprep.subr.mxu0 0.0
    %1176 = vmatpush1.msra.mxu0 0.0
    %1177 = vmatprep.subr.mxu0 0.0
    %1178 = vmatpush1.msra.mxu0 0.0
    %1179 = vmatprep.subr.mxu0 0.0
    %1180 = vmatpush1.msra.mxu0 0.0
    %1181 = vmatprep.subr.mxu0 0.0
    %1182 = vmatpush1.msra.mxu0 0.0
    %1183 = vmatprep.subr.mxu0 0.0
    %1184 = vmatpush1.msra.mxu0 0.0
    %1185 = vmatprep.subr.mxu0 0.0
    %1186 = vmatpush1.msra.mxu0 0.0
    %1187 = vmatprep.subr.mxu0 0.0
    %1188 = vmatpush1.msra.mxu0 0.0
    %1189 = vmatprep.subr.mxu0 0.0
    %1190 = vmatpush1.msra.mxu0 0.0
    %1191 = vmatprep.subr.mxu0 0.0
    %1192 = vmatpush1.msra.mxu0 0.0
    %1193 = vmatprep.subr.mxu0 0.0
    %1194 = vmatpush1.msra.mxu0 0.0
    %1195 = vmatprep.subr.mxu0 0.0
    %1196 = vmatpush1.msra.mxu0 0.0
    %1197 = vmatprep.subr.mxu0 0.0
    %1198 = vmatpush1.msra.mxu0 0.0
    %1199 = vmatprep.subr.mxu0 0.0
    %1200 = vmatpush1.msra.mxu0 %v1158
    %1201 = vmatprep.subr.mxu0 0.0
    %1202 = vmatpush1.msra.mxu0 %v1157
    %1203 = vmatprep.subr.mxu0 0.0
    %1204 = vmatpush2.msra.mxu0 0.0
    %1205 = vmatprep.subr.mxu0 0.0
    %1206 = vmatpush2.msra.mxu0 0.0
    %1207 = vmatprep.subr.mxu0 0.0
    %1208 = vmatpush2.msra.mxu0 0.0
    %1209 = vmatprep.subr.mxu0 0.0
    %1210 = vmatpush2.msra.mxu0 0.0
    %1211 = vmatprep.subr.mxu0 0.0
    %1212 = vmatpush2.msra.mxu0 0.0
    %1213 = vmatprep.subr.mxu0 0.0
    %1214 = vmatpush2.msra.mxu0 0.0
    %1215 = vmatprep.subr.mxu0 0.0
    %1216 = vmatpush2.msra.mxu0 0.0
    %1217 = vmatprep.subr.mxu0 0.0
    %1218 = vmatpush2.msra.mxu0 0.0
    %1219 = vmatprep.subr.mxu0 0.0
    %1220 = vmatpush2.msra.mxu0 0.0
    %1221 = vmatprep.subr.mxu0 0.0
    %1222 = vmatpush2.msra.mxu0 0.0
    %1223 = vmatprep.subr.mxu0 0.0
    %1224 = vmatpush2.msra.mxu0 0.0
    %1225 = vmatprep.subr.mxu0 0.0
    %1226 = vmatpush2.msra.mxu0 0.0
    %1227 = vmatprep.subr.mxu0 0.0
    %1228 = vmatpush2.msra.mxu0 0.0
    %1229 = vmatprep.subr.mxu0 0.0
    %1230 = vmatpush2.msra.mxu0 0.0
    %1231 = vmatprep.subr.mxu0 0.0
    %1232 = vmatpush2.msra.mxu0 0.0
    %1233 = vmatprep.subr.mxu0 0.0
    %1234 = vmatpush2.msra.mxu0 0.0
    %1235 = vmatprep.mubr.f32.mxu0 0.0
    %1236 = vmatmul.mubr.f32.gmra.mxu0 %v1160
    %v1237 = vpop.f32.mrf.mxu0
    %v1238 = vadd.f32 0.0, %v1237
    %v1239 = vpop.f32.mrf.mxu0
    %1240 = vmatprep.mubr.f32.mxu0 0.0
    %1241 = vmatmul.mubr.f32.gmra.mxu0 %v1163
    %v1242 = vpop.f32.mrf.mxu0
    %v1243 = vadd.f32 0.0, %v1242
    %v1244 = vpop.f32.mrf.mxu0
    %1245 = vmatprep.mubr.f32.mxu0 0.0
    %1246 = vmatmul.mubr.f32.gmra.mxu0 %v1166
    %v1247 = vpop.f32.mrf.mxu0
    %v1248 = vadd.f32 0.0, %v1247
    %v1249 = vpop.f32.mrf.mxu0
    %1250 = vmatprep.mubr.f32.mxu0 0.0
    %1251 = vmatmul.mubr.f32.gmra.mxu0 %v1169
    %v1252 = vpop.f32.mrf.mxu0
    %v1253 = vadd.f32 0.0, %v1252
    %v1254 = vpop.f32.mrf.mxu0
    %1255 = vdwg.mxu0
    %v1257 = vsel %vm614, %v855, 0
    %v1260 = vsel %vm614, %v860, 0
    %v1263 = vsel %vm614, %v865, 0
    %v1266 = vsel %vm614, %v870, 0
    %1268 = vmatprep.subr.mxu0 0.0
    %1269 = vmatpush1.msra.mxu0 0.0
    %1270 = vmatprep.subr.mxu0 0.0
    %1271 = vmatpush1.msra.mxu0 0.0
    %1272 = vmatprep.subr.mxu0 0.0
    %1273 = vmatpush1.msra.mxu0 0.0
    %1274 = vmatprep.subr.mxu0 0.0
    %1275 = vmatpush1.msra.mxu0 0.0
    %1276 = vmatprep.subr.mxu0 0.0
    %1277 = vmatpush1.msra.mxu0 0.0
    %1278 = vmatprep.subr.mxu0 0.0
    %1279 = vmatpush1.msra.mxu0 0.0
    %1280 = vmatprep.subr.mxu0 0.0
    %1281 = vmatpush1.msra.mxu0 0.0
    %1282 = vmatprep.subr.mxu0 0.0
    %1283 = vmatpush1.msra.mxu0 0.0
    %1284 = vmatprep.subr.mxu0 0.0
    %1285 = vmatpush1.msra.mxu0 0.0
    %1286 = vmatprep.subr.mxu0 0.0
    %1287 = vmatpush1.msra.mxu0 0.0
    %1288 = vmatprep.subr.mxu0 0.0
    %1289 = vmatpush1.msra.mxu0 0.0
    %1290 = vmatprep.subr.mxu0 0.0
    %1291 = vmatpush1.msra.mxu0 0.0
    %1292 = vmatprep.subr.mxu0 0.0
    %1293 = vmatpush1.msra.mxu0 0.0
    %1294 = vmatprep.subr.mxu0 0.0
    %1295 = vmatpush1.msra.mxu0 0.0
    %1296 = vmatprep.subr.mxu0 0.0
    %1297 = vmatpush1.msra.mxu0 %v874
    %1298 = vmatprep.subr.mxu0 0.0
    %1299 = vmatpush1.msra.mxu0 %v873
    %1300 = vmatprep.subr.mxu0 0.0
    %1301 = vmatpush2.msra.mxu0 0.0
    %1302 = vmatprep.subr.mxu0 0.0
    %1303 = vmatpush2.msra.mxu0 0.0
    %1304 = vmatprep.subr.mxu0 0.0
    %1305 = vmatpush2.msra.mxu0 0.0
    %1306 = vmatprep.subr.mxu0 0.0
    %1307 = vmatpush2.msra.mxu0 0.0
    %1308 = vmatprep.subr.mxu0 0.0
    %1309 = vmatpush2.msra.mxu0 0.0
    %1310 = vmatprep.subr.mxu0 0.0
    %1311 = vmatpush2.msra.mxu0 0.0
    %1312 = vmatprep.subr.mxu0 0.0
    %1313 = vmatpush2.msra.mxu0 0.0
    %1314 = vmatprep.subr.mxu0 0.0
    %1315 = vmatpush2.msra.mxu0 0.0
    %1316 = vmatprep.subr.mxu0 0.0
    %1317 = vmatpush2.msra.mxu0 0.0
    %1318 = vmatprep.subr.mxu0 0.0
    %1319 = vmatpush2.msra.mxu0 0.0
    %1320 = vmatprep.subr.mxu0 0.0
    %1321 = vmatpush2.msra.mxu0 0.0
    %1322 = vmatprep.subr.mxu0 0.0
    %1323 = vmatpush2.msra.mxu0 0.0
    %1324 = vmatprep.subr.mxu0 0.0
    %1325 = vmatpush2.msra.mxu0 0.0
    %1326 = vmatprep.subr.mxu0 0.0
    %1327 = vmatpush2.msra.mxu0 0.0
    %1328 = vmatprep.subr.mxu0 0.0
    %1329 = vmatpush2.msra.mxu0 0.0
    %1330 = vmatprep.subr.mxu0 0.0
    %1331 = vmatpush2.msra.mxu0 0.0
    %1332 = vmatprep.mubr.f32.mxu0 0.0
    %1333 = vmatmul.mubr.f32.gmra.mxu0 %v1257
    %v1334 = vpop.f32.mrf.mxu0
    %v1335 = vadd.f32 %v1238, %v1334
    %v1336 = vpop.f32.mrf.mxu0
    %1337 = vmatprep.mubr.f32.mxu0 0.0
    %1338 = vmatmul.mubr.f32.gmra.mxu0 %v1260
    %v1339 = vpop.f32.mrf.mxu0
    %v1340 = vadd.f32 %v1243, %v1339
    %v1341 = vpop.f32.mrf.mxu0
    %1342 = vmatprep.mubr.f32.mxu0 0.0
    %1343 = vmatmul.mubr.f32.gmra.mxu0 %v1263
    %v1344 = vpop.f32.mrf.mxu0
    %v1345 = vadd.f32 %v1248, %v1344
    %v1346 = vpop.f32.mrf.mxu0
    %1347 = vmatprep.mubr.f32.mxu0 0.0
    %1348 = vmatmul.mubr.f32.gmra.mxu0 %v1266
    %v1349 = vpop.f32.mrf.mxu0
    %v1350 = vadd.f32 %v1253, %v1349
    %v1351 = vpop.f32.mrf.mxu0
    %1352 = vdwg.mxu0
    %1353 = vrot.lane.b32.xlu0 %v396, 96
    %v1354 = vpop.permute.xlu0 %1353
    %1355 = vrot.lane.b32.xlu0 %v401, 96
    %v1356 = vpop.permute.xlu0 %1355
    %1357 = vrot.lane.b32.xlu0 %v406, 96
    %v1358 = vpop.permute.xlu0 %1357
    %1359 = vrot.lane.b32.xlu0 %v411, 96
    %v1360 = vpop.permute.xlu0 %1359
    %1361 = vrot.lane.b32.xlu0 %v496, 96
    %v1362 = vpop.permute.xlu0 %1361
    %1363 = vrot.lane.b32.xlu0 %v501, 96
    %v1364 = vpop.permute.xlu0 %1363
    %1365 = vrot.lane.b32.xlu0 %v506, 96
    %v1366 = vpop.permute.xlu0 %1365
    %1367 = vrot.lane.b32.xlu0 %v511, 96
    %v1368 = vpop.permute.xlu0 %1367
    %v1369 = vsel %vm614, %v1354, 0
    %v1371 = vsel %vm614, %v1356, 0
    %v1373 = vsel %vm614, %v1358, 0
    %v1375 = vsel %vm614, %v1360, 0
    %v1377 = vsel %vm614, %v1362, 0
    %v1379 = vsel %vm614, %v1364, 0
    %v1381 = vsel %vm614, %v1366, 0
    %v1383 = vsel %vm614, %v1368, 0
    %1385 = vmatprep.subr.mxu0 0.0
    %1386 = vmatpush1.xpose.msra.mxu0 0.0
    %1387 = vmatprep.subr.mxu0 0.0
    %1388 = vmatpush1.xpose.msra.mxu0 0.0
    %1389 = vmatprep.subr.mxu0 0.0
    %1390 = vmatpush1.xpose.msra.mxu0 0.0
    %1391 = vmatprep.subr.mxu0 0.0
    %1392 = vmatpush1.xpose.msra.mxu0 0.0
    %1393 = vmatprep.subr.mxu0 0.0
    %1394 = vmatpush1.xpose.msra.mxu0 0.0
    %1395 = vmatprep.subr.mxu0 0.0
    %1396 = vmatpush1.xpose.msra.mxu0 0.0
    %1397 = vmatprep.subr.mxu0 0.0
    %1398 = vmatpush1.xpose.msra.mxu0 0.0
    %1399 = vmatprep.subr.mxu0 0.0
    %1400 = vmatpush1.xpose.msra.mxu0 0.0
    %1401 = vmatprep.subr.mxu0 0.0
    %1402 = vmatpush1.xpose.msra.mxu0 0.0
    %1403 = vmatprep.subr.mxu0 0.0
    %1404 = vmatpush1.xpose.msra.mxu0 0.0
    %1405 = vmatprep.subr.mxu0 0.0
    %1406 = vmatpush1.xpose.msra.mxu0 0.0
    %1407 = vmatprep.subr.mxu0 0.0
    %1408 = vmatpush1.xpose.msra.mxu0 0.0
    %1409 = vmatprep.subr.mxu0 0.0
    %1410 = vmatpush1.xpose.msra.mxu0 %v1383
    %1411 = vmatprep.subr.mxu0 0.0
    %1412 = vmatpush1.xpose.msra.mxu0 %v1381
    %1413 = vmatprep.subr.mxu0 0.0
    %1414 = vmatpush1.xpose.msra.mxu0 %v1379
    %1415 = vmatprep.subr.mxu0 0.0
    %1416 = vmatpush1.xpose.msra.mxu0 %v1377
    %1417 = vmatprep.subr.mxu0 0.0
    %1418 = vmatpush2.xpose.msra.mxu0 0.0
    %1419 = vmatprep.subr.mxu0 0.0
    %1420 = vmatpush2.xpose.msra.mxu0 0.0
    %1421 = vmatprep.subr.mxu0 0.0
    %1422 = vmatpush2.xpose.msra.mxu0 0.0
    %1423 = vmatprep.subr.mxu0 0.0
    %1424 = vmatpush2.xpose.msra.mxu0 0.0
    %1425 = vmatprep.subr.mxu0 0.0
    %1426 = vmatpush2.xpose.msra.mxu0 0.0
    %1427 = vmatprep.subr.mxu0 0.0
    %1428 = vmatpush2.xpose.msra.mxu0 0.0
    %1429 = vmatprep.subr.mxu0 0.0
    %1430 = vmatpush2.xpose.msra.mxu0 0.0
    %1431 = vmatprep.subr.mxu0 0.0
    %1432 = vmatpush2.xpose.msra.mxu0 0.0
    %1433 = vmatprep.subr.mxu0 0.0
    %1434 = vmatpush2.xpose.msra.mxu0 0.0
    %1435 = vmatprep.subr.mxu0 0.0
    %1436 = vmatpush2.xpose.msra.mxu0 0.0
    %1437 = vmatprep.subr.mxu0 0.0
    %1438 = vmatpush2.xpose.msra.mxu0 0.0
    %1439 = vmatprep.subr.mxu0 0.0
    %1440 = vmatpush2.xpose.msra.mxu0 0.0
    %1441 = vmatprep.subr.mxu0 0.0
    %1442 = vmatpush2.xpose.msra.mxu0 0.0
    %1443 = vmatprep.subr.mxu0 0.0
    %1444 = vmatpush2.xpose.msra.mxu0 0.0
    %1445 = vmatprep.subr.mxu0 0.0
    %1446 = vmatpush2.xpose.msra.mxu0 0.0
    %1447 = vmatprep.subr.mxu0 0.0
    %1448 = vmatpush2.xpose.msra.mxu0 0.0
    %1449 = vmatprep.mubr.f32.mxu0 0.0
    %1450 = vmatmul.mubr.f32.gmra.mxu0 %v1369
    %v1451 = vpop.f32.mrf.mxu0
    %v1452 = vadd.f32 0.0, %v1451
    %v1453 = vpop.f32.mrf.mxu0
    %1454 = vmatprep.mubr.f32.mxu0 0.0
    %1455 = vmatmul.mubr.f32.gmra.mxu0 %v1371
    %v1456 = vpop.f32.mrf.mxu0
    %v1457 = vadd.f32 0.0, %v1456
    %v1458 = vpop.f32.mrf.mxu0
    %1459 = vmatprep.mubr.f32.mxu0 0.0
    %1460 = vmatmul.mubr.f32.gmra.mxu0 %v1373
    %v1461 = vpop.f32.mrf.mxu0
    %v1462 = vadd.f32 0.0, %v1461
    %v1463 = vpop.f32.mrf.mxu0
    %1464 = vmatprep.mubr.f32.mxu0 0.0
    %1465 = vmatmul.mubr.f32.gmra.mxu0 %v1375
    %v1466 = vpop.f32.mrf.mxu0
    %v1467 = vadd.f32 0.0, %v1466
    %v1468 = vpop.f32.mrf.mxu0
    %1469 = vdwg.mxu0
    %v1470 = vmul.f32 %v1452, 0.25
    %v1471 = vmul.f32 %v1457, 0.25
    %v1472 = vmul.f32 %v1462, 0.25
    %v1473 = vmul.f32 %v1467, 0.25
    %v1474 = vadd.f32 %v1470, %v68
    %v1475 = vadd.f32 %v1471, %v69
    %v1476 = vadd.f32 %v1472, %v70
    %v1477 = vadd.f32 %v1473, %v71
    %v1478 = vsel %vm124, %v1474, -inf
    %1479 = vmax.xlane.f32.xlu0 %v1478
    %v1480 = vpop.xlane.xlu0 %1479
    %v1481 = vsel %vm124, %v1475, -inf
    %1482 = vmax.xlane.f32.xlu0 %v1481
    %v1483 = vpop.xlane.xlu0 %1482
    %v1484 = vsel %vm124, %v1476, -inf
    %1485 = vmax.xlane.f32.xlu0 %v1484
    %v1486 = vpop.xlane.xlu0 %1485
    %v1487 = vsel %vm124, %v1477, -inf
    %1488 = vmax.xlane.f32.xlu0 %v1487
    %v1489 = vpop.xlane.xlu0 %1488
    %v1490 = vsub.f32 %v1474, %v1480
    %v1491 = vsub.f32 %v1475, %v1483
    %v1492 = vsub.f32 %v1476, %v1486
    %v1493 = vsub.f32 %v1477, %v1489
    %v1494 = vmul.f32 %v1490, 1.442695
    %v1495 = vpow.pop %v1494
    %v1496 = vmul.f32 %v1491, 1.442695
    %v1497 = vpow.pop %v1496
    %v1498 = vmul.f32 %v1492, 1.442695
    %v1499 = vpow.pop %v1498
    %v1500 = vmul.f32 %v1493, 1.442695
    %v1501 = vpow.pop %v1500
    %v1502 = vsel %vm124, %v1495, 0.0
    %1503 = vadd.xlane.f32.xlu0 %v1502
    %v1504 = vpop.xlane.xlu0 %1503
    %v1505 = vsel %vm124, %v1497, 0.0
    %1506 = vadd.xlane.f32.xlu0 %v1505
    %v1507 = vpop.xlane.xlu0 %1506
    %v1508 = vsel %vm124, %v1499, 0.0
    %1509 = vadd.xlane.f32.xlu0 %v1508
    %v1510 = vpop.xlane.xlu0 %1509
    %v1511 = vsel %vm124, %v1501, 0.0
    %1512 = vadd.xlane.f32.xlu0 %v1511
    %v1513 = vpop.xlane.xlu0 %1512
    %v1514 = vrcp.pop %v1504
    %v1515 = vmul.f32 %v1495, %v1514
    %v1516 = vrcp.pop %v1507
    %v1517 = vmul.f32 %v1497, %v1516
    %v1518 = vrcp.pop %v1510
    %v1519 = vmul.f32 %v1499, %v1518
    %v1520 = vrcp.pop %v1513
    %v1521 = vmul.f32 %v1501, %v1520
    %1522 = vrot.lane.b32.xlu0 %v596, 96
    %v1523 = vpop.permute.xlu0 %1522
    %1524 = vrot.lane.b32.xlu0 %v601, 96
    %v1525 = vpop.permute.xlu0 %1524
    %1526 = vrot.lane.b32.xlu0 %v606, 96
    %v1527 = vpop.permute.xlu0 %1526
    %1528 = vrot.lane.b32.xlu0 %v611, 96
    %v1529 = vpop.permute.xlu0 %1528
    %v1535 = vsel %vm124, %v1515, 0
    %v1538 = vsel %vm124, %v1517, 0
    %v1541 = vsel %vm124, %v1519, 0
    %v1544 = vsel %vm124, %v1521, 0
    %1546 = vmatprep.subr.mxu0 0.0
    %1547 = vmatpush1.msra.mxu0 0.0
    %1548 = vmatprep.subr.mxu0 0.0
    %1549 = vmatpush1.msra.mxu0 0.0
    %1550 = vmatprep.subr.mxu0 0.0
    %1551 = vmatpush1.msra.mxu0 0.0
    %1552 = vmatprep.subr.mxu0 0.0
    %1553 = vmatpush1.msra.mxu0 0.0
    %1554 = vmatprep.subr.mxu0 0.0
    %1555 = vmatpush1.msra.mxu0 0.0
    %1556 = vmatprep.subr.mxu0 0.0
    %1557 = vmatpush1.msra.mxu0 0.0
    %1558 = vmatprep.subr.mxu0 0.0
    %1559 = vmatpush1.msra.mxu0 0.0
    %1560 = vmatprep.subr.mxu0 0.0
    %1561 = vmatpush1.msra.mxu0 0.0
    %1562 = vmatprep.subr.mxu0 0.0
    %1563 = vmatpush1.msra.mxu0 0.0
    %1564 = vmatprep.subr.mxu0 0.0
    %1565 = vmatpush1.msra.mxu0 0.0
    %1566 = vmatprep.subr.mxu0 0.0
    %1567 = vmatpush1.msra.mxu0 0.0
    %1568 = vmatprep.subr.mxu0 0.0
    %1569 = vmatpush1.msra.mxu0 0.0
    %1570 = vmatprep.subr.mxu0 0.0
    %1571 = vmatpush1.msra.mxu0 %v1529
    %1572 = vmatprep.subr.mxu0 0.0
    %1573 = vmatpush1.msra.mxu0 %v1527
    %1574 = vmatprep.subr.mxu0 0.0
    %1575 = vmatpush1.msra.mxu0 %v1525
    %1576 = vmatprep.subr.mxu0 0.0
    %1577 = vmatpush1.msra.mxu0 %v1523
    %1578 = vmatprep.subr.mxu0 0.0
    %1579 = vmatpush2.msra.mxu0 0.0
    %1580 = vmatprep.subr.mxu0 0.0
    %1581 = vmatpush2.msra.mxu0 0.0
    %1582 = vmatprep.subr.mxu0 0.0
    %1583 = vmatpush2.msra.mxu0 0.0
    %1584 = vmatprep.subr.mxu0 0.0
    %1585 = vmatpush2.msra.mxu0 0.0
    %1586 = vmatprep.subr.mxu0 0.0
    %1587 = vmatpush2.msra.mxu0 0.0
    %1588 = vmatprep.subr.mxu0 0.0
    %1589 = vmatpush2.msra.mxu0 0.0
    %1590 = vmatprep.subr.mxu0 0.0
    %1591 = vmatpush2.msra.mxu0 0.0
    %1592 = vmatprep.subr.mxu0 0.0
    %1593 = vmatpush2.msra.mxu0 0.0
    %1594 = vmatprep.subr.mxu0 0.0
    %1595 = vmatpush2.msra.mxu0 0.0
    %1596 = vmatprep.subr.mxu0 0.0
    %1597 = vmatpush2.msra.mxu0 0.0
    %1598 = vmatprep.subr.mxu0 0.0
    %1599 = vmatpush2.msra.mxu0 0.0
    %1600 = vmatprep.subr.mxu0 0.0
    %1601 = vmatpush2.msra.mxu0 0.0
    %1602 = vmatprep.subr.mxu0 0.0
    %1603 = vmatpush2.msra.mxu0 0.0
    %1604 = vmatprep.subr.mxu0 0.0
    %1605 = vmatpush2.msra.mxu0 0.0
    %1606 = vmatprep.subr.mxu0 0.0
    %1607 = vmatpush2.msra.mxu0 0.0
    %1608 = vmatprep.subr.mxu0 0.0
    %1609 = vmatpush2.msra.mxu0 0.0
    %1610 = vmatprep.mubr.f32.mxu0 0.0
    %1611 = vmatmul.mubr.f32.gmra.mxu0 %v1535
    %v1612 = vpop.f32.mrf.mxu0
    %v1613 = vadd.f32 0.0, %v1612
    %v1614 = vpop.f32.mrf.mxu0
    %1615 = vmatprep.mubr.f32.mxu0 0.0
    %1616 = vmatmul.mubr.f32.gmra.mxu0 %v1538
    %v1617 = vpop.f32.mrf.mxu0
    %v1618 = vadd.f32 0.0, %v1617
    %v1619 = vpop.f32.mrf.mxu0
    %1620 = vmatprep.mubr.f32.mxu0 0.0
    %1621 = vmatmul.mubr.f32.gmra.mxu0 %v1541
    %v1622 = vpop.f32.mrf.mxu0
    %v1623 = vadd.f32 0.0, %v1622
    %v1624 = vpop.f32.mrf.mxu0
    %1625 = vmatprep.mubr.f32.mxu0 0.0
    %1626 = vmatmul.mubr.f32.gmra.mxu0 %v1544
    %v1627 = vpop.f32.mrf.mxu0
    %v1628 = vadd.f32 0.0, %v1627
    %v1629 = vpop.f32.mrf.mxu0
    %1630 = vdwg.mxu0
    %v1631 = vld [vmem:[%s13 + $0x20] sm:$0xff]
    %v1632 = vld [vmem:[%s13 + $0x28] sm:$0xff]
    %v1634 = vsel %vm614, %v1613, 0
    %v1637 = vsel %vm614, %v1618, 0
    %v1640 = vsel %vm614, %v1623, 0
    %v1643 = vsel %vm614, %v1628, 0
    %1645 = vmatprep.subr.mxu0 0.0
    %1646 = vmatpush1.msra.mxu0 0.0
    %1647 = vmatprep.subr.mxu0 0.0
    %1648 = vmatpush1.msra.mxu0 0.0
    %1649 = vmatprep.subr.mxu0 0.0
    %1650 = vmatpush1.msra.mxu0 0.0
    %1651 = vmatprep.subr.mxu0 0.0
    %1652 = vmatpush1.msra.mxu0 0.0
    %1653 = vmatprep.subr.mxu0 0.0
    %1654 = vmatpush1.msra.mxu0 0.0
    %1655 = vmatprep.subr.mxu0 0.0
    %1656 = vmatpush1.msra.mxu0 0.0
    %1657 = vmatprep.subr.mxu0 0.0
    %1658 = vmatpush1.msra.mxu0 0.0
    %1659 = vmatprep.subr.mxu0 0.0
    %1660 = vmatpush1.msra.mxu0 0.0
    %1661 = vmatprep.subr.mxu0 0.0
    %1662 = vmatpush1.msra.mxu0 0.0
    %1663 = vmatprep.subr.mxu0 0.0
    %1664 = vmatpush1.msra.mxu0 0.0
    %1665 = vmatprep.subr.mxu0 0.0
    %1666 = vmatpush1.msra.mxu0 0.0
    %1667 = vmatprep.subr.mxu0 0.0
    %1668 = vmatpush1.msra.mxu0 0.0
    %1669 = vmatprep.subr.mxu0 0.0
    %1670 = vmatpush1.msra.mxu0 0.0
    %1671 = vmatprep.subr.mxu0 0.0
    %1672 = vmatpush1.msra.mxu0 0.0
    %1673 = vmatprep.subr.mxu0 0.0
    %1674 = vmatpush1.msra.mxu0 %v1632
    %1675 = vmatprep.subr.mxu0 0.0
    %1676 = vmatpush1.msra.mxu0 %v1631
    %1677 = vmatprep.subr.mxu0 0.0
    %1678 = vmatpush2.msra.mxu0 0.0
    %1679 = vmatprep.subr.mxu0 0.0
    %1680 = vmatpush2.msra.mxu0 0.0
    %1681 = vmatprep.subr.mxu0 0.0
    %1682 = vmatpush2.msra.mxu0 0.0
    %1683 = vmatprep.subr.mxu0 0.0
    %1684 = vmatpush2.msra.mxu0 0.0
    %1685 = vmatprep.subr.mxu0 0.0
    %1686 = vmatpush2.msra.mxu0 0.0
    %1687 = vmatprep.subr.mxu0 0.0
    %1688 = vmatpush2.msra.mxu0 0.0
    %1689 = vmatprep.subr.mxu0 0.0
    %1690 = vmatpush2.msra.mxu0 0.0
    %1691 = vmatprep.subr.mxu0 0.0
    %1692 = vmatpush2.msra.mxu0 0.0
    %1693 = vmatprep.subr.mxu0 0.0
    %1694 = vmatpush2.msra.mxu0 0.0
    %1695 = vmatprep.subr.mxu0 0.0
    %1696 = vmatpush2.msra.mxu0 0.0
    %1697 = vmatprep.subr.mxu0 0.0
    %1698 = vmatpush2.msra.mxu0 0.0
    %1699 = vmatprep.subr.mxu0 0.0
    %1700 = vmatpush2.msra.mxu0 0.0
    %1701 = vmatprep.subr.mxu0 0.0
    %1702 = vmatpush2.msra.mxu0 0.0
    %1703 = vmatprep.subr.mxu0 0.0
    %1704 = vmatpush2.msra.mxu0 0.0
    %1705 = vmatprep.subr.mxu0 0.0
    %1706 = vmatpush2.msra.mxu0 0.0
    %1707 = vmatprep.subr.mxu0 0.0
    %1708 = vmatpush2.msra.mxu0 0.0
    %1709 = vmatprep.mubr.f32.mxu0 0.0
    %1710 = vmatmul.mubr.f32.gmra.mxu0 %v1634
    %v1711 = vpop.f32.mrf.mxu0
    %v1712 = vadd.f32 0.0, %v1711
    %v1713 = vpop.f32.mrf.mxu0
    %1714 = vmatprep.mubr.f32.mxu0 0.0
    %1715 = vmatmul.mubr.f32.gmra.mxu0 %v1637
    %v1716 = vpop.f32.mrf.mxu0
    %v1717 = vadd.f32 0.0, %v1716
    %v1718 = vpop.f32.mrf.mxu0
    %1719 = vmatprep.mubr.f32.mxu0 0.0
    %1720 = vmatmul.mubr.f32.gmra.mxu0 %v1640
    %v1721 = vpop.f32.mrf.mxu0
    %v1722 = vadd.f32 0.0, %v1721
    %v1723 = vpop.f32.mrf.mxu0
    %1724 = vmatprep.mubr.f32.mxu0 0.0
    %1725 = vmatmul.mubr.f32.gmra.mxu0 %v1643
    %v1726 = vpop.f32.mrf.mxu0
    %v1727 = vadd.f32 0.0, %v1726
    %v1728 = vpop.f32.mrf.mxu0
    %1729 = vdwg.mxu0
    %v1730 = vadd.f32 %v1335, %v1712
    %v1731 = vadd.f32 %v1340, %v1717
    %v1732 = vadd.f32 %v1345, %v1722
    %v1733 = vadd.f32 %v1350, %v1727
    %1734 = vrot.lane.b32.xlu0 %v396, 80
    %v1735 = vpop.permute.xlu0 %1734
    %1736 = vrot.lane.b32.xlu0 %v401, 80
    %v1737 = vpop.permute.xlu0 %1736
    %1738 = vrot.lane.b32.xlu0 %v406, 80
    %v1739 = vpop.permute.xlu0 %1738
    %1740 = vrot.lane.b32.xlu0 %v411, 80
    %v1741 = vpop.permute.xlu0 %1740
    %1742 = vrot.lane.b32.xlu0 %v496, 80
    %v1743 = vpop.permute.xlu0 %1742
    %1744 = vrot.lane.b32.xlu0 %v501, 80
    %v1745 = vpop.permute.xlu0 %1744
    %1746 = vrot.lane.b32.xlu0 %v506, 80
    %v1747 = vpop.permute.xlu0 %1746
    %1748 = vrot.lane.b32.xlu0 %v511, 80
    %v1749 = vpop.permute.xlu0 %1748
    %v1750 = vsel %vm614, %v1735, 0
    %v1752 = vsel %vm614, %v1737, 0
    %v1754 = vsel %vm614, %v1739, 0
    %v1756 = vsel %vm614, %v1741, 0
    %v1758 = vsel %vm614, %v1743, 0
    %v1760 = vsel %vm614, %v1745, 0
    %v1762 = vsel %vm614, %v1747, 0
    %v1764 = vsel %vm614, %v1749, 0
    %1766 = vmatprep.subr.mxu0 0.0
    %1767 = vmatpush1.xpose.msra.mxu0 0.0
    %1768 = vmatprep.subr.mxu0 0.0
    %1769 = vmatpush1.xpose.msra.mxu0 0.0
    %1770 = vmatprep.subr.mxu0 0.0
    %1771 = vmatpush1.xpose.msra.mxu0 0.0
    %1772 = vmatprep.subr.mxu0 0.0
    %1773 = vmatpush1.xpose.msra.mxu0 0.0
    %1774 = vmatprep.subr.mxu0 0.0
    %1775 = vmatpush1.xpose.msra.mxu0 0.0
    %1776 = vmatprep.subr.mxu0 0.0
    %1777 = vmatpush1.xpose.msra.mxu0 0.0
    %1778 = vmatprep.subr.mxu0 0.0
    %1779 = vmatpush1.xpose.msra.mxu0 0.0
    %1780 = vmatprep.subr.mxu0 0.0
    %1781 = vmatpush1.xpose.msra.mxu0 0.0
    %1782 = vmatprep.subr.mxu0 0.0
    %1783 = vmatpush1.xpose.msra.mxu0 0.0
    %1784 = vmatprep.subr.mxu0 0.0
    %1785 = vmatpush1.xpose.msra.mxu0 0.0
    %1786 = vmatprep.subr.mxu0 0.0
    %1787 = vmatpush1.xpose.msra.mxu0 0.0
    %1788 = vmatprep.subr.mxu0 0.0
    %1789 = vmatpush1.xpose.msra.mxu0 0.0
    %1790 = vmatprep.subr.mxu0 0.0
    %1791 = vmatpush1.xpose.msra.mxu0 %v1764
    %1792 = vmatprep.subr.mxu0 0.0
    %1793 = vmatpush1.xpose.msra.mxu0 %v1762
    %1794 = vmatprep.subr.mxu0 0.0
    %1795 = vmatpush1.xpose.msra.mxu0 %v1760
    %1796 = vmatprep.subr.mxu0 0.0
    %1797 = vmatpush1.xpose.msra.mxu0 %v1758
    %1798 = vmatprep.subr.mxu0 0.0
    %1799 = vmatpush2.xpose.msra.mxu0 0.0
    %1800 = vmatprep.subr.mxu0 0.0
    %1801 = vmatpush2.xpose.msra.mxu0 0.0
    %1802 = vmatprep.subr.mxu0 0.0
    %1803 = vmatpush2.xpose.msra.mxu0 0.0
    %1804 = vmatprep.subr.mxu0 0.0
    %1805 = vmatpush2.xpose.msra.mxu0 0.0
    %1806 = vmatprep.subr.mxu0 0.0
    %1807 = vmatpush2.xpose.msra.mxu0 0.0
    %1808 = vmatprep.subr.mxu0 0.0
    %1809 = vmatpush2.xpose.msra.mxu0 0.0
    %1810 = vmatprep.subr.mxu0 0.0
    %1811 = vmatpush2.xpose.msra.mxu0 0.0
    %1812 = vmatprep.subr.mxu0 0.0
    %1813 = vmatpush2.xpose.msra.mxu0 0.0
    %1814 = vmatprep.subr.mxu0 0.0
    %1815 = vmatpush2.xpose.msra.mxu0 0.0
    %1816 = vmatprep.subr.mxu0 0.0
    %1817 = vmatpush2.xpose.msra.mxu0 0.0
    %1818 = vmatprep.subr.mxu0 0.0
    %1819 = vmatpush2.xpose.msra.mxu0 0.0
    %1820 = vmatprep.subr.mxu0 0.0
    %1821 = vmatpush2.xpose.msra.mxu0 0.0
    %1822 = vmatprep.subr.mxu0 0.0
    %1823 = vmatpush2.xpose.msra.mxu0 0.0
    %1824 = vmatprep.subr.mxu0 0.0
    %1825 = vmatpush2.xpose.msra.mxu0 0.0
    %1826 = vmatprep.subr.mxu0 0.0
    %1827 = vmatpush2.xpose.msra.mxu0 0.0
    %1828 = vmatprep.subr.mxu0 0.0
    %1829 = vmatpush2.xpose.msra.mxu0 0.0
    %1830 = vmatprep.mubr.f32.mxu0 0.0
    %1831 = vmatmul.mubr.f32.gmra.mxu0 %v1750
    %v1832 = vpop.f32.mrf.mxu0
    %v1833 = vadd.f32 0.0, %v1832
    %v1834 = vpop.f32.mrf.mxu0
    %1835 = vmatprep.mubr.f32.mxu0 0.0
    %1836 = vmatmul.mubr.f32.gmra.mxu0 %v1752
    %v1837 = vpop.f32.mrf.mxu0
    %v1838 = vadd.f32 0.0, %v1837
    %v1839 = vpop.f32.mrf.mxu0
    %1840 = vmatprep.mubr.f32.mxu0 0.0
    %1841 = vmatmul.mubr.f32.gmra.mxu0 %v1754
    %v1842 = vpop.f32.mrf.mxu0
    %v1843 = vadd.f32 0.0, %v1842
    %v1844 = vpop.f32.mrf.mxu0
    %1845 = vmatprep.mubr.f32.mxu0 0.0
    %1846 = vmatmul.mubr.f32.gmra.mxu0 %v1756
    %v1847 = vpop.f32.mrf.mxu0
    %v1848 = vadd.f32 0.0, %v1847
    %v1849 = vpop.f32.mrf.mxu0
    %1850 = vdwg.mxu0
    %v1851 = vmul.f32 %v1833, 0.25
    %v1852 = vmul.f32 %v1838, 0.25
    %v1853 = vmul.f32 %v1843, 0.25
    %v1854 = vmul.f32 %v1848, 0.25
    %v1855 = vadd.f32 %v1851, %v68
    %v1856 = vadd.f32 %v1852, %v69
    %v1857 = vadd.f32 %v1853, %v70
    %v1858 = vadd.f32 %v1854, %v71
    %v1859 = vsel %vm124, %v1855, -inf
    %1860 = vmax.xlane.f32.xlu0 %v1859
    %v1861 = vpop.xlane.xlu0 %1860
    %v1862 = vsel %vm124, %v1856, -inf
    %1863 = vmax.xlane.f32.xlu0 %v1862
    %v1864 = vpop.xlane.xlu0 %1863
    %v1865 = vsel %vm124, %v1857, -inf
    %1866 = vmax.xlane.f32.xlu0 %v1865
    %v1867 = vpop.xlane.xlu0 %1866
    %v1868 = vsel %vm124, %v1858, -inf
    %1869 = vmax.xlane.f32.xlu0 %v1868
    %v1870 = vpop.xlane.xlu0 %1869
    %v1871 = vsub.f32 %v1855, %v1861
    %v1872 = vsub.f32 %v1856, %v1864
    %v1873 = vsub.f32 %v1857, %v1867
    %v1874 = vsub.f32 %v1858, %v1870
    %v1875 = vmul.f32 %v1871, 1.442695
    %v1876 = vpow.pop %v1875
    %v1877 = vmul.f32 %v1872, 1.442695
    %v1878 = vpow.pop %v1877
    %v1879 = vmul.f32 %v1873, 1.442695
    %v1880 = vpow.pop %v1879
    %v1881 = vmul.f32 %v1874, 1.442695
    %v1882 = vpow.pop %v1881
    %v1883 = vsel %vm124, %v1876, 0.0
    %1884 = vadd.xlane.f32.xlu0 %v1883
    %v1885 = vpop.xlane.xlu0 %1884
    %v1886 = vsel %vm124, %v1878, 0.0
    %1887 = vadd.xlane.f32.xlu0 %v1886
    %v1888 = vpop.xlane.xlu0 %1887
    %v1889 = vsel %vm124, %v1880, 0.0
    %1890 = vadd.xlane.f32.xlu0 %v1889
    %v1891 = vpop.xlane.xlu0 %1890
    %v1892 = vsel %vm124, %v1882, 0.0
    %1893 = vadd.xlane.f32.xlu0 %v1892
    %v1894 = vpop.xlane.xlu0 %1893
    %v1895 = vrcp.pop %v1885
    %v1896 = vmul.f32 %v1876, %v1895
    %v1897 = vrcp.pop %v1888
    %v1898 = vmul.f32 %v1878, %v1897
    %v1899 = vrcp.pop %v1891
    %v1900 = vmul.f32 %v1880, %v1899
    %v1901 = vrcp.pop %v1894
    %v1902 = vmul.f32 %v1882, %v1901
    %1903 = vrot.lane.b32.xlu0 %v596, 80
    %v1904 = vpop.permute.xlu0 %1903
    %1905 = vrot.lane.b32.xlu0 %v601, 80
    %v1906 = vpop.permute.xlu0 %1905
    %1907 = vrot.lane.b32.xlu0 %v606, 80
    %v1908 = vpop.permute.xlu0 %1907
    %1909 = vrot.lane.b32.xlu0 %v611, 80
    %v1910 = vpop.permute.xlu0 %1909
    %v1916 = vsel %vm124, %v1896, 0
    %v1919 = vsel %vm124, %v1898, 0
    %v1922 = vsel %vm124, %v1900, 0
    %v1925 = vsel %vm124, %v1902, 0
    %1927 = vmatprep.subr.mxu0 0.0
    %1928 = vmatpush1.msra.mxu0 0.0
    %1929 = vmatprep.subr.mxu0 0.0
    %1930 = vmatpush1.msra.mxu0 0.0
    %1931 = vmatprep.subr.mxu0 0.0
    %1932 = vmatpush1.msra.mxu0 0.0
    %1933 = vmatprep.subr.mxu0 0.0
    %1934 = vmatpush1.msra.mxu0 0.0
    %1935 = vmatprep.subr.mxu0 0.0
    %1936 = vmatpush1.msra.mxu0 0.0
    %1937 = vmatprep.subr.mxu0 0.0
    %1938 = vmatpush1.msra.mxu0 0.0
    %1939 = vmatprep.subr.mxu0 0.0
    %1940 = vmatpush1.msra.mxu0 0.0
    %1941 = vmatprep.subr.mxu0 0.0
    %1942 = vmatpush1.msra.mxu0 0.0
    %1943 = vmatprep.subr.mxu0 0.0
    %1944 = vmatpush1.msra.mxu0 0.0
    %1945 = vmatprep.subr.mxu0 0.0
    %1946 = vmatpush1.msra.mxu0 0.0
    %1947 = vmatprep.subr.mxu0 0.0
    %1948 = vmatpush1.msra.mxu0 0.0
    %1949 = vmatprep.subr.mxu0 0.0
    %1950 = vmatpush1.msra.mxu0 0.0
    %1951 = vmatprep.subr.mxu0 0.0
    %1952 = vmatpush1.msra.mxu0 %v1910
    %1953 = vmatprep.subr.mxu0 0.0
    %1954 = vmatpush1.msra.mxu0 %v1908
    %1955 = vmatprep.subr.mxu0 0.0
    %1956 = vmatpush1.msra.mxu0 %v1906
    %1957 = vmatprep.subr.mxu0 0.0
    %1958 = vmatpush1.msra.mxu0 %v1904
    %1959 = vmatprep.subr.mxu0 0.0
    %1960 = vmatpush2.msra.mxu0 0.0
    %1961 = vmatprep.subr.mxu0 0.0
    %1962 = vmatpush2.msra.mxu0 0.0
    %1963 = vmatprep.subr.mxu0 0.0
    %1964 = vmatpush2.msra.mxu0 0.0
    %1965 = vmatprep.subr.mxu0 0.0
    %1966 = vmatpush2.msra.mxu0 0.0
    %1967 = vmatprep.subr.mxu0 0.0
    %1968 = vmatpush2.msra.mxu0 0.0
    %1969 = vmatprep.subr.mxu0 0.0
    %1970 = vmatpush2.msra.mxu0 0.0
    %1971 = vmatprep.subr.mxu0 0.0
    %1972 = vmatpush2.msra.mxu0 0.0
    %1973 = vmatprep.subr.mxu0 0.0
    %1974 = vmatpush2.msra.mxu0 0.0
    %1975 = vmatprep.subr.mxu0 0.0
    %1976 = vmatpush2.msra.mxu0 0.0
    %1977 = vmatprep.subr.mxu0 0.0
    %1978 = vmatpush2.msra.mxu0 0.0
    %1979 = vmatprep.subr.mxu0 0.0
    %1980 = vmatpush2.msra.mxu0 0.0
    %1981 = vmatprep.subr.mxu0 0.0
    %1982 = vmatpush2.msra.mxu0 0.0
    %1983 = vmatprep.subr.mxu0 0.0
    %1984 = vmatpush2.msra.mxu0 0.0
    %1985 = vmatprep.subr.mxu0 0.0
    %1986 = vmatpush2.msra.mxu0 0.0
    %1987 = vmatprep.subr.mxu0 0.0
    %1988 = vmatpush2.msra.mxu0 0.0
    %1989 = vmatprep.subr.mxu0 0.0
    %1990 = vmatpush2.msra.mxu0 0.0
    %1991 = vmatprep.mubr.f32.mxu0 0.0
    %1992 = vmatmul.mubr.f32.gmra.mxu0 %v1916
    %v1993 = vpop.f32.mrf.mxu0
    %v1994 = vadd.f32 0.0, %v1993
    %v1995 = vpop.f32.mrf.mxu0
    %1996 = vmatprep.mubr.f32.mxu0 0.0
    %1997 = vmatmul.mubr.f32.gmra.mxu0 %v1919
    %v1998 = vpop.f32.mrf.mxu0
    %v1999 = vadd.f32 0.0, %v1998
    %v2000 = vpop.f32.mrf.mxu0
    %2001 = vmatprep.mubr.f32.mxu0 0.0
    %2002 = vmatmul.mubr.f32.gmra.mxu0 %v1922
    %v2003 = vpop.f32.mrf.mxu0
    %v2004 = vadd.f32 0.0, %v2003
    %v2005 = vpop.f32.mrf.mxu0
    %2006 = vmatprep.mubr.f32.mxu0 0.0
    %2007 = vmatmul.mubr.f32.gmra.mxu0 %v1925
    %v2008 = vpop.f32.mrf.mxu0
    %v2009 = vadd.f32 0.0, %v2008
    %v2010 = vpop.f32.mrf.mxu0
    %2011 = vdwg.mxu0
    %v2012 = vld [vmem:[%s13 + $0x30] sm:$0xff]
    %v2013 = vld [vmem:[%s13 + $0x38] sm:$0xff]
    %v2015 = vsel %vm614, %v1994, 0
    %v2018 = vsel %vm614, %v1999, 0
    %v2021 = vsel %vm614, %v2004, 0
    %v2024 = vsel %vm614, %v2009, 0
    %2026 = vmatprep.subr.mxu0 0.0
    %2027 = vmatpush1.msra.mxu0 0.0
    %2028 = vmatprep.subr.mxu0 0.0
    %2029 = vmatpush1.msra.mxu0 0.0
    %2030 = vmatprep.subr.mxu0 0.0
    %2031 = vmatpush1.msra.mxu0 0.0
    %2032 = vmatprep.subr.mxu0 0.0
    %2033 = vmatpush1.msra.mxu0 0.0
    %2034 = vmatprep.subr.mxu0 0.0
    %2035 = vmatpush1.msra.mxu0 0.0
    %2036 = vmatprep.subr.mxu0 0.0
    %2037 = vmatpush1.msra.mxu0 0.0
    %2038 = vmatprep.subr.mxu0 0.0
    %2039 = vmatpush1.msra.mxu0 0.0
    %2040 = vmatprep.subr.mxu0 0.0
    %2041 = vmatpush1.msra.mxu0 0.0
    %2042 = vmatprep.subr.mxu0 0.0
    %2043 = vmatpush1.msra.mxu0 0.0
    %2044 = vmatprep.subr.mxu0 0.0
    %2045 = vmatpush1.msra.mxu0 0.0
    %2046 = vmatprep.subr.mxu0 0.0
    %2047 = vmatpush1.msra.mxu0 0.0
    %2048 = vmatprep.subr.mxu0 0.0
    %2049 = vmatpush1.msra.mxu0 0.0
    %2050 = vmatprep.subr.mxu0 0.0
    %2051 = vmatpush1.msra.mxu0 0.0
    %2052 = vmatprep.subr.mxu0 0.0
    %2053 = vmatpush1.msra.mxu0 0.0
    %2054 = vmatprep.subr.mxu0 0.0
    %2055 = vmatpush1.msra.mxu0 %v2013
    %2056 = vmatprep.subr.mxu0 0.0
    %2057 = vmatpush1.msra.mxu0 %v2012
    %2058 = vmatprep.subr.mxu0 0.0
    %2059 = vmatpush2.msra.mxu0 0.0
    %2060 = vmatprep.subr.mxu0 0.0
    %2061 = vmatpush2.msra.mxu0 0.0
    %2062 = vmatprep.subr.mxu0 0.0
    %2063 = vmatpush2.msra.mxu0 0.0
    %2064 = vmatprep.subr.mxu0 0.0
    %2065 = vmatpush2.msra.mxu0 0.0
    %2066 = vmatprep.subr.mxu0 0.0
    %2067 = vmatpush2.msra.mxu0 0.0
    %2068 = vmatprep.subr.mxu0 0.0
    %2069 = vmatpush2.msra.mxu0 0.0
    %2070 = vmatprep.subr.mxu0 0.0
    %2071 = vmatpush2.msra.mxu0 0.0
    %2072 = vmatprep.subr.mxu0 0.0
    %2073 = vmatpush2.msra.mxu0 0.0
    %2074 = vmatprep.subr.mxu0 0.0
    %2075 = vmatpush2.msra.mxu0 0.0
    %2076 = vmatprep.subr.mxu0 0.0
    %2077 = vmatpush2.msra.mxu0 0.0
    %2078 = vmatprep.subr.mxu0 0.0
    %2079 = vmatpush2.msra.mxu0 0.0
    %2080 = vmatprep.subr.mxu0 0.0
    %2081 = vmatpush2.msra.mxu0 0.0
    %2082 = vmatprep.subr.mxu0 0.0
    %2083 = vmatpush2.msra.mxu0 0.0
    %2084 = vmatprep.subr.mxu0 0.0
    %2085 = vmatpush2.msra.mxu0 0.0
    %2086 = vmatprep.subr.mxu0 0.0
    %2087 = vmatpush2.msra.mxu0 0.0
    %2088 = vmatprep.subr.mxu0 0.0
    %2089 = vmatpush2.msra.mxu0 0.0
    %2090 = vmatprep.mubr.f32.mxu0 0.0
    %2091 = vmatmul.mubr.f32.gmra.mxu0 %v2015
    %v2092 = vpop.f32.mrf.mxu0
    %v2093 = vadd.f32 0.0, %v2092
    %v2094 = vpop.f32.mrf.mxu0
    %2095 = vmatprep.mubr.f32.mxu0 0.0
    %2096 = vmatmul.mubr.f32.gmra.mxu0 %v2018
    %v2097 = vpop.f32.mrf.mxu0
    %v2098 = vadd.f32 0.0, %v2097
    %v2099 = vpop.f32.mrf.mxu0
    %2100 = vmatprep.mubr.f32.mxu0 0.0
    %2101 = vmatmul.mubr.f32.gmra.mxu0 %v2021
    %v2102 = vpop.f32.mrf.mxu0
    %v2103 = vadd.f32 0.0, %v2102
    %v2104 = vpop.f32.mrf.mxu0
    %2105 = vmatprep.mubr.f32.mxu0 0.0
    %2106 = vmatmul.mubr.f32.gmra.mxu0 %v2024
    %v2107 = vpop.f32.mrf.mxu0
    %v2108 = vadd.f32 0.0, %v2107
    %v2109 = vpop.f32.mrf.mxu0
    %2110 = vdwg.mxu0
    %v2111 = vadd.f32 %v1730, %v2093
    %v2112 = vadd.f32 %v1731, %v2098
    %v2113 = vadd.f32 %v1732, %v2103
    %v2114 = vadd.f32 %v1733, %v2108
    %v2115 = vld [vmem:[%s14] sm:$0x1]
    %v2117 = vlaneseq
    %v2118 = vshrl.u32 %v2117, 7
    %v2119 = vsub.s32 0, %v2118
    %v2120 = vrot.slane %v2115, %v2119
    %v2122 = vadd.f32 %v2111, %v2120
    %v2123 = vadd.f32 %v2112, %v2120
    %v2124 = vadd.f32 %v2113, %v2120
    %v2125 = vadd.f32 %v2114, %v2120
    %v2126 = vmul.f32 %v86, %v2122
    %v2127 = vmul.f32 %v87, %v2123
    %v2128 = vmul.f32 %v88, %v2124
    %v2129 = vmul.f32 %v89, %v2125
    %v2130 = vadd.f32 %v236, %v2126
    %v2131 = vadd.f32 %v237, %v2127
    %v2132 = vadd.f32 %v238, %v2128
    %v2133 = vadd.f32 %v239, %v2129
    %v2134 = vsel %vm240, %v2130, 0.0
    %2135 = vadd.xlane.f32.xlu0 %v2134
    %v2136 = vpop.xlane.xlu0 %2135
    %v2137 = vsel %vm240, %v2131, 0.0
    %2138 = vadd.xlane.f32.xlu0 %v2137
    %v2139 = vpop.xlane.xlu0 %2138
    %v2140 = vsel %vm240, %v2132, 0.0
    %2141 = vadd.xlane.f32.xlu0 %v2140
    %v2142 = vpop.xlane.xlu0 %2141
    %v2143 = vsel %vm240, %v2133, 0.0
    %2144 = vadd.xlane.f32.xlu0 %v2143
    %v2145 = vpop.xlane.xlu0 %2144
    %v2146 = vmul.f32 %v2136, %v253
    %v2147 = vmul.f32 %v2139, %v253
    %v2148 = vmul.f32 %v2142, %v253
    %v2149 = vmul.f32 %v2145, %v253
    %v2150 = vsub.f32 %v2130, %v2146
    %v2151 = vsub.f32 %v2131, %v2147
    %v2152 = vsub.f32 %v2132, %v2148
    %v2153 = vsub.f32 %v2133, %v2149
    %v2154 = vmul.f32 %v2150, %v2150
    %v2155 = vmul.f32 %v2151, %v2151
    %v2156 = vmul.f32 %v2152, %v2152
    %v2157 = vmul.f32 %v2153, %v2153
    %v2158 = vsel %vm240, %v2154, 0.0
    %2159 = vadd.xlane.f32.xlu0 %v2158
    %v2160 = vpop.xlane.xlu0 %2159
    %v2161 = vsel %vm240, %v2155, 0.0
    %2162 = vadd.xlane.f32.xlu0 %v2161
    %v2163 = vpop.xlane.xlu0 %2162
    %v2164 = vsel %vm240, %v2156, 0.0
    %2165 = vadd.xlane.f32.xlu0 %v2164
    %v2166 = vpop.xlane.xlu0 %2165
    %v2167 = vsel %vm240, %v2157, 0.0
    %2168 = vadd.xlane.f32.xlu0 %v2167
    %v2169 = vpop.xlane.xlu0 %2168
    %v2170 = vmul.f32 %v2160, %v253
    %v2171 = vmul.f32 %v2163, %v253
    %v2172 = vmul.f32 %v2166, %v253
    %v2173 = vmul.f32 %v2169, %v253
    %v2174 = vadd.f32 %v2170, 1e-06
    %v2175 = vadd.f32 %v2171, 1e-06
    %v2176 = vadd.f32 %v2172, 1e-06
    %v2177 = vadd.f32 %v2173, 1e-06
    %v2178 = vrsqrt.pop %v2174
    %v2179 = vrsqrt.pop %v2175
    %v2180 = vrsqrt.pop %v2176
    %v2181 = vrsqrt.pop %v2177
    %v2182 = vmul.f32 %v2150, %v2178
    %v2183 = vmul.f32 %v2151, %v2179
    %v2184 = vmul.f32 %v2152, %v2180
    %v2185 = vmul.f32 %v2153, %v2181
    %v2186 = vmul.f32 %v2182, %v100
    %v2187 = vmul.f32 %v2183, %v101
    %v2188 = vmul.f32 %v2184, %v102
    %v2189 = vmul.f32 %v2185, %v103
    %v2190 = vadd.f32 %v2186, %v91
    %v2191 = vadd.f32 %v2187, %v92
    %v2192 = vadd.f32 %v2188, %v93
    %v2193 = vadd.f32 %v2189, %v94
    %v2194 = vld [vmem:[%s15] sm:$0xff]
    %v2195 = vld [vmem:[%s15 + $0x8] sm:$0xff]
    %v2196 = vld [vmem:[%s15 + $0x10] sm:$0xff]
    %v2197 = vld [vmem:[%s15 + $0x18] sm:$0xff]
    %v2198 = vld [vmem:[%s15 + $0x20] sm:$0xff]
    %v2199 = vld [vmem:[%s15 + $0x28] sm:$0xff]
    %v2200 = vld [vmem:[%s15 + $0x30] sm:$0xff]
    %v2201 = vld [vmem:[%s15 + $0x38] sm:$0xff]
    %v2202 = vld [vmem:[%s15 + $0x40] sm:$0xff]
    %v2203 = vld [vmem:[%s15 + $0x48] sm:$0xff]
    %v2204 = vld [vmem:[%s15 + $0x50] sm:$0xff]
    %v2205 = vld [vmem:[%s15 + $0x58] sm:$0xff]
    %v2206 = vld [vmem:[%s15 + $0x60] sm:$0xff]
    %v2207 = vld [vmem:[%s15 + $0x68] sm:$0xff]
    %v2208 = vld [vmem:[%s15 + $0x70] sm:$0xff]
    %v2209 = vld [vmem:[%s15 + $0x78] sm:$0xff]
    %v2210 = vld [vmem:[%s16] sm:$0x3]
    %v2212 = vlaneseq
    %v2213 = vshrl.u32 %v2212, 7
    %v2214 = vsub.s32 0, %v2213
    %v2215 = vrot.slane %v2210, %v2214
    %v2216 = vlaneseq
    %v2217 = vshrl.u32 %v2216, 7
    %v2218 = vsub.s32 1, %v2217
    %v2219 = vrot.slane %v2210, %v2218
    %v2223 = vsel %vm240, %v2190, 0
    %v2226 = vsel %vm240, %v2191, 0
    %v2229 = vsel %vm240, %v2192, 0
    %v2232 = vsel %vm240, %v2193, 0
    %2234 = vmatprep.subr.mxu0 0.0
    %2235 = vmatpush1.msra.mxu0 0.0
    %2236 = vmatprep.subr.mxu0 0.0
    %2237 = vmatpush1.msra.mxu0 0.0
    %2238 = vmatprep.subr.mxu0 0.0
    %2239 = vmatpush1.msra.mxu0 0.0
    %2240 = vmatprep.subr.mxu0 0.0
    %2241 = vmatpush1.msra.mxu0 0.0
    %2242 = vmatprep.subr.mxu0 0.0
    %2243 = vmatpush1.msra.mxu0 0.0
    %2244 = vmatprep.subr.mxu0 0.0
    %2245 = vmatpush1.msra.mxu0 0.0
    %2246 = vmatprep.subr.mxu0 0.0
    %2247 = vmatpush1.msra.mxu0 0.0
    %2248 = vmatprep.subr.mxu0 0.0
    %2249 = vmatpush1.msra.mxu0 0.0
    %2250 = vmatprep.subr.mxu0 %v2209
    %2251 = vmatpush1.msra.mxu0 %v2208
    %2252 = vmatprep.subr.mxu0 %v2207
    %2253 = vmatpush1.msra.mxu0 %v2206
    %2254 = vmatprep.subr.mxu0 %v2205
    %2255 = vmatpush1.msra.mxu0 %v2204
    %2256 = vmatprep.subr.mxu0 %v2203
    %2257 = vmatpush1.msra.mxu0 %v2202
    %2258 = vmatprep.subr.mxu0 %v2201
    %2259 = vmatpush1.msra.mxu0 %v2200
    %2260 = vmatprep.subr.mxu0 %v2199
    %2261 = vmatpush1.msra.mxu0 %v2198
    %2262 = vmatprep.subr.mxu0 %v2197
    %2263 = vmatpush1.msra.mxu0 %v2196
    %2264 = vmatprep.subr.mxu0 %v2195
    %2265 = vmatpush1.msra.mxu0 %v2194
    %2266 = vmatprep.subr.mxu0 0.0
    %2267 = vmatpush2.msra.mxu0 0.0
    %2268 = vmatprep.subr.mxu0 0.0
    %2269 = vmatpush2.msra.mxu0 0.0
    %2270 = vmatprep.subr.mxu0 0.0
    %2271 = vmatpush2.msra.mxu0 0.0
    %2272 = vmatprep.subr.mxu0 0.0
    %2273 = vmatpush2.msra.mxu0 0.0
    %2274 = vmatprep.subr.mxu0 0.0
    %2275 = vmatpush2.msra.mxu0 0.0
    %2276 = vmatprep.subr.mxu0 0.0
    %2277 = vmatpush2.msra.mxu0 0.0
    %2278 = vmatprep.subr.mxu0 0.0
    %2279 = vmatpush2.msra.mxu0 0.0
    %2280 = vmatprep.subr.mxu0 0.0
    %2281 = vmatpush2.msra.mxu0 0.0
    %2282 = vmatprep.subr.mxu0 0.0
    %2283 = vmatpush2.msra.mxu0 0.0
    %2284 = vmatprep.subr.mxu0 0.0
    %2285 = vmatpush2.msra.mxu0 0.0
    %2286 = vmatprep.subr.mxu0 0.0
    %2287 = vmatpush2.msra.mxu0 0.0
    %2288 = vmatprep.subr.mxu0 0.0
    %2289 = vmatpush2.msra.mxu0 0.0
    %2290 = vmatprep.subr.mxu0 0.0
    %2291 = vmatpush2.msra.mxu0 0.0
    %2292 = vmatprep.subr.mxu0 0.0
    %2293 = vmatpush2.msra.mxu0 0.0
    %2294 = vmatprep.subr.mxu0 0.0
    %2295 = vmatpush2.msra.mxu0 0.0
    %2296 = vmatprep.subr.mxu0 0.0
    %2297 = vmatpush2.msra.mxu0 0.0
    %2298 = vmatprep.mubr.f32.mxu0 0.0
    %2299 = vmatmul.mubr.f32.gmra.mxu0 %v2223
    %v2300 = vpop.f32.mrf.mxu0
    %v2301 = vadd.f32 %v2215, %v2300
    %v2302 = vpop.f32.mrf.mxu0
    %v2303 = vadd.f32 %v2219, %v2302
    %2304 = vmatprep.mubr.f32.mxu0 0.0
    %2305 = vmatmul.mubr.f32.gmra.mxu0 %v2226
    %v2306 = vpop.f32.mrf.mxu0
    %v2307 = vadd.f32 %v2215, %v2306
    %v2308 = vpop.f32.mrf.mxu0
    %v2309 = vadd.f32 %v2219, %v2308
    %2310 = vmatprep.mubr.f32.mxu0 0.0
    %2311 = vmatmul.mubr.f32.gmra.mxu0 %v2229
    %v2312 = vpop.f32.mrf.mxu0
    %v2313 = vadd.f32 %v2215, %v2312
    %v2314 = vpop.f32.mrf.mxu0
    %v2315 = vadd.f32 %v2219, %v2314
    %2316 = vmatprep.mubr.f32.mxu0 0.0
    %2317 = vmatmul.mubr.f32.gmra.mxu0 %v2232
    %v2318 = vpop.f32.mrf.mxu0
    %v2319 = vadd.f32 %v2215, %v2318
    %v2320 = vpop.f32.mrf.mxu0
    %v2321 = vadd.f32 %v2219, %v2320
    %2322 = vdwg.mxu0
    %v2323 = vmul.f32 %v2301, 0.5
    %v2324 = vmul.f32 %v2303, 0.5
    %v2325 = vmul.f32 %v2307, 0.5
    %v2326 = vmul.f32 %v2309, 0.5
    %v2327 = vmul.f32 %v2313, 0.5
    %v2328 = vmul.f32 %v2315, 0.5
    %v2329 = vmul.f32 %v2319, 0.5
    %v2330 = vmul.f32 %v2321, 0.5
    %v2331 = vmul.f32 %v2301, 0.044715
    %v2332 = vmul.f32 %v2303, 0.044715
    %v2333 = vmul.f32 %v2307, 0.044715
    %v2334 = vmul.f32 %v2309, 0.044715
    %v2335 = vmul.f32 %v2313, 0.044715
    %v2336 = vmul.f32 %v2315, 0.044715
    %v2337 = vmul.f32 %v2319, 0.044715
    %v2338 = vmul.f32 %v2321, 0.044715
    %v2339 = vmul.f32 %v2331, %v2301
    %v2340 = vmul.f32 %v2332, %v2303
    %v2341 = vmul.f32 %v2333, %v2307
    %v2342 = vmul.f32 %v2334, %v2309
    %v2343 = vmul.f32 %v2335, %v2313
    %v2344 = vmul.f32 %v2336, %v2315
    %v2345 = vmul.f32 %v2337, %v2319
    %v2346 = vmul.f32 %v2338, %v2321
    %v2347 = vmul.f32 %v2339, %v2301
    %v2348 = vmul.f32 %v2340, %v2303
    %v2349 = vmul.f32 %v2341, %v2307
    %v2350 = vmul.f32 %v2342, %v2309
    %v2351 = vmul.f32 %v2343, %v2313
    %v2352 = vmul.f32 %v2344, %v2315
    %v2353 = vmul.f32 %v2345, %v2319
    %v2354 = vmul.f32 %v2346, %v2321
    %v2355 = vadd.f32 %v2301, %v2347
    %v2356 = vadd.f32 %v2303, %v2348
    %v2357 = vadd.f32 %v2307, %v2349
    %v2358 = vadd.f32 %v2309, %v2350
    %v2359 = vadd.f32 %v2313, %v2351
    %v2360 = vadd.f32 %v2315, %v2352
    %v2361 = vadd.f32 %v2319, %v2353
    %v2362 = vadd.f32 %v2321, %v2354
    %v2363 = vmul.f32 %v2355, 0.7978846
    %v2364 = vmul.f32 %v2356, 0.7978846
    %v2365 = vmul.f32 %v2357, 0.7978846
    %v2366 = vmul.f32 %v2358, 0.7978846
    %v2367 = vmul.f32 %v2359, 0.7978846
    %v2368 = vmul.f32 %v2360, 0.7978846
    %v2369 = vmul.f32 %v2361, 0.7978846
    %v2370 = vmul.f32 %v2362, 0.7978846
    %v2371 = vtanh.pop %v2363
    %v2372 = vtanh.pop %v2364
    %v2373 = vtanh.pop %v2365
    %v2374 = vtanh.pop %v2366
    %v2375 = vtanh.pop %v2367
    %v2376 = vtanh.pop %v2368
    %v2377 = vtanh.pop %v2369
    %v2378 = vtanh.pop %v2370
    %v2379 = vadd.f32 %v2371, 1.0
    %v2380 = vadd.f32 %v2372, 1.0
    %v2381 = vadd.f32 %v2373, 1.0
    %v2382 = vadd.f32 %v2374, 1.0
    %v2383 = vadd.f32 %v2375, 1.0
    %v2384 = vadd.f32 %v2376, 1.0
    %v2385 = vadd.f32 %v2377, 1.0
    %v2386 = vadd.f32 %v2378, 1.0
    %v2387 = vmul.f32 %v2323, %v2379
    %v2388 = vmul.f32 %v2324, %v2380
    %v2389 = vmul.f32 %v2325, %v2381
    %v2390 = vmul.f32 %v2326, %v2382
    %v2391 = vmul.f32 %v2327, %v2383
    %v2392 = vmul.f32 %v2328, %v2384
    %v2393 = vmul.f32 %v2329, %v2385
    %v2394 = vmul.f32 %v2330, %v2386
    %v2395 = vld [vmem:[%s17] sm:$0xff]
    %v2396 = vld [vmem:[%s17 + $0x8] sm:$0xff]
    %v2397 = vld [vmem:[%s17 + $0x10] sm:$0xff]
    %v2398 = vld [vmem:[%s17 + $0x18] sm:$0xff]
    %v2399 = vld [vmem:[%s17 + $0x20] sm:$0xff]
    %v2400 = vld [vmem:[%s17 + $0x28] sm:$0xff]
    %v2401 = vld [vmem:[%s17 + $0x30] sm:$0xff]
    %v2402 = vld [vmem:[%s17 + $0x38] sm:$0xff]
    %v2403 = vld [vmem:[%s17 + $0x40] sm:$0xff]
    %v2404 = vld [vmem:[%s17 + $0x48] sm:$0xff]
    %v2405 = vld [vmem:[%s17 + $0x50] sm:$0xff]
    %v2406 = vld [vmem:[%s17 + $0x58] sm:$0xff]
    %v2407 = vld [vmem:[%s17 + $0x60] sm:$0xff]
    %v2408 = vld [vmem:[%s17 + $0x68] sm:$0xff]
    %v2409 = vld [vmem:[%s17 + $0x70] sm:$0xff]
    %v2410 = vld [vmem:[%s17 + $0x78] sm:$0xff]
    %v2411 = vld [vmem:[%s17 + $0x80] sm:$0xff]
    %v2412 = vld [vmem:[%s17 + $0x88] sm:$0xff]
    %v2413 = vld [vmem:[%s17 + $0x90] sm:$0xff]
    %v2414 = vld [vmem:[%s17 + $0x98] sm:$0xff]
    %v2415 = vld [vmem:[%s17 + $0xa0] sm:$0xff]
    %v2416 = vld [vmem:[%s17 + $0xa8] sm:$0xff]
    %v2417 = vld [vmem:[%s17 + $0xb0] sm:$0xff]
    %v2418 = vld [vmem:[%s17 + $0xb8] sm:$0xff]
    %v2419 = vld [vmem:[%s17 + $0xc0] sm:$0xff]
    %v2420 = vld [vmem:[%s17 + $0xc8] sm:$0xff]
    %v2421 = vld [vmem:[%s17 + $0xd0] sm:$0xff]
    %v2422 = vld [vmem:[%s17 + $0xd8] sm:$0xff]
    %v2423 = vld [vmem:[%s17 + $0xe0] sm:$0xff]
    %v2424 = vld [vmem:[%s17 + $0xe8] sm:$0xff]
    %v2425 = vld [vmem:[%s17 + $0xf0] sm:$0xff]
    %v2426 = vld [vmem:[%s17 + $0xf8] sm:$0xff]
    %v2427 = vld [vmem:[%s18] sm:$0x1]
    %v2429 = vlaneseq
    %v2430 = vshrl.u32 %v2429, 7
    %v2431 = vsub.s32 0, %v2430
    %v2432 = vrot.slane %v2427, %v2431
    %2434 = vmatprep.subr.mxu0 0.0
    %2435 = vmatpush1.msra.mxu0 %v2410
    %2436 = vmatprep.subr.mxu0 0.0
    %2437 = vmatpush1.msra.mxu0 %v2409
    %2438 = vmatprep.subr.mxu0 0.0
    %2439 = vmatpush1.msra.mxu0 %v2408
    %2440 = vmatprep.subr.mxu0 0.0
    %2441 = vmatpush1.msra.mxu0 %v2407
    %2442 = vmatprep.subr.mxu0 0.0
    %2443 = vmatpush1.msra.mxu0 %v2406
    %2444 = vmatprep.subr.mxu0 0.0
    %2445 = vmatpush1.msra.mxu0 %v2405
    %2446 = vmatprep.subr.mxu0 0.0
    %2447 = vmatpush1.msra.mxu0 %v2404
    %2448 = vmatprep.subr.mxu0 0.0
    %2449 = vmatpush1.msra.mxu0 %v2403
    %2450 = vmatprep.subr.mxu0 0.0
    %2451 = vmatpush1.msra.mxu0 %v2402
    %2452 = vmatprep.subr.mxu0 0.0
    %2453 = vmatpush1.msra.mxu0 %v2401
    %2454 = vmatprep.subr.mxu0 0.0
    %2455 = vmatpush1.msra.mxu0 %v2400
    %2456 = vmatprep.subr.mxu0 0.0
    %2457 = vmatpush1.msra.mxu0 %v2399
    %2458 = vmatprep.subr.mxu0 0.0
    %2459 = vmatpush1.msra.mxu0 %v2398
    %2460 = vmatprep.subr.mxu0 0.0
    %2461 = vmatpush1.msra.mxu0 %v2397
    %2462 = vmatprep.subr.mxu0 0.0
    %2463 = vmatpush1.msra.mxu0 %v2396
    %2464 = vmatprep.subr.mxu0 0.0
    %2465 = vmatpush1.msra.mxu0 %v2395
    %2466 = vmatprep.subr.mxu0 0.0
    %2467 = vmatpush2.msra.mxu0 %v2426
    %2468 = vmatprep.subr.mxu0 0.0
    %2469 = vmatpush2.msra.mxu0 %v2425
    %2470 = vmatprep.subr.mxu0 0.0
    %2471 = vmatpush2.msra.mxu0 %v2424
    %2472 = vmatprep.subr.mxu0 0.0
    %2473 = vmatpush2.msra.mxu0 %v2423
    %2474 = vmatprep.subr.mxu0 0.0
    %2475 = vmatpush2.msra.mxu0 %v2422
    %2476 = vmatprep.subr.mxu0 0.0
    %2477 = vmatpush2.msra.mxu0 %v2421
    %2478 = vmatprep.subr.mxu0 0.0
    %2479 = vmatpush2.msra.mxu0 %v2420
    %2480 = vmatprep.subr.mxu0 0.0
    %2481 = vmatpush2.msra.mxu0 %v2419
    %2482 = vmatprep.subr.mxu0 0.0
    %2483 = vmatpush2.msra.mxu0 %v2418
    %2484 = vmatprep.subr.mxu0 0.0
    %2485 = vmatpush2.msra.mxu0 %v2417
    %2486 = vmatprep.subr.mxu0 0.0
    %2487 = vmatpush2.msra.mxu0 %v2416
    %2488 = vmatprep.subr.mxu0 0.0
    %2489 = vmatpush2.msra.mxu0 %v2415
    %2490 = vmatprep.subr.mxu0 0.0
    %2491 = vmatpush2.msra.mxu0 %v2414
    %2492 = vmatprep.subr.mxu0 0.0
    %2493 = vmatpush2.msra.mxu0 %v2413
    %2494 = vmatprep.subr.mxu0 0.0
    %2495 = vmatpush2.msra.mxu0 %v2412
    %2496 = vmatprep.subr.mxu0 0.0
    %2497 = vmatpush2.msra.mxu0 %v2411
    %2498 = vmatprep.mubr.f32.mxu0 %v2388
    %2499 = vmatmul.mubr.f32.gmra.mxu0 %v2387
    %v2500 = vpop.f32.mrf.mxu0
    %v2501 = vadd.f32 %v2432, %v2500
    %v2502 = vpop.f32.mrf.mxu0
    %2503 = vmatprep.mubr.f32.mxu0 %v2390
    %2504 = vmatmul.mubr.f32.gmra.mxu0 %v2389
    %v2505 = vpop.f32.mrf.mxu0
    %v2506 = vadd.f32 %v2432, %v2505
    %v2507 = vpop.f32.mrf.mxu0
    %2508 = vmatprep.mubr.f32.mxu0 %v2392
    %2509 = vmatmul.mubr.f32.gmra.mxu0 %v2391
    %v2510 = vpop.f32.mrf.mxu0
    %v2511 = vadd.f32 %v2432, %v2510
    %v2512 = vpop.f32.mrf.mxu0
    %2513 = vmatprep.mubr.f32.mxu0 %v2394
    %2514 = vmatmul.mubr.f32.gmra.mxu0 %v2393
    %v2515 = vpop.f32.mrf.mxu0
    %v2516 = vadd.f32 %v2432, %v2515
    %v2517 = vpop.f32.mrf.mxu0
    %2518 = vdwg.mxu0
    %v2519 = vmul.f32 %v105, %v2501
    %v2520 = vmul.f32 %v106, %v2506
    %v2521 = vmul.f32 %v107, %v2511
    %v2522 = vmul.f32 %v108, %v2516
    %v2523 = vadd.f32 %v2130, %v2519
    %v2524 = vadd.f32 %v2131, %v2520
    %v2525 = vadd.f32 %v2132, %v2521
    %v2526 = vadd.f32 %v2133, %v2522
    %v2527 = vmul.f32 %v2523, 0.03125
    %v2528 = vmul.f32 %v2524, 0.03125
    %v2529 = vmul.f32 %v2525, 0.03125
    %v2530 = vmul.f32 %v2526, 0.03125
    %v2531 = vadd.f32 %v236, %v2527
    %v2532 = vadd.f32 %v237, %v2528
    %v2533 = vadd.f32 %v238, %v2529
    %v2534 = vadd.f32 %v239, %v2530
    %v2535 = vsel %vm240, %v2531, 0.0
    %2536 = vadd.xlane.f32.xlu0 %v2535
    %v2537 = vpop.xlane.xlu0 %2536
    %v2538 = vsel %vm240, %v2532, 0.0
    %2539 = vadd.xlane.f32.xlu0 %v2538
    %v2540 = vpop.xlane.xlu0 %2539
    %v2541 = vsel %vm240, %v2533, 0.0
    %2542 = vadd.xlane.f32.xlu0 %v2541
    %v2543 = vpop.xlane.xlu0 %2542
    %v2544 = vsel %vm240, %v2534, 0.0
    %2545 = vadd.xlane.f32.xlu0 %v2544
    %v2546 = vpop.xlane.xlu0 %2545
    %v2547 = vmul.f32 %v2537, %v253
    %v2548 = vmul.f32 %v2540, %v253
    %v2549 = vmul.f32 %v2543, %v253
    %v2550 = vmul.f32 %v2546, %v253
    %v2551 = vsub.f32 %v2531, %v2547
    %v2552 = vsub.f32 %v2532, %v2548
    %v2553 = vsub.f32 %v2533, %v2549
    %v2554 = vsub.f32 %v2534, %v2550
    %v2555 = vmul.f32 %v2551, %v2551
    %v2556 = vmul.f32 %v2552, %v2552
    %v2557 = vmul.f32 %v2553, %v2553
    %v2558 = vmul.f32 %v2554, %v2554
    %v2559 = vsel %vm240, %v2555, 0.0
    %2560 = vadd.xlane.f32.xlu0 %v2559
    %v2561 = vpop.xlane.xlu0 %2560
    %v2562 = vsel %vm240, %v2556, 0.0
    %2563 = vadd.xlane.f32.xlu0 %v2562
    %v2564 = vpop.xlane.xlu0 %2563
    %v2565 = vsel %vm240, %v2557, 0.0
    %2566 = vadd.xlane.f32.xlu0 %v2565
    %v2567 = vpop.xlane.xlu0 %2566
    %v2568 = vsel %vm240, %v2558, 0.0
    %2569 = vadd.xlane.f32.xlu0 %v2568
    %v2570 = vpop.xlane.xlu0 %2569
    %v2571 = vmul.f32 %v2561, %v253
    %v2572 = vmul.f32 %v2564, %v253
    %v2573 = vmul.f32 %v2567, %v253
    %v2574 = vmul.f32 %v2570, %v253
    %v2575 = vadd.f32 %v2571, 1e-06
    %v2576 = vadd.f32 %v2572, 1e-06
    %v2577 = vadd.f32 %v2573, 1e-06
    %v2578 = vadd.f32 %v2574, 1e-06
    %v2579 = vrsqrt.pop %v2575
    %v2580 = vrsqrt.pop %v2576
    %v2581 = vrsqrt.pop %v2577
    %v2582 = vrsqrt.pop %v2578
    %v2583 = vmul.f32 %v2551, %v2579
    %v2584 = vmul.f32 %v2552, %v2580
    %v2585 = vmul.f32 %v2553, %v2581
    %v2586 = vmul.f32 %v2554, %v2582
    %v2587 = vmul.f32 %v2583, %v81
    %v2588 = vmul.f32 %v2584, %v82
    %v2589 = vmul.f32 %v2585, %v83
    %v2590 = vmul.f32 %v2586, %v84
    %v2591 = vadd.f32 %v2587, %v72
    %v2592 = vadd.f32 %v2588, %v73
    %v2593 = vadd.f32 %v2589, %v74
    %v2594 = vadd.f32 %v2590, %v75
    %v2595 = vld [vmem:[%s7] sm:$0xff]
    %v2596 = vld [vmem:[%s7 + $0x8] sm:$0xff]
    %v2597 = vld [vmem:[%s7 + $0x10] sm:$0xff]
    %v2598 = vld [vmem:[%s7 + $0x18] sm:$0xff]
    %v2599 = vld [vmem:[%s7 + $0x20] sm:$0xff]
    %v2600 = vld [vmem:[%s7 + $0x28] sm:$0xff]
    %v2601 = vld [vmem:[%s7 + $0x30] sm:$0xff]
    %v2602 = vld [vmem:[%s7 + $0x38] sm:$0xff]
    %v2603 = vld [vmem:[%s8] sm:$0x1]
    %v2605 = vlaneseq
    %v2606 = vshrl.u32 %v2605, 7
    %v2607 = vsub.s32 0, %v2606
    %v2608 = vrot.slane %v2603, %v2607
    %v2611 = vsel %vm240, %v2591, 0
    %v2614 = vsel %vm240, %v2592, 0
    %v2617 = vsel %vm240, %v2593, 0
    %v2620 = vsel %vm240, %v2594, 0
    %2622 = vmatprep.subr.mxu0 0.0
    %2623 = vmatpush1.msra.mxu0 0.0
    %2624 = vmatprep.subr.mxu0 0.0
    %2625 = vmatpush1.msra.mxu0 0.0
    %2626 = vmatprep.subr.mxu0 0.0
    %2627 = vmatpush1.msra.mxu0 0.0
    %2628 = vmatprep.subr.mxu0 0.0
    %2629 = vmatpush1.msra.mxu0 0.0
    %2630 = vmatprep.subr.mxu0 0.0
    %2631 = vmatpush1.msra.mxu0 0.0
    %2632 = vmatprep.subr.mxu0 0.0
    %2633 = vmatpush1.msra.mxu0 0.0
    %2634 = vmatprep.subr.mxu0 0.0
    %2635 = vmatpush1.msra.mxu0 0.0
    %2636 = vmatprep.subr.mxu0 0.0
    %2637 = vmatpush1.msra.mxu0 0.0
    %2638 = vmatprep.subr.mxu0 0.0
    %2639 = vmatpush1.msra.mxu0 %v2602
    %2640 = vmatprep.subr.mxu0 0.0
    %2641 = vmatpush1.msra.mxu0 %v2601
    %2642 = vmatprep.subr.mxu0 0.0
    %2643 = vmatpush1.msra.mxu0 %v2600
    %2644 = vmatprep.subr.mxu0 0.0
    %2645 = vmatpush1.msra.mxu0 %v2599
    %2646 = vmatprep.subr.mxu0 0.0
    %2647 = vmatpush1.msra.mxu0 %v2598
    %2648 = vmatprep.subr.mxu0 0.0
    %2649 = vmatpush1.msra.mxu0 %v2597
    %2650 = vmatprep.subr.mxu0 0.0
    %2651 = vmatpush1.msra.mxu0 %v2596
    %2652 = vmatprep.subr.mxu0 0.0
    %2653 = vmatpush1.msra.mxu0 %v2595
    %2654 = vmatprep.subr.mxu0 0.0
    %2655 = vmatpush2.msra.mxu0 0.0
    %2656 = vmatprep.subr.mxu0 0.0
    %2657 = vmatpush2.msra.mxu0 0.0
    %2658 = vmatprep.subr.mxu0 0.0
    %2659 = vmatpush2.msra.mxu0 0.0
    %2660 = vmatprep.subr.mxu0 0.0
    %2661 = vmatpush2.msra.mxu0 0.0
    %2662 = vmatprep.subr.mxu0 0.0
    %2663 = vmatpush2.msra.mxu0 0.0
    %2664 = vmatprep.subr.mxu0 0.0
    %2665 = vmatpush2.msra.mxu0 0.0
    %2666 = vmatprep.subr.mxu0 0.0
    %2667 = vmatpush2.msra.mxu0 0.0
    %2668 = vmatprep.subr.mxu0 0.0
    %2669 = vmatpush2.msra.mxu0 0.0
    %2670 = vmatprep.subr.mxu0 0.0
    %2671 = vmatpush2.msra.mxu0 0.0
    %2672 = vmatprep.subr.mxu0 0.0
    %2673 = vmatpush2.msra.mxu0 0.0
    %2674 = vmatprep.subr.mxu0 0.0
    %2675 = vmatpush2.msra.mxu0 0.0
    %2676 = vmatprep.subr.mxu0 0.0
    %2677 = vmatpush2.msra.mxu0 0.0
    %2678 = vmatprep.subr.mxu0 0.0
    %2679 = vmatpush2.msra.mxu0 0.0
    %2680 = vmatprep.subr.mxu0 0.0
    %2681 = vmatpush2.msra.mxu0 0.0
    %2682 = vmatprep.subr.mxu0 0.0
    %2683 = vmatpush2.msra.mxu0 0.0
    %2684 = vmatprep.subr.mxu0 0.0
    %2685 = vmatpush2.msra.mxu0 0.0
    %2686 = vmatprep.mubr.f32.mxu0 0.0
    %2687 = vmatmul.mubr.f32.gmra.mxu0 %v2611
    %v2688 = vpop.f32.mrf.mxu0
    %v2689 = vadd.f32 %v2608, %v2688
    %v2690 = vpop.f32.mrf.mxu0
    %2691 = vmatprep.mubr.f32.mxu0 0.0
    %2692 = vmatmul.mubr.f32.gmra.mxu0 %v2614
    %v2693 = vpop.f32.mrf.mxu0
    %v2694 = vadd.f32 %v2608, %v2693
    %v2695 = vpop.f32.mrf.mxu0
    %2696 = vmatprep.mubr.f32.mxu0 0.0
    %2697 = vmatmul.mubr.f32.gmra.mxu0 %v2617
    %v2698 = vpop.f32.mrf.mxu0
    %v2699 = vadd.f32 %v2608, %v2698
    %v2700 = vpop.f32.mrf.mxu0
    %2701 = vmatprep.mubr.f32.mxu0 0.0
    %2702 = vmatmul.mubr.f32.gmra.mxu0 %v2620
    %v2703 = vpop.f32.mrf.mxu0
    %v2704 = vadd.f32 %v2608, %v2703
    %v2705 = vpop.f32.mrf.mxu0
    %2706 = vdwg.mxu0
    %v2707 = vld [vmem:[%s9] sm:$0xff]
    %v2708 = vld [vmem:[%s9 + $0x8] sm:$0xff]
    %v2709 = vld [vmem:[%s9 + $0x10] sm:$0xff]
    %v2710 = vld [vmem:[%s9 + $0x18] sm:$0xff]
    %v2711 = vld [vmem:[%s9 + $0x20] sm:$0xff]
    %v2712 = vld [vmem:[%s9 + $0x28] sm:$0xff]
    %v2713 = vld [vmem:[%s9 + $0x30] sm:$0xff]
    %v2714 = vld [vmem:[%s9 + $0x38] sm:$0xff]
    %v2715 = vld [vmem:[%s10] sm:$0x1]
    %v2717 = vlaneseq
    %v2718 = vshrl.u32 %v2717, 7
    %v2719 = vsub.s32 0, %v2718
    %v2720 = vrot.slane %v2715, %v2719
    %2722 = vmatprep.subr.mxu0 0.0
    %2723 = vmatpush1.msra.mxu0 0.0
    %2724 = vmatprep.subr.mxu0 0.0
    %2725 = vmatpush1.msra.mxu0 0.0
    %2726 = vmatprep.subr.mxu0 0.0
    %2727 = vmatpush1.msra.mxu0 0.0
    %2728 = vmatprep.subr.mxu0 0.0
    %2729 = vmatpush1.msra.mxu0 0.0
    %2730 = vmatprep.subr.mxu0 0.0
    %2731 = vmatpush1.msra.mxu0 0.0
    %2732 = vmatprep.subr.mxu0 0.0
    %2733 = vmatpush1.msra.mxu0 0.0
    %2734 = vmatprep.subr.mxu0 0.0
    %2735 = vmatpush1.msra.mxu0 0.0
    %2736 = vmatprep.subr.mxu0 0.0
    %2737 = vmatpush1.msra.mxu0 0.0
    %2738 = vmatprep.subr.mxu0 0.0
    %2739 = vmatpush1.msra.mxu0 %v2714
    %2740 = vmatprep.subr.mxu0 0.0
    %2741 = vmatpush1.msra.mxu0 %v2713
    %2742 = vmatprep.subr.mxu0 0.0
    %2743 = vmatpush1.msra.mxu0 %v2712
    %2744 = vmatprep.subr.mxu0 0.0
    %2745 = vmatpush1.msra.mxu0 %v2711
    %2746 = vmatprep.subr.mxu0 0.0
    %2747 = vmatpush1.msra.mxu0 %v2710
    %2748 = vmatprep.subr.mxu0 0.0
    %2749 = vmatpush1.msra.mxu0 %v2709
    %2750 = vmatprep.subr.mxu0 0.0
    %2751 = vmatpush1.msra.mxu0 %v2708
    %2752 = vmatprep.subr.mxu0 0.0
    %2753 = vmatpush1.msra.mxu0 %v2707
    %2754 = vmatprep.subr.mxu0 0.0
    %2755 = vmatpush2.msra.mxu0 0.0
    %2756 = vmatprep.subr.mxu0 0.0
    %2757 = vmatpush2.msra.mxu0 0.0
    %2758 = vmatprep.subr.mxu0 0.0
    %2759 = vmatpush2.msra.mxu0 0.0
    %2760 = vmatprep.subr.mxu0 0.0
    %2761 = vmatpush2.msra.mxu0 0.0
    %2762 = vmatprep.subr.mxu0 0.0
    %2763 = vmatpush2.msra.mxu0 0.0
    %2764 = vmatprep.subr.mxu0 0.0
    %2765 = vmatpush2.msra.mxu0 0.0
    %2766 = vmatprep.subr.mxu0 0.0
    %2767 = vmatpush2.msra.mxu0 0.0
    %2768 = vmatprep.subr.mxu0 0.0
    %2769 = vmatpush2.msra.mxu0 0.0
    %2770 = vmatprep.subr.mxu0 0.0
    %2771 = vmatpush2.msra.mxu0 0.0
    %2772 = vmatprep.subr.mxu0 0.0
    %2773 = vmatpush2.msra.mxu0 0.0
    %2774 = vmatprep.subr.mxu0 0.0
    %2775 = vmatpush2.msra.mxu0 0.0
    %2776 = vmatprep.subr.mxu0 0.0
    %2777 = vmatpush2.msra.mxu0 0.0
    %2778 = vmatprep.subr.mxu0 0.0
    %2779 = vmatpush2.msra.mxu0 0.0
    %2780 = vmatprep.subr.mxu0 0.0
    %2781 = vmatpush2.msra.mxu0 0.0
    %2782 = vmatprep.subr.mxu0 0.0
    %2783 = vmatpush2.msra.mxu0 0.0
    %2784 = vmatprep.subr.mxu0 0.0
    %2785 = vmatpush2.msra.mxu0 0.0
    %2786 = vmatprep.mubr.f32.mxu0 0.0
    %2787 = vmatmul.mubr.f32.gmra.mxu0 %v2611
    %v2788 = vpop.f32.mrf.mxu0
    %v2789 = vadd.f32 %v2720, %v2788
    %v2790 = vpop.f32.mrf.mxu0
    %2791 = vmatprep.mubr.f32.mxu0 0.0
    %2792 = vmatmul.mubr.f32.gmra.mxu0 %v2614
    %v2793 = vpop.f32.mrf.mxu0
    %v2794 = vadd.f32 %v2720, %v2793
    %v2795 = vpop.f32.mrf.mxu0
    %2796 = vmatprep.mubr.f32.mxu0 0.0
    %2797 = vmatmul.mubr.f32.gmra.mxu0 %v2617
    %v2798 = vpop.f32.mrf.mxu0
    %v2799 = vadd.f32 %v2720, %v2798
    %v2800 = vpop.f32.mrf.mxu0
    %2801 = vmatprep.mubr.f32.mxu0 0.0
    %2802 = vmatmul.mubr.f32.gmra.mxu0 %v2620
    %v2803 = vpop.f32.mrf.mxu0
    %v2804 = vadd.f32 %v2720, %v2803
    %v2805 = vpop.f32.mrf.mxu0
    %2806 = vdwg.mxu0
    %v2807 = vld [vmem:[%s11] sm:$0xff]
    %v2808 = vld [vmem:[%s11 + $0x8] sm:$0xff]
    %v2809 = vld [vmem:[%s11 + $0x10] sm:$0xff]
    %v2810 = vld [vmem:[%s11 + $0x18] sm:$0xff]
    %v2811 = vld [vmem:[%s11 + $0x20] sm:$0xff]
    %v2812 = vld [vmem:[%s11 + $0x28] sm:$0xff]
    %v2813 = vld [vmem:[%s11 + $0x30] sm:$0xff]
    %v2814 = vld [vmem:[%s11 + $0x38] sm:$0xff]
    %v2815 = vld [vmem:[%s12] sm:$0x1]
    %v2817 = vlaneseq
    %v2818 = vshrl.u32 %v2817, 7
    %v2819 = vsub.s32 0, %v2818
    %v2820 = vrot.slane %v2815, %v2819
    %2822 = vmatprep.subr.mxu0 0.0
    %2823 = vmatpush1.msra.mxu0 0.0
    %2824 = vmatprep.subr.mxu0 0.0
    %2825 = vmatpush1.msra.mxu0 0.0
    %2826 = vmatprep.subr.mxu0 0.0
    %2827 = vmatpush1.msra.mxu0 0.0
    %2828 = vmatprep.subr.mxu0 0.0
    %2829 = vmatpush1.msra.mxu0 0.0
    %2830 = vmatprep.subr.mxu0 0.0
    %2831 = vmatpush1.msra.mxu0 0.0
    %2832 = vmatprep.subr.mxu0 0.0
    %2833 = vmatpush1.msra.mxu0 0.0
    %2834 = vmatprep.subr.mxu0 0.0
    %2835 = vmatpush1.msra.mxu0 0.0
    %2836 = vmatprep.subr.mxu0 0.0
    %2837 = vmatpush1.msra.mxu0 0.0
    %2838 = vmatprep.subr.mxu0 0.0
    %2839 = vmatpush1.msra.mxu0 %v2814
    %2840 = vmatprep.subr.mxu0 0.0
    %2841 = vmatpush1.msra.mxu0 %v2813
    %2842 = vmatprep.subr.mxu0 0.0
    %2843 = vmatpush1.msra.mxu0 %v2812
    %2844 = vmatprep.subr.mxu0 0.0
    %2845 = vmatpush1.msra.mxu0 %v2811
    %2846 = vmatprep.subr.mxu0 0.0
    %2847 = vmatpush1.msra.mxu0 %v2810
    %2848 = vmatprep.subr.mxu0 0.0
    %2849 = vmatpush1.msra.mxu0 %v2809
    %2850 = vmatprep.subr.mxu0 0.0
    %2851 = vmatpush1.msra.mxu0 %v2808
    %2852 = vmatprep.subr.mxu0 0.0
    %2853 = vmatpush1.msra.mxu0 %v2807
    %2854 = vmatprep.subr.mxu0 0.0
    %2855 = vmatpush2.msra.mxu0 0.0
    %2856 = vmatprep.subr.mxu0 0.0
    %2857 = vmatpush2.msra.mxu0 0.0
    %2858 = vmatprep.subr.mxu0 0.0
    %2859 = vmatpush2.msra.mxu0 0.0
    %2860 = vmatprep.subr.mxu0 0.0
    %2861 = vmatpush2.msra.mxu0 0.0
    %2862 = vmatprep.subr.mxu0 0.0
    %2863 = vmatpush2.msra.mxu0 0.0
    %2864 = vmatprep.subr.mxu0 0.0
    %2865 = vmatpush2.msra.mxu0 0.0
    %2866 = vmatprep.subr.mxu0 0.0
    %2867 = vmatpush2.msra.mxu0 0.0
    %2868 = vmatprep.subr.mxu0 0.0
    %2869 = vmatpush2.msra.mxu0 0.0
    %2870 = vmatprep.subr.mxu0 0.0
    %2871 = vmatpush2.msra.mxu0 0.0
    %2872 = vmatprep.subr.mxu0 0.0
    %2873 = vmatpush2.msra.mxu0 0.0
    %2874 = vmatprep.subr.mxu0 0.0
    %2875 = vmatpush2.msra.mxu0 0.0
    %2876 = vmatprep.subr.mxu0 0.0
    %2877 = vmatpush2.msra.mxu0 0.0
    %2878 = vmatprep.subr.mxu0 0.0
    %2879 = vmatpush2.msra.mxu0 0.0
    %2880 = vmatprep.subr.mxu0 0.0
    %2881 = vmatpush2.msra.mxu0 0.0
    %2882 = vmatprep.subr.mxu0 0.0
    %2883 = vmatpush2.msra.mxu0 0.0
    %2884 = vmatprep.subr.mxu0 0.0
    %2885 = vmatpush2.msra.mxu0 0.0
    %2886 = vmatprep.mubr.f32.mxu0 0.0
    %2887 = vmatmul.mubr.f32.gmra.mxu0 %v2611
    %v2888 = vpop.f32.mrf.mxu0
    %v2889 = vadd.f32 %v2820, %v2888
    %v2890 = vpop.f32.mrf.mxu0
    %2891 = vmatprep.mubr.f32.mxu0 0.0
    %2892 = vmatmul.mubr.f32.gmra.mxu0 %v2614
    %v2893 = vpop.f32.mrf.mxu0
    %v2894 = vadd.f32 %v2820, %v2893
    %v2895 = vpop.f32.mrf.mxu0
    %2896 = vmatprep.mubr.f32.mxu0 0.0
    %2897 = vmatmul.mubr.f32.gmra.mxu0 %v2617
    %v2898 = vpop.f32.mrf.mxu0
    %v2899 = vadd.f32 %v2820, %v2898
    %v2900 = vpop.f32.mrf.mxu0
    %2901 = vmatprep.mubr.f32.mxu0 0.0
    %2902 = vmatmul.mubr.f32.gmra.mxu0 %v2620
    %v2903 = vpop.f32.mrf.mxu0
    %v2904 = vadd.f32 %v2820, %v2903
    %v2905 = vpop.f32.mrf.mxu0
    %2906 = vdwg.mxu0
    %v2908 = vsel %vm614, %v2689, 0
    %v2911 = vsel %vm614, %v2694, 0
    %v2914 = vsel %vm614, %v2699, 0
    %v2917 = vsel %vm614, %v2704, 0
    %v2920 = vsel %vm614, %v2789, 0
    %v2923 = vsel %vm614, %v2794, 0
    %v2926 = vsel %vm614, %v2799, 0
    %v2929 = vsel %vm614, %v2804, 0
    %2931 = vmatprep.subr.mxu0 0.0
    %2932 = vmatpush1.xpose.msra.mxu0 0.0
    %2933 = vmatprep.subr.mxu0 0.0
    %2934 = vmatpush1.xpose.msra.mxu0 0.0
    %2935 = vmatprep.subr.mxu0 0.0
    %2936 = vmatpush1.xpose.msra.mxu0 0.0
    %2937 = vmatprep.subr.mxu0 0.0
    %2938 = vmatpush1.xpose.msra.mxu0 0.0
    %2939 = vmatprep.subr.mxu0 0.0
    %2940 = vmatpush1.xpose.msra.mxu0 0.0
    %2941 = vmatprep.subr.mxu0 0.0
    %2942 = vmatpush1.xpose.msra.mxu0 0.0
    %2943 = vmatprep.subr.mxu0 0.0
    %2944 = vmatpush1.xpose.msra.mxu0 0.0
    %2945 = vmatprep.subr.mxu0 0.0
    %2946 = vmatpush1.xpose.msra.mxu0 0.0
    %2947 = vmatprep.subr.mxu0 0.0
    %2948 = vmatpush1.xpose.msra.mxu0 0.0
    %2949 = vmatprep.subr.mxu0 0.0
    %2950 = vmatpush1.xpose.msra.mxu0 0.0
    %2951 = vmatprep.subr.mxu0 0.0
    %2952 = vmatpush1.xpose.msra.mxu0 0.0
    %2953 = vmatprep.subr.mxu0 0.0
    %2954 = vmatpush1.xpose.msra.mxu0 0.0
    %2955 = vmatprep.subr.mxu0 0.0
    %2956 = vmatpush1.xpose.msra.mxu0 %v2929
    %2957 = vmatprep.subr.mxu0 0.0
    %2958 = vmatpush1.xpose.msra.mxu0 %v2926
    %2959 = vmatprep.subr.mxu0 0.0
    %2960 = vmatpush1.xpose.msra.mxu0 %v2923
    %2961 = vmatprep.subr.mxu0 0.0
    %2962 = vmatpush1.xpose.msra.mxu0 %v2920
    %2963 = vmatprep.subr.mxu0 0.0
    %2964 = vmatpush2.xpose.msra.mxu0 0.0
    %2965 = vmatprep.subr.mxu0 0.0
    %2966 = vmatpush2.xpose.msra.mxu0 0.0
    %2967 = vmatprep.subr.mxu0 0.0
    %2968 = vmatpush2.xpose.msra.mxu0 0.0
    %2969 = vmatprep.subr.mxu0 0.0
    %2970 = vmatpush2.xpose.msra.mxu0 0.0
    %2971 = vmatprep.subr.mxu0 0.0
    %2972 = vmatpush2.xpose.msra.mxu0 0.0
    %2973 = vmatprep.subr.mxu0 0.0
    %2974 = vmatpush2.xpose.msra.mxu0 0.0
    %2975 = vmatprep.subr.mxu0 0.0
    %2976 = vmatpush2.xpose.msra.mxu0 0.0
    %2977 = vmatprep.subr.mxu0 0.0
    %2978 = vmatpush2.xpose.msra.mxu0 0.0
    %2979 = vmatprep.subr.mxu0 0.0
    %2980 = vmatpush2.xpose.msra.mxu0 0.0
    %2981 = vmatprep.subr.mxu0 0.0
    %2982 = vmatpush2.xpose.msra.mxu0 0.0
    %2983 = vmatprep.subr.mxu0 0.0
    %2984 = vmatpush2.xpose.msra.mxu0 0.0
    %2985 = vmatprep.subr.mxu0 0.0
    %2986 = vmatpush2.xpose.msra.mxu0 0.0
    %2987 = vmatprep.subr.mxu0 0.0
    %2988 = vmatpush2.xpose.msra.mxu0 0.0
    %2989 = vmatprep.subr.mxu0 0.0
    %2990 = vmatpush2.xpose.msra.mxu0 0.0
    %2991 = vmatprep.subr.mxu0 0.0
    %2992 = vmatpush2.xpose.msra.mxu0 0.0
    %2993 = vmatprep.subr.mxu0 0.0
    %2994 = vmatpush2.xpose.msra.mxu0 0.0
    %2995 = vmatprep.mubr.f32.mxu0 0.0
    %2996 = vmatmul.mubr.f32.gmra.mxu0 %v2908
    %v2997 = vpop.f32.mrf.mxu0
    %v2998 = vadd.f32 0.0, %v2997
    %v2999 = vpop.f32.mrf.mxu0
    %3000 = vmatprep.mubr.f32.mxu0 0.0
    %3001 = vmatmul.mubr.f32.gmra.mxu0 %v2911
    %v3002 = vpop.f32.mrf.mxu0
    %v3003 = vadd.f32 0.0, %v3002
    %v3004 = vpop.f32.mrf.mxu0
    %3005 = vmatprep.mubr.f32.mxu0 0.0
    %3006 = vmatmul.mubr.f32.gmra.mxu0 %v2914
    %v3007 = vpop.f32.mrf.mxu0
    %v3008 = vadd.f32 0.0, %v3007
    %v3009 = vpop.f32.mrf.mxu0
    %3010 = vmatprep.mubr.f32.mxu0 0.0
    %3011 = vmatmul.mubr.f32.gmra.mxu0 %v2917
    %v3012 = vpop.f32.mrf.mxu0
    %v3013 = vadd.f32 0.0, %v3012
    %v3014 = vpop.f32.mrf.mxu0
    %3015 = vdwg.mxu0
    %v3016 = vmul.f32 %v2998, 0.25
    %v3017 = vmul.f32 %v3003, 0.25
    %v3018 = vmul.f32 %v3008, 0.25
    %v3019 = vmul.f32 %v3013, 0.25
    %v3020 = vadd.f32 %v3016, %v68
    %v3021 = vadd.f32 %v3017, %v69
    %v3022 = vadd.f32 %v3018, %v70
    %v3023 = vadd.f32 %v3019, %v71
    %v3024 = vsel %vm124, %v3020, -inf
    %3025 = vmax.xlane.f32.xlu0 %v3024
    %v3026 = vpop.xlane.xlu0 %3025
    %v3027 = vsel %vm124, %v3021, -inf
    %3028 = vmax.xlane.f32.xlu0 %v3027
    %v3029 = vpop.xlane.xlu0 %3028
    %v3030 = vsel %vm124, %v3022, -inf
    %3031 = vmax.xlane.f32.xlu0 %v3030
    %v3032 = vpop.xlane.xlu0 %3031
    %v3033 = vsel %vm124, %v3023, -inf
    %3034 = vmax.xlane.f32.xlu0 %v3033
    %v3035 = vpop.xlane.xlu0 %3034
    %v3036 = vsub.f32 %v3020, %v3026
    %v3037 = vsub.f32 %v3021, %v3029
    %v3038 = vsub.f32 %v3022, %v3032
    %v3039 = vsub.f32 %v3023, %v3035
    %v3040 = vmul.f32 %v3036, 1.442695
    %v3041 = vpow.pop %v3040
    %v3042 = vmul.f32 %v3037, 1.442695
    %v3043 = vpow.pop %v3042
    %v3044 = vmul.f32 %v3038, 1.442695
    %v3045 = vpow.pop %v3044
    %v3046 = vmul.f32 %v3039, 1.442695
    %v3047 = vpow.pop %v3046
    %v3048 = vsel %vm124, %v3041, 0.0
    %3049 = vadd.xlane.f32.xlu0 %v3048
    %v3050 = vpop.xlane.xlu0 %3049
    %v3051 = vsel %vm124, %v3043, 0.0
    %3052 = vadd.xlane.f32.xlu0 %v3051
    %v3053 = vpop.xlane.xlu0 %3052
    %v3054 = vsel %vm124, %v3045, 0.0
    %3055 = vadd.xlane.f32.xlu0 %v3054
    %v3056 = vpop.xlane.xlu0 %3055
    %v3057 = vsel %vm124, %v3047, 0.0
    %3058 = vadd.xlane.f32.xlu0 %v3057
    %v3059 = vpop.xlane.xlu0 %3058
    %v3060 = vrcp.pop %v3050
    %v3061 = vmul.f32 %v3041, %v3060
    %v3062 = vrcp.pop %v3053
    %v3063 = vmul.f32 %v3043, %v3062
    %v3064 = vrcp.pop %v3056
    %v3065 = vmul.f32 %v3045, %v3064
    %v3066 = vrcp.pop %v3059
    %v3067 = vmul.f32 %v3047, %v3066
    %v3069 = vsel %vm124, %v3061, 0
    %v3072 = vsel %vm124, %v3063, 0
    %v3075 = vsel %vm124, %v3065, 0
    %v3078 = vsel %vm124, %v3067, 0
    %3080 = vmatprep.subr.mxu0 0.0
    %3081 = vmatpush1.msra.mxu0 0.0
    %3082 = vmatprep.subr.mxu0 0.0
    %3083 = vmatpush1.msra.mxu0 0.0
    %3084 = vmatprep.subr.mxu0 0.0
    %3085 = vmatpush1.msra.mxu0 0.0
    %3086 = vmatprep.subr.mxu0 0.0
    %3087 = vmatpush1.msra.mxu0 0.0
    %3088 = vmatprep.subr.mxu0 0.0
    %3089 = vmatpush1.msra.mxu0 0.0
    %3090 = vmatprep.subr.mxu0 0.0
    %3091 = vmatpush1.msra.mxu0 0.0
    %3092 = vmatprep.subr.mxu0 0.0
    %3093 = vmatpush1.msra.mxu0 0.0
    %3094 = vmatprep.subr.mxu0 0.0
    %3095 = vmatpush1.msra.mxu0 0.0
    %3096 = vmatprep.subr.mxu0 0.0
    %3097 = vmatpush1.msra.mxu0 0.0
    %3098 = vmatprep.subr.mxu0 0.0
    %3099 = vmatpush1.msra.mxu0 0.0
    %3100 = vmatprep.subr.mxu0 0.0
    %3101 = vmatpush1.msra.mxu0 0.0
    %3102 = vmatprep.subr.mxu0 0.0
    %3103 = vmatpush1.msra.mxu0 0.0
    %3104 = vmatprep.subr.mxu0 0.0
    %3105 = vmatpush1.msra.mxu0 %v2904
    %3106 = vmatprep.subr.mxu0 0.0
    %3107 = vmatpush1.msra.mxu0 %v2899
    %3108 = vmatprep.subr.mxu0 0.0
    %3109 = vmatpush1.msra.mxu0 %v2894
    %3110 = vmatprep.subr.mxu0 0.0
    %3111 = vmatpush1.msra.mxu0 %v2889
    %3112 = vmatprep.subr.mxu0 0.0
    %3113 = vmatpush2.msra.mxu0 0.0
    %3114 = vmatprep.subr.mxu0 0.0
    %3115 = vmatpush2.msra.mxu0 0.0
    %3116 = vmatprep.subr.mxu0 0.0
    %3117 = vmatpush2.msra.mxu0 0.0
    %3118 = vmatprep.subr.mxu0 0.0
    %3119 = vmatpush2.msra.mxu0 0.0
    %3120 = vmatprep.subr.mxu0 0.0
    %3121 = vmatpush2.msra.mxu0 0.0
    %3122 = vmatprep.subr.mxu0 0.0
    %3123 = vmatpush2.msra.mxu0 0.0
    %3124 = vmatprep.subr.mxu0 0.0
    %3125 = vmatpush2.msra.mxu0 0.0
    %3126 = vmatprep.subr.mxu0 0.0
    %3127 = vmatpush2.msra.mxu0 0.0
    %3128 = vmatprep.subr.mxu0 0.0
    %3129 = vmatpush2.msra.mxu0 0.0
    %3130 = vmatprep.subr.mxu0 0.0
    %3131 = vmatpush2.msra.mxu0 0.0
    %3132 = vmatprep.subr.mxu0 0.0
    %3133 = vmatpush2.msra.mxu0 0.0
    %3134 = vmatprep.subr.mxu0 0.0
    %3135 = vmatpush2.msra.mxu0 0.0
    %3136 = vmatprep.subr.mxu0 0.0
    %3137 = vmatpush2.msra.mxu0 0.0
    %3138 = vmatprep.subr.mxu0 0.0
    %3139 = vmatpush2.msra.mxu0 0.0
    %3140 = vmatprep.subr.mxu0 0.0
    %3141 = vmatpush2.msra.mxu0 0.0
    %3142 = vmatprep.subr.mxu0 0.0
    %3143 = vmatpush2.msra.mxu0 0.0
    %3144 = vmatprep.mubr.f32.mxu0 0.0
    %3145 = vmatmul.mubr.f32.gmra.mxu0 %v3069
    %v3146 = vpop.f32.mrf.mxu0
    %v3147 = vadd.f32 0.0, %v3146
    %v3148 = vpop.f32.mrf.mxu0
    %3149 = vmatprep.mubr.f32.mxu0 0.0
    %3150 = vmatmul.mubr.f32.gmra.mxu0 %v3072
    %v3151 = vpop.f32.mrf.mxu0
    %v3152 = vadd.f32 0.0, %v3151
    %v3153 = vpop.f32.mrf.mxu0
    %3154 = vmatprep.mubr.f32.mxu0 0.0
    %3155 = vmatmul.mubr.f32.gmra.mxu0 %v3075
    %v3156 = vpop.f32.mrf.mxu0
    %v3157 = vadd.f32 0.0, %v3156
    %v3158 = vpop.f32.mrf.mxu0
    %3159 = vmatprep.mubr.f32.mxu0 0.0
    %3160 = vmatmul.mubr.f32.gmra.mxu0 %v3078
    %v3161 = vpop.f32.mrf.mxu0
    %v3162 = vadd.f32 0.0, %v3161
    %v3163 = vpop.f32.mrf.mxu0
    %3164 = vdwg.mxu0
    %v3165 = vld [vmem:[%s13] sm:$0xff]
    %v3166 = vld [vmem:[%s13 + $0x8] sm:$0xff]
    %3167 = vrot.lane.b32.xlu0 %v2689, 112
    %v3168 = vpop.permute.xlu0 %3167
    %3169 = vrot.lane.b32.xlu0 %v2694, 112
    %v3170 = vpop.permute.xlu0 %3169
    %3171 = vrot.lane.b32.xlu0 %v2699, 112
    %v3172 = vpop.permute.xlu0 %3171
    %3173 = vrot.lane.b32.xlu0 %v2704, 112
    %v3174 = vpop.permute.xlu0 %3173
    %3175 = vrot.lane.b32.xlu0 %v2789, 112
    %v3176 = vpop.permute.xlu0 %3175
    %3177 = vrot.lane.b32.xlu0 %v2794, 112
    %v3178 = vpop.permute.xlu0 %3177
    %3179 = vrot.lane.b32.xlu0 %v2799, 112
    %v3180 = vpop.permute.xlu0 %3179
    %3181 = vrot.lane.b32.xlu0 %v2804, 112
    %v3182 = vpop.permute.xlu0 %3181
    %v3183 = vsel %vm614, %v3168, 0
    %v3185 = vsel %vm614, %v3170, 0
    %v3187 = vsel %vm614, %v3172, 0
    %v3189 = vsel %vm614, %v3174, 0
    %v3191 = vsel %vm614, %v3176, 0
    %v3193 = vsel %vm614, %v3178, 0
    %v3195 = vsel %vm614, %v3180, 0
    %v3197 = vsel %vm614, %v3182, 0
    %3199 = vmatprep.subr.mxu0 0.0
    %3200 = vmatpush1.xpose.msra.mxu0 0.0
    %3201 = vmatprep.subr.mxu0 0.0
    %3202 = vmatpush1.xpose.msra.mxu0 0.0
    %3203 = vmatprep.subr.mxu0 0.0
    %3204 = vmatpush1.xpose.msra.mxu0 0.0
    %3205 = vmatprep.subr.mxu0 0.0
    %3206 = vmatpush1.xpose.msra.mxu0 0.0
    %3207 = vmatprep.subr.mxu0 0.0
    %3208 = vmatpush1.xpose.msra.mxu0 0.0
    %3209 = vmatprep.subr.mxu0 0.0
    %3210 = vmatpush1.xpose.msra.mxu0 0.0
    %3211 = vmatprep.subr.mxu0 0.0
    %3212 = vmatpush1.xpose.msra.mxu0 0.0
    %3213 = vmatprep.subr.mxu0 0.0
    %3214 = vmatpush1.xpose.msra.mxu0 0.0
    %3215 = vmatprep.subr.mxu0 0.0
    %3216 = vmatpush1.xpose.msra.mxu0 0.0
    %3217 = vmatprep.subr.mxu0 0.0
    %3218 = vmatpush1.xpose.msra.mxu0 0.0
    %3219 = vmatprep.subr.mxu0 0.0
    %3220 = vmatpush1.xpose.msra.mxu0 0.0
    %3221 = vmatprep.subr.mxu0 0.0
    %3222 = vmatpush1.xpose.msra.mxu0 0.0
    %3223 = vmatprep.subr.mxu0 0.0
    %3224 = vmatpush1.xpose.msra.mxu0 %v3197
    %3225 = vmatprep.subr.mxu0 0.0
    %3226 = vmatpush1.xpose.msra.mxu0 %v3195
    %3227 = vmatprep.subr.mxu0 0.0
    %3228 = vmatpush1.xpose.msra.mxu0 %v3193
    %3229 = vmatprep.subr.mxu0 0.0
    %3230 = vmatpush1.xpose.msra.mxu0 %v3191
    %3231 = vmatprep.subr.mxu0 0.0
    %3232 = vmatpush2.xpose.msra.mxu0 0.0
    %3233 = vmatprep.subr.mxu0 0.0
    %3234 = vmatpush2.xpose.msra.mxu0 0.0
    %3235 = vmatprep.subr.mxu0 0.0
    %3236 = vmatpush2.xpose.msra.mxu0 0.0
    %3237 = vmatprep.subr.mxu0 0.0
    %3238 = vmatpush2.xpose.msra.mxu0 0.0
    %3239 = vmatprep.subr.mxu0 0.0
    %3240 = vmatpush2.xpose.msra.mxu0 0.0
    %3241 = vmatprep.subr.mxu0 0.0
    %3242 = vmatpush2.xpose.msra.mxu0 0.0
    %3243 = vmatprep.subr.mxu0 0.0
    %3244 = vmatpush2.xpose.msra.mxu0 0.0
    %3245 = vmatprep.subr.mxu0 0.0
    %3246 = vmatpush2.xpose.msra.mxu0 0.0
    %3247 = vmatprep.subr.mxu0 0.0
    %3248 = vmatpush2.xpose.msra.mxu0 0.0
    %3249 = vmatprep.subr.mxu0 0.0
    %3250 = vmatpush2.xpose.msra.mxu0 0.0
    %3251 = vmatprep.subr.mxu0 0.0
    %3252 = vmatpush2.xpose.msra.mxu0 0.0
    %3253 = vmatprep.subr.mxu0 0.0
    %3254 = vmatpush2.xpose.msra.mxu0 0.0
    %3255 = vmatprep.subr.mxu0 0.0
    %3256 = vmatpush2.xpose.msra.mxu0 0.0
    %3257 = vmatprep.subr.mxu0 0.0
    %3258 = vmatpush2.xpose.msra.mxu0 0.0
    %3259 = vmatprep.subr.mxu0 0.0
    %3260 = vmatpush2.xpose.msra.mxu0 0.0
    %3261 = vmatprep.subr.mxu0 0.0
    %3262 = vmatpush2.xpose.msra.mxu0 0.0
    %3263 = vmatprep.mubr.f32.mxu0 0.0
    %3264 = vmatmul.mubr.f32.gmra.mxu0 %v3183
    %v3265 = vpop.f32.mrf.mxu0
    %v3266 = vadd.f32 0.0, %v3265
    %v3267 = vpop.f32.mrf.mxu0
    %3268 = vmatprep.mubr.f32.mxu0 0.0
    %3269 = vmatmul.mubr.f32.gmra.mxu0 %v3185
    %v3270 = vpop.f32.mrf.mxu0
    %v3271 = vadd.f32 0.0, %v3270
    %v3272 = vpop.f32.mrf.mxu0
    %3273 = vmatprep.mubr.f32.mxu0 0.0
    %3274 = vmatmul.mubr.f32.gmra.mxu0 %v3187
    %v3275 = vpop.f32.mrf.mxu0
    %v3276 = vadd.f32 0.0, %v3275
    %v3277 = vpop.f32.mrf.mxu0
    %3278 = vmatprep.mubr.f32.mxu0 0.0
    %3279 = vmatmul.mubr.f32.gmra.mxu0 %v3189
    %v3280 = vpop.f32.mrf.mxu0
    %v3281 = vadd.f32 0.0, %v3280
    %v3282 = vpop.f32.mrf.mxu0
    %3283 = vdwg.mxu0
    %v3284 = vmul.f32 %v3266, 0.25
    %v3285 = vmul.f32 %v3271, 0.25
    %v3286 = vmul.f32 %v3276, 0.25
    %v3287 = vmul.f32 %v3281, 0.25
    %v3288 = vadd.f32 %v3284, %v68
    %v3289 = vadd.f32 %v3285, %v69
    %v3290 = vadd.f32 %v3286, %v70
    %v3291 = vadd.f32 %v3287, %v71
    %v3292 = vsel %vm124, %v3288, -inf
    %3293 = vmax.xlane.f32.xlu0 %v3292
    %v3294 = vpop.xlane.xlu0 %3293
    %v3295 = vsel %vm124, %v3289, -inf
    %3296 = vmax.xlane.f32.xlu0 %v3295
    %v3297 = vpop.xlane.xlu0 %3296
    %v3298 = vsel %vm124, %v3290, -inf
    %3299 = vmax.xlane.f32.xlu0 %v3298
    %v3300 = vpop.xlane.xlu0 %3299
    %v3301 = vsel %vm124, %v3291, -inf
    %3302 = vmax.xlane.f32.xlu0 %v3301
    %v3303 = vpop.xlane.xlu0 %3302
    %v3304 = vsub.f32 %v3288, %v3294
    %v3305 = vsub.f32 %v3289, %v3297
    %v3306 = vsub.f32 %v3290, %v3300
    %v3307 = vsub.f32 %v3291, %v3303
    %v3308 = vmul.f32 %v3304, 1.442695
    %v3309 = vpow.pop %v3308
    %v3310 = vmul.f32 %v3305, 1.442695
    %v3311 = vpow.pop %v3310
    %v3312 = vmul.f32 %v3306, 1.442695
    %v3313 = vpow.pop %v3312
    %v3314 = vmul.f32 %v3307, 1.442695
    %v3315 = vpow.pop %v3314
    %v3316 = vsel %vm124, %v3309, 0.0
    %3317 = vadd.xlane.f32.xlu0 %v3316
    %v3318 = vpop.xlane.xlu0 %3317
    %v3319 = vsel %vm124, %v3311, 0.0
    %3320 = vadd.xlane.f32.xlu0 %v3319
    %v3321 = vpop.xlane.xlu0 %3320
    %v3322 = vsel %vm124, %v3313, 0.0
    %3323 = vadd.xlane.f32.xlu0 %v3322
    %v3324 = vpop.xlane.xlu0 %3323
    %v3325 = vsel %vm124, %v3315, 0.0
    %3326 = vadd.xlane.f32.xlu0 %v3325
    %v3327 = vpop.xlane.xlu0 %3326
    %v3328 = vrcp.pop %v3318
    %v3329 = vmul.f32 %v3309, %v3328
    %v3330 = vrcp.pop %v3321
    %v3331 = vmul.f32 %v3311, %v3330
    %v3332 = vrcp.pop %v3324
    %v3333 = vmul.f32 %v3313, %v3332
    %v3334 = vrcp.pop %v3327
    %v3335 = vmul.f32 %v3315, %v3334
    %3340 = vrot.lane.b32.xlu0 %v2889, 112
    %v3341 = vpop.permute.xlu0 %3340
    %3342 = vrot.lane.b32.xlu0 %v2894, 112
    %v3343 = vpop.permute.xlu0 %3342
    %3344 = vrot.lane.b32.xlu0 %v2899, 112
    %v3345 = vpop.permute.xlu0 %3344
    %3346 = vrot.lane.b32.xlu0 %v2904, 112
    %v3347 = vpop.permute.xlu0 %3346
    %v3353 = vsel %vm124, %v3329, 0
    %v3356 = vsel %vm124, %v3331, 0
    %v3359 = vsel %vm124, %v3333, 0
    %v3362 = vsel %vm124, %v3335, 0
    %3364 = vmatprep.subr.mxu0 0.0
    %3365 = vmatpush1.msra.mxu0 0.0
    %3366 = vmatprep.subr.mxu0 0.0
    %3367 = vmatpush1.msra.mxu0 0.0
    %3368 = vmatprep.subr.mxu0 0.0
    %3369 = vmatpush1.msra.mxu0 0.0
    %3370 = vmatprep.subr.mxu0 0.0
    %3371 = vmatpush1.msra.mxu0 0.0
    %3372 = vmatprep.subr.mxu0 0.0
    %3373 = vmatpush1.msra.mxu0 0.0
    %3374 = vmatprep.subr.mxu0 0.0
    %3375 = vmatpush1.msra.mxu0 0.0
    %3376 = vmatprep.subr.mxu0 0.0
    %3377 = vmatpush1.msra.mxu0 0.0
    %3378 = vmatprep.subr.mxu0 0.0
    %3379 = vmatpush1.msra.mxu0 0.0
    %3380 = vmatprep.subr.mxu0 0.0
    %3381 = vmatpush1.msra.mxu0 0.0
    %3382 = vmatprep.subr.mxu0 0.0
    %3383 = vmatpush1.msra.mxu0 0.0
    %3384 = vmatprep.subr.mxu0 0.0
    %3385 = vmatpush1.msra.mxu0 0.0
    %3386 = vmatprep.subr.mxu0 0.0
    %3387 = vmatpush1.msra.mxu0 0.0
    %3388 = vmatprep.subr.mxu0 0.0
    %3389 = vmatpush1.msra.mxu0 %v3347
    %3390 = vmatprep.subr.mxu0 0.0
    %3391 = vmatpush1.msra.mxu0 %v3345
    %3392 = vmatprep.subr.mxu0 0.0
    %3393 = vmatpush1.msra.mxu0 %v3343
    %3394 = vmatprep.subr.mxu0 0.0
    %3395 = vmatpush1.msra.mxu0 %v3341
    %3396 = vmatprep.subr.mxu0 0.0
    %3397 = vmatpush2.msra.mxu0 0.0
    %3398 = vmatprep.subr.mxu0 0.0
    %3399 = vmatpush2.msra.mxu0 0.0
    %3400 = vmatprep.subr.mxu0 0.0
    %3401 = vmatpush2.msra.mxu0 0.0
    %3402 = vmatprep.subr.mxu0 0.0
    %3403 = vmatpush2.msra.mxu0 0.0
    %3404 = vmatprep.subr.mxu0 0.0
    %3405 = vmatpush2.msra.mxu0 0.0
    %3406 = vmatprep.subr.mxu0 0.0
    %3407 = vmatpush2.msra.mxu0 0.0
    %3408 = vmatprep.subr.mxu0 0.0
    %3409 = vmatpush2.msra.mxu0 0.0
    %3410 = vmatprep.subr.mxu0 0.0
    %3411 = vmatpush2.msra.mxu0 0.0
    %3412 = vmatprep.subr.mxu0 0.0
    %3413 = vmatpush2.msra.mxu0 0.0
    %3414 = vmatprep.subr.mxu0 0.0
    %3415 = vmatpush2.msra.mxu0 0.0
    %3416 = vmatprep.subr.mxu0 0.0
    %3417 = vmatpush2.msra.mxu0 0.0
    %3418 = vmatprep.subr.mxu0 0.0
    %3419 = vmatpush2.msra.mxu0 0.0
    %3420 = vmatprep.subr.mxu0 0.0
    %3421 = vmatpush2.msra.mxu0 0.0
    %3422 = vmatprep.subr.mxu0 0.0
    %3423 = vmatpush2.msra.mxu0 0.0
    %3424 = vmatprep.subr.mxu0 0.0
    %3425 = vmatpush2.msra.mxu0 0.0
    %3426 = vmatprep.subr.mxu0 0.0
    %3427 = vmatpush2.msra.mxu0 0.0
    %3428 = vmatprep.mubr.f32.mxu0 0.0
    %3429 = vmatmul.mubr.f32.gmra.mxu0 %v3353
    %v3430 = vpop.f32.mrf.mxu0
    %v3431 = vadd.f32 0.0, %v3430
    %v3432 = vpop.f32.mrf.mxu0
    %3433 = vmatprep.mubr.f32.mxu0 0.0
    %3434 = vmatmul.mubr.f32.gmra.mxu0 %v3356
    %v3435 = vpop.f32.mrf.mxu0
    %v3436 = vadd.f32 0.0, %v3435
    %v3437 = vpop.f32.mrf.mxu0
    %3438 = vmatprep.mubr.f32.mxu0 0.0
    %3439 = vmatmul.mubr.f32.gmra.mxu0 %v3359
    %v3440 = vpop.f32.mrf.mxu0
    %v3441 = vadd.f32 0.0, %v3440
    %v3442 = vpop.f32.mrf.mxu0
    %3443 = vmatprep.mubr.f32.mxu0 0.0
    %3444 = vmatmul.mubr.f32.gmra.mxu0 %v3362
    %v3445 = vpop.f32.mrf.mxu0
    %v3446 = vadd.f32 0.0, %v3445
    %v3447 = vpop.f32.mrf.mxu0
    %3448 = vdwg.mxu0
    %v3449 = vld [vmem:[%s13 + $0x10] sm:$0xff]
    %v3450 = vld [vmem:[%s13 + $0x18] sm:$0xff]
    %v3452 = vsel %vm614, %v3431, 0
    %v3455 = vsel %vm614, %v3436, 0
    %v3458 = vsel %vm614, %v3441, 0
    %v3461 = vsel %vm614, %v3446, 0
    %3463 = vmatprep.subr.mxu0 0.0
    %3464 = vmatpush1.msra.mxu0 0.0
    %3465 = vmatprep.subr.mxu0 0.0
    %3466 = vmatpush1.msra.mxu0 0.0
    %3467 = vmatprep.subr.mxu0 0.0
    %3468 = vmatpush1.msra.mxu0 0.0
    %3469 = vmatprep.subr.mxu0 0.0
    %3470 = vmatpush1.msra.mxu0 0.0
    %3471 = vmatprep.subr.mxu0 0.0
    %3472 = vmatpush1.msra.mxu0 0.0
    %3473 = vmatprep.subr.mxu0 0.0
    %3474 = vmatpush1.msra.mxu0 0.0
    %3475 = vmatprep.subr.mxu0 0.0
    %3476 = vmatpush1.msra.mxu0 0.0
    %3477 = vmatprep.subr.mxu0 0.0
    %3478 = vmatpush1.msra.mxu0 0.0
    %3479 = vmatprep.subr.mxu0 0.0
    %3480 = vmatpush1.msra.mxu0 0.0
    %3481 = vmatprep.subr.mxu0 0.0
    %3482 = vmatpush1.msra.mxu0 0.0
    %3483 = vmatprep.subr.mxu0 0.0
    %3484 = vmatpush1.msra.mxu0 0.0
    %3485 = vmatprep.subr.mxu0 0.0
    %3486 = vmatpush1.msra.mxu0 0.0
    %3487 = vmatprep.subr.mxu0 0.0
    %3488 = vmatpush1.msra.mxu0 0.0
    %3489 = vmatprep.subr.mxu0 0.0
    %3490 = vmatpush1.msra.mxu0 0.0
    %3491 = vmatprep.subr.mxu0 0.0
    %3492 = vmatpush1.msra.mxu0 %v3450
    %3493 = vmatprep.subr.mxu0 0.0
    %3494 = vmatpush1.msra.mxu0 %v3449
    %3495 = vmatprep.subr.mxu0 0.0
    %3496 = vmatpush2.msra.mxu0 0.0
    %3497 = vmatprep.subr.mxu0 0.0
    %3498 = vmatpush2.msra.mxu0 0.0
    %3499 = vmatprep.subr.mxu0 0.0
    %3500 = vmatpush2.msra.mxu0 0.0
    %3501 = vmatprep.subr.mxu0 0.0
    %3502 = vmatpush2.msra.mxu0 0.0
    %3503 = vmatprep.subr.mxu0 0.0
    %3504 = vmatpush2.msra.mxu0 0.0
    %3505 = vmatprep.subr.mxu0 0.0
    %3506 = vmatpush2.msra.mxu0 0.0
    %3507 = vmatprep.subr.mxu0 0.0
    %3508 = vmatpush2.msra.mxu0 0.0
    %3509 = vmatprep.subr.mxu0 0.0
    %3510 = vmatpush2.msra.mxu0 0.0
    %3511 = vmatprep.subr.mxu0 0.0
    %3512 = vmatpush2.msra.mxu0 0.0
    %3513 = vmatprep.subr.mxu0 0.0
    %3514 = vmatpush2.msra.mxu0 0.0
    %3515 = vmatprep.subr.mxu0 0.0
    %3516 = vmatpush2.msra.mxu0 0.0
    %3517 = vmatprep.subr.mxu0 0.0
    %3518 = vmatpush2.msra.mxu0 0.0
    %3519 = vmatprep.subr.mxu0 0.0
    %3520 = vmatpush2.msra.mxu0 0.0
    %3521 = vmatprep.subr.mxu0 0.0
    %3522 = vmatpush2.msra.mxu0 0.0
    %3523 = vmatprep.subr.mxu0 0.0
    %3524 = vmatpush2.msra.mxu0 0.0
    %3525 = vmatprep.subr.mxu0 0.0
    %3526 = vmatpush2.msra.mxu0 0.0
    %3527 = vmatprep.mubr.f32.mxu0 0.0
    %3528 = vmatmul.mubr.f32.gmra.mxu0 %v3452
    %v3529 = vpop.f32.mrf.mxu0
    %v3530 = vadd.f32 0.0, %v3529
    %v3531 = vpop.f32.mrf.mxu0
    %3532 = vmatprep.mubr.f32.mxu0 0.0
    %3533 = vmatmul.mubr.f32.gmra.mxu0 %v3455
    %v3534 = vpop.f32.mrf.mxu0
    %v3535 = vadd.f32 0.0, %v3534
    %v3536 = vpop.f32.mrf.mxu0
    %3537 = vmatprep.mubr.f32.mxu0 0.0
    %3538 = vmatmul.mubr.f32.gmra.mxu0 %v3458
    %v3539 = vpop.f32.mrf.mxu0
    %v3540 = vadd.f32 0.0, %v3539
    %v3541 = vpop.f32.mrf.mxu0
    %3542 = vmatprep.mubr.f32.mxu0 0.0
    %3543 = vmatmul.mubr.f32.gmra.mxu0 %v3461
    %v3544 = vpop.f32.mrf.mxu0
    %v3545 = vadd.f32 0.0, %v3544
    %v3546 = vpop.f32.mrf.mxu0
    %3547 = vdwg.mxu0
    %v3549 = vsel %vm614, %v3147, 0
    %v3552 = vsel %vm614, %v3152, 0
    %v3555 = vsel %vm614, %v3157, 0
    %v3558 = vsel %vm614, %v3162, 0
    %3560 = vmatprep.subr.mxu0 0.0
    %3561 = vmatpush1.msra.mxu0 0.0
    %3562 = vmatprep.subr.mxu0 0.0
    %3563 = vmatpush1.msra.mxu0 0.0
    %3564 = vmatprep.subr.mxu0 0.0
    %3565 = vmatpush1.msra.mxu0 0.0
    %3566 = vmatprep.subr.mxu0 0.0
    %3567 = vmatpush1.msra.mxu0 0.0
    %3568 = vmatprep.subr.mxu0 0.0
    %3569 = vmatpush1.msra.mxu0 0.0
    %3570 = vmatprep.subr.mxu0 0.0
    %3571 = vmatpush1.msra.mxu0 0.0
    %3572 = vmatprep.subr.mxu0 0.0
    %3573 = vmatpush1.msra.mxu0 0.0
    %3574 = vmatprep.subr.mxu0 0.0
    %3575 = vmatpush1.msra.mxu0 0.0
    %3576 = vmatprep.subr.mxu0 0.0
    %3577 = vmatpush1.msra.mxu0 0.0
    %3578 = vmatprep.subr.mxu0 0.0
    %3579 = vmatpush1.msra.mxu0 0.0
    %3580 = vmatprep.subr.mxu0 0.0
    %3581 = vmatpush1.msra.mxu0 0.0
    %3582 = vmatprep.subr.mxu0 0.0
    %3583 = vmatpush1.msra.mxu0 0.0
    %3584 = vmatprep.subr.mxu0 0.0
    %3585 = vmatpush1.msra.mxu0 0.0
    %3586 = vmatprep.subr.mxu0 0.0
    %3587 = vmatpush1.msra.mxu0 0.0
    %3588 = vmatprep.subr.mxu0 0.0
    %3589 = vmatpush1.msra.mxu0 %v3166
    %3590 = vmatprep.subr.mxu0 0.0
    %3591 = vmatpush1.msra.mxu0 %v3165
    %3592 = vmatprep.subr.mxu0 0.0
    %3593 = vmatpush2.msra.mxu0 0.0
    %3594 = vmatprep.subr.mxu0 0.0
    %3595 = vmatpush2.msra.mxu0 0.0
    %3596 = vmatprep.subr.mxu0 0.0
    %3597 = vmatpush2.msra.mxu0 0.0
    %3598 = vmatprep.subr.mxu0 0.0
    %3599 = vmatpush2.msra.mxu0 0.0
    %3600 = vmatprep.subr.mxu0 0.0
    %3601 = vmatpush2.msra.mxu0 0.0
    %3602 = vmatprep.subr.mxu0 0.0
    %3603 = vmatpush2.msra.mxu0 0.0
    %3604 = vmatprep.subr.mxu0 0.0
    %3605 = vmatpush2.msra.mxu0 0.0
    %3606 = vmatprep.subr.mxu0 0.0
    %3607 = vmatpush2.msra.mxu0 0.0
    %3608 = vmatprep.subr.mxu0 0.0
    %3609 = vmatpush2.msra.mxu0 0.0
    %3610 = vmatprep.subr.mxu0 0.0
    %3611 = vmatpush2.msra.mxu0 0.0
    %3612 = vmatprep.subr.mxu0 0.0
    %3613 = vmatpush2.msra.mxu0 0.0
    %3614 = vmatprep.subr.mxu0 0.0
    %3615 = vmatpush2.msra.mxu0 0.0
    %3616 = vmatprep.subr.mxu0 0.0
    %3617 = vmatpush2.msra.mxu0 0.0
    %3618 = vmatprep.subr.mxu0 0.0
    %3619 = vmatpush2.msra.mxu0 0.0
    %3620 = vmatprep.subr.mxu0 0.0
    %3621 = vmatpush2.msra.mxu0 0.0
    %3622 = vmatprep.subr.mxu0 0.0
    %3623 = vmatpush2.msra.mxu0 0.0
    %3624 = vmatprep.mubr.f32.mxu0 0.0
    %3625 = vmatmul.mubr.f32.gmra.mxu0 %v3549
    %v3626 = vpop.f32.mrf.mxu0
    %v3627 = vadd.f32 %v3530, %v3626
    %v3628 = vpop.f32.mrf.mxu0
    %3629 = vmatprep.mubr.f32.mxu0 0.0
    %3630 = vmatmul.mubr.f32.gmra.mxu0 %v3552
    %v3631 = vpop.f32.mrf.mxu0
    %v3632 = vadd.f32 %v3535, %v3631
    %v3633 = vpop.f32.mrf.mxu0
    %3634 = vmatprep.mubr.f32.mxu0 0.0
    %3635 = vmatmul.mubr.f32.gmra.mxu0 %v3555
    %v3636 = vpop.f32.mrf.mxu0
    %v3637 = vadd.f32 %v3540, %v3636
    %v3638 = vpop.f32.mrf.mxu0
    %3639 = vmatprep.mubr.f32.mxu0 0.0
    %3640 = vmatmul.mubr.f32.gmra.mxu0 %v3558
    %v3641 = vpop.f32.mrf.mxu0
    %v3642 = vadd.f32 %v3545, %v3641
    %v3643 = vpop.f32.mrf.mxu0
    %3644 = vdwg.mxu0
    %3645 = vrot.lane.b32.xlu0 %v2689, 96
    %v3646 = vpop.permute.xlu0 %3645
    %3647 = vrot.lane.b32.xlu0 %v2694, 96
    %v3648 = vpop.permute.xlu0 %3647
    %3649 = vrot.lane.b32.xlu0 %v2699, 96
    %v3650 = vpop.permute.xlu0 %3649
    %3651 = vrot.lane.b32.xlu0 %v2704, 96
    %v3652 = vpop.permute.xlu0 %3651
    %3653 = vrot.lane.b32.xlu0 %v2789, 96
    %v3654 = vpop.permute.xlu0 %3653
    %3655 = vrot.lane.b32.xlu0 %v2794, 96
    %v3656 = vpop.permute.xlu0 %3655
    %3657 = vrot.lane.b32.xlu0 %v2799, 96
    %v3658 = vpop.permute.xlu0 %3657
    %3659 = vrot.lane.b32.xlu0 %v2804, 96
    %v3660 = vpop.permute.xlu0 %3659
    %v3661 = vsel %vm614, %v3646, 0
    %v3663 = vsel %vm614, %v3648, 0
    %v3665 = vsel %vm614, %v3650, 0
    %v3667 = vsel %vm614, %v3652, 0
    %v3669 = vsel %vm614, %v3654, 0
    %v3671 = vsel %vm614, %v3656, 0
    %v3673 = vsel %vm614, %v3658, 0
    %v3675 = vsel %vm614, %v3660, 0
    %3677 = vmatprep.subr.mxu0 0.0
    %3678 = vmatpush1.xpose.msra.mxu0 0.0
    %3679 = vmatprep.subr.mxu0 0.0
    %3680 = vmatpush1.xpose.msra.mxu0 0.0
    %3681 = vmatprep.subr.mxu0 0.0
    %3682 = vmatpush1.xpose.msra.mxu0 0.0
    %3683 = vmatprep.subr.mxu0 0.0
    %3684 = vmatpush1.xpose.msra.mxu0 0.0
    %3685 = vmatprep.subr.mxu0 0.0
    %3686 = vmatpush1.xpose.msra.mxu0 0.0
    %3687 = vmatprep.subr.mxu0 0.0
    %3688 = vmatpush1.xpose.msra.mxu0 0.0
    %3689 = vmatprep.subr.mxu0 0.0
    %3690 = vmatpush1.xpose.msra.mxu0 0.0
    %3691 = vmatprep.subr.mxu0 0.0
    %3692 = vmatpush1.xpose.msra.mxu0 0.0
    %3693 = vmatprep.subr.mxu0 0.0
    %3694 = vmatpush1.xpose.msra.mxu0 0.0
    %3695 = vmatprep.subr.mxu0 0.0
    %3696 = vmatpush1.xpose.msra.mxu0 0.0
    %3697 = vmatprep.subr.mxu0 0.0
    %3698 = vmatpush1.xpose.msra.mxu0 0.0
    %3699 = vmatprep.subr.mxu0 0.0
    %3700 = vmatpush1.xpose.msra.mxu0 0.0
    %3701 = vmatprep.subr.mxu0 0.0
    %3702 = vmatpush1.xpose.msra.mxu0 %v3675
    %3703 = vmatprep.subr.mxu0 0.0
    %3704 = vmatpush1.xpose.msra.mxu0 %v3673
    %3705 = vmatprep.subr.mxu0 0.0
    %3706 = vmatpush1.xpose.msra.mxu0 %v3671
    %3707 = vmatprep.subr.mxu0 0.0
    %3708 = vmatpush1.xpose.msra.mxu0 %v3669
    %3709 = vmatprep.subr.mxu0 0.0
    %3710 = vmatpush2.xpose.msra.mxu0 0.0
    %3711 = vmatprep.subr.mxu0 0.0
    %3712 = vmatpush2.xpose.msra.mxu0 0.0
    %3713 = vmatprep.subr.mxu0 0.0
    %3714 = vmatpush2.xpose.msra.mxu0 0.0
    %3715 = vmatprep.subr.mxu0 0.0
    %3716 = vmatpush2.xpose.msra.mxu0 0.0
    %3717 = vmatprep.subr.mxu0 0.0
    %3718 = vmatpush2.xpose.msra.mxu0 0.0
    %3719 = vmatprep.subr.mxu0 0.0
    %3720 = vmatpush2.xpose.msra.mxu0 0.0
    %3721 = vmatprep.subr.mxu0 0.0
    %3722 = vmatpush2.xpose.msra.mxu0 0.0
    %3723 = vmatprep.subr.mxu0 0.0
    %3724 = vmatpush2.xpose.msra.mxu0 0.0
    %3725 = vmatprep.subr.mxu0 0.0
    %3726 = vmatpush2.xpose.msra.mxu0 0.0
    %3727 = vmatprep.subr.mxu0 0.0
    %3728 = vmatpush2.xpose.msra.mxu0 0.0
    %3729 = vmatprep.subr.mxu0 0.0
    %3730 = vmatpush2.xpose.msra.mxu0 0.0
    %3731 = vmatprep.subr.mxu0 0.0
    %3732 = vmatpush2.xpose.msra.mxu0 0.0
    %3733 = vmatprep.subr.mxu0 0.0
    %3734 = vmatpush2.xpose.msra.mxu0 0.0
    %3735 = vmatprep.subr.mxu0 0.0
    %3736 = vmatpush2.xpose.msra.mxu0 0.0
    %3737 = vmatprep.subr.mxu0 0.0
    %3738 = vmatpush2.xpose.msra.mxu0 0.0
    %3739 = vmatprep.subr.mxu0 0.0
    %3740 = vmatpush2.xpose.msra.mxu0 0.0
    %3741 = vmatprep.mubr.f32.mxu0 0.0
    %3742 = vmatmul.mubr.f32.gmra.mxu0 %v3661
    %v3743 = vpop.f32.mrf.mxu0
    %v3744 = vadd.f32 0.0, %v3743
    %v3745 = vpop.f32.mrf.mxu0
    %3746 = vmatprep.mubr.f32.mxu0 0.0
    %3747 = vmatmul.mubr.f32.gmra.mxu0 %v3663
    %v3748 = vpop.f32.mrf.mxu0
    %v3749 = vadd.f32 0.0, %v3748
    %v3750 = vpop.f32.mrf.mxu0
    %3751 = vmatprep.mubr.f32.mxu0 0.0
    %3752 = vmatmul.mubr.f32.gmra.mxu0 %v3665
    %v3753 = vpop.f32.mrf.mxu0
    %v3754 = vadd.f32 0.0, %v3753
    %v3755 = vpop.f32.mrf.mxu0
    %3756 = vmatprep.mubr.f32.mxu0 0.0
    %3757 = vmatmul.mubr.f32.gmra.mxu0 %v3667
    %v3758 = vpop.f32.mrf.mxu0
    %v3759 = vadd.f32 0.0, %v3758
    %v3760 = vpop.f32.mrf.mxu0
    %3761 = vdwg.mxu0
    %v3762 = vmul.f32 %v3744, 0.25
    %v3763 = vmul.f32 %v3749, 0.25
    %v3764 = vmul.f32 %v3754, 0.25
    %v3765 = vmul.f32 %v3759, 0.25
    %v3766 = vadd.f32 %v3762, %v68
    %v3767 = vadd.f32 %v3763, %v69
    %v3768 = vadd.f32 %v3764, %v70
    %v3769 = vadd.f32 %v3765, %v71
    %v3770 = vsel %vm124, %v3766, -inf
    %3771 = vmax.xlane.f32.xlu0 %v3770
    %v3772 = vpop.xlane.xlu0 %3771
    %v3773 = vsel %vm124, %v3767, -inf
    %3774 = vmax.xlane.f32.xlu0 %v3773
    %v3775 = vpop.xlane.xlu0 %3774
    %v3776 = vsel %vm124, %v3768, -inf
    %3777 = vmax.xlane.f32.xlu0 %v3776
    %v3778 = vpop.xlane.xlu0 %3777
    %v3779 = vsel %vm124, %v3769, -inf
    %3780 = vmax.xlane.f32.xlu0 %v3779
    %v3781 = vpop.xlane.xlu0 %3780
    %v3782 = vsub.f32 %v3766, %v3772
    %v3783 = vsub.f32 %v3767, %v3775
    %v3784 = vsub.f32 %v3768, %v3778
    %v3785 = vsub.f32 %v3769, %v3781
    %v3786 = vmul.f32 %v3782, 1.442695
    %v3787 = vpow.pop %v3786
    %v3788 = vmul.f32 %v3783, 1.442695
    %v3789 = vpow.pop %v3788
    %v3790 = vmul.f32 %v3784, 1.442695
    %v3791 = vpow.pop %v3790
    %v3792 = vmul.f32 %v3785, 1.442695
    %v3793 = vpow.pop %v3792
    %v3794 = vsel %vm124, %v3787, 0.0
    %3795 = vadd.xlane.f32.xlu0 %v3794
    %v3796 = vpop.xlane.xlu0 %3795
    %v3797 = vsel %vm124, %v3789, 0.0
    %3798 = vadd.xlane.f32.xlu0 %v3797
    %v3799 = vpop.xlane.xlu0 %3798
    %v3800 = vsel %vm124, %v3791, 0.0
    %3801 = vadd.xlane.f32.xlu0 %v3800
    %v3802 = vpop.xlane.xlu0 %3801
    %v3803 = vsel %vm124, %v3793, 0.0
    %3804 = vadd.xlane.f32.xlu0 %v3803
    %v3805 = vpop.xlane.xlu0 %3804
    %v3806 = vrcp.pop %v3796
    %v3807 = vmul.f32 %v3787, %v3806
    %v3808 = vrcp.pop %v3799
    %v3809 = vmul.f32 %v3789, %v3808
    %v3810 = vrcp.pop %v3802
    %v3811 = vmul.f32 %v3791, %v3810
    %v3812 = vrcp.pop %v3805
    %v3813 = vmul.f32 %v3793, %v3812
    %3814 = vrot.lane.b32.xlu0 %v2889, 96
    %v3815 = vpop.permute.xlu0 %3814
    %3816 = vrot.lane.b32.xlu0 %v2894, 96
    %v3817 = vpop.permute.xlu0 %3816
    %3818 = vrot.lane.b32.xlu0 %v2899, 96
    %v3819 = vpop.permute.xlu0 %3818
    %3820 = vrot.lane.b32.xlu0 %v2904, 96
    %v3821 = vpop.permute.xlu0 %3820
    %v3827 = vsel %vm124, %v3807, 0
    %v3830 = vsel %vm124, %v3809, 0
    %v3833 = vsel %vm124, %v3811, 0
    %v3836 = vsel %vm124, %v3813, 0
    %3838 = vmatprep.subr.mxu0 0.0
    %3839 = vmatpush1.msra.mxu0 0.0
    %3840 = vmatprep.subr.mxu0 0.0
    %3841 = vmatpush1.msra.mxu0 0.0
    %3842 = vmatprep.subr.mxu0 0.0
    %3843 = vmatpush1.msra.mxu0 0.0
    %3844 = vmatprep.subr.mxu0 0.0
    %3845 = vmatpush1.msra.mxu0 0.0
    %3846 = vmatprep.subr.mxu0 0.0
    %3847 = vmatpush1.msra.mxu0 0.0
    %3848 = vmatprep.subr.mxu0 0.0
    %3849 = vmatpush1.msra.mxu0 0.0
    %3850 = vmatprep.subr.mxu0 0.0
    %3851 = vmatpush1.msra.mxu0 0.0
    %3852 = vmatprep.subr.mxu0 0.0
    %3853 = vmatpush1.msra.mxu0 0.0
    %3854 = vmatprep.subr.mxu0 0.0
    %3855 = vmatpush1.msra.mxu0 0.0
    %3856 = vmatprep.subr.mxu0 0.0
    %3857 = vmatpush1.msra.mxu0 0.0
    %3858 = vmatprep.subr.mxu0 0.0
    %3859 = vmatpush1.msra.mxu0 0.0
    %3860 = vmatprep.subr.mxu0 0.0
    %3861 = vmatpush1.msra.mxu0 0.0
    %3862 = vmatprep.subr.mxu0 0.0
    %3863 = vmatpush1.msra.mxu0 %v3821
    %3864 = vmatprep.subr.mxu0 0.0
    %3865 = vmatpush1.msra.mxu0 %v3819
    %3866 = vmatprep.subr.mxu0 0.0
    %3867 = vmatpush1.msra.mxu0 %v3817
    %3868 = vmatprep.subr.mxu0 0.0
    %3869 = vmatpush1.msra.mxu0 %v3815
    %3870 = vmatprep.subr.mxu0 0.0
    %3871 = vmatpush2.msra.mxu0 0.0
    %3872 = vmatprep.subr.mxu0 0.0
    %3873 = vmatpush2.msra.mxu0 0.0
    %3874 = vmatprep.subr.mxu0 0.0
    %3875 = vmatpush2.msra.mxu0 0.0
    %3876 = vmatprep.subr.mxu0 0.0
    %3877 = vmatpush2.msra.mxu0 0.0
    %3878 = vmatprep.subr.mxu0 0.0
    %3879 = vmatpush2.msra.mxu0 0.0
    %3880 = vmatprep.subr.mxu0 0.0
    %3881 = vmatpush2.msra.mxu0 0.0
    %3882 = vmatprep.subr.mxu0 0.0
    %3883 = vmatpush2.msra.mxu0 0.0
    %3884 = vmatprep.subr.mxu0 0.0
    %3885 = vmatpush2.msra.mxu0 0.0
    %3886 = vmatprep.subr.mxu0 0.0
    %3887 = vmatpush2.msra.mxu0 0.0
    %3888 = vmatprep.subr.mxu0 0.0
    %3889 = vmatpush2.msra.mxu0 0.0
    %3890 = vmatprep.subr.mxu0 0.0
    %3891 = vmatpush2.msra.mxu0 0.0
    %3892 = vmatprep.subr.mxu0 0.0
    %3893 = vmatpush2.msra.mxu0 0.0
    %3894 = vmatprep.subr.mxu0 0.0
    %3895 = vmatpush2.msra.mxu0 0.0
    %3896 = vmatprep.subr.mxu0 0.0
    %3897 = vmatpush2.msra.mxu0 0.0
    %3898 = vmatprep.subr.mxu0 0.0
    %3899 = vmatpush2.msra.mxu0 0.0
    %3900 = vmatprep.subr.mxu0 0.0
    %3901 = vmatpush2.msra.mxu0 0.0
    %3902 = vmatprep.mubr.f32.mxu0 0.0
    %3903 = vmatmul.mubr.f32.gmra.mxu0 %v3827
    %v3904 = vpop.f32.mrf.mxu0
    %v3905 = vadd.f32 0.0, %v3904
    %v3906 = vpop.f32.mrf.mxu0
    %3907 = vmatprep.mubr.f32.mxu0 0.0
    %3908 = vmatmul.mubr.f32.gmra.mxu0 %v3830
    %v3909 = vpop.f32.mrf.mxu0
    %v3910 = vadd.f32 0.0, %v3909
    %v3911 = vpop.f32.mrf.mxu0
    %3912 = vmatprep.mubr.f32.mxu0 0.0
    %3913 = vmatmul.mubr.f32.gmra.mxu0 %v3833
    %v3914 = vpop.f32.mrf.mxu0
    %v3915 = vadd.f32 0.0, %v3914
    %v3916 = vpop.f32.mrf.mxu0
    %3917 = vmatprep.mubr.f32.mxu0 0.0
    %3918 = vmatmul.mubr.f32.gmra.mxu0 %v3836
    %v3919 = vpop.f32.mrf.mxu0
    %v3920 = vadd.f32 0.0, %v3919
    %v3921 = vpop.f32.mrf.mxu0
    %3922 = vdwg.mxu0
    %v3923 = vld [vmem:[%s13 + $0x20] sm:$0xff]
    %v3924 = vld [vmem:[%s13 + $0x28] sm:$0xff]
    %v3926 = vsel %vm614, %v3905, 0
    %v3929 = vsel %vm614, %v3910, 0
    %v3932 = vsel %vm614, %v3915, 0
    %v3935 = vsel %vm614, %v3920, 0
    %3937 = vmatprep.subr.mxu0 0.0
    %3938 = vmatpush1.msra.mxu0 0.0
    %3939 = vmatprep.subr.mxu0 0.0
    %3940 = vmatpush1.msra.mxu0 0.0
    %3941 = vmatprep.subr.mxu0 0.0
    %3942 = vmatpush1.msra.mxu0 0.0
    %3943 = vmatprep.subr.mxu0 0.0
    %3944 = vmatpush1.msra.mxu0 0.0
    %3945 = vmatprep.subr.mxu0 0.0
    %3946 = vmatpush1.msra.mxu0 0.0
    %3947 = vmatprep.subr.mxu0 0.0
    %3948 = vmatpush1.msra.mxu0 0.0
    %3949 = vmatprep.subr.mxu0 0.0
    %3950 = vmatpush1.msra.mxu0 0.0
    %3951 = vmatprep.subr.mxu0 0.0
    %3952 = vmatpush1.msra.mxu0 0.0
    %3953 = vmatprep.subr.mxu0 0.0
    %3954 = vmatpush1.msra.mxu0 0.0
    %3955 = vmatprep.subr.mxu0 0.0
    %3956 = vmatpush1.msra.mxu0 0.0
    %3957 = vmatprep.subr.mxu0 0.0
    %3958 = vmatpush1.msra.mxu0 0.0
    %3959 = vmatprep.subr.mxu0 0.0
    %3960 = vmatpush1.msra.mxu0 0.0
    %3961 = vmatprep.subr.mxu0 0.0
    %3962 = vmatpush1.msra.mxu0 0.0
    %3963 = vmatprep.subr.mxu0 0.0
    %3964 = vmatpush1.msra.mxu0 0.0
    %3965 = vmatprep.subr.mxu0 0.0
    %3966 = vmatpush1.msra.mxu0 %v3924
    %3967 = vmatprep.subr.mxu0 0.0
    %3968 = vmatpush1.msra.mxu0 %v3923
    %3969 = vmatprep.subr.mxu0 0.0
    %3970 = vmatpush2.msra.mxu0 0.0
    %3971 = vmatprep.subr.mxu0 0.0
    %3972 = vmatpush2.msra.mxu0 0.0
    %3973 = vmatprep.subr.mxu0 0.0
    %3974 = vmatpush2.msra.mxu0 0.0
    %3975 = vmatprep.subr.mxu0 0.0
    %3976 = vmatpush2.msra.mxu0 0.0
    %3977 = vmatprep.subr.mxu0 0.0
    %3978 = vmatpush2.msra.mxu0 0.0
    %3979 = vmatprep.subr.mxu0 0.0
    %3980 = vmatpush2.msra.mxu0 0.0
    %3981 = vmatprep.subr.mxu0 0.0
    %3982 = vmatpush2.msra.mxu0 0.0
    %3983 = vmatprep.subr.mxu0 0.0
    %3984 = vmatpush2.msra.mxu0 0.0
    %3985 = vmatprep.subr.mxu0 0.0
    %3986 = vmatpush2.msra.mxu0 0.0
    %3987 = vmatprep.subr.mxu0 0.0
    %3988 = vmatpush2.msra.mxu0 0.0
    %3989 = vmatprep.subr.mxu0 0.0
    %3990 = vmatpush2.msra.mxu0 0.0
    %3991 = vmatprep.subr.mxu0 0.0
    %3992 = vmatpush2.msra.mxu0 0.0
    %3993 = vmatprep.subr.mxu0 0.0
    %3994 = vmatpush2.msra.mxu0 0.0
    %3995 = vmatprep.subr.mxu0 0.0
    %3996 = vmatpush2.msra.mxu0 0.0
    %3997 = vmatprep.subr.mxu0 0.0
    %3998 = vmatpush2.msra.mxu0 0.0
    %3999 = vmatprep.subr.mxu0 0.0
    %4000 = vmatpush2.msra.mxu0 0.0
    %4001 = vmatprep.mubr.f32.mxu0 0.0
    %4002 = vmatmul.mubr.f32.gmra.mxu0 %v3926
    %v4003 = vpop.f32.mrf.mxu0
    %v4004 = vadd.f32 0.0, %v4003
    %v4005 = vpop.f32.mrf.mxu0
    %4006 = vmatprep.mubr.f32.mxu0 0.0
    %4007 = vmatmul.mubr.f32.gmra.mxu0 %v3929
    %v4008 = vpop.f32.mrf.mxu0
    %v4009 = vadd.f32 0.0, %v4008
    %v4010 = vpop.f32.mrf.mxu0
    %4011 = vmatprep.mubr.f32.mxu0 0.0
    %4012 = vmatmul.mubr.f32.gmra.mxu0 %v3932
    %v4013 = vpop.f32.mrf.mxu0
    %v4014 = vadd.f32 0.0, %v4013
    %v4015 = vpop.f32.mrf.mxu0
    %4016 = vmatprep.mubr.f32.mxu0 0.0
    %4017 = vmatmul.mubr.f32.gmra.mxu0 %v3935
    %v4018 = vpop.f32.mrf.mxu0
    %v4019 = vadd.f32 0.0, %v4018
    %v4020 = vpop.f32.mrf.mxu0
    %4021 = vdwg.mxu0
    %v4022 = vadd.f32 %v3627, %v4004
    %v4023 = vadd.f32 %v3632, %v4009
    %v4024 = vadd.f32 %v3637, %v4014
    %v4025 = vadd.f32 %v3642, %v4019
    %4026 = vrot.lane.b32.xlu0 %v2689, 80
    %v4027 = vpop.permute.xlu0 %4026
    %4028 = vrot.lane.b32.xlu0 %v2694, 80
    %v4029 = vpop.permute.xlu0 %4028
    %4030 = vrot.lane.b32.xlu0 %v2699, 80
    %v4031 = vpop.permute.xlu0 %4030
    %4032 = vrot.lane.b32.xlu0 %v2704, 80
    %v4033 = vpop.permute.xlu0 %4032
    %4034 = vrot.lane.b32.xlu0 %v2789, 80
    %v4035 = vpop.permute.xlu0 %4034
    %4036 = vrot.lane.b32.xlu0 %v2794, 80
    %v4037 = vpop.permute.xlu0 %4036
    %4038 = vrot.lane.b32.xlu0 %v2799, 80
    %v4039 = vpop.permute.xlu0 %4038
    %4040 = vrot.lane.b32.xlu0 %v2804, 80
    %v4041 = vpop.permute.xlu0 %4040
    %v4042 = vsel %vm614, %v4027, 0
    %v4044 = vsel %vm614, %v4029, 0
    %v4046 = vsel %vm614, %v4031, 0
    %v4048 = vsel %vm614, %v4033, 0
    %v4050 = vsel %vm614, %v4035, 0
    %v4052 = vsel %vm614, %v4037, 0
    %v4054 = vsel %vm614, %v4039, 0
    %v4056 = vsel %vm614, %v4041, 0
    %4058 = vmatprep.subr.mxu0 0.0
    %4059 = vmatpush1.xpose.msra.mxu0 0.0
    %4060 = vmatprep.subr.mxu0 0.0
    %4061 = vmatpush1.xpose.msra.mxu0 0.0
    %4062 = vmatprep.subr.mxu0 0.0
    %4063 = vmatpush1.xpose.msra.mxu0 0.0
    %4064 = vmatprep.subr.mxu0 0.0
    %4065 = vmatpush1.xpose.msra.mxu0 0.0
    %4066 = vmatprep.subr.mxu0 0.0
    %4067 = vmatpush1.xpose.msra.mxu0 0.0
    %4068 = vmatprep.subr.mxu0 0.0
    %4069 = vmatpush1.xpose.msra.mxu0 0.0
    %4070 = vmatprep.subr.mxu0 0.0
    %4071 = vmatpush1.xpose.msra.mxu0 0.0
    %4072 = vmatprep.subr.mxu0 0.0
    %4073 = vmatpush1.xpose.msra.mxu0 0.0
    %4074 = vmatprep.subr.mxu0 0.0
    %4075 = vmatpush1.xpose.msra.mxu0 0.0
    %4076 = vmatprep.subr.mxu0 0.0
    %4077 = vmatpush1.xpose.msra.mxu0 0.0
    %4078 = vmatprep.subr.mxu0 0.0
    %4079 = vmatpush1.xpose.msra.mxu0 0.0
    %4080 = vmatprep.subr.mxu0 0.0
    %4081 = vmatpush1.xpose.msra.mxu0 0.0
    %4082 = vmatprep.subr.mxu0 0.0
    %4083 = vmatpush1.xpose.msra.mxu0 %v4056
    %4084 = vmatprep.subr.mxu0 0.0
    %4085 = vmatpush1.xpose.msra.mxu0 %v4054
    %4086 = vmatprep.subr.mxu0 0.0
    %4087 = vmatpush1.xpose.msra.mxu0 %v4052
    %4088 = vmatprep.subr.mxu0 0.0
    %4089 = vmatpush1.xpose.msra.mxu0 %v4050
    %4090 = vmatprep.subr.mxu0 0.0
    %4091 = vmatpush2.xpose.msra.mxu0 0.0
    %4092 = vmatprep.subr.mxu0 0.0
    %4093 = vmatpush2.xpose.msra.mxu0 0.0
    %4094 = vmatprep.subr.mxu0 0.0
    %4095 = vmatpush2.xpose.msra.mxu0 0.0
    %4096 = vmatprep.subr.mxu0 0.0
    %4097 = vmatpush2.xpose.msra.mxu0 0.0
    %4098 = vmatprep.subr.mxu0 0.0
    %4099 = vmatpush2.xpose.msra.mxu0 0.0
    %4100 = vmatprep.subr.mxu0 0.0
    %4101 = vmatpush2.xpose.msra.mxu0 0.0
    %4102 = vmatprep.subr.mxu0 0.0
    %4103 = vmatpush2.xpose.msra.mxu0 0.0
    %4104 = vmatprep.subr.mxu0 0.0
    %4105 = vmatpush2.xpose.msra.mxu0 0.0
    %4106 = vmatprep.subr.mxu0 0.0
    %4107 = vmatpush2.xpose.msra.mxu0 0.0
    %4108 = vmatprep.subr.mxu0 0.0
    %4109 = vmatpush2.xpose.msra.mxu0 0.0
    %4110 = vmatprep.subr.mxu0 0.0
    %4111 = vmatpush2.xpose.msra.mxu0 0.0
    %4112 = vmatprep.subr.mxu0 0.0
    %4113 = vmatpush2.xpose.msra.mxu0 0.0
    %4114 = vmatprep.subr.mxu0 0.0
    %4115 = vmatpush2.xpose.msra.mxu0 0.0
    %4116 = vmatprep.subr.mxu0 0.0
    %4117 = vmatpush2.xpose.msra.mxu0 0.0
    %4118 = vmatprep.subr.mxu0 0.0
    %4119 = vmatpush2.xpose.msra.mxu0 0.0
    %4120 = vmatprep.subr.mxu0 0.0
    %4121 = vmatpush2.xpose.msra.mxu0 0.0
    %4122 = vmatprep.mubr.f32.mxu0 0.0
    %4123 = vmatmul.mubr.f32.gmra.mxu0 %v4042
    %v4124 = vpop.f32.mrf.mxu0
    %v4125 = vadd.f32 0.0, %v4124
    %v4126 = vpop.f32.mrf.mxu0
    %4127 = vmatprep.mubr.f32.mxu0 0.0
    %4128 = vmatmul.mubr.f32.gmra.mxu0 %v4044
    %v4129 = vpop.f32.mrf.mxu0
    %v4130 = vadd.f32 0.0, %v4129
    %v4131 = vpop.f32.mrf.mxu0
    %4132 = vmatprep.mubr.f32.mxu0 0.0
    %4133 = vmatmul.mubr.f32.gmra.mxu0 %v4046
    %v4134 = vpop.f32.mrf.mxu0
    %v4135 = vadd.f32 0.0, %v4134
    %v4136 = vpop.f32.mrf.mxu0
    %4137 = vmatprep.mubr.f32.mxu0 0.0
    %4138 = vmatmul.mubr.f32.gmra.mxu0 %v4048
    %v4139 = vpop.f32.mrf.mxu0
    %v4140 = vadd.f32 0.0, %v4139
    %v4141 = vpop.f32.mrf.mxu0
    %4142 = vdwg.mxu0
    %v4143 = vmul.f32 %v4125, 0.25
    %v4144 = vmul.f32 %v4130, 0.25
    %v4145 = vmul.f32 %v4135, 0.25
    %v4146 = vmul.f32 %v4140, 0.25
    %v4147 = vadd.f32 %v4143, %v68
    %v4148 = vadd.f32 %v4144, %v69
    %v4149 = vadd.f32 %v4145, %v70
    %v4150 = vadd.f32 %v4146, %v71
    %v4151 = vsel %vm124, %v4147, -inf
    %4152 = vmax.xlane.f32.xlu0 %v4151
    %v4153 = vpop.xlane.xlu0 %4152
    %v4154 = vsel %vm124, %v4148, -inf
    %4155 = vmax.xlane.f32.xlu0 %v4154
    %v4156 = vpop.xlane.xlu0 %4155
    %v4157 = vsel %vm124, %v4149, -inf
    %4158 = vmax.xlane.f32.xlu0 %v4157
    %v4159 = vpop.xlane.xlu0 %4158
    %v4160 = vsel %vm124, %v4150, -inf
    %4161 = vmax.xlane.f32.xlu0 %v4160
    %v4162 = vpop.xlane.xlu0 %4161
    %v4163 = vsub.f32 %v4147, %v4153
    %v4164 = vsub.f32 %v4148, %v4156
    %v4165 = vsub.f32 %v4149, %v4159
    %v4166 = vsub.f32 %v4150, %v4162
    %v4167 = vmul.f32 %v4163, 1.442695
    %v4168 = vpow.pop %v4167
    %v4169 = vmul.f32 %v4164, 1.442695
    %v4170 = vpow.pop %v4169
    %v4171 = vmul.f32 %v4165, 1.442695
    %v4172 = vpow.pop %v4171
    %v4173 = vmul.f32 %v4166, 1.442695
    %v4174 = vpow.pop %v4173
    %v4175 = vsel %vm124, %v4168, 0.0
    %4176 = vadd.xlane.f32.xlu0 %v4175
    %v4177 = vpop.xlane.xlu0 %4176
    %v4178 = vsel %vm124, %v4170, 0.0
    %4179 = vadd.xlane.f32.xlu0 %v4178
    %v4180 = vpop.xlane.xlu0 %4179
    %v4181 = vsel %vm124, %v4172, 0.0
    %4182 = vadd.xlane.f32.xlu0 %v4181
    %v4183 = vpop.xlane.xlu0 %4182
    %v4184 = vsel %vm124, %v4174, 0.0
    %4185 = vadd.xlane.f32.xlu0 %v4184
    %v4186 = vpop.xlane.xlu0 %4185
    %v4187 = vrcp.pop %v4177
    %v4188 = vmul.f32 %v4168, %v4187
    %v4189 = vrcp.pop %v4180
    %v4190 = vmul.f32 %v4170, %v4189
    %v4191 = vrcp.pop %v4183
    %v4192 = vmul.f32 %v4172, %v4191
    %v4193 = vrcp.pop %v4186
    %v4194 = vmul.f32 %v4174, %v4193
    %4195 = vrot.lane.b32.xlu0 %v2889, 80
    %v4196 = vpop.permute.xlu0 %4195
    %4197 = vrot.lane.b32.xlu0 %v2894, 80
    %v4198 = vpop.permute.xlu0 %4197
    %4199 = vrot.lane.b32.xlu0 %v2899, 80
    %v4200 = vpop.permute.xlu0 %4199
    %4201 = vrot.lane.b32.xlu0 %v2904, 80
    %v4202 = vpop.permute.xlu0 %4201
    %v4208 = vsel %vm124, %v4188, 0
    %v4211 = vsel %vm124, %v4190, 0
    %v4214 = vsel %vm124, %v4192, 0
    %v4217 = vsel %vm124, %v4194, 0
    %4219 = vmatprep.subr.mxu0 0.0
    %4220 = vmatpush1.msra.mxu0 0.0
    %4221 = vmatprep.subr.mxu0 0.0
    %4222 = vmatpush1.msra.mxu0 0.0
    %4223 = vmatprep.subr.mxu0 0.0
    %4224 = vmatpush1.msra.mxu0 0.0
    %4225 = vmatprep.subr.mxu0 0.0
    %4226 = vmatpush1.msra.mxu0 0.0
    %4227 = vmatprep.subr.mxu0 0.0
    %4228 = vmatpush1.msra.mxu0 0.0
    %4229 = vmatprep.subr.mxu0 0.0
    %4230 = vmatpush1.msra.mxu0 0.0
    %4231 = vmatprep.subr.mxu0 0.0
    %4232 = vmatpush1.msra.mxu0 0.0
    %4233 = vmatprep.subr.mxu0 0.0
    %4234 = vmatpush1.msra.mxu0 0.0
    %4235 = vmatprep.subr.mxu0 0.0
    %4236 = vmatpush1.msra.mxu0 0.0
    %4237 = vmatprep.subr.mxu0 0.0
    %4238 = vmatpush1.msra.mxu0 0.0
    %4239 = vmatprep.subr.mxu0 0.0
    %4240 = vmatpush1.msra.mxu0 0.0
    %4241 = vmatprep.subr.mxu0 0.0
    %4242 = vmatpush1.msra.mxu0 0.0
    %4243 = vmatprep.subr.mxu0 0.0
    %4244 = vmatpush1.msra.mxu0 %v4202
    %4245 = vmatprep.subr.mxu0 0.0
    %4246 = vmatpush1.msra.mxu0 %v4200
    %4247 = vmatprep.subr.mxu0 0.0
    %4248 = vmatpush1.msra.mxu0 %v4198
    %4249 = vmatprep.subr.mxu0 0.0
    %4250 = vmatpush1.msra.mxu0 %v4196
    %4251 = vmatprep.subr.mxu0 0.0
    %4252 = vmatpush2.msra.mxu0 0.0
    %4253 = vmatprep.subr.mxu0 0.0
    %4254 = vmatpush2.msra.mxu0 0.0
    %4255 = vmatprep.subr.mxu0 0.0
    %4256 = vmatpush2.msra.mxu0 0.0
    %4257 = vmatprep.subr.mxu0 0.0
    %4258 = vmatpush2.msra.mxu0 0.0
    %4259 = vmatprep.subr.mxu0 0.0
    %4260 = vmatpush2.msra.mxu0 0.0
    %4261 = vmatprep.subr.mxu0 0.0
    %4262 = vmatpush2.msra.mxu0 0.0
    %4263 = vmatprep.subr.mxu0 0.0
    %4264 = vmatpush2.msra.mxu0 0.0
    %4265 = vmatprep.subr.mxu0 0.0
    %4266 = vmatpush2.msra.mxu0 0.0
    %4267 = vmatprep.subr.mxu0 0.0
    %4268 = vmatpush2.msra.mxu0 0.0
    %4269 = vmatprep.subr.mxu0 0.0
    %4270 = vmatpush2.msra.mxu0 0.0
    %4271 = vmatprep.subr.mxu0 0.0
    %4272 = vmatpush2.msra.mxu0 0.0
    %4273 = vmatprep.subr.mxu0 0.0
    %4274 = vmatpush2.msra.mxu0 0.0
    %4275 = vmatprep.subr.mxu0 0.0
    %4276 = vmatpush2.msra.mxu0 0.0
    %4277 = vmatprep.subr.mxu0 0.0
    %4278 = vmatpush2.msra.mxu0 0.0
    %4279 = vmatprep.subr.mxu0 0.0
    %4280 = vmatpush2.msra.mxu0 0.0
    %4281 = vmatprep.subr.mxu0 0.0
    %4282 = vmatpush2.msra.mxu0 0.0
    %4283 = vmatprep.mubr.f32.mxu0 0.0
    %4284 = vmatmul.mubr.f32.gmra.mxu0 %v4208
    %v4285 = vpop.f32.mrf.mxu0
    %v4286 = vadd.f32 0.0, %v4285
    %v4287 = vpop.f32.mrf.mxu0
    %4288 = vmatprep.mubr.f32.mxu0 0.0
    %4289 = vmatmul.mubr.f32.gmra.mxu0 %v4211
    %v4290 = vpop.f32.mrf.mxu0
    %v4291 = vadd.f32 0.0, %v4290
    %v4292 = vpop.f32.mrf.mxu0
    %4293 = vmatprep.mubr.f32.mxu0 0.0
    %4294 = vmatmul.mubr.f32.gmra.mxu0 %v4214
    %v4295 = vpop.f32.mrf.mxu0
    %v4296 = vadd.f32 0.0, %v4295
    %v4297 = vpop.f32.mrf.mxu0
    %4298 = vmatprep.mubr.f32.mxu0 0.0
    %4299 = vmatmul.mubr.f32.gmra.mxu0 %v4217
    %v4300 = vpop.f32.mrf.mxu0
    %v4301 = vadd.f32 0.0, %v4300
    %v4302 = vpop.f32.mrf.mxu0
    %4303 = vdwg.mxu0
    %v4304 = vld [vmem:[%s13 + $0x30] sm:$0xff]
    %v4305 = vld [vmem:[%s13 + $0x38] sm:$0xff]
    %v4307 = vsel %vm614, %v4286, 0
    %v4310 = vsel %vm614, %v4291, 0
    %v4313 = vsel %vm614, %v4296, 0
    %v4316 = vsel %vm614, %v4301, 0
    %4318 = vmatprep.subr.mxu0 0.0
    %4319 = vmatpush1.msra.mxu0 0.0
    %4320 = vmatprep.subr.mxu0 0.0
    %4321 = vmatpush1.msra.mxu0 0.0
    %4322 = vmatprep.subr.mxu0 0.0
    %4323 = vmatpush1.msra.mxu0 0.0
    %4324 = vmatprep.subr.mxu0 0.0
    %4325 = vmatpush1.msra.mxu0 0.0
    %4326 = vmatprep.subr.mxu0 0.0
    %4327 = vmatpush1.msra.mxu0 0.0
    %4328 = vmatprep.subr.mxu0 0.0
    %4329 = vmatpush1.msra.mxu0 0.0
    %4330 = vmatprep.subr.mxu0 0.0
    %4331 = vmatpush1.msra.mxu0 0.0
    %4332 = vmatprep.subr.mxu0 0.0
    %4333 = vmatpush1.msra.mxu0 0.0
    %4334 = vmatprep.subr.mxu0 0.0
    %4335 = vmatpush1.msra.mxu0 0.0
    %4336 = vmatprep.subr.mxu0 0.0
    %4337 = vmatpush1.msra.mxu0 0.0
    %4338 = vmatprep.subr.mxu0 0.0
    %4339 = vmatpush1.msra.mxu0 0.0
    %4340 = vmatprep.subr.mxu0 0.0
    %4341 = vmatpush1.msra.mxu0 0.0
    %4342 = vmatprep.subr.mxu0 0.0
    %4343 = vmatpush1.msra.mxu0 0.0
    %4344 = vmatprep.subr.mxu0 0.0
    %4345 = vmatpush1.msra.mxu0 0.0
    %4346 = vmatprep.subr.mxu0 0.0
    %4347 = vmatpush1.msra.mxu0 %v4305
    %4348 = vmatprep.subr.mxu0 0.0
    %4349 = vmatpush1.msra.mxu0 %v4304
    %4350 = vmatprep.subr.mxu0 0.0
    %4351 = vmatpush2.msra.mxu0 0.0
    %4352 = vmatprep.subr.mxu0 0.0
    %4353 = vmatpush2.msra.mxu0 0.0
    %4354 = vmatprep.subr.mxu0 0.0
    %4355 = vmatpush2.msra.mxu0 0.0
    %4356 = vmatprep.subr.mxu0 0.0
    %4357 = vmatpush2.msra.mxu0 0.0
    %4358 = vmatprep.subr.mxu0 0.0
    %4359 = vmatpush2.msra.mxu0 0.0
    %4360 = vmatprep.subr.mxu0 0.0
    %4361 = vmatpush2.msra.mxu0 0.0
    %4362 = vmatprep.subr.mxu0 0.0
    %4363 = vmatpush2.msra.mxu0 0.0
    %4364 = vmatprep.subr.mxu0 0.0
    %4365 = vmatpush2.msra.mxu0 0.0
    %4366 = vmatprep.subr.mxu0 0.0
    %4367 = vmatpush2.msra.mxu0 0.0
    %4368 = vmatprep.subr.mxu0 0.0
    %4369 = vmatpush2.msra.mxu0 0.0
    %4370 = vmatprep.subr.mxu0 0.0
    %4371 = vmatpush2.msra.mxu0 0.0
    %4372 = vmatprep.subr.mxu0 0.0
    %4373 = vmatpush2.msra.mxu0 0.0
    %4374 = vmatprep.subr.mxu0 0.0
    %4375 = vmatpush2.msra.mxu0 0.0
    %4376 = vmatprep.subr.mxu0 0.0
    %4377 = vmatpush2.msra.mxu0 0.0
    %4378 = vmatprep.subr.mxu0 0.0
    %4379 = vmatpush2.msra.mxu0 0.0
    %4380 = vmatprep.subr.mxu0 0.0
    %4381 = vmatpush2.msra.mxu0 0.0
    %4382 = vmatprep.mubr.f32.mxu0 0.0
    %4383 = vmatmul.mubr.f32.gmra.mxu0 %v4307
    %v4384 = vpop.f32.mrf.mxu0
    %v4385 = vadd.f32 0.0, %v4384
    %v4386 = vpop.f32.mrf.mxu0
    %4387 = vmatprep.mubr.f32.mxu0 0.0
    %4388 = vmatmul.mubr.f32.gmra.mxu0 %v4310
    %v4389 = vpop.f32.mrf.mxu0
    %v4390 = vadd.f32 0.0, %v4389
    %v4391 = vpop.f32.mrf.mxu0
    %4392 = vmatprep.mubr.f32.mxu0 0.0
    %4393 = vmatmul.mubr.f32.gmra.mxu0 %v4313
    %v4394 = vpop.f32.mrf.mxu0
    %v4395 = vadd.f32 0.0, %v4394
    %v4396 = vpop.f32.mrf.mxu0
    %4397 = vmatprep.mubr.f32.mxu0 0.0
    %4398 = vmatmul.mubr.f32.gmra.mxu0 %v4316
    %v4399 = vpop.f32.mrf.mxu0
    %v4400 = vadd.f32 0.0, %v4399
    %v4401 = vpop.f32.mrf.mxu0
    %4402 = vdwg.mxu0
    %v4403 = vadd.f32 %v4022, %v4385
    %v4404 = vadd.f32 %v4023, %v4390
    %v4405 = vadd.f32 %v4024, %v4395
    %v4406 = vadd.f32 %v4025, %v4400
    %v4407 = vld [vmem:[%s14] sm:$0x1]
    %v4409 = vlaneseq
    %v4410 = vshrl.u32 %v4409, 7
    %v4411 = vsub.s32 0, %v4410
    %v4412 = vrot.slane %v4407, %v4411
    %v4414 = vadd.f32 %v4403, %v4412
    %v4415 = vadd.f32 %v4404, %v4412
    %v4416 = vadd.f32 %v4405, %v4412
    %v4417 = vadd.f32 %v4406, %v4412
    %v4418 = vmul.f32 %v86, %v4414
    %v4419 = vmul.f32 %v87, %v4415
    %v4420 = vmul.f32 %v88, %v4416
    %v4421 = vmul.f32 %v89, %v4417
    %v4422 = vadd.f32 %v2531, %v4418
    %v4423 = vadd.f32 %v2532, %v4419
    %v4424 = vadd.f32 %v2533, %v4420
    %v4425 = vadd.f32 %v2534, %v4421
    %v4426 = vsel %vm240, %v4422, 0.0
    %4427 = vadd.xlane.f32.xlu0 %v4426
    %v4428 = vpop.xlane.xlu0 %4427
    %v4429 = vsel %vm240, %v4423, 0.0
    %4430 = vadd.xlane.f32.xlu0 %v4429
    %v4431 = vpop.xlane.xlu0 %4430
    %v4432 = vsel %vm240, %v4424, 0.0
    %4433 = vadd.xlane.f32.xlu0 %v4432
    %v4434 = vpop.xlane.xlu0 %4433
    %v4435 = vsel %vm240, %v4425, 0.0
    %4436 = vadd.xlane.f32.xlu0 %v4435
    %v4437 = vpop.xlane.xlu0 %4436
    %v4438 = vmul.f32 %v4428, %v253
    %v4439 = vmul.f32 %v4431, %v253
    %v4440 = vmul.f32 %v4434, %v253
    %v4441 = vmul.f32 %v4437, %v253
    %v4442 = vsub.f32 %v4422, %v4438
    %v4443 = vsub.f32 %v4423, %v4439
    %v4444 = vsub.f32 %v4424, %v4440
    %v4445 = vsub.f32 %v4425, %v4441
    %v4446 = vmul.f32 %v4442, %v4442
    %v4447 = vmul.f32 %v4443, %v4443
    %v4448 = vmul.f32 %v4444, %v4444
    %v4449 = vmul.f32 %v4445, %v4445
    %v4450 = vsel %vm240, %v4446, 0.0
    %4451 = vadd.xlane.f32.xlu0 %v4450
    %v4452 = vpop.xlane.xlu0 %4451
    %v4453 = vsel %vm240, %v4447, 0.0
    %4454 = vadd.xlane.f32.xlu0 %v4453
    %v4455 = vpop.xlane.xlu0 %4454
    %v4456 = vsel %vm240, %v4448, 0.0
    %4457 = vadd.xlane.f32.xlu0 %v4456
    %v4458 = vpop.xlane.xlu0 %4457
    %v4459 = vsel %vm240, %v4449, 0.0
    %4460 = vadd.xlane.f32.xlu0 %v4459
    %v4461 = vpop.xlane.xlu0 %4460
    %v4462 = vmul.f32 %v4452, %v253
    %v4463 = vmul.f32 %v4455, %v253
    %v4464 = vmul.f32 %v4458, %v253
    %v4465 = vmul.f32 %v4461, %v253
    %v4466 = vadd.f32 %v4462, 1e-06
    %v4467 = vadd.f32 %v4463, 1e-06
    %v4468 = vadd.f32 %v4464, 1e-06
    %v4469 = vadd.f32 %v4465, 1e-06
    %v4470 = vrsqrt.pop %v4466
    %v4471 = vrsqrt.pop %v4467
    %v4472 = vrsqrt.pop %v4468
    %v4473 = vrsqrt.pop %v4469
    %v4474 = vmul.f32 %v4442, %v4470
    %v4475 = vmul.f32 %v4443, %v4471
    %v4476 = vmul.f32 %v4444, %v4472
    %v4477 = vmul.f32 %v4445, %v4473
    %v4478 = vmul.f32 %v4474, %v100
    %v4479 = vmul.f32 %v4475, %v101
    %v4480 = vmul.f32 %v4476, %v102
    %v4481 = vmul.f32 %v4477, %v103
    %v4482 = vadd.f32 %v4478, %v91
    %v4483 = vadd.f32 %v4479, %v92
    %v4484 = vadd.f32 %v4480, %v93
    %v4485 = vadd.f32 %v4481, %v94
    %v4486 = vld [vmem:[%s15] sm:$0xff]
    %v4487 = vld [vmem:[%s15 + $0x8] sm:$0xff]
    %v4488 = vld [vmem:[%s15 + $0x10] sm:$0xff]
    %v4489 = vld [vmem:[%s15 + $0x18] sm:$0xff]
    %v4490 = vld [vmem:[%s15 + $0x20] sm:$0xff]
    %v4491 = vld [vmem:[%s15 + $0x28] sm:$0xff]
    %v4492 = vld [vmem:[%s15 + $0x30] sm:$0xff]
    %v4493 = vld [vmem:[%s15 + $0x38] sm:$0xff]
    %v4494 = vld [vmem:[%s15 + $0x40] sm:$0xff]
    %v4495 = vld [vmem:[%s15 + $0x48] sm:$0xff]
    %v4496 = vld [vmem:[%s15 + $0x50] sm:$0xff]
    %v4497 = vld [vmem:[%s15 + $0x58] sm:$0xff]
    %v4498 = vld [vmem:[%s15 + $0x60] sm:$0xff]
    %v4499 = vld [vmem:[%s15 + $0x68] sm:$0xff]
    %v4500 = vld [vmem:[%s15 + $0x70] sm:$0xff]
    %v4501 = vld [vmem:[%s15 + $0x78] sm:$0xff]
    %v4502 = vld [vmem:[%s16] sm:$0x3]
    %v4504 = vlaneseq
    %v4505 = vshrl.u32 %v4504, 7
    %v4506 = vsub.s32 0, %v4505
    %v4507 = vrot.slane %v4502, %v4506
    %v4508 = vlaneseq
    %v4509 = vshrl.u32 %v4508, 7
    %v4510 = vsub.s32 1, %v4509
    %v4511 = vrot.slane %v4502, %v4510
    %v4515 = vsel %vm240, %v4482, 0
    %v4518 = vsel %vm240, %v4483, 0
    %v4521 = vsel %vm240, %v4484, 0
    %v4524 = vsel %vm240, %v4485, 0
    %4526 = vmatprep.subr.mxu0 0.0
    %4527 = vmatpush1.msra.mxu0 0.0
    %4528 = vmatprep.subr.mxu0 0.0
    %4529 = vmatpush1.msra.mxu0 0.0
    %4530 = vmatprep.subr.mxu0 0.0
    %4531 = vmatpush1.msra.mxu0 0.0
    %4532 = vmatprep.subr.mxu0 0.0
    %4533 = vmatpush1.msra.mxu0 0.0
    %4534 = vmatprep.subr.mxu0 0.0
    %4535 = vmatpush1.msra.mxu0 0.0
    %4536 = vmatprep.subr.mxu0 0.0
    %4537 = vmatpush1.msra.mxu0 0.0
    %4538 = vmatprep.subr.mxu0 0.0
    %4539 = vmatpush1.msra.mxu0 0.0
    %4540 = vmatprep.subr.mxu0 0.0
    %4541 = vmatpush1.msra.mxu0 0.0
    %4542 = vmatprep.subr.mxu0 %v4501
    %4543 = vmatpush1.msra.mxu0 %v4500
    %4544 = vmatprep.subr.mxu0 %v4499
    %4545 = vmatpush1.msra.mxu0 %v4498
    %4546 = vmatprep.subr.mxu0 %v4497
    %4547 = vmatpush1.msra.mxu0 %v4496
    %4548 = vmatprep.subr.mxu0 %v4495
    %4549 = vmatpush1.msra.mxu0 %v4494
    %4550 = vmatprep.subr.mxu0 %v4493
    %4551 = vmatpush1.msra.mxu0 %v4492
    %4552 = vmatprep.subr.mxu0 %v4491
    %4553 = vmatpush1.msra.mxu0 %v4490
    %4554 = vmatprep.subr.mxu0 %v4489
    %4555 = vmatpush1.msra.mxu0 %v4488
    %4556 = vmatprep.subr.mxu0 %v4487
    %4557 = vmatpush1.msra.mxu0 %v4486
    %4558 = vmatprep.subr.mxu0 0.0
    %4559 = vmatpush2.msra.mxu0 0.0
    %4560 = vmatprep.subr.mxu0 0.0
    %4561 = vmatpush2.msra.mxu0 0.0
    %4562 = vmatprep.subr.mxu0 0.0
    %4563 = vmatpush2.msra.mxu0 0.0
    %4564 = vmatprep.subr.mxu0 0.0
    %4565 = vmatpush2.msra.mxu0 0.0
    %4566 = vmatprep.subr.mxu0 0.0
    %4567 = vmatpush2.msra.mxu0 0.0
    %4568 = vmatprep.subr.mxu0 0.0
    %4569 = vmatpush2.msra.mxu0 0.0
    %4570 = vmatprep.subr.mxu0 0.0
    %4571 = vmatpush2.msra.mxu0 0.0
    %4572 = vmatprep.subr.mxu0 0.0
    %4573 = vmatpush2.msra.mxu0 0.0
    %4574 = vmatprep.subr.mxu0 0.0
    %4575 = vmatpush2.msra.mxu0 0.0
    %4576 = vmatprep.subr.mxu0 0.0
    %4577 = vmatpush2.msra.mxu0 0.0
    %4578 = vmatprep.subr.mxu0 0.0
    %4579 = vmatpush2.msra.mxu0 0.0
    %4580 = vmatprep.subr.mxu0 0.0
    %4581 = vmatpush2.msra.mxu0 0.0
    %4582 = vmatprep.subr.mxu0 0.0
    %4583 = vmatpush2.msra.mxu0 0.0
    %4584 = vmatprep.subr.mxu0 0.0
    %4585 = vmatpush2.msra.mxu0 0.0
    %4586 = vmatprep.subr.mxu0 0.0
    %4587 = vmatpush2.msra.mxu0 0.0
    %4588 = vmatprep.subr.mxu0 0.0
    %4589 = vmatpush2.msra.mxu0 0.0
    %4590 = vmatprep.mubr.f32.mxu0 0.0
    %4591 = vmatmul.mubr.f32.gmra.mxu0 %v4515
    %v4592 = vpop.f32.mrf.mxu0
    %v4593 = vadd.f32 %v4507, %v4592
    %v4594 = vpop.f32.mrf.mxu0
    %v4595 = vadd.f32 %v4511, %v4594
    %4596 = vmatprep.mubr.f32.mxu0 0.0
    %4597 = vmatmul.mubr.f32.gmra.mxu0 %v4518
    %v4598 = vpop.f32.mrf.mxu0
    %v4599 = vadd.f32 %v4507, %v4598
    %v4600 = vpop.f32.mrf.mxu0
    %v4601 = vadd.f32 %v4511, %v4600
    %4602 = vmatprep.mubr.f32.mxu0 0.0
    %4603 = vmatmul.mubr.f32.gmra.mxu0 %v4521
    %v4604 = vpop.f32.mrf.mxu0
    %v4605 = vadd.f32 %v4507, %v4604
    %v4606 = vpop.f32.mrf.mxu0
    %v4607 = vadd.f32 %v4511, %v4606
    %4608 = vmatprep.mubr.f32.mxu0 0.0
    %4609 = vmatmul.mubr.f32.gmra.mxu0 %v4524
    %v4610 = vpop.f32.mrf.mxu0
    %v4611 = vadd.f32 %v4507, %v4610
    %v4612 = vpop.f32.mrf.mxu0
    %v4613 = vadd.f32 %v4511, %v4612
    %4614 = vdwg.mxu0
    %v4615 = vmul.f32 %v4593, 0.5
    %v4616 = vmul.f32 %v4595, 0.5
    %v4617 = vmul.f32 %v4599, 0.5
    %v4618 = vmul.f32 %v4601, 0.5
    %v4619 = vmul.f32 %v4605, 0.5
    %v4620 = vmul.f32 %v4607, 0.5
    %v4621 = vmul.f32 %v4611, 0.5
    %v4622 = vmul.f32 %v4613, 0.5
    %v4623 = vmul.f32 %v4593, 0.044715
    %v4624 = vmul.f32 %v4595, 0.044715
    %v4625 = vmul.f32 %v4599, 0.044715
    %v4626 = vmul.f32 %v4601, 0.044715
    %v4627 = vmul.f32 %v4605, 0.044715
    %v4628 = vmul.f32 %v4607, 0.044715
    %v4629 = vmul.f32 %v4611, 0.044715
    %v4630 = vmul.f32 %v4613, 0.044715
    %v4631 = vmul.f32 %v4623, %v4593
    %v4632 = vmul.f32 %v4624, %v4595
    %v4633 = vmul.f32 %v4625, %v4599
    %v4634 = vmul.f32 %v4626, %v4601
    %v4635 = vmul.f32 %v4627, %v4605
    %v4636 = vmul.f32 %v4628, %v4607
    %v4637 = vmul.f32 %v4629, %v4611
    %v4638 = vmul.f32 %v4630, %v4613
    %v4639 = vmul.f32 %v4631, %v4593
    %v4640 = vmul.f32 %v4632, %v4595
    %v4641 = vmul.f32 %v4633, %v4599
    %v4642 = vmul.f32 %v4634, %v4601
    %v4643 = vmul.f32 %v4635, %v4605
    %v4644 = vmul.f32 %v4636, %v4607
    %v4645 = vmul.f32 %v4637, %v4611
    %v4646 = vmul.f32 %v4638, %v4613
    %v4647 = vadd.f32 %v4593, %v4639
    %v4648 = vadd.f32 %v4595, %v4640
    %v4649 = vadd.f32 %v4599, %v4641
    %v4650 = vadd.f32 %v4601, %v4642
    %v4651 = vadd.f32 %v4605, %v4643
    %v4652 = vadd.f32 %v4607, %v4644
    %v4653 = vadd.f32 %v4611, %v4645
    %v4654 = vadd.f32 %v4613, %v4646
    %v4655 = vmul.f32 %v4647, 0.7978846
    %v4656 = vmul.f32 %v4648, 0.7978846
    %v4657 = vmul.f32 %v4649, 0.7978846
    %v4658 = vmul.f32 %v4650, 0.7978846
    %v4659 = vmul.f32 %v4651, 0.7978846
    %v4660 = vmul.f32 %v4652, 0.7978846
    %v4661 = vmul.f32 %v4653, 0.7978846
    %v4662 = vmul.f32 %v4654, 0.7978846
    %v4663 = vtanh.pop %v4655
    %v4664 = vtanh.pop %v4656
    %v4665 = vtanh.pop %v4657
    %v4666 = vtanh.pop %v4658
    %v4667 = vtanh.pop %v4659
    %v4668 = vtanh.pop %v4660
    %v4669 = vtanh.pop %v4661
    %v4670 = vtanh.pop %v4662
    %v4671 = vadd.f32 %v4663, 1.0
    %v4672 = vadd.f32 %v4664, 1.0
    %v4673 = vadd.f32 %v4665, 1.0
    %v4674 = vadd.f32 %v4666, 1.0
    %v4675 = vadd.f32 %v4667, 1.0
    %v4676 = vadd.f32 %v4668, 1.0
    %v4677 = vadd.f32 %v4669, 1.0
    %v4678 = vadd.f32 %v4670, 1.0
    %v4679 = vmul.f32 %v4615, %v4671
    %v4680 = vmul.f32 %v4616, %v4672
    %v4681 = vmul.f32 %v4617, %v4673
    %v4682 = vmul.f32 %v4618, %v4674
    %v4683 = vmul.f32 %v4619, %v4675
    %v4684 = vmul.f32 %v4620, %v4676
    %v4685 = vmul.f32 %v4621, %v4677
    %v4686 = vmul.f32 %v4622, %v4678
    %v4687 = vld [vmem:[%s17] sm:$0xff]
    %v4688 = vld [vmem:[%s17 + $0x8] sm:$0xff]
    %v4689 = vld [vmem:[%s17 + $0x10] sm:$0xff]
    %v4690 = vld [vmem:[%s17 + $0x18] sm:$0xff]
    %v4691 = vld [vmem:[%s17 + $0x20] sm:$0xff]
    %v4692 = vld [vmem:[%s17 + $0x28] sm:$0xff]
    %v4693 = vld [vmem:[%s17 + $0x30] sm:$0xff]
    %v4694 = vld [vmem:[%s17 + $0x38] sm:$0xff]
    %v4695 = vld [vmem:[%s17 + $0x40] sm:$0xff]
    %v4696 = vld [vmem:[%s17 + $0x48] sm:$0xff]
    %v4697 = vld [vmem:[%s17 + $0x50] sm:$0xff]
    %v4698 = vld [vmem:[%s17 + $0x58] sm:$0xff]
    %v4699 = vld [vmem:[%s17 + $0x60] sm:$0xff]
    %v4700 = vld [vmem:[%s17 + $0x68] sm:$0xff]
    %v4701 = vld [vmem:[%s17 + $0x70] sm:$0xff]
    %v4702 = vld [vmem:[%s17 + $0x78] sm:$0xff]
    %v4703 = vld [vmem:[%s17 + $0x80] sm:$0xff]
    %v4704 = vld [vmem:[%s17 + $0x88] sm:$0xff]
    %v4705 = vld [vmem:[%s17 + $0x90] sm:$0xff]
    %v4706 = vld [vmem:[%s17 + $0x98] sm:$0xff]
    %v4707 = vld [vmem:[%s17 + $0xa0] sm:$0xff]
    %v4708 = vld [vmem:[%s17 + $0xa8] sm:$0xff]
    %v4709 = vld [vmem:[%s17 + $0xb0] sm:$0xff]
    %v4710 = vld [vmem:[%s17 + $0xb8] sm:$0xff]
    %v4711 = vld [vmem:[%s17 + $0xc0] sm:$0xff]
    %v4712 = vld [vmem:[%s17 + $0xc8] sm:$0xff]
    %v4713 = vld [vmem:[%s17 + $0xd0] sm:$0xff]
    %v4714 = vld [vmem:[%s17 + $0xd8] sm:$0xff]
    %v4715 = vld [vmem:[%s17 + $0xe0] sm:$0xff]
    %v4716 = vld [vmem:[%s17 + $0xe8] sm:$0xff]
    %v4717 = vld [vmem:[%s17 + $0xf0] sm:$0xff]
    %v4718 = vld [vmem:[%s17 + $0xf8] sm:$0xff]
    %v4719 = vld [vmem:[%s18] sm:$0x1]
    %v4721 = vlaneseq
    %v4722 = vshrl.u32 %v4721, 7
    %v4723 = vsub.s32 0, %v4722
    %v4724 = vrot.slane %v4719, %v4723
    %4726 = vmatprep.subr.mxu0 0.0
    %4727 = vmatpush1.msra.mxu0 %v4702
    %4728 = vmatprep.subr.mxu0 0.0
    %4729 = vmatpush1.msra.mxu0 %v4701
    %4730 = vmatprep.subr.mxu0 0.0
    %4731 = vmatpush1.msra.mxu0 %v4700
    %4732 = vmatprep.subr.mxu0 0.0
    %4733 = vmatpush1.msra.mxu0 %v4699
    %4734 = vmatprep.subr.mxu0 0.0
    %4735 = vmatpush1.msra.mxu0 %v4698
    %4736 = vmatprep.subr.mxu0 0.0
    %4737 = vmatpush1.msra.mxu0 %v4697
    %4738 = vmatprep.subr.mxu0 0.0
    %4739 = vmatpush1.msra.mxu0 %v4696
    %4740 = vmatprep.subr.mxu0 0.0
    %4741 = vmatpush1.msra.mxu0 %v4695
    %4742 = vmatprep.subr.mxu0 0.0
    %4743 = vmatpush1.msra.mxu0 %v4694
    %4744 = vmatprep.subr.mxu0 0.0
    %4745 = vmatpush1.msra.mxu0 %v4693
    %4746 = vmatprep.subr.mxu0 0.0
    %4747 = vmatpush1.msra.mxu0 %v4692
    %4748 = vmatprep.subr.mxu0 0.0
    %4749 = vmatpush1.msra.mxu0 %v4691
    %4750 = vmatprep.subr.mxu0 0.0
    %4751 = vmatpush1.msra.mxu0 %v4690
    %4752 = vmatprep.subr.mxu0 0.0
    %4753 = vmatpush1.msra.mxu0 %v4689
    %4754 = vmatprep.subr.mxu0 0.0
    %4755 = vmatpush1.msra.mxu0 %v4688
    %4756 = vmatprep.subr.mxu0 0.0
    %4757 = vmatpush1.msra.mxu0 %v4687
    %4758 = vmatprep.subr.mxu0 0.0
    %4759 = vmatpush2.msra.mxu0 %v4718
    %4760 = vmatprep.subr.mxu0 0.0
    %4761 = vmatpush2.msra.mxu0 %v4717
    %4762 = vmatprep.subr.mxu0 0.0
    %4763 = vmatpush2.msra.mxu0 %v4716
    %4764 = vmatprep.subr.mxu0 0.0
    %4765 = vmatpush2.msra.mxu0 %v4715
    %4766 = vmatprep.subr.mxu0 0.0
    %4767 = vmatpush2.msra.mxu0 %v4714
    %4768 = vmatprep.subr.mxu0 0.0
    %4769 = vmatpush2.msra.mxu0 %v4713
    %4770 = vmatprep.subr.mxu0 0.0
    %4771 = vmatpush2.msra.mxu0 %v4712
    %4772 = vmatprep.subr.mxu0 0.0
    %4773 = vmatpush2.msra.mxu0 %v4711
    %4774 = vmatprep.subr.mxu0 0.0
    %4775 = vmatpush2.msra.mxu0 %v4710
    %4776 = vmatprep.subr.mxu0 0.0
    %4777 = vmatpush2.msra.mxu0 %v4709
    %4778 = vmatprep.subr.mxu0 0.0
    %4779 = vmatpush2.msra.mxu0 %v4708
    %4780 = vmatprep.subr.mxu0 0.0
    %4781 = vmatpush2.msra.mxu0 %v4707
    %4782 = vmatprep.subr.mxu0 0.0
    %4783 = vmatpush2.msra.mxu0 %v4706
    %4784 = vmatprep.subr.mxu0 0.0
    %4785 = vmatpush2.msra.mxu0 %v4705
    %4786 = vmatprep.subr.mxu0 0.0
    %4787 = vmatpush2.msra.mxu0 %v4704
    %4788 = vmatprep.subr.mxu0 0.0
    %4789 = vmatpush2.msra.mxu0 %v4703
    %4790 = vmatprep.mubr.f32.mxu0 %v4680
    %4791 = vmatmul.mubr.f32.gmra.mxu0 %v4679
    %v4792 = vpop.f32.mrf.mxu0
    %v4793 = vadd.f32 %v4724, %v4792
    %v4794 = vpop.f32.mrf.mxu0
    %4795 = vmatprep.mubr.f32.mxu0 %v4682
    %4796 = vmatmul.mubr.f32.gmra.mxu0 %v4681
    %v4797 = vpop.f32.mrf.mxu0
    %v4798 = vadd.f32 %v4724, %v4797
    %v4799 = vpop.f32.mrf.mxu0
    %4800 = vmatprep.mubr.f32.mxu0 %v4684
    %4801 = vmatmul.mubr.f32.gmra.mxu0 %v4683
    %v4802 = vpop.f32.mrf.mxu0
    %v4803 = vadd.f32 %v4724, %v4802
    %v4804 = vpop.f32.mrf.mxu0
    %4805 = vmatprep.mubr.f32.mxu0 %v4686
    %4806 = vmatmul.mubr.f32.gmra.mxu0 %v4685
    %v4807 = vpop.f32.mrf.mxu0
    %v4808 = vadd.f32 %v4724, %v4807
    %v4809 = vpop.f32.mrf.mxu0
    %4810 = vdwg.mxu0
    %v4811 = vmul.f32 %v105, %v4793
    %v4812 = vmul.f32 %v106, %v4798
    %v4813 = vmul.f32 %v107, %v4803
    %v4814 = vmul.f32 %v108, %v4808
    %v4815 = vadd.f32 %v4422, %v4811
    %v4816 = vadd.f32 %v4423, %v4812
    %v4817 = vadd.f32 %v4424, %v4813
    %v4818 = vadd.f32 %v4425, %v4814
    %v4819 = vmul.f32 %v4815, 0.03125
    %v4820 = vmul.f32 %v4816, 0.03125
    %v4821 = vmul.f32 %v4817, 0.03125
    %v4822 = vmul.f32 %v4818, 0.03125
    %v4823 = vadd.f32 %v236, %v4819
    %v4824 = vadd.f32 %v237, %v4820
    %v4825 = vadd.f32 %v238, %v4821
    %v4826 = vadd.f32 %v239, %v4822
    %v4827 = vsel %vm240, %v4823, 0.0
    %4828 = vadd.xlane.f32.xlu0 %v4827
    %v4829 = vpop.xlane.xlu0 %4828
    %v4830 = vsel %vm240, %v4824, 0.0
    %4831 = vadd.xlane.f32.xlu0 %v4830
    %v4832 = vpop.xlane.xlu0 %4831
    %v4833 = vsel %vm240, %v4825, 0.0
    %4834 = vadd.xlane.f32.xlu0 %v4833
    %v4835 = vpop.xlane.xlu0 %4834
    %v4836 = vsel %vm240, %v4826, 0.0
    %4837 = vadd.xlane.f32.xlu0 %v4836
    %v4838 = vpop.xlane.xlu0 %4837
    %v4839 = vmul.f32 %v4829, %v253
    %v4840 = vmul.f32 %v4832, %v253
    %v4841 = vmul.f32 %v4835, %v253
    %v4842 = vmul.f32 %v4838, %v253
    %v4843 = vsub.f32 %v4823, %v4839
    %v4844 = vsub.f32 %v4824, %v4840
    %v4845 = vsub.f32 %v4825, %v4841
    %v4846 = vsub.f32 %v4826, %v4842
    %v4847 = vmul.f32 %v4843, %v4843
    %v4848 = vmul.f32 %v4844, %v4844
    %v4849 = vmul.f32 %v4845, %v4845
    %v4850 = vmul.f32 %v4846, %v4846
    %v4851 = vsel %vm240, %v4847, 0.0
    %4852 = vadd.xlane.f32.xlu0 %v4851
    %v4853 = vpop.xlane.xlu0 %4852
    %v4854 = vsel %vm240, %v4848, 0.0
    %4855 = vadd.xlane.f32.xlu0 %v4854
    %v4856 = vpop.xlane.xlu0 %4855
    %v4857 = vsel %vm240, %v4849, 0.0
    %4858 = vadd.xlane.f32.xlu0 %v4857
    %v4859 = vpop.xlane.xlu0 %4858
    %v4860 = vsel %vm240, %v4850, 0.0
    %4861 = vadd.xlane.f32.xlu0 %v4860
    %v4862 = vpop.xlane.xlu0 %4861
    %v4863 = vmul.f32 %v4853, %v253
    %v4864 = vmul.f32 %v4856, %v253
    %v4865 = vmul.f32 %v4859, %v253
    %v4866 = vmul.f32 %v4862, %v253
    %v4867 = vadd.f32 %v4863, 1e-06
    %v4868 = vadd.f32 %v4864, 1e-06
    %v4869 = vadd.f32 %v4865, 1e-06
    %v4870 = vadd.f32 %v4866, 1e-06
    %v4871 = vrsqrt.pop %v4867
    %v4872 = vrsqrt.pop %v4868
    %v4873 = vrsqrt.pop %v4869
    %v4874 = vrsqrt.pop %v4870
    %v4875 = vmul.f32 %v4843, %v4871
    %v4876 = vmul.f32 %v4844, %v4872
    %v4877 = vmul.f32 %v4845, %v4873
    %v4878 = vmul.f32 %v4846, %v4874
    %v4879 = vmul.f32 %v4875, %v81
    %v4880 = vmul.f32 %v4876, %v82
    %v4881 = vmul.f32 %v4877, %v83
    %v4882 = vmul.f32 %v4878, %v84
    %v4883 = vadd.f32 %v4879, %v72
    %v4884 = vadd.f32 %v4880, %v73
    %v4885 = vadd.f32 %v4881, %v74
    %v4886 = vadd.f32 %v4882, %v75
    %v4887 = vld [vmem:[%s7] sm:$0xff]
    %v4888 = vld [vmem:[%s7 + $0x8] sm:$0xff]
    %v4889 = vld [vmem:[%s7 + $0x10] sm:$0xff]
    %v4890 = vld [vmem:[%s7 + $0x18] sm:$0xff]
    %v4891 = vld [vmem:[%s7 + $0x20] sm:$0xff]
    %v4892 = vld [vmem:[%s7 + $0x28] sm:$0xff]
    %v4893 = vld [vmem:[%s7 + $0x30] sm:$0xff]
    %v4894 = vld [vmem:[%s7 + $0x38] sm:$0xff]
    %v4895 = vld [vmem:[%s8] sm:$0x1]
    %v4897 = vlaneseq
    %v4898 = vshrl.u32 %v4897, 7
    %v4899 = vsub.s32 0, %v4898
    %v4900 = vrot.slane %v4895, %v4899
    %v4903 = vsel %vm240, %v4883, 0
    %v4906 = vsel %vm240, %v4884, 0
    %v4909 = vsel %vm240, %v4885, 0
    %v4912 = vsel %vm240, %v4886, 0
    %4914 = vmatprep.subr.mxu0 0.0
    %4915 = vmatpush1.msra.mxu0 0.0
    %4916 = vmatprep.subr.mxu0 0.0
    %4917 = vmatpush1.msra.mxu0 0.0
    %4918 = vmatprep.subr.mxu0 0.0
    %4919 = vmatpush1.msra.mxu0 0.0
    %4920 = vmatprep.subr.mxu0 0.0
    %4921 = vmatpush1.msra.mxu0 0.0
    %4922 = vmatprep.subr.mxu0 0.0
    %4923 = vmatpush1.msra.mxu0 0.0
    %4924 = vmatprep.subr.mxu0 0.0
    %4925 = vmatpush1.msra.mxu0 0.0
    %4926 = vmatprep.subr.mxu0 0.0
    %4927 = vmatpush1.msra.mxu0 0.0
    %4928 = vmatprep.subr.mxu0 0.0
    %4929 = vmatpush1.msra.mxu0 0.0
    %4930 = vmatprep.subr.mxu0 0.0
    %4931 = vmatpush1.msra.mxu0 %v4894
    %4932 = vmatprep.subr.mxu0 0.0
    %4933 = vmatpush1.msra.mxu0 %v4893
    %4934 = vmatprep.subr.mxu0 0.0
    %4935 = vmatpush1.msra.mxu0 %v4892
    %4936 = vmatprep.subr.mxu0 0.0
    %4937 = vmatpush1.msra.mxu0 %v4891
    %4938 = vmatprep.subr.mxu0 0.0
    %4939 = vmatpush1.msra.mxu0 %v4890
    %4940 = vmatprep.subr.mxu0 0.0
    %4941 = vmatpush1.msra.mxu0 %v4889
    %4942 = vmatprep.subr.mxu0 0.0
    %4943 = vmatpush1.msra.mxu0 %v4888
    %4944 = vmatprep.subr.mxu0 0.0
    %4945 = vmatpush1.msra.mxu0 %v4887
    %4946 = vmatprep.subr.mxu0 0.0
    %4947 = vmatpush2.msra.mxu0 0.0
    %4948 = vmatprep.subr.mxu0 0.0
    %4949 = vmatpush2.msra.mxu0 0.0
    %4950 = vmatprep.subr.mxu0 0.0
    %4951 = vmatpush2.msra.mxu0 0.0
    %4952 = vmatprep.subr.mxu0 0.0
    %4953 = vmatpush2.msra.mxu0 0.0
    %4954 = vmatprep.subr.mxu0 0.0
    %4955 = vmatpush2.msra.mxu0 0.0
    %4956 = vmatprep.subr.mxu0 0.0
    %4957 = vmatpush2.msra.mxu0 0.0
    %4958 = vmatprep.subr.mxu0 0.0
    %4959 = vmatpush2.msra.mxu0 0.0
    %4960 = vmatprep.subr.mxu0 0.0
    %4961 = vmatpush2.msra.mxu0 0.0
    %4962 = vmatprep.subr.mxu0 0.0
    %4963 = vmatpush2.msra.mxu0 0.0
    %4964 = vmatprep.subr.mxu0 0.0
    %4965 = vmatpush2.msra.mxu0 0.0
    %4966 = vmatprep.subr.mxu0 0.0
    %4967 = vmatpush2.msra.mxu0 0.0
    %4968 = vmatprep.subr.mxu0 0.0
    %4969 = vmatpush2.msra.mxu0 0.0
    %4970 = vmatprep.subr.mxu0 0.0
    %4971 = vmatpush2.msra.mxu0 0.0
    %4972 = vmatprep.subr.mxu0 0.0
    %4973 = vmatpush2.msra.mxu0 0.0
    %4974 = vmatprep.subr.mxu0 0.0
    %4975 = vmatpush2.msra.mxu0 0.0
    %4976 = vmatprep.subr.mxu0 0.0
    %4977 = vmatpush2.msra.mxu0 0.0
    %4978 = vmatprep.mubr.f32.mxu0 0.0
    %4979 = vmatmul.mubr.f32.gmra.mxu0 %v4903
    %v4980 = vpop.f32.mrf.mxu0
    %v4981 = vadd.f32 %v4900, %v4980
    %v4982 = vpop.f32.mrf.mxu0
    %4983 = vmatprep.mubr.f32.mxu0 0.0
    %4984 = vmatmul.mubr.f32.gmra.mxu0 %v4906
    %v4985 = vpop.f32.mrf.mxu0
    %v4986 = vadd.f32 %v4900, %v4985
    %v4987 = vpop.f32.mrf.mxu0
    %4988 = vmatprep.mubr.f32.mxu0 0.0
    %4989 = vmatmul.mubr.f32.gmra.mxu0 %v4909
    %v4990 = vpop.f32.mrf.mxu0
    %v4991 = vadd.f32 %v4900, %v4990
    %v4992 = vpop.f32.mrf.mxu0
    %4993 = vmatprep.mubr.f32.mxu0 0.0
    %4994 = vmatmul.mubr.f32.gmra.mxu0 %v4912
    %v4995 = vpop.f32.mrf.mxu0
    %v4996 = vadd.f32 %v4900, %v4995
    %v4997 = vpop.f32.mrf.mxu0
    %4998 = vdwg.mxu0
    %v4999 = vld [vmem:[%s9] sm:$0xff]
    %v5000 = vld [vmem:[%s9 + $0x8] sm:$0xff]
    %v5001 = vld [vmem:[%s9 + $0x10] sm:$0xff]
    %v5002 = vld [vmem:[%s9 + $0x18] sm:$0xff]
    %v5003 = vld [vmem:[%s9 + $0x20] sm:$0xff]
    %v5004 = vld [vmem:[%s9 + $0x28] sm:$0xff]
    %v5005 = vld [vmem:[%s9 + $0x30] sm:$0xff]
    %v5006 = vld [vmem:[%s9 + $0x38] sm:$0xff]
    %v5007 = vld [vmem:[%s10] sm:$0x1]
    %v5009 = vlaneseq
    %v5010 = vshrl.u32 %v5009, 7
    %v5011 = vsub.s32 0, %v5010
    %v5012 = vrot.slane %v5007, %v5011
    %5014 = vmatprep.subr.mxu0 0.0
    %5015 = vmatpush1.msra.mxu0 0.0
    %5016 = vmatprep.subr.mxu0 0.0
    %5017 = vmatpush1.msra.mxu0 0.0
    %5018 = vmatprep.subr.mxu0 0.0
    %5019 = vmatpush1.msra.mxu0 0.0
    %5020 = vmatprep.subr.mxu0 0.0
    %5021 = vmatpush1.msra.mxu0 0.0
    %5022 = vmatprep.subr.mxu0 0.0
    %5023 = vmatpush1.msra.mxu0 0.0
    %5024 = vmatprep.subr.mxu0 0.0
    %5025 = vmatpush1.msra.mxu0 0.0
    %5026 = vmatprep.subr.mxu0 0.0
    %5027 = vmatpush1.msra.mxu0 0.0
    %5028 = vmatprep.subr.mxu0 0.0
    %5029 = vmatpush1.msra.mxu0 0.0
    %5030 = vmatprep.subr.mxu0 0.0
    %5031 = vmatpush1.msra.mxu0 %v5006
    %5032 = vmatprep.subr.mxu0 0.0
    %5033 = vmatpush1.msra.mxu0 %v5005
    %5034 = vmatprep.subr.mxu0 0.0
    %5035 = vmatpush1.msra.mxu0 %v5004
    %5036 = vmatprep.subr.mxu0 0.0
    %5037 = vmatpush1.msra.mxu0 %v5003
    %5038 = vmatprep.subr.mxu0 0.0
    %5039 = vmatpush1.msra.mxu0 %v5002
    %5040 = vmatprep.subr.mxu0 0.0
    %5041 = vmatpush1.msra.mxu0 %v5001
    %5042 = vmatprep.subr.mxu0 0.0
    %5043 = vmatpush1.msra.mxu0 %v5000
    %5044 = vmatprep.subr.mxu0 0.0
    %5045 = vmatpush1.msra.mxu0 %v4999
    %5046 = vmatprep.subr.mxu0 0.0
    %5047 = vmatpush2.msra.mxu0 0.0
    %5048 = vmatprep.subr.mxu0 0.0
    %5049 = vmatpush2.msra.mxu0 0.0
    %5050 = vmatprep.subr.mxu0 0.0
    %5051 = vmatpush2.msra.mxu0 0.0
    %5052 = vmatprep.subr.mxu0 0.0
    %5053 = vmatpush2.msra.mxu0 0.0
    %5054 = vmatprep.subr.mxu0 0.0
    %5055 = vmatpush2.msra.mxu0 0.0
    %5056 = vmatprep.subr.mxu0 0.0
    %5057 = vmatpush2.msra.mxu0 0.0
    %5058 = vmatprep.subr.mxu0 0.0
    %5059 = vmatpush2.msra.mxu0 0.0
    %5060 = vmatprep.subr.mxu0 0.0
    %5061 = vmatpush2.msra.mxu0 0.0
    %5062 = vmatprep.subr.mxu0 0.0
    %5063 = vmatpush2.msra.mxu0 0.0
    %5064 = vmatprep.subr.mxu0 0.0
    %5065 = vmatpush2.msra.mxu0 0.0
    %5066 = vmatprep.subr.mxu0 0.0
    %5067 = vmatpush2.msra.mxu0 0.0
    %5068 = vmatprep.subr.mxu0 0.0
    %5069 = vmatpush2.msra.mxu0 0.0
    %5070 = vmatprep.subr.mxu0 0.0
    %5071 = vmatpush2.msra.mxu0 0.0
    %5072 = vmatprep.subr.mxu0 0.0
    %5073 = vmatpush2.msra.mxu0 0.0
    %5074 = vmatprep.subr.mxu0 0.0
    %5075 = vmatpush2.msra.mxu0 0.0
    %5076 = vmatprep.subr.mxu0 0.0
    %5077 = vmatpush2.msra.mxu0 0.0
    %5078 = vmatprep.mubr.f32.mxu0 0.0
    %5079 = vmatmul.mubr.f32.gmra.mxu0 %v4903
    %v5080 = vpop.f32.mrf.mxu0
    %v5081 = vadd.f32 %v5012, %v5080
    %v5082 = vpop.f32.mrf.mxu0
    %5083 = vmatprep.mubr.f32.mxu0 0.0
    %5084 = vmatmul.mubr.f32.gmra.mxu0 %v4906
    %v5085 = vpop.f32.mrf.mxu0
    %v5086 = vadd.f32 %v5012, %v5085
    %v5087 = vpop.f32.mrf.mxu0
    %5088 = vmatprep.mubr.f32.mxu0 0.0
    %5089 = vmatmul.mubr.f32.gmra.mxu0 %v4909
    %v5090 = vpop.f32.mrf.mxu0
    %v5091 = vadd.f32 %v5012, %v5090
    %v5092 = vpop.f32.mrf.mxu0
    %5093 = vmatprep.mubr.f32.mxu0 0.0
    %5094 = vmatmul.mubr.f32.gmra.mxu0 %v4912
    %v5095 = vpop.f32.mrf.mxu0
    %v5096 = vadd.f32 %v5012, %v5095
    %v5097 = vpop.f32.mrf.mxu0
    %5098 = vdwg.mxu0
    %v5099 = vld [vmem:[%s11] sm:$0xff]
    %v5100 = vld [vmem:[%s11 + $0x8] sm:$0xff]
    %v5101 = vld [vmem:[%s11 + $0x10] sm:$0xff]
    %v5102 = vld [vmem:[%s11 + $0x18] sm:$0xff]
    %v5103 = vld [vmem:[%s11 + $0x20] sm:$0xff]
    %v5104 = vld [vmem:[%s11 + $0x28] sm:$0xff]
    %v5105 = vld [vmem:[%s11 + $0x30] sm:$0xff]
    %v5106 = vld [vmem:[%s11 + $0x38] sm:$0xff]
    %v5107 = vld [vmem:[%s12] sm:$0x1]
    %v5109 = vlaneseq
    %v5110 = vshrl.u32 %v5109, 7
    %v5111 = vsub.s32 0, %v5110
    %v5112 = vrot.slane %v5107, %v5111
    %5114 = vmatprep.subr.mxu0 0.0
    %5115 = vmatpush1.msra.mxu0 0.0
    %5116 = vmatprep.subr.mxu0 0.0
    %5117 = vmatpush1.msra.mxu0 0.0
    %5118 = vmatprep.subr.mxu0 0.0
    %5119 = vmatpush1.msra.mxu0 0.0
    %5120 = vmatprep.subr.mxu0 0.0
    %5121 = vmatpush1.msra.mxu0 0.0
    %5122 = vmatprep.subr.mxu0 0.0
    %5123 = vmatpush1.msra.mxu0 0.0
    %5124 = vmatprep.subr.mxu0 0.0
    %5125 = vmatpush1.msra.mxu0 0.0
    %5126 = vmatprep.subr.mxu0 0.0
    %5127 = vmatpush1.msra.mxu0 0.0
    %5128 = vmatprep.subr.mxu0 0.0
    %5129 = vmatpush1.msra.mxu0 0.0
    %5130 = vmatprep.subr.mxu0 0.0
    %5131 = vmatpush1.msra.mxu0 %v5106
    %5132 = vmatprep.subr.mxu0 0.0
    %5133 = vmatpush1.msra.mxu0 %v5105
    %5134 = vmatprep.subr.mxu0 0.0
    %5135 = vmatpush1.msra.mxu0 %v5104
    %5136 = vmatprep.subr.mxu0 0.0
    %5137 = vmatpush1.msra.mxu0 %v5103
    %5138 = vmatprep.subr.mxu0 0.0
    %5139 = vmatpush1.msra.mxu0 %v5102
    %5140 = vmatprep.subr.mxu0 0.0
    %5141 = vmatpush1.msra.mxu0 %v5101
    %5142 = vmatprep.subr.mxu0 0.0
    %5143 = vmatpush1.msra.mxu0 %v5100
    %5144 = vmatprep.subr.mxu0 0.0
    %5145 = vmatpush1.msra.mxu0 %v5099
    %5146 = vmatprep.subr.mxu0 0.0
    %5147 = vmatpush2.msra.mxu0 0.0
    %5148 = vmatprep.subr.mxu0 0.0
    %5149 = vmatpush2.msra.mxu0 0.0
    %5150 = vmatprep.subr.mxu0 0.0
    %5151 = vmatpush2.msra.mxu0 0.0
    %5152 = vmatprep.subr.mxu0 0.0
    %5153 = vmatpush2.msra.mxu0 0.0
    %5154 = vmatprep.subr.mxu0 0.0
    %5155 = vmatpush2.msra.mxu0 0.0
    %5156 = vmatprep.subr.mxu0 0.0
    %5157 = vmatpush2.msra.mxu0 0.0
    %5158 = vmatprep.subr.mxu0 0.0
    %5159 = vmatpush2.msra.mxu0 0.0
    %5160 = vmatprep.subr.mxu0 0.0
    %5161 = vmatpush2.msra.mxu0 0.0
    %5162 = vmatprep.subr.mxu0 0.0
    %5163 = vmatpush2.msra.mxu0 0.0
    %5164 = vmatprep.subr.mxu0 0.0
    %5165 = vmatpush2.msra.mxu0 0.0
    %5166 = vmatprep.subr.mxu0 0.0
    %5167 = vmatpush2.msra.mxu0 0.0
    %5168 = vmatprep.subr.mxu0 0.0
    %5169 = vmatpush2.msra.mxu0 0.0
    %5170 = vmatprep.subr.mxu0 0.0
    %5171 = vmatpush2.msra.mxu0 0.0
    %5172 = vmatprep.subr.mxu0 0.0
    %5173 = vmatpush2.msra.mxu0 0.0
    %5174 = vmatprep.subr.mxu0 0.0
    %5175 = vmatpush2.msra.mxu0 0.0
    %5176 = vmatprep.subr.mxu0 0.0
    %5177 = vmatpush2.msra.mxu0 0.0
    %5178 = vmatprep.mubr.f32.mxu0 0.0
    %5179 = vmatmul.mubr.f32.gmra.mxu0 %v4903
    %v5180 = vpop.f32.mrf.mxu0
    %v5181 = vadd.f32 %v5112, %v5180
    %v5182 = vpop.f32.mrf.mxu0
    %5183 = vmatprep.mubr.f32.mxu0 0.0
    %5184 = vmatmul.mubr.f32.gmra.mxu0 %v4906
    %v5185 = vpop.f32.mrf.mxu0
    %v5186 = vadd.f32 %v5112, %v5185
    %v5187 = vpop.f32.mrf.mxu0
    %5188 = vmatprep.mubr.f32.mxu0 0.0
    %5189 = vmatmul.mubr.f32.gmra.mxu0 %v4909
    %v5190 = vpop.f32.mrf.mxu0
    %v5191 = vadd.f32 %v5112, %v5190
    %v5192 = vpop.f32.mrf.mxu0
    %5193 = vmatprep.mubr.f32.mxu0 0.0
    %5194 = vmatmul.mubr.f32.gmra.mxu0 %v4912
    %v5195 = vpop.f32.mrf.mxu0
    %v5196 = vadd.f32 %v5112, %v5195
    %v5197 = vpop.f32.mrf.mxu0
    %5198 = vdwg.mxu0
    %v5200 = vsel %vm614, %v4981, 0
    %v5203 = vsel %vm614, %v4986, 0
    %v5206 = vsel %vm614, %v4991, 0
    %v5209 = vsel %vm614, %v4996, 0
    %v5212 = vsel %vm614, %v5081, 0
    %v5215 = vsel %vm614, %v5086, 0
    %v5218 = vsel %vm614, %v5091, 0
    %v5221 = vsel %vm614, %v5096, 0
    %5223 = vmatprep.subr.mxu0 0.0
    %5224 = vmatpush1.xpose.msra.mxu0 0.0
    %5225 = vmatprep.subr.mxu0 0.0
    %5226 = vmatpush1.xpose.msra.mxu0 0.0
    %5227 = vmatprep.subr.mxu0 0.0
    %5228 = vmatpush1.xpose.msra.mxu0 0.0
    %5229 = vmatprep.subr.mxu0 0.0
    %5230 = vmatpush1.xpose.msra.mxu0 0.0
    %5231 = vmatprep.subr.mxu0 0.0
    %5232 = vmatpush1.xpose.msra.mxu0 0.0
    %5233 = vmatprep.subr.mxu0 0.0
    %5234 = vmatpush1.xpose.msra.mxu0 0.0
    %5235 = vmatprep.subr.mxu0 0.0
    %5236 = vmatpush1.xpose.msra.mxu0 0.0
    %5237 = vmatprep.subr.mxu0 0.0
    %5238 = vmatpush1.xpose.msra.mxu0 0.0
    %5239 = vmatprep.subr.mxu0 0.0
    %5240 = vmatpush1.xpose.msra.mxu0 0.0
    %5241 = vmatprep.subr.mxu0 0.0
    %5242 = vmatpush1.xpose.msra.mxu0 0.0
    %5243 = vmatprep.subr.mxu0 0.0
    %5244 = vmatpush1.xpose.msra.mxu0 0.0
    %5245 = vmatprep.subr.mxu0 0.0
    %5246 = vmatpush1.xpose.msra.mxu0 0.0
    %5247 = vmatprep.subr.mxu0 0.0
    %5248 = vmatpush1.xpose.msra.mxu0 %v5221
    %5249 = vmatprep.subr.mxu0 0.0
    %5250 = vmatpush1.xpose.msra.mxu0 %v5218
    %5251 = vmatprep.subr.mxu0 0.0
    %5252 = vmatpush1.xpose.msra.mxu0 %v5215
    %5253 = vmatprep.subr.mxu0 0.0
    %5254 = vmatpush1.xpose.msra.mxu0 %v5212
    %5255 = vmatprep.subr.mxu0 0.0
    %5256 = vmatpush2.xpose.msra.mxu0 0.0
    %5257 = vmatprep.subr.mxu0 0.0
    %5258 = vmatpush2.xpose.msra.mxu0 0.0
    %5259 = vmatprep.subr.mxu0 0.0
    %5260 = vmatpush2.xpose.msra.mxu0 0.0
    %5261 = vmatprep.subr.mxu0 0.0
    %5262 = vmatpush2.xpose.msra.mxu0 0.0
    %5263 = vmatprep.subr.mxu0 0.0
    %5264 = vmatpush2.xpose.msra.mxu0 0.0
    %5265 = vmatprep.subr.mxu0 0.0
    %5266 = vmatpush2.xpose.msra.mxu0 0.0
    %5267 = vmatprep.subr.mxu0 0.0
    %5268 = vmatpush2.xpose.msra.mxu0 0.0
    %5269 = vmatprep.subr.mxu0 0.0
    %5270 = vmatpush2.xpose.msra.mxu0 0.0
    %5271 = vmatprep.subr.mxu0 0.0
    %5272 = vmatpush2.xpose.msra.mxu0 0.0
    %5273 = vmatprep.subr.mxu0 0.0
    %5274 = vmatpush2.xpose.msra.mxu0 0.0
    %5275 = vmatprep.subr.mxu0 0.0
    %5276 = vmatpush2.xpose.msra.mxu0 0.0
    %5277 = vmatprep.subr.mxu0 0.0
    %5278 = vmatpush2.xpose.msra.mxu0 0.0
    %5279 = vmatprep.subr.mxu0 0.0
    %5280 = vmatpush2.xpose.msra.mxu0 0.0
    %5281 = vmatprep.subr.mxu0 0.0
    %5282 = vmatpush2.xpose.msra.mxu0 0.0
    %5283 = vmatprep.subr.mxu0 0.0
    %5284 = vmatpush2.xpose.msra.mxu0 0.0
    %5285 = vmatprep.subr.mxu0 0.0
    %5286 = vmatpush2.xpose.msra.mxu0 0.0
    %5287 = vmatprep.mubr.f32.mxu0 0.0
    %5288 = vmatmul.mubr.f32.gmra.mxu0 %v5200
    %v5289 = vpop.f32.mrf.mxu0
    %v5290 = vadd.f32 0.0, %v5289
    %v5291 = vpop.f32.mrf.mxu0
    %5292 = vmatprep.mubr.f32.mxu0 0.0
    %5293 = vmatmul.mubr.f32.gmra.mxu0 %v5203
    %v5294 = vpop.f32.mrf.mxu0
    %v5295 = vadd.f32 0.0, %v5294
    %v5296 = vpop.f32.mrf.mxu0
    %5297 = vmatprep.mubr.f32.mxu0 0.0
    %5298 = vmatmul.mubr.f32.gmra.mxu0 %v5206
    %v5299 = vpop.f32.mrf.mxu0
    %v5300 = vadd.f32 0.0, %v5299
    %v5301 = vpop.f32.mrf.mxu0
    %5302 = vmatprep.mubr.f32.mxu0 0.0
    %5303 = vmatmul.mubr.f32.gmra.mxu0 %v5209
    %v5304 = vpop.f32.mrf.mxu0
    %v5305 = vadd.f32 0.0, %v5304
    %v5306 = vpop.f32.mrf.mxu0
    %5307 = vdwg.mxu0
    %v5308 = vmul.f32 %v5290, 0.25
    %v5309 = vmul.f32 %v5295, 0.25
    %v5310 = vmul.f32 %v5300, 0.25
    %v5311 = vmul.f32 %v5305, 0.25
    %v5312 = vadd.f32 %v5308, %v68
    %v5313 = vadd.f32 %v5309, %v69
    %v5314 = vadd.f32 %v5310, %v70
    %v5315 = vadd.f32 %v5311, %v71
    %v5316 = vsel %vm124, %v5312, -inf
    %5317 = vmax.xlane.f32.xlu0 %v5316
    %v5318 = vpop.xlane.xlu0 %5317
    %v5319 = vsel %vm124, %v5313, -inf
    %5320 = vmax.xlane.f32.xlu0 %v5319
    %v5321 = vpop.xlane.xlu0 %5320
    %v5322 = vsel %vm124, %v5314, -inf
    %5323 = vmax.xlane.f32.xlu0 %v5322
    %v5324 = vpop.xlane.xlu0 %5323
    %v5325 = vsel %vm124, %v5315, -inf
    %5326 = vmax.xlane.f32.xlu0 %v5325
    %v5327 = vpop.xlane.xlu0 %5326
    %v5328 = vsub.f32 %v5312, %v5318
    %v5329 = vsub.f32 %v5313, %v5321
    %v5330 = vsub.f32 %v5314, %v5324
    %v5331 = vsub.f32 %v5315, %v5327
    %v5332 = vmul.f32 %v5328, 1.442695
    %v5333 = vpow.pop %v5332
    %v5334 = vmul.f32 %v5329, 1.442695
    %v5335 = vpow.pop %v5334
    %v5336 = vmul.f32 %v5330, 1.442695
    %v5337 = vpow.pop %v5336
    %v5338 = vmul.f32 %v5331, 1.442695
    %v5339 = vpow.pop %v5338
    %v5340 = vsel %vm124, %v5333, 0.0
    %5341 = vadd.xlane.f32.xlu0 %v5340
    %v5342 = vpop.xlane.xlu0 %5341
    %v5343 = vsel %vm124, %v5335, 0.0
    %5344 = vadd.xlane.f32.xlu0 %v5343
    %v5345 = vpop.xlane.xlu0 %5344
    %v5346 = vsel %vm124, %v5337, 0.0
    %5347 = vadd.xlane.f32.xlu0 %v5346
    %v5348 = vpop.xlane.xlu0 %5347
    %v5349 = vsel %vm124, %v5339, 0.0
    %5350 = vadd.xlane.f32.xlu0 %v5349
    %v5351 = vpop.xlane.xlu0 %5350
    %v5352 = vrcp.pop %v5342
    %v5353 = vmul.f32 %v5333, %v5352
    %v5354 = vrcp.pop %v5345
    %v5355 = vmul.f32 %v5335, %v5354
    %v5356 = vrcp.pop %v5348
    %v5357 = vmul.f32 %v5337, %v5356
    %v5358 = vrcp.pop %v5351
    %v5359 = vmul.f32 %v5339, %v5358
    %v5361 = vsel %vm124, %v5353, 0
    %v5364 = vsel %vm124, %v5355, 0
    %v5367 = vsel %vm124, %v5357, 0
    %v5370 = vsel %vm124, %v5359, 0
    %5372 = vmatprep.subr.mxu0 0.0
    %5373 = vmatpush1.msra.mxu0 0.0
    %5374 = vmatprep.subr.mxu0 0.0
    %5375 = vmatpush1.msra.mxu0 0.0
    %5376 = vmatprep.subr.mxu0 0.0
    %5377 = vmatpush1.msra.mxu0 0.0
    %5378 = vmatprep.subr.mxu0 0.0
    %5379 = vmatpush1.msra.mxu0 0.0
    %5380 = vmatprep.subr.mxu0 0.0
    %5381 = vmatpush1.msra.mxu0 0.0
    %5382 = vmatprep.subr.mxu0 0.0
    %5383 = vmatpush1.msra.mxu0 0.0
    %5384 = vmatprep.subr.mxu0 0.0
    %5385 = vmatpush1.msra.mxu0 0.0
    %5386 = vmatprep.subr.mxu0 0.0
    %5387 = vmatpush1.msra.mxu0 0.0
    %5388 = vmatprep.subr.mxu0 0.0
    %5389 = vmatpush1.msra.mxu0 0.0
    %5390 = vmatprep.subr.mxu0 0.0
    %5391 = vmatpush1.msra.mxu0 0.0
    %5392 = vmatprep.subr.mxu0 0.0
    %5393 = vmatpush1.msra.mxu0 0.0
    %5394 = vmatprep.subr.mxu0 0.0
    %5395 = vmatpush1.msra.mxu0 0.0
    %5396 = vmatprep.subr.mxu0 0.0
    %5397 = vmatpush1.msra.mxu0 %v5196
    %5398 = vmatprep.subr.mxu0 0.0
    %5399 = vmatpush1.msra.mxu0 %v5191
    %5400 = vmatprep.subr.mxu0 0.0
    %5401 = vmatpush1.msra.mxu0 %v5186
    %5402 = vmatprep.subr.mxu0 0.0
    %5403 = vmatpush1.msra.mxu0 %v5181
    %5404 = vmatprep.subr.mxu0 0.0
    %5405 = vmatpush2.msra.mxu0 0.0
    %5406 = vmatprep.subr.mxu0 0.0
    %5407 = vmatpush2.msra.mxu0 0.0
    %5408 = vmatprep.subr.mxu0 0.0
    %5409 = vmatpush2.msra.mxu0 0.0
    %5410 = vmatprep.subr.mxu0 0.0
    %5411 = vmatpush2.msra.mxu0 0.0
    %5412 = vmatprep.subr.mxu0 0.0
    %5413 = vmatpush2.msra.mxu0 0.0
    %5414 = vmatprep.subr.mxu0 0.0
    %5415 = vmatpush2.msra.mxu0 0.0
    %5416 = vmatprep.subr.mxu0 0.0
    %5417 = vmatpush2.msra.mxu0 0.0
    %5418 = vmatprep.subr.mxu0 0.0
    %5419 = vmatpush2.msra.mxu0 0.0
    %5420 = vmatprep.subr.mxu0 0.0
    %5421 = vmatpush2.msra.mxu0 0.0
    %5422 = vmatprep.subr.mxu0 0.0
    %5423 = vmatpush2.msra.mxu0 0.0
    %5424 = vmatprep.subr.mxu0 0.0
    %5425 = vmatpush2.msra.mxu0 0.0
    %5426 = vmatprep.subr.mxu0 0.0
    %5427 = vmatpush2.msra.mxu0 0.0
    %5428 = vmatprep.subr.mxu0 0.0
    %5429 = vmatpush2.msra.mxu0 0.0
    %5430 = vmatprep.subr.mxu0 0.0
    %5431 = vmatpush2.msra.mxu0 0.0
    %5432 = vmatprep.subr.mxu0 0.0
    %5433 = vmatpush2.msra.mxu0 0.0
    %5434 = vmatprep.subr.mxu0 0.0
    %5435 = vmatpush2.msra.mxu0 0.0
    %5436 = vmatprep.mubr.f32.mxu0 0.0
    %5437 = vmatmul.mubr.f32.gmra.mxu0 %v5361
    %v5438 = vpop.f32.mrf.mxu0
    %v5439 = vadd.f32 0.0, %v5438
    %v5440 = vpop.f32.mrf.mxu0
    %5441 = vmatprep.mubr.f32.mxu0 0.0
    %5442 = vmatmul.mubr.f32.gmra.mxu0 %v5364
    %v5443 = vpop.f32.mrf.mxu0
    %v5444 = vadd.f32 0.0, %v5443
    %v5445 = vpop.f32.mrf.mxu0
    %5446 = vmatprep.mubr.f32.mxu0 0.0
    %5447 = vmatmul.mubr.f32.gmra.mxu0 %v5367
    %v5448 = vpop.f32.mrf.mxu0
    %v5449 = vadd.f32 0.0, %v5448
    %v5450 = vpop.f32.mrf.mxu0
    %5451 = vmatprep.mubr.f32.mxu0 0.0
    %5452 = vmatmul.mubr.f32.gmra.mxu0 %v5370
    %v5453 = vpop.f32.mrf.mxu0
    %v5454 = vadd.f32 0.0, %v5453
    %v5455 = vpop.f32.mrf.mxu0
    %5456 = vdwg.mxu0
    %v5457 = vld [vmem:[%s13] sm:$0xff]
    %v5458 = vld [vmem:[%s13 + $0x8] sm:$0xff]
    %5459 = vrot.lane.b32.xlu0 %v4981, 112
    %v5460 = vpop.permute.xlu0 %5459
    %5461 = vrot.lane.b32.xlu0 %v4986, 112
    %v5462 = vpop.permute.xlu0 %5461
    %5463 = vrot.lane.b32.xlu0 %v4991, 112
    %v5464 = vpop.permute.xlu0 %5463
    %5465 = vrot.lane.b32.xlu0 %v4996, 112
    %v5466 = vpop.permute.xlu0 %5465
    %5467 = vrot.lane.b32.xlu0 %v5081, 112
    %v5468 = vpop.permute.xlu0 %5467
    %5469 = vrot.lane.b32.xlu0 %v5086, 112
    %v5470 = vpop.permute.xlu0 %5469
    %5471 = vrot.lane.b32.xlu0 %v5091, 112
    %v5472 = vpop.permute.xlu0 %5471
    %5473 = vrot.lane.b32.xlu0 %v5096, 112
    %v5474 = vpop.permute.xlu0 %5473
    %v5475 = vsel %vm614, %v5460, 0
    %v5477 = vsel %vm614, %v5462, 0
    %v5479 = vsel %vm614, %v5464, 0
    %v5481 = vsel %vm614, %v5466, 0
    %v5483 = vsel %vm614, %v5468, 0
    %v5485 = vsel %vm614, %v5470, 0
    %v5487 = vsel %vm614, %v5472, 0
    %v5489 = vsel %vm614, %v5474, 0
    %5491 = vmatprep.subr.mxu0 0.0
    %5492 = vmatpush1.xpose.msra.mxu0 0.0
    %5493 = vmatprep.subr.mxu0 0.0
    %5494 = vmatpush1.xpose.msra.mxu0 0.0
    %5495 = vmatprep.subr.mxu0 0.0
    %5496 = vmatpush1.xpose.msra.mxu0 0.0
    %5497 = vmatprep.subr.mxu0 0.0
    %5498 = vmatpush1.xpose.msra.mxu0 0.0
    %5499 = vmatprep.subr.mxu0 0.0
    %5500 = vmatpush1.xpose.msra.mxu0 0.0
    %5501 = vmatprep.subr.mxu0 0.0
    %5502 = vmatpush1.xpose.msra.mxu0 0.0
    %5503 = vmatprep.subr.mxu0 0.0
    %5504 = vmatpush1.xpose.msra.mxu0 0.0
    %5505 = vmatprep.subr.mxu0 0.0
    %5506 = vmatpush1.xpose.msra.mxu0 0.0
    %5507 = vmatprep.subr.mxu0 0.0
    %5508 = vmatpush1.xpose.msra.mxu0 0.0
    %5509 = vmatprep.subr.mxu0 0.0
    %5510 = vmatpush1.xpose.msra.mxu0 0.0
    %5511 = vmatprep.subr.mxu0 0.0
    %5512 = vmatpush1.xpose.msra.mxu0 0.0
    %5513 = vmatprep.subr.mxu0 0.0
    %5514 = vmatpush1.xpose.msra.mxu0 0.0
    %5515 = vmatprep.subr.mxu0 0.0
    %5516 = vmatpush1.xpose.msra.mxu0 %v5489
    %5517 = vmatprep.subr.mxu0 0.0
    %5518 = vmatpush1.xpose.msra.mxu0 %v5487
    %5519 = vmatprep.subr.mxu0 0.0
    %5520 = vmatpush1.xpose.msra.mxu0 %v5485
    %5521 = vmatprep.subr.mxu0 0.0
    %5522 = vmatpush1.xpose.msra.mxu0 %v5483
    %5523 = vmatprep.subr.mxu0 0.0
    %5524 = vmatpush2.xpose.msra.mxu0 0.0
    %5525 = vmatprep.subr.mxu0 0.0
    %5526 = vmatpush2.xpose.msra.mxu0 0.0
    %5527 = vmatprep.subr.mxu0 0.0
    %5528 = vmatpush2.xpose.msra.mxu0 0.0
    %5529 = vmatprep.subr.mxu0 0.0
    %5530 = vmatpush2.xpose.msra.mxu0 0.0
    %5531 = vmatprep.subr.mxu0 0.0
    %5532 = vmatpush2.xpose.msra.mxu0 0.0
    %5533 = vmatprep.subr.mxu0 0.0
    %5534 = vmatpush2.xpose.msra.mxu0 0.0
    %5535 = vmatprep.subr.mxu0 0.0
    %5536 = vmatpush2.xpose.msra.mxu0 0.0
    %5537 = vmatprep.subr.mxu0 0.0
    %5538 = vmatpush2.xpose.msra.mxu0 0.0
    %5539 = vmatprep.subr.mxu0 0.0
    %5540 = vmatpush2.xpose.msra.mxu0 0.0
    %5541 = vmatprep.subr.mxu0 0.0
    %5542 = vmatpush2.xpose.msra.mxu0 0.0
    %5543 = vmatprep.subr.mxu0 0.0
    %5544 = vmatpush2.xpose.msra.mxu0 0.0
    %5545 = vmatprep.subr.mxu0 0.0
    %5546 = vmatpush2.xpose.msra.mxu0 0.0
    %5547 = vmatprep.subr.mxu0 0.0
    %5548 = vmatpush2.xpose.msra.mxu0 0.0
    %5549 = vmatprep.subr.mxu0 0.0
    %5550 = vmatpush2.xpose.msra.mxu0 0.0
    %5551 = vmatprep.subr.mxu0 0.0
    %5552 = vmatpush2.xpose.msra.mxu0 0.0
    %5553 = vmatprep.subr.mxu0 0.0
    %5554 = vmatpush2.xpose.msra.mxu0 0.0
    %5555 = vmatprep.mubr.f32.mxu0 0.0
    %5556 = vmatmul.mubr.f32.gmra.mxu0 %v5475
    %v5557 = vpop.f32.mrf.mxu0
    %v5558 = vadd.f32 0.0, %v5557
    %v5559 = vpop.f32.mrf.mxu0
    %5560 = vmatprep.mubr.f32.mxu0 0.0
    %5561 = vmatmul.mubr.f32.gmra.mxu0 %v5477
    %v5562 = vpop.f32.mrf.mxu0
    %v5563 = vadd.f32 0.0, %v5562
    %v5564 = vpop.f32.mrf.mxu0
    %5565 = vmatprep.mubr.f32.mxu0 0.0
    %5566 = vmatmul.mubr.f32.gmra.mxu0 %v5479
    %v5567 = vpop.f32.mrf.mxu0
    %v5568 = vadd.f32 0.0, %v5567
    %v5569 = vpop.f32.mrf.mxu0
    %5570 = vmatprep.mubr.f32.mxu0 0.0
    %5571 = vmatmul.mubr.f32.gmra.mxu0 %v5481
    %v5572 = vpop.f32.mrf.mxu0
    %v5573 = vadd.f32 0.0, %v5572
    %v5574 = vpop.f32.mrf.mxu0
    %5575 = vdwg.mxu0
    %v5576 = vmul.f32 %v5558, 0.25
    %v5577 = vmul.f32 %v5563, 0.25
    %v5578 = vmul.f32 %v5568, 0.25
    %v5579 = vmul.f32 %v5573, 0.25
    %v5580 = vadd.f32 %v5576, %v68
    %v5581 = vadd.f32 %v5577, %v69
    %v5582 = vadd.f32 %v5578, %v70
    %v5583 = vadd.f32 %v5579, %v71
    %v5584 = vsel %vm124, %v5580, -inf
    %5585 = vmax.xlane.f32.xlu0 %v5584
    %v5586 = vpop.xlane.xlu0 %5585
    %v5587 = vsel %vm124, %v5581, -inf
    %5588 = vmax.xlane.f32.xlu0 %v5587
    %v5589 = vpop.xlane.xlu0 %5588
    %v5590 = vsel %vm124, %v5582, -inf
    %5591 = vmax.xlane.f32.xlu0 %v5590
    %v5592 = vpop.xlane.xlu0 %5591
    %v5593 = vsel %vm124, %v5583, -inf
    %5594 = vmax.xlane.f32.xlu0 %v5593
    %v5595 = vpop.xlane.xlu0 %5594
    %v5596 = vsub.f32 %v5580, %v5586
    %v5597 = vsub.f32 %v5581, %v5589
    %v5598 = vsub.f32 %v5582, %v5592
    %v5599 = vsub.f32 %v5583, %v5595
    %v5600 = vmul.f32 %v5596, 1.442695
    %v5601 = vpow.pop %v5600
    %v5602 = vmul.f32 %v5597, 1.442695
    %v5603 = vpow.pop %v5602
    %v5604 = vmul.f32 %v5598, 1.442695
    %v5605 = vpow.pop %v5604
    %v5606 = vmul.f32 %v5599, 1.442695
    %v5607 = vpow.pop %v5606
    %v5608 = vsel %vm124, %v5601, 0.0
    %5609 = vadd.xlane.f32.xlu0 %v5608
    %v5610 = vpop.xlane.xlu0 %5609
    %v5611 = vsel %vm124, %v5603, 0.0
    %5612 = vadd.xlane.f32.xlu0 %v5611
    %v5613 = vpop.xlane.xlu0 %5612
    %v5614 = vsel %vm124, %v5605, 0.0
    %5615 = vadd.xlane.f32.xlu0 %v5614
    %v5616 = vpop.xlane.xlu0 %5615
    %v5617 = vsel %vm124, %v5607, 0.0
    %5618 = vadd.xlane.f32.xlu0 %v5617
    %v5619 = vpop.xlane.xlu0 %5618
    %v5620 = vrcp.pop %v5610
    %v5621 = vmul.f32 %v5601, %v5620
    %v5622 = vrcp.pop %v5613
    %v5623 = vmul.f32 %v5603, %v5622
    %v5624 = vrcp.pop %v5616
    %v5625 = vmul.f32 %v5605, %v5624
    %v5626 = vrcp.pop %v5619
    %v5627 = vmul.f32 %v5607, %v5626
    %5632 = vrot.lane.b32.xlu0 %v5181, 112
    %v5633 = vpop.permute.xlu0 %5632
    %5634 = vrot.lane.b32.xlu0 %v5186, 112
    %v5635 = vpop.permute.xlu0 %5634
    %5636 = vrot.lane.b32.xlu0 %v5191, 112
    %v5637 = vpop.permute.xlu0 %5636
    %5638 = vrot.lane.b32.xlu0 %v5196, 112
    %v5639 = vpop.permute.xlu0 %5638
    %v5645 = vsel %vm124, %v5621, 0
    %v5648 = vsel %vm124, %v5623, 0
    %v5651 = vsel %vm124, %v5625, 0
    %v5654 = vsel %vm124, %v5627, 0
    %5656 = vmatprep.subr.mxu0 0.0
    %5657 = vmatpush1.msra.mxu0 0.0
    %5658 = vmatprep.subr.mxu0 0.0
    %5659 = vmatpush1.msra.mxu0 0.0
    %5660 = vmatprep.subr.mxu0 0.0
    %5661 = vmatpush1.msra.mxu0 0.0
    %5662 = vmatprep.subr.mxu0 0.0
    %5663 = vmatpush1.msra.mxu0 0.0
    %5664 = vmatprep.subr.mxu0 0.0
    %5665 = vmatpush1.msra.mxu0 0.0
    %5666 = vmatprep.subr.mxu0 0.0
    %5667 = vmatpush1.msra.mxu0 0.0
    %5668 = vmatprep.subr.mxu0 0.0
    %5669 = vmatpush1.msra.mxu0 0.0
    %5670 = vmatprep.subr.mxu0 0.0
    %5671 = vmatpush1.msra.mxu0 0.0
    %5672 = vmatprep.subr.mxu0 0.0
    %5673 = vmatpush1.msra.mxu0 0.0
    %5674 = vmatprep.subr.mxu0 0.0
    %5675 = vmatpush1.msra.mxu0 0.0
    %5676 = vmatprep.subr.mxu0 0.0
    %5677 = vmatpush1.msra.mxu0 0.0
    %5678 = vmatprep.subr.mxu0 0.0
    %5679 = vmatpush1.msra.mxu0 0.0
    %5680 = vmatprep.subr.mxu0 0.0
    %5681 = vmatpush1.msra.mxu0 %v5639
    %5682 = vmatprep.subr.mxu0 0.0
    %5683 = vmatpush1.msra.mxu0 %v5637
    %5684 = vmatprep.subr.mxu0 0.0
    %5685 = vmatpush1.msra.mxu0 %v5635
    %5686 = vmatprep.subr.mxu0 0.0
    %5687 = vmatpush1.msra.mxu0 %v5633
    %5688 = vmatprep.subr.mxu0 0.0
    %5689 = vmatpush2.msra.mxu0 0.0
    %5690 = vmatprep.subr.mxu0 0.0
    %5691 = vmatpush2.msra.mxu0 0.0
    %5692 = vmatprep.subr.mxu0 0.0
    %5693 = vmatpush2.msra.mxu0 0.0
    %5694 = vmatprep.subr.mxu0 0.0
    %5695 = vmatpush2.msra.mxu0 0.0
    %5696 = vmatprep.subr.mxu0 0.0
    %5697 = vmatpush2.msra.mxu0 0.0
    %5698 = vmatprep.subr.mxu0 0.0
    %5699 = vmatpush2.msra.mxu0 0.0
    %5700 = vmatprep.subr.mxu0 0.0
    %5701 = vmatpush2.msra.mxu0 0.0
    %5702 = vmatprep.subr.mxu0 0.0
    %5703 = vmatpush2.msra.mxu0 0.0
    %5704 = vmatprep.subr.mxu0 0.0
    %5705 = vmatpush2.msra.mxu0 0.0
    %5706 = vmatprep.subr.mxu0 0.0
    %5707 = vmatpush2.msra.mxu0 0.0
    %5708 = vmatprep.subr.mxu0 0.0
    %5709 = vmatpush2.msra.mxu0 0.0
    %5710 = vmatprep.subr.mxu0 0.0
    %5711 = vmatpush2.msra.mxu0 0.0
    %5712 = vmatprep.subr.mxu0 0.0
    %5713 = vmatpush2.msra.mxu0 0.0
    %5714 = vmatprep.subr.mxu0 0.0
    %5715 = vmatpush2.msra.mxu0 0.0
    %5716 = vmatprep.subr.mxu0 0.0
    %5717 = vmatpush2.msra.mxu0 0.0
    %5718 = vmatprep.subr.mxu0 0.0
    %5719 = vmatpush2.msra.mxu0 0.0
    %5720 = vmatprep.mubr.f32.mxu0 0.0
    %5721 = vmatmul.mubr.f32.gmra.mxu0 %v5645
    %v5722 = vpop.f32.mrf.mxu0
    %v5723 = vadd.f32 0.0, %v5722
    %v5724 = vpop.f32.mrf.mxu0
    %5725 = vmatprep.mubr.f32.mxu0 0.0
    %5726 = vmatmul.mubr.f32.gmra.mxu0 %v5648
    %v5727 = vpop.f32.mrf.mxu0
    %v5728 = vadd.f32 0.0, %v5727
    %v5729 = vpop.f32.mrf.mxu0
    %5730 = vmatprep.mubr.f32.mxu0 0.0
    %5731 = vmatmul.mubr.f32.gmra.mxu0 %v5651
    %v5732 = vpop.f32.mrf.mxu0
    %v5733 = vadd.f32 0.0, %v5732
    %v5734 = vpop.f32.mrf.mxu0
    %5735 = vmatprep.mubr.f32.mxu0 0.0
    %5736 = vmatmul.mubr.f32.gmra.mxu0 %v5654
    %v5737 = vpop.f32.mrf.mxu0
    %v5738 = vadd.f32 0.0, %v5737
    %v5739 = vpop.f32.mrf.mxu0
    %5740 = vdwg.mxu0
    %v5741 = vld [vmem:[%s13 + $0x10] sm:$0xff]
    %v5742 = vld [vmem:[%s13 + $0x18] sm:$0xff]
    %v5744 = vsel %vm614, %v5723, 0
    %v5747 = vsel %vm614, %v5728, 0
    %v5750 = vsel %vm614, %v5733, 0
    %v5753 = vsel %vm614, %v5738, 0
    %5755 = vmatprep.subr.mxu0 0.0
    %5756 = vmatpush1.msra.mxu0 0.0
    %5757 = vmatprep.subr.mxu0 0.0
    %5758 = vmatpush1.msra.mxu0 0.0
    %5759 = vmatprep.subr.mxu0 0.0
    %5760 = vmatpush1.msra.mxu0 0.0
    %5761 = vmatprep.subr.mxu0 0.0
    %5762 = vmatpush1.msra.mxu0 0.0
    %5763 = vmatprep.subr.mxu0 0.0
    %5764 = vmatpush1.msra.mxu0 0.0
    %5765 = vmatprep.subr.mxu0 0.0
    %5766 = vmatpush1.msra.mxu0 0.0
    %5767 = vmatprep.subr.mxu0 0.0
    %5768 = vmatpush1.msra.mxu0 0.0
    %5769 = vmatprep.subr.mxu0 0.0
    %5770 = vmatpush1.msra.mxu0 0.0
    %5771 = vmatprep.subr.mxu0 0.0
    %5772 = vmatpush1.msra.mxu0 0.0
    %5773 = vmatprep.subr.mxu0 0.0
    %5774 = vmatpush1.msra.mxu0 0.0
    %5775 = vmatprep.subr.mxu0 0.0
    %5776 = vmatpush1.msra.mxu0 0.0
    %5777 = vmatprep.subr.mxu0 0.0
    %5778 = vmatpush1.msra.mxu0 0.0
    %5779 = vmatprep.subr.mxu0 0.0
    %5780 = vmatpush1.msra.mxu0 0.0
    %5781 = vmatprep.subr.mxu0 0.0
    %5782 = vmatpush1.msra.mxu0 0.0
    %5783 = vmatprep.subr.mxu0 0.0
    %5784 = vmatpush1.msra.mxu0 %v5742
    %5785 = vmatprep.subr.mxu0 0.0
    %5786 = vmatpush1.msra.mxu0 %v5741
    %5787 = vmatprep.subr.mxu0 0.0
    %5788 = vmatpush2.msra.mxu0 0.0
    %5789 = vmatprep.subr.mxu0 0.0
    %5790 = vmatpush2.msra.mxu0 0.0
    %5791 = vmatprep.subr.mxu0 0.0
    %5792 = vmatpush2.msra.mxu0 0.0
    %5793 = vmatprep.subr.mxu0 0.0
    %5794 = vmatpush2.msra.mxu0 0.0
    %5795 = vmatprep.subr.mxu0 0.0
    %5796 = vmatpush2.msra.mxu0 0.0
    %5797 = vmatprep.subr.mxu0 0.0
    %5798 = vmatpush2.msra.mxu0 0.0
    %5799 = vmatprep.subr.mxu0 0.0
    %5800 = vmatpush2.msra.mxu0 0.0
    %5801 = vmatprep.subr.mxu0 0.0
    %5802 = vmatpush2.msra.mxu0 0.0
    %5803 = vmatprep.subr.mxu0 0.0
    %5804 = vmatpush2.msra.mxu0 0.0
    %5805 = vmatprep.subr.mxu0 0.0
    %5806 = vmatpush2.msra.mxu0 0.0
    %5807 = vmatprep.subr.mxu0 0.0
    %5808 = vmatpush2.msra.mxu0 0.0
    %5809 = vmatprep.subr.mxu0 0.0
    %5810 = vmatpush2.msra.mxu0 0.0
    %5811 = vmatprep.subr.mxu0 0.0
    %5812 = vmatpush2.msra.mxu0 0.0
    %5813 = vmatprep.subr.mxu0 0.0
    %5814 = vmatpush2.msra.mxu0 0.0
    %5815 = vmatprep.subr.mxu0 0.0
    %5816 = vmatpush2.msra.mxu0 0.0
    %5817 = vmatprep.subr.mxu0 0.0
    %5818 = vmatpush2.msra.mxu0 0.0
    %5819 = vmatprep.mubr.f32.mxu0 0.0
    %5820 = vmatmul.mubr.f32.gmra.mxu0 %v5744
    %v5821 = vpop.f32.mrf.mxu0
    %v5822 = vadd.f32 0.0, %v5821
    %v5823 = vpop.f32.mrf.mxu0
    %5824 = vmatprep.mubr.f32.mxu0 0.0
    %5825 = vmatmul.mubr.f32.gmra.mxu0 %v5747
    %v5826 = vpop.f32.mrf.mxu0
    %v5827 = vadd.f32 0.0, %v5826
    %v5828 = vpop.f32.mrf.mxu0
    %5829 = vmatprep.mubr.f32.mxu0 0.0
    %5830 = vmatmul.mubr.f32.gmra.mxu0 %v5750
    %v5831 = vpop.f32.mrf.mxu0
    %v5832 = vadd.f32 0.0, %v5831
    %v5833 = vpop.f32.mrf.mxu0
    %5834 = vmatprep.mubr.f32.mxu0 0.0
    %5835 = vmatmul.mubr.f32.gmra.mxu0 %v5753
    %v5836 = vpop.f32.mrf.mxu0
    %v5837 = vadd.f32 0.0, %v5836
    %v5838 = vpop.f32.mrf.mxu0
    %5839 = vdwg.mxu0
    %v5841 = vsel %vm614, %v5439, 0
    %v5844 = vsel %vm614, %v5444, 0
    %v5847 = vsel %vm614, %v5449, 0
    %v5850 = vsel %vm614, %v5454, 0
    %5852 = vmatprep.subr.mxu0 0.0
    %5853 = vmatpush1.msra.mxu0 0.0
    %5854 = vmatprep.subr.mxu0 0.0
    %5855 = vmatpush1.msra.mxu0 0.0
    %5856 = vmatprep.subr.mxu0 0.0
    %5857 = vmatpush1.msra.mxu0 0.0
    %5858 = vmatprep.subr.mxu0 0.0
    %5859 = vmatpush1.msra.mxu0 0.0
    %5860 = vmatprep.subr.mxu0 0.0
    %5861 = vmatpush1.msra.mxu0 0.0
    %5862 = vmatprep.subr.mxu0 0.0
    %5863 = vmatpush1.msra.mxu0 0.0
    %5864 = vmatprep.subr.mxu0 0.0
    %5865 = vmatpush1.msra.mxu0 0.0
    %5866 = vmatprep.subr.mxu0 0.0
    %5867 = vmatpush1.msra.mxu0 0.0
    %5868 = vmatprep.subr.mxu0 0.0
    %5869 = vmatpush1.msra.mxu0 0.0
    %5870 = vmatprep.subr.mxu0 0.0
    %5871 = vmatpush1.msra.mxu0 0.0
    %5872 = vmatprep.subr.mxu0 0.0
    %5873 = vmatpush1.msra.mxu0 0.0
    %5874 = vmatprep.subr.mxu0 0.0
    %5875 = vmatpush1.msra.mxu0 0.0
    %5876 = vmatprep.subr.mxu0 0.0
    %5877 = vmatpush1.msra.mxu0 0.0
    %5878 = vmatprep.subr.mxu0 0.0
    %5879 = vmatpush1.msra.mxu0 0.0
    %5880 = vmatprep.subr.mxu0 0.0
    %5881 = vmatpush1.msra.mxu0 %v5458
    %5882 = vmatprep.subr.mxu0 0.0
    %5883 = vmatpush1.msra.mxu0 %v5457
    %5884 = vmatprep.subr.mxu0 0.0
    %5885 = vmatpush2.msra.mxu0 0.0
    %5886 = vmatprep.subr.mxu0 0.0
    %5887 = vmatpush2.msra.mxu0 0.0
    %5888 = vmatprep.subr.mxu0 0.0
    %5889 = vmatpush2.msra.mxu0 0.0
    %5890 = vmatprep.subr.mxu0 0.0
    %5891 = vmatpush2.msra.mxu0 0.0
    %5892 = vmatprep.subr.mxu0 0.0
    %5893 = vmatpush2.msra.mxu0 0.0
    %5894 = vmatprep.subr.mxu0 0.0
    %5895 = vmatpush2.msra.mxu0 0.0
    %5896 = vmatprep.subr.mxu0 0.0
    %5897 = vmatpush2.msra.mxu0 0.0
    %5898 = vmatprep.subr.mxu0 0.0
    %5899 = vmatpush2.msra.mxu0 0.0
    %5900 = vmatprep.subr.mxu0 0.0
    %5901 = vmatpush2.msra.mxu0 0.0
    %5902 = vmatprep.subr.mxu0 0.0
    %5903 = vmatpush2.msra.mxu0 0.0
    %5904 = vmatprep.subr.mxu0 0.0
    %5905 = vmatpush2.msra.mxu0 0.0
    %5906 = vmatprep.subr.mxu0 0.0
    %5907 = vmatpush2.msra.mxu0 0.0
    %5908 = vmatprep.subr.mxu0 0.0
    %5909 = vmatpush2.msra.mxu0 0.0
    %5910 = vmatprep.subr.mxu0 0.0
    %5911 = vmatpush2.msra.mxu0 0.0
    %5912 = vmatprep.subr.mxu0 0.0
    %5913 = vmatpush2.msra.mxu0 0.0
    %5914 = vmatprep.subr.mxu0 0.0
    %5915 = vmatpush2.msra.mxu0 0.0
    %5916 = vmatprep.mubr.f32.mxu0 0.0
    %5917 = vmatmul.mubr.f32.gmra.mxu0 %v5841
    %v5918 = vpop.f32.mrf.mxu0
    %v5919 = vadd.f32 %v5822, %v5918
    %v5920 = vpop.f32.mrf.mxu0
    %5921 = vmatprep.mubr.f32.mxu0 0.0
    %5922 = vmatmul.mubr.f32.gmra.mxu0 %v5844
    %v5923 = vpop.f32.mrf.mxu0
    %v5924 = vadd.f32 %v5827, %v5923
    %v5925 = vpop.f32.mrf.mxu0
    %5926 = vmatprep.mubr.f32.mxu0 0.0
    %5927 = vmatmul.mubr.f32.gmra.mxu0 %v5847
    %v5928 = vpop.f32.mrf.mxu0
    %v5929 = vadd.f32 %v5832, %v5928
    %v5930 = vpop.f32.mrf.mxu0
    %5931 = vmatprep.mubr.f32.mxu0 0.0
    %5932 = vmatmul.mubr.f32.gmra.mxu0 %v5850
    %v5933 = vpop.f32.mrf.mxu0
    %v5934 = vadd.f32 %v5837, %v5933
    %v5935 = vpop.f32.mrf.mxu0
    %5936 = vdwg.mxu0
    %5937 = vrot.lane.b32.xlu0 %v4981, 96
    %v5938 = vpop.permute.xlu0 %5937
    %5939 = vrot.lane.b32.xlu0 %v4986, 96
    %v5940 = vpop.permute.xlu0 %5939
    %5941 = vrot.lane.b32.xlu0 %v4991, 96
    %v5942 = vpop.permute.xlu0 %5941
    %5943 = vrot.lane.b32.xlu0 %v4996, 96
    %v5944 = vpop.permute.xlu0 %5943
    %5945 = vrot.lane.b32.xlu0 %v5081, 96
    %v5946 = vpop.permute.xlu0 %5945
    %5947 = vrot.lane.b32.xlu0 %v5086, 96
    %v5948 = vpop.permute.xlu0 %5947
    %5949 = vrot.lane.b32.xlu0 %v5091, 96
    %v5950 = vpop.permute.xlu0 %5949
    %5951 = vrot.lane.b32.xlu0 %v5096, 96
    %v5952 = vpop.permute.xlu0 %5951
    %v5953 = vsel %vm614, %v5938, 0
    %v5955 = vsel %vm614, %v5940, 0
    %v5957 = vsel %vm614, %v5942, 0
    %v5959 = vsel %vm614, %v5944, 0
    %v5961 = vsel %vm614, %v5946, 0
    %v5963 = vsel %vm614, %v5948, 0
    %v5965 = vsel %vm614, %v5950, 0
    %v5967 = vsel %vm614, %v5952, 0
    %5969 = vmatprep.subr.mxu0 0.0
    %5970 = vmatpush1.xpose.msra.mxu0 0.0
    %5971 = vmatprep.subr.mxu0 0.0
    %5972 = vmatpush1.xpose.msra.mxu0 0.0
    %5973 = vmatprep.subr.mxu0 0.0
    %5974 = vmatpush1.xpose.msra.mxu0 0.0
    %5975 = vmatprep.subr.mxu0 0.0
    %5976 = vmatpush1.xpose.msra.mxu0 0.0
    %5977 = vmatprep.subr.mxu0 0.0
    %5978 = vmatpush1.xpose.msra.mxu0 0.0
    %5979 = vmatprep.subr.mxu0 0.0
    %5980 = vmatpush1.xpose.msra.mxu0 0.0
    %5981 = vmatprep.subr.mxu0 0.0
    %5982 = vmatpush1.xpose.msra.mxu0 0.0
    %5983 = vmatprep.subr.mxu0 0.0
    %5984 = vmatpush1.xpose.msra.mxu0 0.0
    %5985 = vmatprep.subr.mxu0 0.0
    %5986 = vmatpush1.xpose.msra.mxu0 0.0
    %5987 = vmatprep.subr.mxu0 0.0
    %5988 = vmatpush1.xpose.msra.mxu0 0.0
    %5989 = vmatprep.subr.mxu0 0.0
    %5990 = vmatpush1.xpose.msra.mxu0 0.0
    %5991 = vmatprep.subr.mxu0 0.0
    %5992 = vmatpush1.xpose.msra.mxu0 0.0
    %5993 = vmatprep.subr.mxu0 0.0
    %5994 = vmatpush1.xpose.msra.mxu0 %v5967
    %5995 = vmatprep.subr.mxu0 0.0
    %5996 = vmatpush1.xpose.msra.mxu0 %v5965
    %5997 = vmatprep.subr.mxu0 0.0
    %5998 = vmatpush1.xpose.msra.mxu0 %v5963
    %5999 = vmatprep.subr.mxu0 0.0
    %6000 = vmatpush1.xpose.msra.mxu0 %v5961
    %6001 = vmatprep.subr.mxu0 0.0
    %6002 = vmatpush2.xpose.msra.mxu0 0.0
    %6003 = vmatprep.subr.mxu0 0.0
    %6004 = vmatpush2.xpose.msra.mxu0 0.0
    %6005 = vmatprep.subr.mxu0 0.0
    %6006 = vmatpush2.xpose.msra.mxu0 0.0
    %6007 = vmatprep.subr.mxu0 0.0
    %6008 = vmatpush2.xpose.msra.mxu0 0.0
    %6009 = vmatprep.subr.mxu0 0.0
    %6010 = vmatpush2.xpose.msra.mxu0 0.0
    %6011 = vmatprep.subr.mxu0 0.0
    %6012 = vmatpush2.xpose.msra.mxu0 0.0
    %6013 = vmatprep.subr.mxu0 0.0
    %6014 = vmatpush2.xpose.msra.mxu0 0.0
    %6015 = vmatprep.subr.mxu0 0.0
    %6016 = vmatpush2.xpose.msra.mxu0 0.0
    %6017 = vmatprep.subr.mxu0 0.0
    %6018 = vmatpush2.xpose.msra.mxu0 0.0
    %6019 = vmatprep.subr.mxu0 0.0
    %6020 = vmatpush2.xpose.msra.mxu0 0.0
    %6021 = vmatprep.subr.mxu0 0.0
    %6022 = vmatpush2.xpose.msra.mxu0 0.0
    %6023 = vmatprep.subr.mxu0 0.0
    %6024 = vmatpush2.xpose.msra.mxu0 0.0
    %6025 = vmatprep.subr.mxu0 0.0
    %6026 = vmatpush2.xpose.msra.mxu0 0.0
    %6027 = vmatprep.subr.mxu0 0.0
    %6028 = vmatpush2.xpose.msra.mxu0 0.0
    %6029 = vmatprep.subr.mxu0 0.0
    %6030 = vmatpush2.xpose.msra.mxu0 0.0
    %6031 = vmatprep.subr.mxu0 0.0
    %6032 = vmatpush2.xpose.msra.mxu0 0.0
    %6033 = vmatprep.mubr.f32.mxu0 0.0
    %6034 = vmatmul.mubr.f32.gmra.mxu0 %v5953
    %v6035 = vpop.f32.mrf.mxu0
    %v6036 = vadd.f32 0.0, %v6035
    %v6037 = vpop.f32.mrf.mxu0
    %6038 = vmatprep.mubr.f32.mxu0 0.0
    %6039 = vmatmul.mubr.f32.gmra.mxu0 %v5955
    %v6040 = vpop.f32.mrf.mxu0
    %v6041 = vadd.f32 0.0, %v6040
    %v6042 = vpop.f32.mrf.mxu0
    %6043 = vmatprep.mubr.f32.mxu0 0.0
    %6044 = vmatmul.mubr.f32.gmra.mxu0 %v5957
    %v6045 = vpop.f32.mrf.mxu0
    %v6046 = vadd.f32 0.0, %v6045
    %v6047 = vpop.f32.mrf.mxu0
    %6048 = vmatprep.mubr.f32.mxu0 0.0
    %6049 = vmatmul.mubr.f32.gmra.mxu0 %v5959
    %v6050 = vpop.f32.mrf.mxu0
    %v6051 = vadd.f32 0.0, %v6050
    %v6052 = vpop.f32.mrf.mxu0
    %6053 = vdwg.mxu0
    %v6054 = vmul.f32 %v6036, 0.25
    %v6055 = vmul.f32 %v6041, 0.25
    %v6056 = vmul.f32 %v6046, 0.25
    %v6057 = vmul.f32 %v6051, 0.25
    %v6058 = vadd.f32 %v6054, %v68
    %v6059 = vadd.f32 %v6055, %v69
    %v6060 = vadd.f32 %v6056, %v70
    %v6061 = vadd.f32 %v6057, %v71
    %v6062 = vsel %vm124, %v6058, -inf
    %6063 = vmax.xlane.f32.xlu0 %v6062
    %v6064 = vpop.xlane.xlu0 %6063
    %v6065 = vsel %vm124, %v6059, -inf
    %6066 = vmax.xlane.f32.xlu0 %v6065
    %v6067 = vpop.xlane.xlu0 %6066
    %v6068 = vsel %vm124, %v6060, -inf
    %6069 = vmax.xlane.f32.xlu0 %v6068
    %v6070 = vpop.xlane.xlu0 %6069
    %v6071 = vsel %vm124, %v6061, -inf
    %6072 = vmax.xlane.f32.xlu0 %v6071
    %v6073 = vpop.xlane.xlu0 %6072
    %v6074 = vsub.f32 %v6058, %v6064
    %v6075 = vsub.f32 %v6059, %v6067
    %v6076 = vsub.f32 %v6060, %v6070
    %v6077 = vsub.f32 %v6061, %v6073
    %v6078 = vmul.f32 %v6074, 1.442695
    %v6079 = vpow.pop %v6078
    %v6080 = vmul.f32 %v6075, 1.442695
    %v6081 = vpow.pop %v6080
    %v6082 = vmul.f32 %v6076, 1.442695
    %v6083 = vpow.pop %v6082
    %v6084 = vmul.f32 %v6077, 1.442695
    %v6085 = vpow.pop %v6084
    %v6086 = vsel %vm124, %v6079, 0.0
    %6087 = vadd.xlane.f32.xlu0 %v6086
    %v6088 = vpop.xlane.xlu0 %6087
    %v6089 = vsel %vm124, %v6081, 0.0
    %6090 = vadd.xlane.f32.xlu0 %v6089
    %v6091 = vpop.xlane.xlu0 %6090
    %v6092 = vsel %vm124, %v6083, 0.0
    %6093 = vadd.xlane.f32.xlu0 %v6092
    %v6094 = vpop.xlane.xlu0 %6093
    %v6095 = vsel %vm124, %v6085, 0.0
    %6096 = vadd.xlane.f32.xlu0 %v6095
    %v6097 = vpop.xlane.xlu0 %6096
    %v6098 = vrcp.pop %v6088
    %v6099 = vmul.f32 %v6079, %v6098
    %v6100 = vrcp.pop %v6091
    %v6101 = vmul.f32 %v6081, %v6100
    %v6102 = vrcp.pop %v6094
    %v6103 = vmul.f32 %v6083, %v6102
    %v6104 = vrcp.pop %v6097
    %v6105 = vmul.f32 %v6085, %v6104
    %6106 = vrot.lane.b32.xlu0 %v5181, 96
    %v6107 = vpop.permute.xlu0 %6106
    %6108 = vrot.lane.b32.xlu0 %v5186, 96
    %v6109 = vpop.permute.xlu0 %6108
    %6110 = vrot.lane.b32.xlu0 %v5191, 96
    %v6111 = vpop.permute.xlu0 %6110
    %6112 = vrot.lane.b32.xlu0 %v5196, 96
    %v6113 = vpop.permute.xlu0 %6112
    %v6119 = vsel %vm124, %v6099, 0
    %v6122 = vsel %vm124, %v6101, 0
    %v6125 = vsel %vm124, %v6103, 0
    %v6128 = vsel %vm124, %v6105, 0
    %6130 = vmatprep.subr.mxu0 0.0
    %6131 = vmatpush1.msra.mxu0 0.0
    %6132 = vmatprep.subr.mxu0 0.0
    %6133 = vmatpush1.msra.mxu0 0.0
    %6134 = vmatprep.subr.mxu0 0.0
    %6135 = vmatpush1.msra.mxu0 0.0
    %6136 = vmatprep.subr.mxu0 0.0
    %6137 = vmatpush1.msra.mxu0 0.0
    %6138 = vmatprep.subr.mxu0 0.0
    %6139 = vmatpush1.msra.mxu0 0.0
    %6140 = vmatprep.subr.mxu0 0.0
    %6141 = vmatpush1.msra.mxu0 0.0
    %6142 = vmatprep.subr.mxu0 0.0
    %6143 = vmatpush1.msra.mxu0 0.0
    %6144 = vmatprep.subr.mxu0 0.0
    %6145 = vmatpush1.msra.mxu0 0.0
    %6146 = vmatprep.subr.mxu0 0.0
    %6147 = vmatpush1.msra.mxu0 0.0
    %6148 = vmatprep.subr.mxu0 0.0
    %6149 = vmatpush1.msra.mxu0 0.0
    %6150 = vmatprep.subr.mxu0 0.0
    %6151 = vmatpush1.msra.mxu0 0.0
    %6152 = vmatprep.subr.mxu0 0.0
    %6153 = vmatpush1.msra.mxu0 0.0
    %6154 = vmatprep.subr.mxu0 0.0
    %6155 = vmatpush1.msra.mxu0 %v6113
    %6156 = vmatprep.subr.mxu0 0.0
    %6157 = vmatpush1.msra.mxu0 %v6111
    %6158 = vmatprep.subr.mxu0 0.0
    %6159 = vmatpush1.msra.mxu0 %v6109
    %6160 = vmatprep.subr.mxu0 0.0
    %6161 = vmatpush1.msra.mxu0 %v6107
    %6162 = vmatprep.subr.mxu0 0.0
    %6163 = vmatpush2.msra.mxu0 0.0
    %6164 = vmatprep.subr.mxu0 0.0
    %6165 = vmatpush2.msra.mxu0 0.0
    %6166 = vmatprep.subr.mxu0 0.0
    %6167 = vmatpush2.msra.mxu0 0.0
    %6168 = vmatprep.subr.mxu0 0.0
    %6169 = vmatpush2.msra.mxu0 0.0
    %6170 = vmatprep.subr.mxu0 0.0
    %6171 = vmatpush2.msra.mxu0 0.0
    %6172 = vmatprep.subr.mxu0 0.0
    %6173 = vmatpush2.msra.mxu0 0.0
    %6174 = vmatprep.subr.mxu0 0.0
    %6175 = vmatpush2.msra.mxu0 0.0
    %6176 = vmatprep.subr.mxu0 0.0
    %6177 = vmatpush2.msra.mxu0 0.0
    %6178 = vmatprep.subr.mxu0 0.0
    %6179 = vmatpush2.msra.mxu0 0.0
    %6180 = vmatprep.subr.mxu0 0.0
    %6181 = vmatpush2.msra.mxu0 0.0
    %6182 = vmatprep.subr.mxu0 0.0
    %6183 = vmatpush2.msra.mxu0 0.0
    %6184 = vmatprep.subr.mxu0 0.0
    %6185 = vmatpush2.msra.mxu0 0.0
    %6186 = vmatprep.subr.mxu0 0.0
    %6187 = vmatpush2.msra.mxu0 0.0
    %6188 = vmatprep.subr.mxu0 0.0
    %6189 = vmatpush2.msra.mxu0 0.0
    %6190 = vmatprep.subr.mxu0 0.0
    %6191 = vmatpush2.msra.mxu0 0.0
    %6192 = vmatprep.subr.mxu0 0.0
    %6193 = vmatpush2.msra.mxu0 0.0
    %6194 = vmatprep.mubr.f32.mxu0 0.0
    %6195 = vmatmul.mubr.f32.gmra.mxu0 %v6119
    %v6196 = vpop.f32.mrf.mxu0
    %v6197 = vadd.f32 0.0, %v6196
    %v6198 = vpop.f32.mrf.mxu0
    %6199 = vmatprep.mubr.f32.mxu0 0.0
    %6200 = vmatmul.mubr.f32.gmra.mxu0 %v6122
    %v6201 = vpop.f32.mrf.mxu0
    %v6202 = vadd.f32 0.0, %v6201
    %v6203 = vpop.f32.mrf.mxu0
    %6204 = vmatprep.mubr.f32.mxu0 0.0
    %6205 = vmatmul.mubr.f32.gmra.mxu0 %v6125
    %v6206 = vpop.f32.mrf.mxu0
    %v6207 = vadd.f32 0.0, %v6206
    %v6208 = vpop.f32.mrf.mxu0
    %6209 = vmatprep.mubr.f32.mxu0 0.0
    %6210 = vmatmul.mubr.f32.gmra.mxu0 %v6128
    %v6211 = vpop.f32.mrf.mxu0
    %v6212 = vadd.f32 0.0, %v6211
    %v6213 = vpop.f32.mrf.mxu0
    %6214 = vdwg.mxu0
    %v6215 = vld [vmem:[%s13 + $0x20] sm:$0xff]
    %v6216 = vld [vmem:[%s13 + $0x28] sm:$0xff]
    %v6218 = vsel %vm614, %v6197, 0
    %v6221 = vsel %vm614, %v6202, 0
    %v6224 = vsel %vm614, %v6207, 0
    %v6227 = vsel %vm614, %v6212, 0
    %6229 = vmatprep.subr.mxu0 0.0
    %6230 = vmatpush1.msra.mxu0 0.0
    %6231 = vmatprep.subr.mxu0 0.0
    %6232 = vmatpush1.msra.mxu0 0.0
    %6233 = vmatprep.subr.mxu0 0.0
    %6234 = vmatpush1.msra.mxu0 0.0
    %6235 = vmatprep.subr.mxu0 0.0
    %6236 = vmatpush1.msra.mxu0 0.0
    %6237 = vmatprep.subr.mxu0 0.0
    %6238 = vmatpush1.msra.mxu0 0.0
    %6239 = vmatprep.subr.mxu0 0.0
    %6240 = vmatpush1.msra.mxu0 0.0
    %6241 = vmatprep.subr.mxu0 0.0
    %6242 = vmatpush1.msra.mxu0 0.0
    %6243 = vmatprep.subr.mxu0 0.0
    %6244 = vmatpush1.msra.mxu0 0.0
    %6245 = vmatprep.subr.mxu0 0.0
    %6246 = vmatpush1.msra.mxu0 0.0
    %6247 = vmatprep.subr.mxu0 0.0
    %6248 = vmatpush1.msra.mxu0 0.0
    %6249 = vmatprep.subr.mxu0 0.0
    %6250 = vmatpush1.msra.mxu0 0.0
    %6251 = vmatprep.subr.mxu0 0.0
    %6252 = vmatpush1.msra.mxu0 0.0
    %6253 = vmatprep.subr.mxu0 0.0
    %6254 = vmatpush1.msra.mxu0 0.0
    %6255 = vmatprep.subr.mxu0 0.0
    %6256 = vmatpush1.msra.mxu0 0.0
    %6257 = vmatprep.subr.mxu0 0.0
    %6258 = vmatpush1.msra.mxu0 %v6216
    %6259 = vmatprep.subr.mxu0 0.0
    %6260 = vmatpush1.msra.mxu0 %v6215
    %6261 = vmatprep.subr.mxu0 0.0
    %6262 = vmatpush2.msra.mxu0 0.0
    %6263 = vmatprep.subr.mxu0 0.0
    %6264 = vmatpush2.msra.mxu0 0.0
    %6265 = vmatprep.subr.mxu0 0.0
    %6266 = vmatpush2.msra.mxu0 0.0
    %6267 = vmatprep.subr.mxu0 0.0
    %6268 = vmatpush2.msra.mxu0 0.0
    %6269 = vmatprep.subr.mxu0 0.0
    %6270 = vmatpush2.msra.mxu0 0.0
    %6271 = vmatprep.subr.mxu0 0.0
    %6272 = vmatpush2.msra.mxu0 0.0
    %6273 = vmatprep.subr.mxu0 0.0
    %6274 = vmatpush2.msra.mxu0 0.0
    %6275 = vmatprep.subr.mxu0 0.0
    %6276 = vmatpush2.msra.mxu0 0.0
    %6277 = vmatprep.subr.mxu0 0.0
    %6278 = vmatpush2.msra.mxu0 0.0
    %6279 = vmatprep.subr.mxu0 0.0
    %6280 = vmatpush2.msra.mxu0 0.0
    %6281 = vmatprep.subr.mxu0 0.0
    %6282 = vmatpush2.msra.mxu0 0.0
    %6283 = vmatprep.subr.mxu0 0.0
    %6284 = vmatpush2.msra.mxu0 0.0
    %6285 = vmatprep.subr.mxu0 0.0
    %6286 = vmatpush2.msra.mxu0 0.0
    %6287 = vmatprep.subr.mxu0 0.0
    %6288 = vmatpush2.msra.mxu0 0.0
    %6289 = vmatprep.subr.mxu0 0.0
    %6290 = vmatpush2.msra.mxu0 0.0
    %6291 = vmatprep.subr.mxu0 0.0
    %6292 = vmatpush2.msra.mxu0 0.0
    %6293 = vmatprep.mubr.f32.mxu0 0.0
    %6294 = vmatmul.mubr.f32.gmra.mxu0 %v6218
    %v6295 = vpop.f32.mrf.mxu0
    %v6296 = vadd.f32 0.0, %v6295
    %v6297 = vpop.f32.mrf.mxu0
    %6298 = vmatprep.mubr.f32.mxu0 0.0
    %6299 = vmatmul.mubr.f32.gmra.mxu0 %v6221
    %v6300 = vpop.f32.mrf.mxu0
    %v6301 = vadd.f32 0.0, %v6300
    %v6302 = vpop.f32.mrf.mxu0
    %6303 = vmatprep.mubr.f32.mxu0 0.0
    %6304 = vmatmul.mubr.f32.gmra.mxu0 %v6224
    %v6305 = vpop.f32.mrf.mxu0
    %v6306 = vadd.f32 0.0, %v6305
    %v6307 = vpop.f32.mrf.mxu0
    %6308 = vmatprep.mubr.f32.mxu0 0.0
    %6309 = vmatmul.mubr.f32.gmra.mxu0 %v6227
    %v6310 = vpop.f32.mrf.mxu0
    %v6311 = vadd.f32 0.0, %v6310
    %v6312 = vpop.f32.mrf.mxu0
    %6313 = vdwg.mxu0
    %v6314 = vadd.f32 %v5919, %v6296
    %v6315 = vadd.f32 %v5924, %v6301
    %v6316 = vadd.f32 %v5929, %v6306
    %v6317 = vadd.f32 %v5934, %v6311
    %6318 = vrot.lane.b32.xlu0 %v4981, 80
    %v6319 = vpop.permute.xlu0 %6318
    %6320 = vrot.lane.b32.xlu0 %v4986, 80
    %v6321 = vpop.permute.xlu0 %6320
    %6322 = vrot.lane.b32.xlu0 %v4991, 80
    %v6323 = vpop.permute.xlu0 %6322
    %6324 = vrot.lane.b32.xlu0 %v4996, 80
    %v6325 = vpop.permute.xlu0 %6324
    %6326 = vrot.lane.b32.xlu0 %v5081, 80
    %v6327 = vpop.permute.xlu0 %6326
    %6328 = vrot.lane.b32.xlu0 %v5086, 80
    %v6329 = vpop.permute.xlu0 %6328
    %6330 = vrot.lane.b32.xlu0 %v5091, 80
    %v6331 = vpop.permute.xlu0 %6330
    %6332 = vrot.lane.b32.xlu0 %v5096, 80
    %v6333 = vpop.permute.xlu0 %6332
    %v6334 = vsel %vm614, %v6319, 0
    %v6336 = vsel %vm614, %v6321, 0
    %v6338 = vsel %vm614, %v6323, 0
    %v6340 = vsel %vm614, %v6325, 0
    %v6342 = vsel %vm614, %v6327, 0
    %v6344 = vsel %vm614, %v6329, 0
    %v6346 = vsel %vm614, %v6331, 0
    %v6348 = vsel %vm614, %v6333, 0
    %6350 = vmatprep.subr.mxu0 0.0
    %6351 = vmatpush1.xpose.msra.mxu0 0.0
    %6352 = vmatprep.subr.mxu0 0.0
    %6353 = vmatpush1.xpose.msra.mxu0 0.0
    %6354 = vmatprep.subr.mxu0 0.0
    %6355 = vmatpush1.xpose.msra.mxu0 0.0
    %6356 = vmatprep.subr.mxu0 0.0
    %6357 = vmatpush1.xpose.msra.mxu0 0.0
    %6358 = vmatprep.subr.mxu0 0.0
    %6359 = vmatpush1.xpose.msra.mxu0 0.0
    %6360 = vmatprep.subr.mxu0 0.0
    %6361 = vmatpush1.xpose.msra.mxu0 0.0
    %6362 = vmatprep.subr.mxu0 0.0
    %6363 = vmatpush1.xpose.msra.mxu0 0.0
    %6364 = vmatprep.subr.mxu0 0.0
    %6365 = vmatpush1.xpose.msra.mxu0 0.0
    %6366 = vmatprep.subr.mxu0 0.0
    %6367 = vmatpush1.xpose.msra.mxu0 0.0
    %6368 = vmatprep.subr.mxu0 0.0
    %6369 = vmatpush1.xpose.msra.mxu0 0.0
    %6370 = vmatprep.subr.mxu0 0.0
    %6371 = vmatpush1.xpose.msra.mxu0 0.0
    %6372 = vmatprep.subr.mxu0 0.0
    %6373 = vmatpush1.xpose.msra.mxu0 0.0
    %6374 = vmatprep.subr.mxu0 0.0
    %6375 = vmatpush1.xpose.msra.mxu0 %v6348
    %6376 = vmatprep.subr.mxu0 0.0
    %6377 = vmatpush1.xpose.msra.mxu0 %v6346
    %6378 = vmatprep.subr.mxu0 0.0
    %6379 = vmatpush1.xpose.msra.mxu0 %v6344
    %6380 = vmatprep.subr.mxu0 0.0
    %6381 = vmatpush1.xpose.msra.mxu0 %v6342
    %6382 = vmatprep.subr.mxu0 0.0
    %6383 = vmatpush2.xpose.msra.mxu0 0.0
    %6384 = vmatprep.subr.mxu0 0.0
    %6385 = vmatpush2.xpose.msra.mxu0 0.0
    %6386 = vmatprep.subr.mxu0 0.0
    %6387 = vmatpush2.xpose.msra.mxu0 0.0
    %6388 = vmatprep.subr.mxu0 0.0
    %6389 = vmatpush2.xpose.msra.mxu0 0.0
    %6390 = vmatprep.subr.mxu0 0.0
    %6391 = vmatpush2.xpose.msra.mxu0 0.0
    %6392 = vmatprep.subr.mxu0 0.0
    %6393 = vmatpush2.xpose.msra.mxu0 0.0
    %6394 = vmatprep.subr.mxu0 0.0
    %6395 = vmatpush2.xpose.msra.mxu0 0.0
    %6396 = vmatprep.subr.mxu0 0.0
    %6397 = vmatpush2.xpose.msra.mxu0 0.0
    %6398 = vmatprep.subr.mxu0 0.0
    %6399 = vmatpush2.xpose.msra.mxu0 0.0
    %6400 = vmatprep.subr.mxu0 0.0
    %6401 = vmatpush2.xpose.msra.mxu0 0.0
    %6402 = vmatprep.subr.mxu0 0.0
    %6403 = vmatpush2.xpose.msra.mxu0 0.0
    %6404 = vmatprep.subr.mxu0 0.0
    %6405 = vmatpush2.xpose.msra.mxu0 0.0
    %6406 = vmatprep.subr.mxu0 0.0
    %6407 = vmatpush2.xpose.msra.mxu0 0.0
    %6408 = vmatprep.subr.mxu0 0.0
    %6409 = vmatpush2.xpose.msra.mxu0 0.0
    %6410 = vmatprep.subr.mxu0 0.0
    %6411 = vmatpush2.xpose.msra.mxu0 0.0
    %6412 = vmatprep.subr.mxu0 0.0
    %6413 = vmatpush2.xpose.msra.mxu0 0.0
    %6414 = vmatprep.mubr.f32.mxu0 0.0
    %6415 = vmatmul.mubr.f32.gmra.mxu0 %v6334
    %v6416 = vpop.f32.mrf.mxu0
    %v6417 = vadd.f32 0.0, %v6416
    %v6418 = vpop.f32.mrf.mxu0
    %6419 = vmatprep.mubr.f32.mxu0 0.0
    %6420 = vmatmul.mubr.f32.gmra.mxu0 %v6336
    %v6421 = vpop.f32.mrf.mxu0
    %v6422 = vadd.f32 0.0, %v6421
    %v6423 = vpop.f32.mrf.mxu0
    %6424 = vmatprep.mubr.f32.mxu0 0.0
    %6425 = vmatmul.mubr.f32.gmra.mxu0 %v6338
    %v6426 = vpop.f32.mrf.mxu0
    %v6427 = vadd.f32 0.0, %v6426
    %v6428 = vpop.f32.mrf.mxu0
    %6429 = vmatprep.mubr.f32.mxu0 0.0
    %6430 = vmatmul.mubr.f32.gmra.mxu0 %v6340
    %v6431 = vpop.f32.mrf.mxu0
    %v6432 = vadd.f32 0.0, %v6431
    %v6433 = vpop.f32.mrf.mxu0
    %6434 = vdwg.mxu0
    %v6435 = vmul.f32 %v6417, 0.25
    %v6436 = vmul.f32 %v6422, 0.25
    %v6437 = vmul.f32 %v6427, 0.25
    %v6438 = vmul.f32 %v6432, 0.25
    %v6439 = vadd.f32 %v6435, %v68
    %v6440 = vadd.f32 %v6436, %v69
    %v6441 = vadd.f32 %v6437, %v70
    %v6442 = vadd.f32 %v6438, %v71
    %v6443 = vsel %vm124, %v6439, -inf
    %6444 = vmax.xlane.f32.xlu0 %v6443
    %v6445 = vpop.xlane.xlu0 %6444
    %v6446 = vsel %vm124, %v6440, -inf
    %6447 = vmax.xlane.f32.xlu0 %v6446
    %v6448 = vpop.xlane.xlu0 %6447
    %v6449 = vsel %vm124, %v6441, -inf
    %6450 = vmax.xlane.f32.xlu0 %v6449
    %v6451 = vpop.xlane.xlu0 %6450
    %v6452 = vsel %vm124, %v6442, -inf
    %6453 = vmax.xlane.f32.xlu0 %v6452
    %v6454 = vpop.xlane.xlu0 %6453
    %v6455 = vsub.f32 %v6439, %v6445
    %v6456 = vsub.f32 %v6440, %v6448
    %v6457 = vsub.f32 %v6441, %v6451
    %v6458 = vsub.f32 %v6442, %v6454
    %v6459 = vmul.f32 %v6455, 1.442695
    %v6460 = vpow.pop %v6459
    %v6461 = vmul.f32 %v6456, 1.442695
    %v6462 = vpow.pop %v6461
    %v6463 = vmul.f32 %v6457, 1.442695
    %v6464 = vpow.pop %v6463
    %v6465 = vmul.f32 %v6458, 1.442695
    %v6466 = vpow.pop %v6465
    %v6467 = vsel %vm124, %v6460, 0.0
    %6468 = vadd.xlane.f32.xlu0 %v6467
    %v6469 = vpop.xlane.xlu0 %6468
    %v6470 = vsel %vm124, %v6462, 0.0
    %6471 = vadd.xlane.f32.xlu0 %v6470
    %v6472 = vpop.xlane.xlu0 %6471
    %v6473 = vsel %vm124, %v6464, 0.0
    %6474 = vadd.xlane.f32.xlu0 %v6473
    %v6475 = vpop.xlane.xlu0 %6474
    %v6476 = vsel %vm124, %v6466, 0.0
    %6477 = vadd.xlane.f32.xlu0 %v6476
    %v6478 = vpop.xlane.xlu0 %6477
    %v6479 = vrcp.pop %v6469
    %v6480 = vmul.f32 %v6460, %v6479
    %v6481 = vrcp.pop %v6472
    %v6482 = vmul.f32 %v6462, %v6481
    %v6483 = vrcp.pop %v6475
    %v6484 = vmul.f32 %v6464, %v6483
    %v6485 = vrcp.pop %v6478
    %v6486 = vmul.f32 %v6466, %v6485
    %6487 = vrot.lane.b32.xlu0 %v5181, 80
    %v6488 = vpop.permute.xlu0 %6487
    %6489 = vrot.lane.b32.xlu0 %v5186, 80
    %v6490 = vpop.permute.xlu0 %6489
    %6491 = vrot.lane.b32.xlu0 %v5191, 80
    %v6492 = vpop.permute.xlu0 %6491
    %6493 = vrot.lane.b32.xlu0 %v5196, 80
    %v6494 = vpop.permute.xlu0 %6493
    %v6500 = vsel %vm124, %v6480, 0
    %v6503 = vsel %vm124, %v6482, 0
    %v6506 = vsel %vm124, %v6484, 0
    %v6509 = vsel %vm124, %v6486, 0
    %6511 = vmatprep.subr.mxu0 0.0
    %6512 = vmatpush1.msra.mxu0 0.0
    %6513 = vmatprep.subr.mxu0 0.0
    %6514 = vmatpush1.msra.mxu0 0.0
    %6515 = vmatprep.subr.mxu0 0.0
    %6516 = vmatpush1.msra.mxu0 0.0
    %6517 = vmatprep.subr.mxu0 0.0
    %6518 = vmatpush1.msra.mxu0 0.0
    %6519 = vmatprep.subr.mxu0 0.0
    %6520 = vmatpush1.msra.mxu0 0.0
    %6521 = vmatprep.subr.mxu0 0.0
    %6522 = vmatpush1.msra.mxu0 0.0
    %6523 = vmatprep.subr.mxu0 0.0
    %6524 = vmatpush1.msra.mxu0 0.0
    %6525 = vmatprep.subr.mxu0 0.0
    %6526 = vmatpush1.msra.mxu0 0.0
    %6527 = vmatprep.subr.mxu0 0.0
    %6528 = vmatpush1.msra.mxu0 0.0
    %6529 = vmatprep.subr.mxu0 0.0
    %6530 = vmatpush1.msra.mxu0 0.0
    %6531 = vmatprep.subr.mxu0 0.0
    %6532 = vmatpush1.msra.mxu0 0.0
    %6533 = vmatprep.subr.mxu0 0.0
    %6534 = vmatpush1.msra.mxu0 0.0
    %6535 = vmatprep.subr.mxu0 0.0
    %6536 = vmatpush1.msra.mxu0 %v6494
    %6537 = vmatprep.subr.mxu0 0.0
    %6538 = vmatpush1.msra.mxu0 %v6492
    %6539 = vmatprep.subr.mxu0 0.0
    %6540 = vmatpush1.msra.mxu0 %v6490
    %6541 = vmatprep.subr.mxu0 0.0
    %6542 = vmatpush1.msra.mxu0 %v6488
    %6543 = vmatprep.subr.mxu0 0.0
    %6544 = vmatpush2.msra.mxu0 0.0
    %6545 = vmatprep.subr.mxu0 0.0
    %6546 = vmatpush2.msra.mxu0 0.0
    %6547 = vmatprep.subr.mxu0 0.0
    %6548 = vmatpush2.msra.mxu0 0.0
    %6549 = vmatprep.subr.mxu0 0.0
    %6550 = vmatpush2.msra.mxu0 0.0
    %6551 = vmatprep.subr.mxu0 0.0
    %6552 = vmatpush2.msra.mxu0 0.0
    %6553 = vmatprep.subr.mxu0 0.0
    %6554 = vmatpush2.msra.mxu0 0.0
    %6555 = vmatprep.subr.mxu0 0.0
    %6556 = vmatpush2.msra.mxu0 0.0
    %6557 = vmatprep.subr.mxu0 0.0
    %6558 = vmatpush2.msra.mxu0 0.0
    %6559 = vmatprep.subr.mxu0 0.0
    %6560 = vmatpush2.msra.mxu0 0.0
    %6561 = vmatprep.subr.mxu0 0.0
    %6562 = vmatpush2.msra.mxu0 0.0
    %6563 = vmatprep.subr.mxu0 0.0
    %6564 = vmatpush2.msra.mxu0 0.0
    %6565 = vmatprep.subr.mxu0 0.0
    %6566 = vmatpush2.msra.mxu0 0.0
    %6567 = vmatprep.subr.mxu0 0.0
    %6568 = vmatpush2.msra.mxu0 0.0
    %6569 = vmatprep.subr.mxu0 0.0
    %6570 = vmatpush2.msra.mxu0 0.0
    %6571 = vmatprep.subr.mxu0 0.0
    %6572 = vmatpush2.msra.mxu0 0.0
    %6573 = vmatprep.subr.mxu0 0.0
    %6574 = vmatpush2.msra.mxu0 0.0
    %6575 = vmatprep.mubr.f32.mxu0 0.0
    %6576 = vmatmul.mubr.f32.gmra.mxu0 %v6500
    %v6577 = vpop.f32.mrf.mxu0
    %v6578 = vadd.f32 0.0, %v6577
    %v6579 = vpop.f32.mrf.mxu0
    %6580 = vmatprep.mubr.f32.mxu0 0.0
    %6581 = vmatmul.mubr.f32.gmra.mxu0 %v6503
    %v6582 = vpop.f32.mrf.mxu0
    %v6583 = vadd.f32 0.0, %v6582
    %v6584 = vpop.f32.mrf.mxu0
    %6585 = vmatprep.mubr.f32.mxu0 0.0
    %6586 = vmatmul.mubr.f32.gmra.mxu0 %v6506
    %v6587 = vpop.f32.mrf.mxu0
    %v6588 = vadd.f32 0.0, %v6587
    %v6589 = vpop.f32.mrf.mxu0
    %6590 = vmatprep.mubr.f32.mxu0 0.0
    %6591 = vmatmul.mubr.f32.gmra.mxu0 %v6509
    %v6592 = vpop.f32.mrf.mxu0
    %v6593 = vadd.f32 0.0, %v6592
    %v6594 = vpop.f32.mrf.mxu0
    %6595 = vdwg.mxu0
    %v6596 = vld [vmem:[%s13 + $0x30] sm:$0xff]
    %v6597 = vld [vmem:[%s13 + $0x38] sm:$0xff]
    %v6599 = vsel %vm614, %v6578, 0
    %v6602 = vsel %vm614, %v6583, 0
    %v6605 = vsel %vm614, %v6588, 0
    %v6608 = vsel %vm614, %v6593, 0
    %6610 = vmatprep.subr.mxu0 0.0
    %6611 = vmatpush1.msra.mxu0 0.0
    %6612 = vmatprep.subr.mxu0 0.0
    %6613 = vmatpush1.msra.mxu0 0.0
    %6614 = vmatprep.subr.mxu0 0.0
    %6615 = vmatpush1.msra.mxu0 0.0
    %6616 = vmatprep.subr.mxu0 0.0
    %6617 = vmatpush1.msra.mxu0 0.0
    %6618 = vmatprep.subr.mxu0 0.0
    %6619 = vmatpush1.msra.mxu0 0.0
    %6620 = vmatprep.subr.mxu0 0.0
    %6621 = vmatpush1.msra.mxu0 0.0
    %6622 = vmatprep.subr.mxu0 0.0
    %6623 = vmatpush1.msra.mxu0 0.0
    %6624 = vmatprep.subr.mxu0 0.0
    %6625 = vmatpush1.msra.mxu0 0.0
    %6626 = vmatprep.subr.mxu0 0.0
    %6627 = vmatpush1.msra.mxu0 0.0
    %6628 = vmatprep.subr.mxu0 0.0
    %6629 = vmatpush1.msra.mxu0 0.0
    %6630 = vmatprep.subr.mxu0 0.0
    %6631 = vmatpush1.msra.mxu0 0.0
    %6632 = vmatprep.subr.mxu0 0.0
    %6633 = vmatpush1.msra.mxu0 0.0
    %6634 = vmatprep.subr.mxu0 0.0
    %6635 = vmatpush1.msra.mxu0 0.0
    %6636 = vmatprep.subr.mxu0 0.0
    %6637 = vmatpush1.msra.mxu0 0.0
    %6638 = vmatprep.subr.mxu0 0.0
    %6639 = vmatpush1.msra.mxu0 %v6597
    %6640 = vmatprep.subr.mxu0 0.0
    %6641 = vmatpush1.msra.mxu0 %v6596
    %6642 = vmatprep.subr.mxu0 0.0
    %6643 = vmatpush2.msra.mxu0 0.0
    %6644 = vmatprep.subr.mxu0 0.0
    %6645 = vmatpush2.msra.mxu0 0.0
    %6646 = vmatprep.subr.mxu0 0.0
    %6647 = vmatpush2.msra.mxu0 0.0
    %6648 = vmatprep.subr.mxu0 0.0
    %6649 = vmatpush2.msra.mxu0 0.0
    %6650 = vmatprep.subr.mxu0 0.0
    %6651 = vmatpush2.msra.mxu0 0.0
    %6652 = vmatprep.subr.mxu0 0.0
    %6653 = vmatpush2.msra.mxu0 0.0
    %6654 = vmatprep.subr.mxu0 0.0
    %6655 = vmatpush2.msra.mxu0 0.0
    %6656 = vmatprep.subr.mxu0 0.0
    %6657 = vmatpush2.msra.mxu0 0.0
    %6658 = vmatprep.subr.mxu0 0.0
    %6659 = vmatpush2.msra.mxu0 0.0
    %6660 = vmatprep.subr.mxu0 0.0
    %6661 = vmatpush2.msra.mxu0 0.0
    %6662 = vmatprep.subr.mxu0 0.0
    %6663 = vmatpush2.msra.mxu0 0.0
    %6664 = vmatprep.subr.mxu0 0.0
    %6665 = vmatpush2.msra.mxu0 0.0
    %6666 = vmatprep.subr.mxu0 0.0
    %6667 = vmatpush2.msra.mxu0 0.0
    %6668 = vmatprep.subr.mxu0 0.0
    %6669 = vmatpush2.msra.mxu0 0.0
    %6670 = vmatprep.subr.mxu0 0.0
    %6671 = vmatpush2.msra.mxu0 0.0
    %6672 = vmatprep.subr.mxu0 0.0
    %6673 = vmatpush2.msra.mxu0 0.0
    %6674 = vmatprep.mubr.f32.mxu0 0.0
    %6675 = vmatmul.mubr.f32.gmra.mxu0 %v6599
    %v6676 = vpop.f32.mrf.mxu0
    %v6677 = vadd.f32 0.0, %v6676
    %v6678 = vpop.f32.mrf.mxu0
    %6679 = vmatprep.mubr.f32.mxu0 0.0
    %6680 = vmatmul.mubr.f32.gmra.mxu0 %v6602
    %v6681 = vpop.f32.mrf.mxu0
    %v6682 = vadd.f32 0.0, %v6681
    %v6683 = vpop.f32.mrf.mxu0
    %6684 = vmatprep.mubr.f32.mxu0 0.0
    %6685 = vmatmul.mubr.f32.gmra.mxu0 %v6605
    %v6686 = vpop.f32.mrf.mxu0
    %v6687 = vadd.f32 0.0, %v6686
    %v6688 = vpop.f32.mrf.mxu0
    %6689 = vmatprep.mubr.f32.mxu0 0.0
    %6690 = vmatmul.mubr.f32.gmra.mxu0 %v6608
    %v6691 = vpop.f32.mrf.mxu0
    %v6692 = vadd.f32 0.0, %v6691
    %v6693 = vpop.f32.mrf.mxu0
    %6694 = vdwg.mxu0
    %v6695 = vadd.f32 %v6314, %v6677
    %v6696 = vadd.f32 %v6315, %v6682
    %v6697 = vadd.f32 %v6316, %v6687
    %v6698 = vadd.f32 %v6317, %v6692
    %v6699 = vld [vmem:[%s14] sm:$0x1]
    %v6701 = vlaneseq
    %v6702 = vshrl.u32 %v6701, 7
    %v6703 = vsub.s32 0, %v6702
    %v6704 = vrot.slane %v6699, %v6703
    %v6706 = vadd.f32 %v6695, %v6704
    %v6707 = vadd.f32 %v6696, %v6704
    %v6708 = vadd.f32 %v6697, %v6704
    %v6709 = vadd.f32 %v6698, %v6704
    %v6710 = vmul.f32 %v86, %v6706
    %v6711 = vmul.f32 %v87, %v6707
    %v6712 = vmul.f32 %v88, %v6708
    %v6713 = vmul.f32 %v89, %v6709
    %v6714 = vadd.f32 %v4823, %v6710
    %v6715 = vadd.f32 %v4824, %v6711
    %v6716 = vadd.f32 %v4825, %v6712
    %v6717 = vadd.f32 %v4826, %v6713
    %v6718 = vsel %vm240, %v6714, 0.0
    %6719 = vadd.xlane.f32.xlu0 %v6718
    %v6720 = vpop.xlane.xlu0 %6719
    %v6721 = vsel %vm240, %v6715, 0.0
    %6722 = vadd.xlane.f32.xlu0 %v6721
    %v6723 = vpop.xlane.xlu0 %6722
    %v6724 = vsel %vm240, %v6716, 0.0
    %6725 = vadd.xlane.f32.xlu0 %v6724
    %v6726 = vpop.xlane.xlu0 %6725
    %v6727 = vsel %vm240, %v6717, 0.0
    %6728 = vadd.xlane.f32.xlu0 %v6727
    %v6729 = vpop.xlane.xlu0 %6728
    %v6730 = vmul.f32 %v6720, %v253
    %v6731 = vmul.f32 %v6723, %v253
    %v6732 = vmul.f32 %v6726, %v253
    %v6733 = vmul.f32 %v6729, %v253
    %v6734 = vsub.f32 %v6714, %v6730
    %v6735 = vsub.f32 %v6715, %v6731
    %v6736 = vsub.f32 %v6716, %v6732
    %v6737 = vsub.f32 %v6717, %v6733
    %v6738 = vmul.f32 %v6734, %v6734
    %v6739 = vmul.f32 %v6735, %v6735
    %v6740 = vmul.f32 %v6736, %v6736
    %v6741 = vmul.f32 %v6737, %v6737
    %v6742 = vsel %vm240, %v6738, 0.0
    %6743 = vadd.xlane.f32.xlu0 %v6742
    %v6744 = vpop.xlane.xlu0 %6743
    %v6745 = vsel %vm240, %v6739, 0.0
    %6746 = vadd.xlane.f32.xlu0 %v6745
    %v6747 = vpop.xlane.xlu0 %6746
    %v6748 = vsel %vm240, %v6740, 0.0
    %6749 = vadd.xlane.f32.xlu0 %v6748
    %v6750 = vpop.xlane.xlu0 %6749
    %v6751 = vsel %vm240, %v6741, 0.0
    %6752 = vadd.xlane.f32.xlu0 %v6751
    %v6753 = vpop.xlane.xlu0 %6752
    %v6754 = vmul.f32 %v6744, %v253
    %v6755 = vmul.f32 %v6747, %v253
    %v6756 = vmul.f32 %v6750, %v253
    %v6757 = vmul.f32 %v6753, %v253
    %v6758 = vadd.f32 %v6754, 1e-06
    %v6759 = vadd.f32 %v6755, 1e-06
    %v6760 = vadd.f32 %v6756, 1e-06
    %v6761 = vadd.f32 %v6757, 1e-06
    %v6762 = vrsqrt.pop %v6758
    %v6763 = vrsqrt.pop %v6759
    %v6764 = vrsqrt.pop %v6760
    %v6765 = vrsqrt.pop %v6761
    %v6766 = vmul.f32 %v6734, %v6762
    %v6767 = vmul.f32 %v6735, %v6763
    %v6768 = vmul.f32 %v6736, %v6764
    %v6769 = vmul.f32 %v6737, %v6765
    %v6770 = vmul.f32 %v6766, %v100
    %v6771 = vmul.f32 %v6767, %v101
    %v6772 = vmul.f32 %v6768, %v102
    %v6773 = vmul.f32 %v6769, %v103
    %v6774 = vadd.f32 %v6770, %v91
    %v6775 = vadd.f32 %v6771, %v92
    %v6776 = vadd.f32 %v6772, %v93
    %v6777 = vadd.f32 %v6773, %v94
    %v6778 = vld [vmem:[%s15] sm:$0xff]
    %v6779 = vld [vmem:[%s15 + $0x8] sm:$0xff]
    %v6780 = vld [vmem:[%s15 + $0x10] sm:$0xff]
    %v6781 = vld [vmem:[%s15 + $0x18] sm:$0xff]
    %v6782 = vld [vmem:[%s15 + $0x20] sm:$0xff]
    %v6783 = vld [vmem:[%s15 + $0x28] sm:$0xff]
    %v6784 = vld [vmem:[%s15 + $0x30] sm:$0xff]
    %v6785 = vld [vmem:[%s15 + $0x38] sm:$0xff]
    %v6786 = vld [vmem:[%s15 + $0x40] sm:$0xff]
    %v6787 = vld [vmem:[%s15 + $0x48] sm:$0xff]
    %v6788 = vld [vmem:[%s15 + $0x50] sm:$0xff]
    %v6789 = vld [vmem:[%s15 + $0x58] sm:$0xff]
    %v6790 = vld [vmem:[%s15 + $0x60] sm:$0xff]
    %v6791 = vld [vmem:[%s15 + $0x68] sm:$0xff]
    %v6792 = vld [vmem:[%s15 + $0x70] sm:$0xff]
    %v6793 = vld [vmem:[%s15 + $0x78] sm:$0xff]
    %v6794 = vld [vmem:[%s16] sm:$0x3]
    %v6796 = vlaneseq
    %v6797 = vshrl.u32 %v6796, 7
    %v6798 = vsub.s32 0, %v6797
    %v6799 = vrot.slane %v6794, %v6798
    %v6800 = vlaneseq
    %v6801 = vshrl.u32 %v6800, 7
    %v6802 = vsub.s32 1, %v6801
    %v6803 = vrot.slane %v6794, %v6802
    %v6807 = vsel %vm240, %v6774, 0
    %v6810 = vsel %vm240, %v6775, 0
    %v6813 = vsel %vm240, %v6776, 0
    %v6816 = vsel %vm240, %v6777, 0
    %6818 = vmatprep.subr.mxu0 0.0
    %6819 = vmatpush1.msra.mxu0 0.0
    %6820 = vmatprep.subr.mxu0 0.0
    %6821 = vmatpush1.msra.mxu0 0.0
    %6822 = vmatprep.subr.mxu0 0.0
    %6823 = vmatpush1.msra.mxu0 0.0
    %6824 = vmatprep.subr.mxu0 0.0
    %6825 = vmatpush1.msra.mxu0 0.0
    %6826 = vmatprep.subr.mxu0 0.0
    %6827 = vmatpush1.msra.mxu0 0.0
    %6828 = vmatprep.subr.mxu0 0.0
    %6829 = vmatpush1.msra.mxu0 0.0
    %6830 = vmatprep.subr.mxu0 0.0
    %6831 = vmatpush1.msra.mxu0 0.0
    %6832 = vmatprep.subr.mxu0 0.0
    %6833 = vmatpush1.msra.mxu0 0.0
    %6834 = vmatprep.subr.mxu0 %v6793
    %6835 = vmatpush1.msra.mxu0 %v6792
    %6836 = vmatprep.subr.mxu0 %v6791
    %6837 = vmatpush1.msra.mxu0 %v6790
    %6838 = vmatprep.subr.mxu0 %v6789
    %6839 = vmatpush1.msra.mxu0 %v6788
    %6840 = vmatprep.subr.mxu0 %v6787
    %6841 = vmatpush1.msra.mxu0 %v6786
    %6842 = vmatprep.subr.mxu0 %v6785
    %6843 = vmatpush1.msra.mxu0 %v6784
    %6844 = vmatprep.subr.mxu0 %v6783
    %6845 = vmatpush1.msra.mxu0 %v6782
    %6846 = vmatprep.subr.mxu0 %v6781
    %6847 = vmatpush1.msra.mxu0 %v6780
    %6848 = vmatprep.subr.mxu0 %v6779
    %6849 = vmatpush1.msra.mxu0 %v6778
    %6850 = vmatprep.subr.mxu0 0.0
    %6851 = vmatpush2.msra.mxu0 0.0
    %6852 = vmatprep.subr.mxu0 0.0
    %6853 = vmatpush2.msra.mxu0 0.0
    %6854 = vmatprep.subr.mxu0 0.0
    %6855 = vmatpush2.msra.mxu0 0.0
    %6856 = vmatprep.subr.mxu0 0.0
    %6857 = vmatpush2.msra.mxu0 0.0
    %6858 = vmatprep.subr.mxu0 0.0
    %6859 = vmatpush2.msra.mxu0 0.0
    %6860 = vmatprep.subr.mxu0 0.0
    %6861 = vmatpush2.msra.mxu0 0.0
    %6862 = vmatprep.subr.mxu0 0.0
    %6863 = vmatpush2.msra.mxu0 0.0
    %6864 = vmatprep.subr.mxu0 0.0
    %6865 = vmatpush2.msra.mxu0 0.0
    %6866 = vmatprep.subr.mxu0 0.0
    %6867 = vmatpush2.msra.mxu0 0.0
    %6868 = vmatprep.subr.mxu0 0.0
    %6869 = vmatpush2.msra.mxu0 0.0
    %6870 = vmatprep.subr.mxu0 0.0
    %6871 = vmatpush2.msra.mxu0 0.0
    %6872 = vmatprep.subr.mxu0 0.0
    %6873 = vmatpush2.msra.mxu0 0.0
    %6874 = vmatprep.subr.mxu0 0.0
    %6875 = vmatpush2.msra.mxu0 0.0
    %6876 = vmatprep.subr.mxu0 0.0
    %6877 = vmatpush2.msra.mxu0 0.0
    %6878 = vmatprep.subr.mxu0 0.0
    %6879 = vmatpush2.msra.mxu0 0.0
    %6880 = vmatprep.subr.mxu0 0.0
    %6881 = vmatpush2.msra.mxu0 0.0
    %6882 = vmatprep.mubr.f32.mxu0 0.0
    %6883 = vmatmul.mubr.f32.gmra.mxu0 %v6807
    %v6884 = vpop.f32.mrf.mxu0
    %v6885 = vadd.f32 %v6799, %v6884
    %v6886 = vpop.f32.mrf.mxu0
    %v6887 = vadd.f32 %v6803, %v6886
    %6888 = vmatprep.mubr.f32.mxu0 0.0
    %6889 = vmatmul.mubr.f32.gmra.mxu0 %v6810
    %v6890 = vpop.f32.mrf.mxu0
    %v6891 = vadd.f32 %v6799, %v6890
    %v6892 = vpop.f32.mrf.mxu0
    %v6893 = vadd.f32 %v6803, %v6892
    %6894 = vmatprep.mubr.f32.mxu0 0.0
    %6895 = vmatmul.mubr.f32.gmra.mxu0 %v6813
    %v6896 = vpop.f32.mrf.mxu0
    %v6897 = vadd.f32 %v6799, %v6896
    %v6898 = vpop.f32.mrf.mxu0
    %v6899 = vadd.f32 %v6803, %v6898
    %6900 = vmatprep.mubr.f32.mxu0 0.0
    %6901 = vmatmul.mubr.f32.gmra.mxu0 %v6816
    %v6902 = vpop.f32.mrf.mxu0
    %v6903 = vadd.f32 %v6799, %v6902
    %v6904 = vpop.f32.mrf.mxu0
    %v6905 = vadd.f32 %v6803, %v6904
    %6906 = vdwg.mxu0
    %v6907 = vmul.f32 %v6885, 0.5
    %v6908 = vmul.f32 %v6887, 0.5
    %v6909 = vmul.f32 %v6891, 0.5
    %v6910 = vmul.f32 %v6893, 0.5
    %v6911 = vmul.f32 %v6897, 0.5
    %v6912 = vmul.f32 %v6899, 0.5
    %v6913 = vmul.f32 %v6903, 0.5
    %v6914 = vmul.f32 %v6905, 0.5
    %v6915 = vmul.f32 %v6885, 0.044715
    %v6916 = vmul.f32 %v6887, 0.044715
    %v6917 = vmul.f32 %v6891, 0.044715
    %v6918 = vmul.f32 %v6893, 0.044715
    %v6919 = vmul.f32 %v6897, 0.044715
    %v6920 = vmul.f32 %v6899, 0.044715
    %v6921 = vmul.f32 %v6903, 0.044715
    %v6922 = vmul.f32 %v6905, 0.044715
    %v6923 = vmul.f32 %v6915, %v6885
    %v6924 = vmul.f32 %v6916, %v6887
    %v6925 = vmul.f32 %v6917, %v6891
    %v6926 = vmul.f32 %v6918, %v6893
    %v6927 = vmul.f32 %v6919, %v6897
    %v6928 = vmul.f32 %v6920, %v6899
    %v6929 = vmul.f32 %v6921, %v6903
    %v6930 = vmul.f32 %v6922, %v6905
    %v6931 = vmul.f32 %v6923, %v6885
    %v6932 = vmul.f32 %v6924, %v6887
    %v6933 = vmul.f32 %v6925, %v6891
    %v6934 = vmul.f32 %v6926, %v6893
    %v6935 = vmul.f32 %v6927, %v6897
    %v6936 = vmul.f32 %v6928, %v6899
    %v6937 = vmul.f32 %v6929, %v6903
    %v6938 = vmul.f32 %v6930, %v6905
    %v6939 = vadd.f32 %v6885, %v6931
    %v6940 = vadd.f32 %v6887, %v6932
    %v6941 = vadd.f32 %v6891, %v6933
    %v6942 = vadd.f32 %v6893, %v6934
    %v6943 = vadd.f32 %v6897, %v6935
    %v6944 = vadd.f32 %v6899, %v6936
    %v6945 = vadd.f32 %v6903, %v6937
    %v6946 = vadd.f32 %v6905, %v6938
    %v6947 = vmul.f32 %v6939, 0.7978846
    %v6948 = vmul.f32 %v6940, 0.7978846
    %v6949 = vmul.f32 %v6941, 0.7978846
    %v6950 = vmul.f32 %v6942, 0.7978846
    %v6951 = vmul.f32 %v6943, 0.7978846
    %v6952 = vmul.f32 %v6944, 0.7978846
    %v6953 = vmul.f32 %v6945, 0.7978846
    %v6954 = vmul.f32 %v6946, 0.7978846
    %v6955 = vtanh.pop %v6947
    %v6956 = vtanh.pop %v6948
    %v6957 = vtanh.pop %v6949
    %v6958 = vtanh.pop %v6950
    %v6959 = vtanh.pop %v6951
    %v6960 = vtanh.pop %v6952
    %v6961 = vtanh.pop %v6953
    %v6962 = vtanh.pop %v6954
    %v6963 = vadd.f32 %v6955, 1.0
    %v6964 = vadd.f32 %v6956, 1.0
    %v6965 = vadd.f32 %v6957, 1.0
    %v6966 = vadd.f32 %v6958, 1.0
    %v6967 = vadd.f32 %v6959, 1.0
    %v6968 = vadd.f32 %v6960, 1.0
    %v6969 = vadd.f32 %v6961, 1.0
    %v6970 = vadd.f32 %v6962, 1.0
    %v6971 = vmul.f32 %v6907, %v6963
    %v6972 = vmul.f32 %v6908, %v6964
    %v6973 = vmul.f32 %v6909, %v6965
    %v6974 = vmul.f32 %v6910, %v6966
    %v6975 = vmul.f32 %v6911, %v6967
    %v6976 = vmul.f32 %v6912, %v6968
    %v6977 = vmul.f32 %v6913, %v6969
    %v6978 = vmul.f32 %v6914, %v6970
    %v6979 = vld [vmem:[%s17] sm:$0xff]
    %v6980 = vld [vmem:[%s17 + $0x8] sm:$0xff]
    %v6981 = vld [vmem:[%s17 + $0x10] sm:$0xff]
    %v6982 = vld [vmem:[%s17 + $0x18] sm:$0xff]
    %v6983 = vld [vmem:[%s17 + $0x20] sm:$0xff]
    %v6984 = vld [vmem:[%s17 + $0x28] sm:$0xff]
    %v6985 = vld [vmem:[%s17 + $0x30] sm:$0xff]
    %v6986 = vld [vmem:[%s17 + $0x38] sm:$0xff]
    %v6987 = vld [vmem:[%s17 + $0x40] sm:$0xff]
    %v6988 = vld [vmem:[%s17 + $0x48] sm:$0xff]
    %v6989 = vld [vmem:[%s17 + $0x50] sm:$0xff]
    %v6990 = vld [vmem:[%s17 + $0x58] sm:$0xff]
    %v6991 = vld [vmem:[%s17 + $0x60] sm:$0xff]
    %v6992 = vld [vmem:[%s17 + $0x68] sm:$0xff]
    %v6993 = vld [vmem:[%s17 + $0x70] sm:$0xff]
    %v6994 = vld [vmem:[%s17 + $0x78] sm:$0xff]
    %v6995 = vld [vmem:[%s17 + $0x80] sm:$0xff]
    %v6996 = vld [vmem:[%s17 + $0x88] sm:$0xff]
    %v6997 = vld [vmem:[%s17 + $0x90] sm:$0xff]
    %v6998 = vld [vmem:[%s17 + $0x98] sm:$0xff]
    %v6999 = vld [vmem:[%s17 + $0xa0] sm:$0xff]
    %v7000 = vld [vmem:[%s17 + $0xa8] sm:$0xff]
    %v7001 = vld [vmem:[%s17 + $0xb0] sm:$0xff]
    %v7002 = vld [vmem:[%s17 + $0xb8] sm:$0xff]
    %v7003 = vld [vmem:[%s17 + $0xc0] sm:$0xff]
    %v7004 = vld [vmem:[%s17 + $0xc8] sm:$0xff]
    %v7005 = vld [vmem:[%s17 + $0xd0] sm:$0xff]
    %v7006 = vld [vmem:[%s17 + $0xd8] sm:$0xff]
    %v7007 = vld [vmem:[%s17 + $0xe0] sm:$0xff]
    %v7008 = vld [vmem:[%s17 + $0xe8] sm:$0xff]
    %v7009 = vld [vmem:[%s17 + $0xf0] sm:$0xff]
    %v7010 = vld [vmem:[%s17 + $0xf8] sm:$0xff]
    %v7011 = vld [vmem:[%s18] sm:$0x1]
    %v7013 = vlaneseq
    %v7014 = vshrl.u32 %v7013, 7
    %v7015 = vsub.s32 0, %v7014
    %v7016 = vrot.slane %v7011, %v7015
    %7018 = vmatprep.subr.mxu0 0.0
    %7019 = vmatpush1.msra.mxu0 %v6994
    %7020 = vmatprep.subr.mxu0 0.0
    %7021 = vmatpush1.msra.mxu0 %v6993
    %7022 = vmatprep.subr.mxu0 0.0
    %7023 = vmatpush1.msra.mxu0 %v6992
    %7024 = vmatprep.subr.mxu0 0.0
    %7025 = vmatpush1.msra.mxu0 %v6991
    %7026 = vmatprep.subr.mxu0 0.0
    %7027 = vmatpush1.msra.mxu0 %v6990
    %7028 = vmatprep.subr.mxu0 0.0
    %7029 = vmatpush1.msra.mxu0 %v6989
    %7030 = vmatprep.subr.mxu0 0.0
    %7031 = vmatpush1.msra.mxu0 %v6988
    %7032 = vmatprep.subr.mxu0 0.0
    %7033 = vmatpush1.msra.mxu0 %v6987
    %7034 = vmatprep.subr.mxu0 0.0
    %7035 = vmatpush1.msra.mxu0 %v6986
    %7036 = vmatprep.subr.mxu0 0.0
    %7037 = vmatpush1.msra.mxu0 %v6985
    %7038 = vmatprep.subr.mxu0 0.0
    %7039 = vmatpush1.msra.mxu0 %v6984
    %7040 = vmatprep.subr.mxu0 0.0
    %7041 = vmatpush1.msra.mxu0 %v6983
    %7042 = vmatprep.subr.mxu0 0.0
    %7043 = vmatpush1.msra.mxu0 %v6982
    %7044 = vmatprep.subr.mxu0 0.0
    %7045 = vmatpush1.msra.mxu0 %v6981
    %7046 = vmatprep.subr.mxu0 0.0
    %7047 = vmatpush1.msra.mxu0 %v6980
    %7048 = vmatprep.subr.mxu0 0.0
    %7049 = vmatpush1.msra.mxu0 %v6979
    %7050 = vmatprep.subr.mxu0 0.0
    %7051 = vmatpush2.msra.mxu0 %v7010
    %7052 = vmatprep.subr.mxu0 0.0
    %7053 = vmatpush2.msra.mxu0 %v7009
    %7054 = vmatprep.subr.mxu0 0.0
    %7055 = vmatpush2.msra.mxu0 %v7008
    %7056 = vmatprep.subr.mxu0 0.0
    %7057 = vmatpush2.msra.mxu0 %v7007
    %7058 = vmatprep.subr.mxu0 0.0
    %7059 = vmatpush2.msra.mxu0 %v7006
    %7060 = vmatprep.subr.mxu0 0.0
    %7061 = vmatpush2.msra.mxu0 %v7005
    %7062 = vmatprep.subr.mxu0 0.0
    %7063 = vmatpush2.msra.mxu0 %v7004
    %7064 = vmatprep.subr.mxu0 0.0
    %7065 = vmatpush2.msra.mxu0 %v7003
    %7066 = vmatprep.subr.mxu0 0.0
    %7067 = vmatpush2.msra.mxu0 %v7002
    %7068 = vmatprep.subr.mxu0 0.0
    %7069 = vmatpush2.msra.mxu0 %v7001
    %7070 = vmatprep.subr.mxu0 0.0
    %7071 = vmatpush2.msra.mxu0 %v7000
    %7072 = vmatprep.subr.mxu0 0.0
    %7073 = vmatpush2.msra.mxu0 %v6999
    %7074 = vmatprep.subr.mxu0 0.0
    %7075 = vmatpush2.msra.mxu0 %v6998
    %7076 = vmatprep.subr.mxu0 0.0
    %7077 = vmatpush2.msra.mxu0 %v6997
    %7078 = vmatprep.subr.mxu0 0.0
    %7079 = vmatpush2.msra.mxu0 %v6996
    %7080 = vmatprep.subr.mxu0 0.0
    %7081 = vmatpush2.msra.mxu0 %v6995
    %7082 = vmatprep.mubr.f32.mxu0 %v6972
    %7083 = vmatmul.mubr.f32.gmra.mxu0 %v6971
    %v7084 = vpop.f32.mrf.mxu0
    %v7085 = vadd.f32 %v7016, %v7084
    %v7086 = vpop.f32.mrf.mxu0
    %7087 = vmatprep.mubr.f32.mxu0 %v6974
    %7088 = vmatmul.mubr.f32.gmra.mxu0 %v6973
    %v7089 = vpop.f32.mrf.mxu0
    %v7090 = vadd.f32 %v7016, %v7089
    %v7091 = vpop.f32.mrf.mxu0
    %7092 = vmatprep.mubr.f32.mxu0 %v6976
    %7093 = vmatmul.mubr.f32.gmra.mxu0 %v6975
    %v7094 = vpop.f32.mrf.mxu0
    %v7095 = vadd.f32 %v7016, %v7094
    %v7096 = vpop.f32.mrf.mxu0
    %7097 = vmatprep.mubr.f32.mxu0 %v6978
    %7098 = vmatmul.mubr.f32.gmra.mxu0 %v6977
    %v7099 = vpop.f32.mrf.mxu0
    %v7100 = vadd.f32 %v7016, %v7099
    %v7101 = vpop.f32.mrf.mxu0
    %7102 = vdwg.mxu0
    %v7103 = vmul.f32 %v105, %v7085
    %v7104 = vmul.f32 %v106, %v7090
    %v7105 = vmul.f32 %v107, %v7095
    %v7106 = vmul.f32 %v108, %v7100
    %v7107 = vadd.f32 %v6714, %v7103
    %v7108 = vadd.f32 %v6715, %v7104
    %v7109 = vadd.f32 %v6716, %v7105
    %v7110 = vadd.f32 %v6717, %v7106
    %v7111 = vmul.f32 %v7107, 0.0625
    %v7112 = vmul.f32 %v7108, 0.0625
    %v7113 = vmul.f32 %v7109, 0.0625
    %v7114 = vmul.f32 %v7110, 0.0625
    %v7115 = vadd.f32 %v236, %v7111
    %v7116 = vadd.f32 %v237, %v7112
    %v7117 = vadd.f32 %v238, %v7113
    %v7118 = vadd.f32 %v239, %v7114
    %v7119 = vsel %vm240, %v7115, 0.0
    %7120 = vadd.xlane.f32.xlu0 %v7119
    %v7121 = vpop.xlane.xlu0 %7120
    %v7122 = vsel %vm240, %v7116, 0.0
    %7123 = vadd.xlane.f32.xlu0 %v7122
    %v7124 = vpop.xlane.xlu0 %7123
    %v7125 = vsel %vm240, %v7117, 0.0
    %7126 = vadd.xlane.f32.xlu0 %v7125
    %v7127 = vpop.xlane.xlu0 %7126
    %v7128 = vsel %vm240, %v7118, 0.0
    %7129 = vadd.xlane.f32.xlu0 %v7128
    %v7130 = vpop.xlane.xlu0 %7129
    %v7131 = vmul.f32 %v7121, %v253
    %v7132 = vmul.f32 %v7124, %v253
    %v7133 = vmul.f32 %v7127, %v253
    %v7134 = vmul.f32 %v7130, %v253
    %v7135 = vsub.f32 %v7115, %v7131
    %v7136 = vsub.f32 %v7116, %v7132
    %v7137 = vsub.f32 %v7117, %v7133
    %v7138 = vsub.f32 %v7118, %v7134
    %v7139 = vmul.f32 %v7135, %v7135
    %v7140 = vmul.f32 %v7136, %v7136
    %v7141 = vmul.f32 %v7137, %v7137
    %v7142 = vmul.f32 %v7138, %v7138
    %v7143 = vsel %vm240, %v7139, 0.0
    %7144 = vadd.xlane.f32.xlu0 %v7143
    %v7145 = vpop.xlane.xlu0 %7144
    %v7146 = vsel %vm240, %v7140, 0.0
    %7147 = vadd.xlane.f32.xlu0 %v7146
    %v7148 = vpop.xlane.xlu0 %7147
    %v7149 = vsel %vm240, %v7141, 0.0
    %7150 = vadd.xlane.f32.xlu0 %v7149
    %v7151 = vpop.xlane.xlu0 %7150
    %v7152 = vsel %vm240, %v7142, 0.0
    %7153 = vadd.xlane.f32.xlu0 %v7152
    %v7154 = vpop.xlane.xlu0 %7153
    %v7155 = vmul.f32 %v7145, %v253
    %v7156 = vmul.f32 %v7148, %v253
    %v7157 = vmul.f32 %v7151, %v253
    %v7158 = vmul.f32 %v7154, %v253
    %v7159 = vadd.f32 %v7155, 1e-06
    %v7160 = vadd.f32 %v7156, 1e-06
    %v7161 = vadd.f32 %v7157, 1e-06
    %v7162 = vadd.f32 %v7158, 1e-06
    %v7163 = vrsqrt.pop %v7159
    %v7164 = vrsqrt.pop %v7160
    %v7165 = vrsqrt.pop %v7161
    %v7166 = vrsqrt.pop %v7162
    %v7167 = vmul.f32 %v7135, %v7163
    %v7168 = vmul.f32 %v7136, %v7164
    %v7169 = vmul.f32 %v7137, %v7165
    %v7170 = vmul.f32 %v7138, %v7166
    %v7171 = vmul.f32 %v7167, %v81
    %v7172 = vmul.f32 %v7168, %v82
    %v7173 = vmul.f32 %v7169, %v83
    %v7174 = vmul.f32 %v7170, %v84
    %v7175 = vadd.f32 %v7171, %v72
    %v7176 = vadd.f32 %v7172, %v73
    %v7177 = vadd.f32 %v7173, %v74
    %v7178 = vadd.f32 %v7174, %v75
    %v7179 = vld [vmem:[%s7] sm:$0xff]
    %v7180 = vld [vmem:[%s7 + $0x8] sm:$0xff]
    %v7181 = vld [vmem:[%s7 + $0x10] sm:$0xff]
    %v7182 = vld [vmem:[%s7 + $0x18] sm:$0xff]
    %v7183 = vld [vmem:[%s7 + $0x20] sm:$0xff]
    %v7184 = vld [vmem:[%s7 + $0x28] sm:$0xff]
    %v7185 = vld [vmem:[%s7 + $0x30] sm:$0xff]
    %v7186 = vld [vmem:[%s7 + $0x38] sm:$0xff]
    %v7187 = vld [vmem:[%s8] sm:$0x1]
    %v7189 = vlaneseq
    %v7190 = vshrl.u32 %v7189, 7
    %v7191 = vsub.s32 0, %v7190
    %v7192 = vrot.slane %v7187, %v7191
    %v7195 = vsel %vm240, %v7175, 0
    %v7198 = vsel %vm240, %v7176, 0
    %v7201 = vsel %vm240, %v7177, 0
    %v7204 = vsel %vm240, %v7178, 0
    %7206 = vmatprep.subr.mxu0 0.0
    %7207 = vmatpush1.msra.mxu0 0.0
    %7208 = vmatprep.subr.mxu0 0.0
    %7209 = vmatpush1.msra.mxu0 0.0
    %7210 = vmatprep.subr.mxu0 0.0
    %7211 = vmatpush1.msra.mxu0 0.0
    %7212 = vmatprep.subr.mxu0 0.0
    %7213 = vmatpush1.msra.mxu0 0.0
    %7214 = vmatprep.subr.mxu0 0.0
    %7215 = vmatpush1.msra.mxu0 0.0
    %7216 = vmatprep.subr.mxu0 0.0
    %7217 = vmatpush1.msra.mxu0 0.0
    %7218 = vmatprep.subr.mxu0 0.0
    %7219 = vmatpush1.msra.mxu0 0.0
    %7220 = vmatprep.subr.mxu0 0.0
    %7221 = vmatpush1.msra.mxu0 0.0
    %7222 = vmatprep.subr.mxu0 0.0
    %7223 = vmatpush1.msra.mxu0 %v7186
    %7224 = vmatprep.subr.mxu0 0.0
    %7225 = vmatpush1.msra.mxu0 %v7185
    %7226 = vmatprep.subr.mxu0 0.0
    %7227 = vmatpush1.msra.mxu0 %v7184
    %7228 = vmatprep.subr.mxu0 0.0
    %7229 = vmatpush1.msra.mxu0 %v7183
    %7230 = vmatprep.subr.mxu0 0.0
    %7231 = vmatpush1.msra.mxu0 %v7182
    %7232 = vmatprep.subr.mxu0 0.0
    %7233 = vmatpush1.msra.mxu0 %v7181
    %7234 = vmatprep.subr.mxu0 0.0
    %7235 = vmatpush1.msra.mxu0 %v7180
    %7236 = vmatprep.subr.mxu0 0.0
    %7237 = vmatpush1.msra.mxu0 %v7179
    %7238 = vmatprep.subr.mxu0 0.0
    %7239 = vmatpush2.msra.mxu0 0.0
    %7240 = vmatprep.subr.mxu0 0.0
    %7241 = vmatpush2.msra.mxu0 0.0
    %7242 = vmatprep.subr.mxu0 0.0
    %7243 = vmatpush2.msra.mxu0 0.0
    %7244 = vmatprep.subr.mxu0 0.0
    %7245 = vmatpush2.msra.mxu0 0.0
    %7246 = vmatprep.subr.mxu0 0.0
    %7247 = vmatpush2.msra.mxu0 0.0
    %7248 = vmatprep.subr.mxu0 0.0
    %7249 = vmatpush2.msra.mxu0 0.0
    %7250 = vmatprep.subr.mxu0 0.0
    %7251 = vmatpush2.msra.mxu0 0.0
    %7252 = vmatprep.subr.mxu0 0.0
    %7253 = vmatpush2.msra.mxu0 0.0
    %7254 = vmatprep.subr.mxu0 0.0
    %7255 = vmatpush2.msra.mxu0 0.0
    %7256 = vmatprep.subr.mxu0 0.0
    %7257 = vmatpush2.msra.mxu0 0.0
    %7258 = vmatprep.subr.mxu0 0.0
    %7259 = vmatpush2.msra.mxu0 0.0
    %7260 = vmatprep.subr.mxu0 0.0
    %7261 = vmatpush2.msra.mxu0 0.0
    %7262 = vmatprep.subr.mxu0 0.0
    %7263 = vmatpush2.msra.mxu0 0.0
    %7264 = vmatprep.subr.mxu0 0.0
    %7265 = vmatpush2.msra.mxu0 0.0
    %7266 = vmatprep.subr.mxu0 0.0
    %7267 = vmatpush2.msra.mxu0 0.0
    %7268 = vmatprep.subr.mxu0 0.0
    %7269 = vmatpush2.msra.mxu0 0.0
    %7270 = vmatprep.mubr.f32.mxu0 0.0
    %7271 = vmatmul.mubr.f32.gmra.mxu0 %v7195
    %v7272 = vpop.f32.mrf.mxu0
    %v7273 = vadd.f32 %v7192, %v7272
    %v7274 = vpop.f32.mrf.mxu0
    %7275 = vmatprep.mubr.f32.mxu0 0.0
    %7276 = vmatmul.mubr.f32.gmra.mxu0 %v7198
    %v7277 = vpop.f32.mrf.mxu0
    %v7278 = vadd.f32 %v7192, %v7277
    %v7279 = vpop.f32.mrf.mxu0
    %7280 = vmatprep.mubr.f32.mxu0 0.0
    %7281 = vmatmul.mubr.f32.gmra.mxu0 %v7201
    %v7282 = vpop.f32.mrf.mxu0
    %v7283 = vadd.f32 %v7192, %v7282
    %v7284 = vpop.f32.mrf.mxu0
    %7285 = vmatprep.mubr.f32.mxu0 0.0
    %7286 = vmatmul.mubr.f32.gmra.mxu0 %v7204
    %v7287 = vpop.f32.mrf.mxu0
    %v7288 = vadd.f32 %v7192, %v7287
    %v7289 = vpop.f32.mrf.mxu0
    %7290 = vdwg.mxu0
    %v7291 = vld [vmem:[%s9] sm:$0xff]
    %v7292 = vld [vmem:[%s9 + $0x8] sm:$0xff]
    %v7293 = vld [vmem:[%s9 + $0x10] sm:$0xff]
    %v7294 = vld [vmem:[%s9 + $0x18] sm:$0xff]
    %v7295 = vld [vmem:[%s9 + $0x20] sm:$0xff]
    %v7296 = vld [vmem:[%s9 + $0x28] sm:$0xff]
    %v7297 = vld [vmem:[%s9 + $0x30] sm:$0xff]
    %v7298 = vld [vmem:[%s9 + $0x38] sm:$0xff]
    %v7299 = vld [vmem:[%s10] sm:$0x1]
    %v7301 = vlaneseq
    %v7302 = vshrl.u32 %v7301, 7
    %v7303 = vsub.s32 0, %v7302
    %v7304 = vrot.slane %v7299, %v7303
    %7306 = vmatprep.subr.mxu0 0.0
    %7307 = vmatpush1.msra.mxu0 0.0
    %7308 = vmatprep.subr.mxu0 0.0
    %7309 = vmatpush1.msra.mxu0 0.0
    %7310 = vmatprep.subr.mxu0 0.0
    %7311 = vmatpush1.msra.mxu0 0.0
    %7312 = vmatprep.subr.mxu0 0.0
    %7313 = vmatpush1.msra.mxu0 0.0
    %7314 = vmatprep.subr.mxu0 0.0
    %7315 = vmatpush1.msra.mxu0 0.0
    %7316 = vmatprep.subr.mxu0 0.0
    %7317 = vmatpush1.msra.mxu0 0.0
    %7318 = vmatprep.subr.mxu0 0.0
    %7319 = vmatpush1.msra.mxu0 0.0
    %7320 = vmatprep.subr.mxu0 0.0
    %7321 = vmatpush1.msra.mxu0 0.0
    %7322 = vmatprep.subr.mxu0 0.0
    %7323 = vmatpush1.msra.mxu0 %v7298
    %7324 = vmatprep.subr.mxu0 0.0
    %7325 = vmatpush1.msra.mxu0 %v7297
    %7326 = vmatprep.subr.mxu0 0.0
    %7327 = vmatpush1.msra.mxu0 %v7296
    %7328 = vmatprep.subr.mxu0 0.0
    %7329 = vmatpush1.msra.mxu0 %v7295
    %7330 = vmatprep.subr.mxu0 0.0
    %7331 = vmatpush1.msra.mxu0 %v7294
    %7332 = vmatprep.subr.mxu0 0.0
    %7333 = vmatpush1.msra.mxu0 %v7293
    %7334 = vmatprep.subr.mxu0 0.0
    %7335 = vmatpush1.msra.mxu0 %v7292
    %7336 = vmatprep.subr.mxu0 0.0
    %7337 = vmatpush1.msra.mxu0 %v7291
    %7338 = vmatprep.subr.mxu0 0.0
    %7339 = vmatpush2.msra.mxu0 0.0
    %7340 = vmatprep.subr.mxu0 0.0
    %7341 = vmatpush2.msra.mxu0 0.0
    %7342 = vmatprep.subr.mxu0 0.0
    %7343 = vmatpush2.msra.mxu0 0.0
    %7344 = vmatprep.subr.mxu0 0.0
    %7345 = vmatpush2.msra.mxu0 0.0
    %7346 = vmatprep.subr.mxu0 0.0
    %7347 = vmatpush2.msra.mxu0 0.0
    %7348 = vmatprep.subr.mxu0 0.0
    %7349 = vmatpush2.msra.mxu0 0.0
    %7350 = vmatprep.subr.mxu0 0.0
    %7351 = vmatpush2.msra.mxu0 0.0
    %7352 = vmatprep.subr.mxu0 0.0
    %7353 = vmatpush2.msra.mxu0 0.0
    %7354 = vmatprep.subr.mxu0 0.0
    %7355 = vmatpush2.msra.mxu0 0.0
    %7356 = vmatprep.subr.mxu0 0.0
    %7357 = vmatpush2.msra.mxu0 0.0
    %7358 = vmatprep.subr.mxu0 0.0
    %7359 = vmatpush2.msra.mxu0 0.0
    %7360 = vmatprep.subr.mxu0 0.0
    %7361 = vmatpush2.msra.mxu0 0.0
    %7362 = vmatprep.subr.mxu0 0.0
    %7363 = vmatpush2.msra.mxu0 0.0
    %7364 = vmatprep.subr.mxu0 0.0
    %7365 = vmatpush2.msra.mxu0 0.0
    %7366 = vmatprep.subr.mxu0 0.0
    %7367 = vmatpush2.msra.mxu0 0.0
    %7368 = vmatprep.subr.mxu0 0.0
    %7369 = vmatpush2.msra.mxu0 0.0
    %7370 = vmatprep.mubr.f32.mxu0 0.0
    %7371 = vmatmul.mubr.f32.gmra.mxu0 %v7195
    %v7372 = vpop.f32.mrf.mxu0
    %v7373 = vadd.f32 %v7304, %v7372
    %v7374 = vpop.f32.mrf.mxu0
    %7375 = vmatprep.mubr.f32.mxu0 0.0
    %7376 = vmatmul.mubr.f32.gmra.mxu0 %v7198
    %v7377 = vpop.f32.mrf.mxu0
    %v7378 = vadd.f32 %v7304, %v7377
    %v7379 = vpop.f32.mrf.mxu0
    %7380 = vmatprep.mubr.f32.mxu0 0.0
    %7381 = vmatmul.mubr.f32.gmra.mxu0 %v7201
    %v7382 = vpop.f32.mrf.mxu0
    %v7383 = vadd.f32 %v7304, %v7382
    %v7384 = vpop.f32.mrf.mxu0
    %7385 = vmatprep.mubr.f32.mxu0 0.0
    %7386 = vmatmul.mubr.f32.gmra.mxu0 %v7204
    %v7387 = vpop.f32.mrf.mxu0
    %v7388 = vadd.f32 %v7304, %v7387
    %v7389 = vpop.f32.mrf.mxu0
    %7390 = vdwg.mxu0
    %v7391 = vld [vmem:[%s11] sm:$0xff]
    %v7392 = vld [vmem:[%s11 + $0x8] sm:$0xff]
    %v7393 = vld [vmem:[%s11 + $0x10] sm:$0xff]
    %v7394 = vld [vmem:[%s11 + $0x18] sm:$0xff]
    %v7395 = vld [vmem:[%s11 + $0x20] sm:$0xff]
    %v7396 = vld [vmem:[%s11 + $0x28] sm:$0xff]
    %v7397 = vld [vmem:[%s11 + $0x30] sm:$0xff]
    %v7398 = vld [vmem:[%s11 + $0x38] sm:$0xff]
    %v7399 = vld [vmem:[%s12] sm:$0x1]
    %v7401 = vlaneseq
    %v7402 = vshrl.u32 %v7401, 7
    %v7403 = vsub.s32 0, %v7402
    %v7404 = vrot.slane %v7399, %v7403
    %7406 = vmatprep.subr.mxu0 0.0
    %7407 = vmatpush1.msra.mxu0 0.0
    %7408 = vmatprep.subr.mxu0 0.0
    %7409 = vmatpush1.msra.mxu0 0.0
    %7410 = vmatprep.subr.mxu0 0.0
    %7411 = vmatpush1.msra.mxu0 0.0
    %7412 = vmatprep.subr.mxu0 0.0
    %7413 = vmatpush1.msra.mxu0 0.0
    %7414 = vmatprep.subr.mxu0 0.0
    %7415 = vmatpush1.msra.mxu0 0.0
    %7416 = vmatprep.subr.mxu0 0.0
    %7417 = vmatpush1.msra.mxu0 0.0
    %7418 = vmatprep.subr.mxu0 0.0
    %7419 = vmatpush1.msra.mxu0 0.0
    %7420 = vmatprep.subr.mxu0 0.0
    %7421 = vmatpush1.msra.mxu0 0.0
    %7422 = vmatprep.subr.mxu0 0.0
    %7423 = vmatpush1.msra.mxu0 %v7398
    %7424 = vmatprep.subr.mxu0 0.0
    %7425 = vmatpush1.msra.mxu0 %v7397
    %7426 = vmatprep.subr.mxu0 0.0
    %7427 = vmatpush1.msra.mxu0 %v7396
    %7428 = vmatprep.subr.mxu0 0.0
    %7429 = vmatpush1.msra.mxu0 %v7395
    %7430 = vmatprep.subr.mxu0 0.0
    %7431 = vmatpush1.msra.mxu0 %v7394
    %7432 = vmatprep.subr.mxu0 0.0
    %7433 = vmatpush1.msra.mxu0 %v7393
    %7434 = vmatprep.subr.mxu0 0.0
    %7435 = vmatpush1.msra.mxu0 %v7392
    %7436 = vmatprep.subr.mxu0 0.0
    %7437 = vmatpush1.msra.mxu0 %v7391
    %7438 = vmatprep.subr.mxu0 0.0
    %7439 = vmatpush2.msra.mxu0 0.0
    %7440 = vmatprep.subr.mxu0 0.0
    %7441 = vmatpush2.msra.mxu0 0.0
    %7442 = vmatprep.subr.mxu0 0.0
    %7443 = vmatpush2.msra.mxu0 0.0
    %7444 = vmatprep.subr.mxu0 0.0
    %7445 = vmatpush2.msra.mxu0 0.0
    %7446 = vmatprep.subr.mxu0 0.0
    %7447 = vmatpush2.msra.mxu0 0.0
    %7448 = vmatprep.subr.mxu0 0.0
    %7449 = vmatpush2.msra.mxu0 0.0
    %7450 = vmatprep.subr.mxu0 0.0
    %7451 = vmatpush2.msra.mxu0 0.0
    %7452 = vmatprep.subr.mxu0 0.0
    %7453 = vmatpush2.msra.mxu0 0.0
    %7454 = vmatprep.subr.mxu0 0.0
    %7455 = vmatpush2.msra.mxu0 0.0
    %7456 = vmatprep.subr.mxu0 0.0
    %7457 = vmatpush2.msra.mxu0 0.0
    %7458 = vmatprep.subr.mxu0 0.0
    %7459 = vmatpush2.msra.mxu0 0.0
    %7460 = vmatprep.subr.mxu0 0.0
    %7461 = vmatpush2.msra.mxu0 0.0
    %7462 = vmatprep.subr.mxu0 0.0
    %7463 = vmatpush2.msra.mxu0 0.0
    %7464 = vmatprep.subr.mxu0 0.0
    %7465 = vmatpush2.msra.mxu0 0.0
    %7466 = vmatprep.subr.mxu0 0.0
    %7467 = vmatpush2.msra.mxu0 0.0
    %7468 = vmatprep.subr.mxu0 0.0
    %7469 = vmatpush2.msra.mxu0 0.0
    %7470 = vmatprep.mubr.f32.mxu0 0.0
    %7471 = vmatmul.mubr.f32.gmra.mxu0 %v7195
    %v7472 = vpop.f32.mrf.mxu0
    %v7473 = vadd.f32 %v7404, %v7472
    %v7474 = vpop.f32.mrf.mxu0
    %7475 = vmatprep.mubr.f32.mxu0 0.0
    %7476 = vmatmul.mubr.f32.gmra.mxu0 %v7198
    %v7477 = vpop.f32.mrf.mxu0
    %v7478 = vadd.f32 %v7404, %v7477
    %v7479 = vpop.f32.mrf.mxu0
    %7480 = vmatprep.mubr.f32.mxu0 0.0
    %7481 = vmatmul.mubr.f32.gmra.mxu0 %v7201
    %v7482 = vpop.f32.mrf.mxu0
    %v7483 = vadd.f32 %v7404, %v7482
    %v7484 = vpop.f32.mrf.mxu0
    %7485 = vmatprep.mubr.f32.mxu0 0.0
    %7486 = vmatmul.mubr.f32.gmra.mxu0 %v7204
    %v7487 = vpop.f32.mrf.mxu0
    %v7488 = vadd.f32 %v7404, %v7487
    %v7489 = vpop.f32.mrf.mxu0
    %7490 = vdwg.mxu0
    %v7492 = vsel %vm614, %v7273, 0
    %v7495 = vsel %vm614, %v7278, 0
    %v7498 = vsel %vm614, %v7283, 0
    %v7501 = vsel %vm614, %v7288, 0
    %v7504 = vsel %vm614, %v7373, 0
    %v7507 = vsel %vm614, %v7378, 0
    %v7510 = vsel %vm614, %v7383, 0
    %v7513 = vsel %vm614, %v7388, 0
    %7515 = vmatprep.subr.mxu0 0.0
    %7516 = vmatpush1.xpose.msra.mxu0 0.0
    %7517 = vmatprep.subr.mxu0 0.0
    %7518 = vmatpush1.xpose.msra.mxu0 0.0
    %7519 = vmatprep.subr.mxu0 0.0
    %7520 = vmatpush1.xpose.msra.mxu0 0.0
    %7521 = vmatprep.subr.mxu0 0.0
    %7522 = vmatpush1.xpose.msra.mxu0 0.0
    %7523 = vmatprep.subr.mxu0 0.0
    %7524 = vmatpush1.xpose.msra.mxu0 0.0
    %7525 = vmatprep.subr.mxu0 0.0
    %7526 = vmatpush1.xpose.msra.mxu0 0.0
    %7527 = vmatprep.subr.mxu0 0.0
    %7528 = vmatpush1.xpose.msra.mxu0 0.0
    %7529 = vmatprep.subr.mxu0 0.0
    %7530 = vmatpush1.xpose.msra.mxu0 0.0
    %7531 = vmatprep.subr.mxu0 0.0
    %7532 = vmatpush1.xpose.msra.mxu0 0.0
    %7533 = vmatprep.subr.mxu0 0.0
    %7534 = vmatpush1.xpose.msra.mxu0 0.0
    %7535 = vmatprep.subr.mxu0 0.0
    %7536 = vmatpush1.xpose.msra.mxu0 0.0
    %7537 = vmatprep.subr.mxu0 0.0
    %7538 = vmatpush1.xpose.msra.mxu0 0.0
    %7539 = vmatprep.subr.mxu0 0.0
    %7540 = vmatpush1.xpose.msra.mxu0 %v7513
    %7541 = vmatprep.subr.mxu0 0.0
    %7542 = vmatpush1.xpose.msra.mxu0 %v7510
    %7543 = vmatprep.subr.mxu0 0.0
    %7544 = vmatpush1.xpose.msra.mxu0 %v7507
    %7545 = vmatprep.subr.mxu0 0.0
    %7546 = vmatpush1.xpose.msra.mxu0 %v7504
    %7547 = vmatprep.subr.mxu0 0.0
    %7548 = vmatpush2.xpose.msra.mxu0 0.0
    %7549 = vmatprep.subr.mxu0 0.0
    %7550 = vmatpush2.xpose.msra.mxu0 0.0
    %7551 = vmatprep.subr.mxu0 0.0
    %7552 = vmatpush2.xpose.msra.mxu0 0.0
    %7553 = vmatprep.subr.mxu0 0.0
    %7554 = vmatpush2.xpose.msra.mxu0 0.0
    %7555 = vmatprep.subr.mxu0 0.0
    %7556 = vmatpush2.xpose.msra.mxu0 0.0
    %7557 = vmatprep.subr.mxu0 0.0
    %7558 = vmatpush2.xpose.msra.mxu0 0.0
    %7559 = vmatprep.subr.mxu0 0.0
    %7560 = vmatpush2.xpose.msra.mxu0 0.0
    %7561 = vmatprep.subr.mxu0 0.0
    %7562 = vmatpush2.xpose.msra.mxu0 0.0
    %7563 = vmatprep.subr.mxu0 0.0
    %7564 = vmatpush2.xpose.msra.mxu0 0.0
    %7565 = vmatprep.subr.mxu0 0.0
    %7566 = vmatpush2.xpose.msra.mxu0 0.0
    %7567 = vmatprep.subr.mxu0 0.0
    %7568 = vmatpush2.xpose.msra.mxu0 0.0
    %7569 = vmatprep.subr.mxu0 0.0
    %7570 = vmatpush2.xpose.msra.mxu0 0.0
    %7571 = vmatprep.subr.mxu0 0.0
    %7572 = vmatpush2.xpose.msra.mxu0 0.0
    %7573 = vmatprep.subr.mxu0 0.0
    %7574 = vmatpush2.xpose.msra.mxu0 0.0
    %7575 = vmatprep.subr.mxu0 0.0
    %7576 = vmatpush2.xpose.msra.mxu0 0.0
    %7577 = vmatprep.subr.mxu0 0.0
    %7578 = vmatpush2.xpose.msra.mxu0 0.0
    %7579 = vmatprep.mubr.f32.mxu0 0.0
    %7580 = vmatmul.mubr.f32.gmra.mxu0 %v7492
    %v7581 = vpop.f32.mrf.mxu0
    %v7582 = vadd.f32 0.0, %v7581
    %v7583 = vpop.f32.mrf.mxu0
    %7584 = vmatprep.mubr.f32.mxu0 0.0
    %7585 = vmatmul.mubr.f32.gmra.mxu0 %v7495
    %v7586 = vpop.f32.mrf.mxu0
    %v7587 = vadd.f32 0.0, %v7586
    %v7588 = vpop.f32.mrf.mxu0
    %7589 = vmatprep.mubr.f32.mxu0 0.0
    %7590 = vmatmul.mubr.f32.gmra.mxu0 %v7498
    %v7591 = vpop.f32.mrf.mxu0
    %v7592 = vadd.f32 0.0, %v7591
    %v7593 = vpop.f32.mrf.mxu0
    %7594 = vmatprep.mubr.f32.mxu0 0.0
    %7595 = vmatmul.mubr.f32.gmra.mxu0 %v7501
    %v7596 = vpop.f32.mrf.mxu0
    %v7597 = vadd.f32 0.0, %v7596
    %v7598 = vpop.f32.mrf.mxu0
    %7599 = vdwg.mxu0
    %v7600 = vmul.f32 %v7582, 0.25
    %v7601 = vmul.f32 %v7587, 0.25
    %v7602 = vmul.f32 %v7592, 0.25
    %v7603 = vmul.f32 %v7597, 0.25
    %v7604 = vadd.f32 %v7600, %v68
    %v7605 = vadd.f32 %v7601, %v69
    %v7606 = vadd.f32 %v7602, %v70
    %v7607 = vadd.f32 %v7603, %v71
    %v7608 = vsel %vm124, %v7604, -inf
    %7609 = vmax.xlane.f32.xlu0 %v7608
    %v7610 = vpop.xlane.xlu0 %7609
    %v7611 = vsel %vm124, %v7605, -inf
    %7612 = vmax.xlane.f32.xlu0 %v7611
    %v7613 = vpop.xlane.xlu0 %7612
    %v7614 = vsel %vm124, %v7606, -inf
    %7615 = vmax.xlane.f32.xlu0 %v7614
    %v7616 = vpop.xlane.xlu0 %7615
    %v7617 = vsel %vm124, %v7607, -inf
    %7618 = vmax.xlane.f32.xlu0 %v7617
    %v7619 = vpop.xlane.xlu0 %7618
    %v7620 = vsub.f32 %v7604, %v7610
    %v7621 = vsub.f32 %v7605, %v7613
    %v7622 = vsub.f32 %v7606, %v7616
    %v7623 = vsub.f32 %v7607, %v7619
    %v7624 = vmul.f32 %v7620, 1.442695
    %v7625 = vpow.pop %v7624
    %v7626 = vmul.f32 %v7621, 1.442695
    %v7627 = vpow.pop %v7626
    %v7628 = vmul.f32 %v7622, 1.442695
    %v7629 = vpow.pop %v7628
    %v7630 = vmul.f32 %v7623, 1.442695
    %v7631 = vpow.pop %v7630
    %v7632 = vsel %vm124, %v7625, 0.0
    %7633 = vadd.xlane.f32.xlu0 %v7632
    %v7634 = vpop.xlane.xlu0 %7633
    %v7635 = vsel %vm124, %v7627, 0.0
    %7636 = vadd.xlane.f32.xlu0 %v7635
    %v7637 = vpop.xlane.xlu0 %7636
    %v7638 = vsel %vm124, %v7629, 0.0
    %7639 = vadd.xlane.f32.xlu0 %v7638
    %v7640 = vpop.xlane.xlu0 %7639
    %v7641 = vsel %vm124, %v7631, 0.0
    %7642 = vadd.xlane.f32.xlu0 %v7641
    %v7643 = vpop.xlane.xlu0 %7642
    %v7644 = vrcp.pop %v7634
    %v7645 = vmul.f32 %v7625, %v7644
    %v7646 = vrcp.pop %v7637
    %v7647 = vmul.f32 %v7627, %v7646
    %v7648 = vrcp.pop %v7640
    %v7649 = vmul.f32 %v7629, %v7648
    %v7650 = vrcp.pop %v7643
    %v7651 = vmul.f32 %v7631, %v7650
    %v7653 = vsel %vm124, %v7645, 0
    %v7656 = vsel %vm124, %v7647, 0
    %v7659 = vsel %vm124, %v7649, 0
    %v7662 = vsel %vm124, %v7651, 0
    %7664 = vmatprep.subr.mxu0 0.0
    %7665 = vmatpush1.msra.mxu0 0.0
    %7666 = vmatprep.subr.mxu0 0.0
    %7667 = vmatpush1.msra.mxu0 0.0
    %7668 = vmatprep.subr.mxu0 0.0
    %7669 = vmatpush1.msra.mxu0 0.0
    %7670 = vmatprep.subr.mxu0 0.0
    %7671 = vmatpush1.msra.mxu0 0.0
    %7672 = vmatprep.subr.mxu0 0.0
    %7673 = vmatpush1.msra.mxu0 0.0
    %7674 = vmatprep.subr.mxu0 0.0
    %7675 = vmatpush1.msra.mxu0 0.0
    %7676 = vmatprep.subr.mxu0 0.0
    %7677 = vmatpush1.msra.mxu0 0.0
    %7678 = vmatprep.subr.mxu0 0.0
    %7679 = vmatpush1.msra.mxu0 0.0
    %7680 = vmatprep.subr.mxu0 0.0
    %7681 = vmatpush1.msra.mxu0 0.0
    %7682 = vmatprep.subr.mxu0 0.0
    %7683 = vmatpush1.msra.mxu0 0.0
    %7684 = vmatprep.subr.mxu0 0.0
    %7685 = vmatpush1.msra.mxu0 0.0
    %7686 = vmatprep.subr.mxu0 0.0
    %7687 = vmatpush1.msra.mxu0 0.0
    %7688 = vmatprep.subr.mxu0 0.0
    %7689 = vmatpush1.msra.mxu0 %v7488
    %7690 = vmatprep.subr.mxu0 0.0
    %7691 = vmatpush1.msra.mxu0 %v7483
    %7692 = vmatprep.subr.mxu0 0.0
    %7693 = vmatpush1.msra.mxu0 %v7478
    %7694 = vmatprep.subr.mxu0 0.0
    %7695 = vmatpush1.msra.mxu0 %v7473
    %7696 = vmatprep.subr.mxu0 0.0
    %7697 = vmatpush2.msra.mxu0 0.0
    %7698 = vmatprep.subr.mxu0 0.0
    %7699 = vmatpush2.msra.mxu0 0.0
    %7700 = vmatprep.subr.mxu0 0.0
    %7701 = vmatpush2.msra.mxu0 0.0
    %7702 = vmatprep.subr.mxu0 0.0
    %7703 = vmatpush2.msra.mxu0 0.0
    %7704 = vmatprep.subr.mxu0 0.0
    %7705 = vmatpush2.msra.mxu0 0.0
    %7706 = vmatprep.subr.mxu0 0.0
    %7707 = vmatpush2.msra.mxu0 0.0
    %7708 = vmatprep.subr.mxu0 0.0
    %7709 = vmatpush2.msra.mxu0 0.0
    %7710 = vmatprep.subr.mxu0 0.0
    %7711 = vmatpush2.msra.mxu0 0.0
    %7712 = vmatprep.subr.mxu0 0.0
    %7713 = vmatpush2.msra.mxu0 0.0
    %7714 = vmatprep.subr.mxu0 0.0
    %7715 = vmatpush2.msra.mxu0 0.0
    %7716 = vmatprep.subr.mxu0 0.0
    %7717 = vmatpush2.msra.mxu0 0.0
    %7718 = vmatprep.subr.mxu0 0.0
    %7719 = vmatpush2.msra.mxu0 0.0
    %7720 = vmatprep.subr.mxu0 0.0
    %7721 = vmatpush2.msra.mxu0 0.0
    %7722 = vmatprep.subr.mxu0 0.0
    %7723 = vmatpush2.msra.mxu0 0.0
    %7724 = vmatprep.subr.mxu0 0.0
    %7725 = vmatpush2.msra.mxu0 0.0
    %7726 = vmatprep.subr.mxu0 0.0
    %7727 = vmatpush2.msra.mxu0 0.0
    %7728 = vmatprep.mubr.f32.mxu0 0.0
    %7729 = vmatmul.mubr.f32.gmra.mxu0 %v7653
    %v7730 = vpop.f32.mrf.mxu0
    %v7731 = vadd.f32 0.0, %v7730
    %v7732 = vpop.f32.mrf.mxu0
    %7733 = vmatprep.mubr.f32.mxu0 0.0
    %7734 = vmatmul.mubr.f32.gmra.mxu0 %v7656
    %v7735 = vpop.f32.mrf.mxu0
    %v7736 = vadd.f32 0.0, %v7735
    %v7737 = vpop.f32.mrf.mxu0
    %7738 = vmatprep.mubr.f32.mxu0 0.0
    %7739 = vmatmul.mubr.f32.gmra.mxu0 %v7659
    %v7740 = vpop.f32.mrf.mxu0
    %v7741 = vadd.f32 0.0, %v7740
    %v7742 = vpop.f32.mrf.mxu0
    %7743 = vmatprep.mubr.f32.mxu0 0.0
    %7744 = vmatmul.mubr.f32.gmra.mxu0 %v7662
    %v7745 = vpop.f32.mrf.mxu0
    %v7746 = vadd.f32 0.0, %v7745
    %v7747 = vpop.f32.mrf.mxu0
    %7748 = vdwg.mxu0
    %v7749 = vld [vmem:[%s13] sm:$0xff]
    %v7750 = vld [vmem:[%s13 + $0x8] sm:$0xff]
    %7751 = vrot.lane.b32.xlu0 %v7273, 112
    %v7752 = vpop.permute.xlu0 %7751
    %7753 = vrot.lane.b32.xlu0 %v7278, 112
    %v7754 = vpop.permute.xlu0 %7753
    %7755 = vrot.lane.b32.xlu0 %v7283, 112
    %v7756 = vpop.permute.xlu0 %7755
    %7757 = vrot.lane.b32.xlu0 %v7288, 112
    %v7758 = vpop.permute.xlu0 %7757
    %7759 = vrot.lane.b32.xlu0 %v7373, 112
    %v7760 = vpop.permute.xlu0 %7759
    %7761 = vrot.lane.b32.xlu0 %v7378, 112
    %v7762 = vpop.permute.xlu0 %7761
    %7763 = vrot.lane.b32.xlu0 %v7383, 112
    %v7764 = vpop.permute.xlu0 %7763
    %7765 = vrot.lane.b32.xlu0 %v7388, 112
    %v7766 = vpop.permute.xlu0 %7765
    %v7767 = vsel %vm614, %v7752, 0
    %v7769 = vsel %vm614, %v7754, 0
    %v7771 = vsel %vm614, %v7756, 0
    %v7773 = vsel %vm614, %v7758, 0
    %v7775 = vsel %vm614, %v7760, 0
    %v7777 = vsel %vm614, %v7762, 0
    %v7779 = vsel %vm614, %v7764, 0
    %v7781 = vsel %vm614, %v7766, 0
    %7783 = vmatprep.subr.mxu0 0.0
    %7784 = vmatpush1.xpose.msra.mxu0 0.0
    %7785 = vmatprep.subr.mxu0 0.0
    %7786 = vmatpush1.xpose.msra.mxu0 0.0
    %7787 = vmatprep.subr.mxu0 0.0
    %7788 = vmatpush1.xpose.msra.mxu0 0.0
    %7789 = vmatprep.subr.mxu0 0.0
    %7790 = vmatpush1.xpose.msra.mxu0 0.0
    %7791 = vmatprep.subr.mxu0 0.0
    %7792 = vmatpush1.xpose.msra.mxu0 0.0
    %7793 = vmatprep.subr.mxu0 0.0
    %7794 = vmatpush1.xpose.msra.mxu0 0.0
    %7795 = vmatprep.subr.mxu0 0.0
    %7796 = vmatpush1.xpose.msra.mxu0 0.0
    %7797 = vmatprep.subr.mxu0 0.0
    %7798 = vmatpush1.xpose.msra.mxu0 0.0
    %7799 = vmatprep.subr.mxu0 0.0
    %7800 = vmatpush1.xpose.msra.mxu0 0.0
    %7801 = vmatprep.subr.mxu0 0.0
    %7802 = vmatpush1.xpose.msra.mxu0 0.0
    %7803 = vmatprep.subr.mxu0 0.0
    %7804 = vmatpush1.xpose.msra.mxu0 0.0
    %7805 = vmatprep.subr.mxu0 0.0
    %7806 = vmatpush1.xpose.msra.mxu0 0.0
    %7807 = vmatprep.subr.mxu0 0.0
    %7808 = vmatpush1.xpose.msra.mxu0 %v7781
    %7809 = vmatprep.subr.mxu0 0.0
    %7810 = vmatpush1.xpose.msra.mxu0 %v7779
    %7811 = vmatprep.subr.mxu0 0.0
    %7812 = vmatpush1.xpose.msra.mxu0 %v7777
    %7813 = vmatprep.subr.mxu0 0.0
    %7814 = vmatpush1.xpose.msra.mxu0 %v7775
    %7815 = vmatprep.subr.mxu0 0.0
    %7816 = vmatpush2.xpose.msra.mxu0 0.0
    %7817 = vmatprep.subr.mxu0 0.0
    %7818 = vmatpush2.xpose.msra.mxu0 0.0
    %7819 = vmatprep.subr.mxu0 0.0
    %7820 = vmatpush2.xpose.msra.mxu0 0.0
    %7821 = vmatprep.subr.mxu0 0.0
    %7822 = vmatpush2.xpose.msra.mxu0 0.0
    %7823 = vmatprep.subr.mxu0 0.0
    %7824 = vmatpush2.xpose.msra.mxu0 0.0
    %7825 = vmatprep.subr.mxu0 0.0
    %7826 = vmatpush2.xpose.msra.mxu0 0.0
    %7827 = vmatprep.subr.mxu0 0.0
    %7828 = vmatpush2.xpose.msra.mxu0 0.0
    %7829 = vmatprep.subr.mxu0 0.0
    %7830 = vmatpush2.xpose.msra.mxu0 0.0
    %7831 = vmatprep.subr.mxu0 0.0
    %7832 = vmatpush2.xpose.msra.mxu0 0.0
    %7833 = vmatprep.subr.mxu0 0.0
    %7834 = vmatpush2.xpose.msra.mxu0 0.0
    %7835 = vmatprep.subr.mxu0 0.0
    %7836 = vmatpush2.xpose.msra.mxu0 0.0
    %7837 = vmatprep.subr.mxu0 0.0
    %7838 = vmatpush2.xpose.msra.mxu0 0.0
    %7839 = vmatprep.subr.mxu0 0.0
    %7840 = vmatpush2.xpose.msra.mxu0 0.0
    %7841 = vmatprep.subr.mxu0 0.0
    %7842 = vmatpush2.xpose.msra.mxu0 0.0
    %7843 = vmatprep.subr.mxu0 0.0
    %7844 = vmatpush2.xpose.msra.mxu0 0.0
    %7845 = vmatprep.subr.mxu0 0.0
    %7846 = vmatpush2.xpose.msra.mxu0 0.0
    %7847 = vmatprep.mubr.f32.mxu0 0.0
    %7848 = vmatmul.mubr.f32.gmra.mxu0 %v7767
    %v7849 = vpop.f32.mrf.mxu0
    %v7850 = vadd.f32 0.0, %v7849
    %v7851 = vpop.f32.mrf.mxu0
    %7852 = vmatprep.mubr.f32.mxu0 0.0
    %7853 = vmatmul.mubr.f32.gmra.mxu0 %v7769
    %v7854 = vpop.f32.mrf.mxu0
    %v7855 = vadd.f32 0.0, %v7854
    %v7856 = vpop.f32.mrf.mxu0
    %7857 = vmatprep.mubr.f32.mxu0 0.0
    %7858 = vmatmul.mubr.f32.gmra.mxu0 %v7771
    %v7859 = vpop.f32.mrf.mxu0
    %v7860 = vadd.f32 0.0, %v7859
    %v7861 = vpop.f32.mrf.mxu0
    %7862 = vmatprep.mubr.f32.mxu0 0.0
    %7863 = vmatmul.mubr.f32.gmra.mxu0 %v7773
    %v7864 = vpop.f32.mrf.mxu0
    %v7865 = vadd.f32 0.0, %v7864
    %v7866 = vpop.f32.mrf.mxu0
    %7867 = vdwg.mxu0
    %v7868 = vmul.f32 %v7850, 0.25
    %v7869 = vmul.f32 %v7855, 0.25
    %v7870 = vmul.f32 %v7860, 0.25
    %v7871 = vmul.f32 %v7865, 0.25
    %v7872 = vadd.f32 %v7868, %v68
    %v7873 = vadd.f32 %v7869, %v69
    %v7874 = vadd.f32 %v7870, %v70
    %v7875 = vadd.f32 %v7871, %v71
    %v7876 = vsel %vm124, %v7872, -inf
    %7877 = vmax.xlane.f32.xlu0 %v7876
    %v7878 = vpop.xlane.xlu0 %7877
    %v7879 = vsel %vm124, %v7873, -inf
    %7880 = vmax.xlane.f32.xlu0 %v7879
    %v7881 = vpop.xlane.xlu0 %7880
    %v7882 = vsel %vm124, %v7874, -inf
    %7883 = vmax.xlane.f32.xlu0 %v7882
    %v7884 = vpop.xlane.xlu0 %7883
    %v7885 = vsel %vm124, %v7875, -inf
    %7886 = vmax.xlane.f32.xlu0 %v7885
    %v7887 = vpop.xlane.xlu0 %7886
    %v7888 = vsub.f32 %v7872, %v7878
    %v7889 = vsub.f32 %v7873, %v7881
    %v7890 = vsub.f32 %v7874, %v7884
    %v7891 = vsub.f32 %v7875, %v7887
    %v7892 = vmul.f32 %v7888, 1.442695
    %v7893 = vpow.pop %v7892
    %v7894 = vmul.f32 %v7889, 1.442695
    %v7895 = vpow.pop %v7894
    %v7896 = vmul.f32 %v7890, 1.442695
    %v7897 = vpow.pop %v7896
    %v7898 = vmul.f32 %v7891, 1.442695
    %v7899 = vpow.pop %v7898
    %v7900 = vsel %vm124, %v7893, 0.0
    %7901 = vadd.xlane.f32.xlu0 %v7900
    %v7902 = vpop.xlane.xlu0 %7901
    %v7903 = vsel %vm124, %v7895, 0.0
    %7904 = vadd.xlane.f32.xlu0 %v7903
    %v7905 = vpop.xlane.xlu0 %7904
    %v7906 = vsel %vm124, %v7897, 0.0
    %7907 = vadd.xlane.f32.xlu0 %v7906
    %v7908 = vpop.xlane.xlu0 %7907
    %v7909 = vsel %vm124, %v7899, 0.0
    %7910 = vadd.xlane.f32.xlu0 %v7909
    %v7911 = vpop.xlane.xlu0 %7910
    %v7912 = vrcp.pop %v7902
    %v7913 = vmul.f32 %v7893, %v7912
    %v7914 = vrcp.pop %v7905
    %v7915 = vmul.f32 %v7895, %v7914
    %v7916 = vrcp.pop %v7908
    %v7917 = vmul.f32 %v7897, %v7916
    %v7918 = vrcp.pop %v7911
    %v7919 = vmul.f32 %v7899, %v7918
    %7924 = vrot.lane.b32.xlu0 %v7473, 112
    %v7925 = vpop.permute.xlu0 %7924
    %7926 = vrot.lane.b32.xlu0 %v7478, 112
    %v7927 = vpop.permute.xlu0 %7926
    %7928 = vrot.lane.b32.xlu0 %v7483, 112
    %v7929 = vpop.permute.xlu0 %7928
    %7930 = vrot.lane.b32.xlu0 %v7488, 112
    %v7931 = vpop.permute.xlu0 %7930
    %v7937 = vsel %vm124, %v7913, 0
    %v7940 = vsel %vm124, %v7915, 0
    %v7943 = vsel %vm124, %v7917, 0
    %v7946 = vsel %vm124, %v7919, 0
    %7948 = vmatprep.subr.mxu0 0.0
    %7949 = vmatpush1.msra.mxu0 0.0
    %7950 = vmatprep.subr.mxu0 0.0
    %7951 = vmatpush1.msra.mxu0 0.0
    %7952 = vmatprep.subr.mxu0 0.0
    %7953 = vmatpush1.msra.mxu0 0.0
    %7954 = vmatprep.subr.mxu0 0.0
    %7955 = vmatpush1.msra.mxu0 0.0
    %7956 = vmatprep.subr.mxu0 0.0
    %7957 = vmatpush1.msra.mxu0 0.0
    %7958 = vmatprep.subr.mxu0 0.0
    %7959 = vmatpush1.msra.mxu0 0.0
    %7960 = vmatprep.subr.mxu0 0.0
    %7961 = vmatpush1.msra.mxu0 0.0
    %7962 = vmatprep.subr.mxu0 0.0
    %7963 = vmatpush1.msra.mxu0 0.0
    %7964 = vmatprep.subr.mxu0 0.0
    %7965 = vmatpush1.msra.mxu0 0.0
    %7966 = vmatprep.subr.mxu0 0.0
    %7967 = vmatpush1.msra.mxu0 0.0
    %7968 = vmatprep.subr.mxu0 0.0
    %7969 = vmatpush1.msra.mxu0 0.0
    %7970 = vmatprep.subr.mxu0 0.0
    %7971 = vmatpush1.msra.mxu0 0.0
    %7972 = vmatprep.subr.mxu0 0.0
    %7973 = vmatpush1.msra.mxu0 %v7931
    %7974 = vmatprep.subr.mxu0 0.0
    %7975 = vmatpush1.msra.mxu0 %v7929
    %7976 = vmatprep.subr.mxu0 0.0
    %7977 = vmatpush1.msra.mxu0 %v7927
    %7978 = vmatprep.subr.mxu0 0.0
    %7979 = vmatpush1.msra.mxu0 %v7925
    %7980 = vmatprep.subr.mxu0 0.0
    %7981 = vmatpush2.msra.mxu0 0.0
    %7982 = vmatprep.subr.mxu0 0.0
    %7983 = vmatpush2.msra.mxu0 0.0
    %7984 = vmatprep.subr.mxu0 0.0
    %7985 = vmatpush2.msra.mxu0 0.0
    %7986 = vmatprep.subr.mxu0 0.0
    %7987 = vmatpush2.msra.mxu0 0.0
    %7988 = vmatprep.subr.mxu0 0.0
    %7989 = vmatpush2.msra.mxu0 0.0
    %7990 = vmatprep.subr.mxu0 0.0
    %7991 = vmatpush2.msra.mxu0 0.0
    %7992 = vmatprep.subr.mxu0 0.0
    %7993 = vmatpush2.msra.mxu0 0.0
    %7994 = vmatprep.subr.mxu0 0.0
    %7995 = vmatpush2.msra.mxu0 0.0
    %7996 = vmatprep.subr.mxu0 0.0
    %7997 = vmatpush2.msra.mxu0 0.0
    %7998 = vmatprep.subr.mxu0 0.0
    %7999 = vmatpush2.msra.mxu0 0.0
    %8000 = vmatprep.subr.mxu0 0.0
    %8001 = vmatpush2.msra.mxu0 0.0
    %8002 = vmatprep.subr.mxu0 0.0
    %8003 = vmatpush2.msra.mxu0 0.0
    %8004 = vmatprep.subr.mxu0 0.0
    %8005 = vmatpush2.msra.mxu0 0.0
    %8006 = vmatprep.subr.mxu0 0.0
    %8007 = vmatpush2.msra.mxu0 0.0
    %8008 = vmatprep.subr.mxu0 0.0
    %8009 = vmatpush2.msra.mxu0 0.0
    %8010 = vmatprep.subr.mxu0 0.0
    %8011 = vmatpush2.msra.mxu0 0.0
    %8012 = vmatprep.mubr.f32.mxu0 0.0
    %8013 = vmatmul.mubr.f32.gmra.mxu0 %v7937
    %v8014 = vpop.f32.mrf.mxu0
    %v8015 = vadd.f32 0.0, %v8014
    %v8016 = vpop.f32.mrf.mxu0
    %8017 = vmatprep.mubr.f32.mxu0 0.0
    %8018 = vmatmul.mubr.f32.gmra.mxu0 %v7940
    %v8019 = vpop.f32.mrf.mxu0
    %v8020 = vadd.f32 0.0, %v8019
    %v8021 = vpop.f32.mrf.mxu0
    %8022 = vmatprep.mubr.f32.mxu0 0.0
    %8023 = vmatmul.mubr.f32.gmra.mxu0 %v7943
    %v8024 = vpop.f32.mrf.mxu0
    %v8025 = vadd.f32 0.0, %v8024
    %v8026 = vpop.f32.mrf.mxu0
    %8027 = vmatprep.mubr.f32.mxu0 0.0
    %8028 = vmatmul.mubr.f32.gmra.mxu0 %v7946
    %v8029 = vpop.f32.mrf.mxu0
    %v8030 = vadd.f32 0.0, %v8029
    %v8031 = vpop.f32.mrf.mxu0
    %8032 = vdwg.mxu0
    %v8033 = vld [vmem:[%s13 + $0x10] sm:$0xff]
    %v8034 = vld [vmem:[%s13 + $0x18] sm:$0xff]
    %v8036 = vsel %vm614, %v8015, 0
    %v8039 = vsel %vm614, %v8020, 0
    %v8042 = vsel %vm614, %v8025, 0
    %v8045 = vsel %vm614, %v8030, 0
    %8047 = vmatprep.subr.mxu0 0.0
    %8048 = vmatpush1.msra.mxu0 0.0
    %8049 = vmatprep.subr.mxu0 0.0
    %8050 = vmatpush1.msra.mxu0 0.0
    %8051 = vmatprep.subr.mxu0 0.0
    %8052 = vmatpush1.msra.mxu0 0.0
    %8053 = vmatprep.subr.mxu0 0.0
    %8054 = vmatpush1.msra.mxu0 0.0
    %8055 = vmatprep.subr.mxu0 0.0
    %8056 = vmatpush1.msra.mxu0 0.0
    %8057 = vmatprep.subr.mxu0 0.0
    %8058 = vmatpush1.msra.mxu0 0.0
    %8059 = vmatprep.subr.mxu0 0.0
    %8060 = vmatpush1.msra.mxu0 0.0
    %8061 = vmatprep.subr.mxu0 0.0
    %8062 = vmatpush1.msra.mxu0 0.0
    %8063 = vmatprep.subr.mxu0 0.0
    %8064 = vmatpush1.msra.mxu0 0.0
    %8065 = vmatprep.subr.mxu0 0.0
    %8066 = vmatpush1.msra.mxu0 0.0
    %8067 = vmatprep.subr.mxu0 0.0
    %8068 = vmatpush1.msra.mxu0 0.0
    %8069 = vmatprep.subr.mxu0 0.0
    %8070 = vmatpush1.msra.mxu0 0.0
    %8071 = vmatprep.subr.mxu0 0.0
    %8072 = vmatpush1.msra.mxu0 0.0
    %8073 = vmatprep.subr.mxu0 0.0
    %8074 = vmatpush1.msra.mxu0 0.0
    %8075 = vmatprep.subr.mxu0 0.0
    %8076 = vmatpush1.msra.mxu0 %v8034
    %8077 = vmatprep.subr.mxu0 0.0
    %8078 = vmatpush1.msra.mxu0 %v8033
    %8079 = vmatprep.subr.mxu0 0.0
    %8080 = vmatpush2.msra.mxu0 0.0
    %8081 = vmatprep.subr.mxu0 0.0
    %8082 = vmatpush2.msra.mxu0 0.0
    %8083 = vmatprep.subr.mxu0 0.0
    %8084 = vmatpush2.msra.mxu0 0.0
    %8085 = vmatprep.subr.mxu0 0.0
    %8086 = vmatpush2.msra.mxu0 0.0
    %8087 = vmatprep.subr.mxu0 0.0
    %8088 = vmatpush2.msra.mxu0 0.0
    %8089 = vmatprep.subr.mxu0 0.0
    %8090 = vmatpush2.msra.mxu0 0.0
    %8091 = vmatprep.subr.mxu0 0.0
    %8092 = vmatpush2.msra.mxu0 0.0
    %8093 = vmatprep.subr.mxu0 0.0
    %8094 = vmatpush2.msra.mxu0 0.0
    %8095 = vmatprep.subr.mxu0 0.0
    %8096 = vmatpush2.msra.mxu0 0.0
    %8097 = vmatprep.subr.mxu0 0.0
    %8098 = vmatpush2.msra.mxu0 0.0
    %8099 = vmatprep.subr.mxu0 0.0
    %8100 = vmatpush2.msra.mxu0 0.0
    %8101 = vmatprep.subr.mxu0 0.0
    %8102 = vmatpush2.msra.mxu0 0.0
    %8103 = vmatprep.subr.mxu0 0.0
    %8104 = vmatpush2.msra.mxu0 0.0
    %8105 = vmatprep.subr.mxu0 0.0
    %8106 = vmatpush2.msra.mxu0 0.0
    %8107 = vmatprep.subr.mxu0 0.0
    %8108 = vmatpush2.msra.mxu0 0.0
    %8109 = vmatprep.subr.mxu0 0.0
    %8110 = vmatpush2.msra.mxu0 0.0
    %8111 = vmatprep.mubr.f32.mxu0 0.0
    %8112 = vmatmul.mubr.f32.gmra.mxu0 %v8036
    %v8113 = vpop.f32.mrf.mxu0
    %v8114 = vadd.f32 0.0, %v8113
    %v8115 = vpop.f32.mrf.mxu0
    %8116 = vmatprep.mubr.f32.mxu0 0.0
    %8117 = vmatmul.mubr.f32.gmra.mxu0 %v8039
    %v8118 = vpop.f32.mrf.mxu0
    %v8119 = vadd.f32 0.0, %v8118
    %v8120 = vpop.f32.mrf.mxu0
    %8121 = vmatprep.mubr.f32.mxu0 0.0
    %8122 = vmatmul.mubr.f32.gmra.mxu0 %v8042
    %v8123 = vpop.f32.mrf.mxu0
    %v8124 = vadd.f32 0.0, %v8123
    %v8125 = vpop.f32.mrf.mxu0
    %8126 = vmatprep.mubr.f32.mxu0 0.0
    %8127 = vmatmul.mubr.f32.gmra.mxu0 %v8045
    %v8128 = vpop.f32.mrf.mxu0
    %v8129 = vadd.f32 0.0, %v8128
    %v8130 = vpop.f32.mrf.mxu0
    %8131 = vdwg.mxu0
    %v8133 = vsel %vm614, %v7731, 0
    %v8136 = vsel %vm614, %v7736, 0
    %v8139 = vsel %vm614, %v7741, 0
    %v8142 = vsel %vm614, %v7746, 0
    %8144 = vmatprep.subr.mxu0 0.0
    %8145 = vmatpush1.msra.mxu0 0.0
    %8146 = vmatprep.subr.mxu0 0.0
    %8147 = vmatpush1.msra.mxu0 0.0
    %8148 = vmatprep.subr.mxu0 0.0
    %8149 = vmatpush1.msra.mxu0 0.0
    %8150 = vmatprep.subr.mxu0 0.0
    %8151 = vmatpush1.msra.mxu0 0.0
    %8152 = vmatprep.subr.mxu0 0.0
    %8153 = vmatpush1.msra.mxu0 0.0
    %8154 = vmatprep.subr.mxu0 0.0
    %8155 = vmatpush1.msra.mxu0 0.0
    %8156 = vmatprep.subr.mxu0 0.0
    %8157 = vmatpush1.msra.mxu0 0.0
    %8158 = vmatprep.subr.mxu0 0.0
    %8159 = vmatpush1.msra.mxu0 0.0
    %8160 = vmatprep.subr.mxu0 0.0
    %8161 = vmatpush1.msra.mxu0 0.0
    %8162 = vmatprep.subr.mxu0 0.0
    %8163 = vmatpush1.msra.mxu0 0.0
    %8164 = vmatprep.subr.mxu0 0.0
    %8165 = vmatpush1.msra.mxu0 0.0
    %8166 = vmatprep.subr.mxu0 0.0
    %8167 = vmatpush1.msra.mxu0 0.0
    %8168 = vmatprep.subr.mxu0 0.0
    %8169 = vmatpush1.msra.mxu0 0.0
    %8170 = vmatprep.subr.mxu0 0.0
    %8171 = vmatpush1.msra.mxu0 0.0
    %8172 = vmatprep.subr.mxu0 0.0
    %8173 = vmatpush1.msra.mxu0 %v7750
    %8174 = vmatprep.subr.mxu0 0.0
    %8175 = vmatpush1.msra.mxu0 %v7749
    %8176 = vmatprep.subr.mxu0 0.0
    %8177 = vmatpush2.msra.mxu0 0.0
    %8178 = vmatprep.subr.mxu0 0.0
    %8179 = vmatpush2.msra.mxu0 0.0
    %8180 = vmatprep.subr.mxu0 0.0
    %8181 = vmatpush2.msra.mxu0 0.0
    %8182 = vmatprep.subr.mxu0 0.0
    %8183 = vmatpush2.msra.mxu0 0.0
    %8184 = vmatprep.subr.mxu0 0.0
    %8185 = vmatpush2.msra.mxu0 0.0
    %8186 = vmatprep.subr.mxu0 0.0
    %8187 = vmatpush2.msra.mxu0 0.0
    %8188 = vmatprep.subr.mxu0 0.0
    %8189 = vmatpush2.msra.mxu0 0.0
    %8190 = vmatprep.subr.mxu0 0.0
    %8191 = vmatpush2.msra.mxu0 0.0
    %8192 = vmatprep.subr.mxu0 0.0
    %8193 = vmatpush2.msra.mxu0 0.0
    %8194 = vmatprep.subr.mxu0 0.0
    %8195 = vmatpush2.msra.mxu0 0.0
    %8196 = vmatprep.subr.mxu0 0.0
    %8197 = vmatpush2.msra.mxu0 0.0
    %8198 = vmatprep.subr.mxu0 0.0
    %8199 = vmatpush2.msra.mxu0 0.0
    %8200 = vmatprep.subr.mxu0 0.0
    %8201 = vmatpush2.msra.mxu0 0.0
    %8202 = vmatprep.subr.mxu0 0.0
    %8203 = vmatpush2.msra.mxu0 0.0
    %8204 = vmatprep.subr.mxu0 0.0
    %8205 = vmatpush2.msra.mxu0 0.0
    %8206 = vmatprep.subr.mxu0 0.0
    %8207 = vmatpush2.msra.mxu0 0.0
    %8208 = vmatprep.mubr.f32.mxu0 0.0
    %8209 = vmatmul.mubr.f32.gmra.mxu0 %v8133
    %v8210 = vpop.f32.mrf.mxu0
    %v8211 = vadd.f32 %v8114, %v8210
    %v8212 = vpop.f32.mrf.mxu0
    %8213 = vmatprep.mubr.f32.mxu0 0.0
    %8214 = vmatmul.mubr.f32.gmra.mxu0 %v8136
    %v8215 = vpop.f32.mrf.mxu0
    %v8216 = vadd.f32 %v8119, %v8215
    %v8217 = vpop.f32.mrf.mxu0
    %8218 = vmatprep.mubr.f32.mxu0 0.0
    %8219 = vmatmul.mubr.f32.gmra.mxu0 %v8139
    %v8220 = vpop.f32.mrf.mxu0
    %v8221 = vadd.f32 %v8124, %v8220
    %v8222 = vpop.f32.mrf.mxu0
    %8223 = vmatprep.mubr.f32.mxu0 0.0
    %8224 = vmatmul.mubr.f32.gmra.mxu0 %v8142
    %v8225 = vpop.f32.mrf.mxu0
    %v8226 = vadd.f32 %v8129, %v8225
    %v8227 = vpop.f32.mrf.mxu0
    %8228 = vdwg.mxu0
    %8229 = vrot.lane.b32.xlu0 %v7273, 96
    %v8230 = vpop.permute.xlu0 %8229
    %8231 = vrot.lane.b32.xlu0 %v7278, 96
    %v8232 = vpop.permute.xlu0 %8231
    %8233 = vrot.lane.b32.xlu0 %v7283, 96
    %v8234 = vpop.permute.xlu0 %8233
    %8235 = vrot.lane.b32.xlu0 %v7288, 96
    %v8236 = vpop.permute.xlu0 %8235
    %8237 = vrot.lane.b32.xlu0 %v7373, 96
    %v8238 = vpop.permute.xlu0 %8237
    %8239 = vrot.lane.b32.xlu0 %v7378, 96
    %v8240 = vpop.permute.xlu0 %8239
    %8241 = vrot.lane.b32.xlu0 %v7383, 96
    %v8242 = vpop.permute.xlu0 %8241
    %8243 = vrot.lane.b32.xlu0 %v7388, 96
    %v8244 = vpop.permute.xlu0 %8243
    %v8245 = vsel %vm614, %v8230, 0
    %v8247 = vsel %vm614, %v8232, 0
    %v8249 = vsel %vm614, %v8234, 0
    %v8251 = vsel %vm614, %v8236, 0
    %v8253 = vsel %vm614, %v8238, 0
    %v8255 = vsel %vm614, %v8240, 0
    %v8257 = vsel %vm614, %v8242, 0
    %v8259 = vsel %vm614, %v8244, 0
    %8261 = vmatprep.subr.mxu0 0.0
    %8262 = vmatpush1.xpose.msra.mxu0 0.0
    %8263 = vmatprep.subr.mxu0 0.0
    %8264 = vmatpush1.xpose.msra.mxu0 0.0
    %8265 = vmatprep.subr.mxu0 0.0
    %8266 = vmatpush1.xpose.msra.mxu0 0.0
    %8267 = vmatprep.subr.mxu0 0.0
    %8268 = vmatpush1.xpose.msra.mxu0 0.0
    %8269 = vmatprep.subr.mxu0 0.0
    %8270 = vmatpush1.xpose.msra.mxu0 0.0
    %8271 = vmatprep.subr.mxu0 0.0
    %8272 = vmatpush1.xpose.msra.mxu0 0.0
    %8273 = vmatprep.subr.mxu0 0.0
    %8274 = vmatpush1.xpose.msra.mxu0 0.0
    %8275 = vmatprep.subr.mxu0 0.0
    %8276 = vmatpush1.xpose.msra.mxu0 0.0
    %8277 = vmatprep.subr.mxu0 0.0
    %8278 = vmatpush1.xpose.msra.mxu0 0.0
    %8279 = vmatprep.subr.mxu0 0.0
    %8280 = vmatpush1.xpose.msra.mxu0 0.0
    %8281 = vmatprep.subr.mxu0 0.0
    %8282 = vmatpush1.xpose.msra.mxu0 0.0
    %8283 = vmatprep.subr.mxu0 0.0
    %8284 = vmatpush1.xpose.msra.mxu0 0.0
    %8285 = vmatprep.subr.mxu0 0.0
    %8286 = vmatpush1.xpose.msra.mxu0 %v8259
    %8287 = vmatprep.subr.mxu0 0.0
    %8288 = vmatpush1.xpose.msra.mxu0 %v8257
    %8289 = vmatprep.subr.mxu0 0.0
    %8290 = vmatpush1.xpose.msra.mxu0 %v8255
    %8291 = vmatprep.subr.mxu0 0.0
    %8292 = vmatpush1.xpose.msra.mxu0 %v8253
    %8293 = vmatprep.subr.mxu0 0.0
    %8294 = vmatpush2.xpose.msra.mxu0 0.0
    %8295 = vmatprep.subr.mxu0 0.0
    %8296 = vmatpush2.xpose.msra.mxu0 0.0
    %8297 = vmatprep.subr.mxu0 0.0
    %8298 = vmatpush2.xpose.msra.mxu0 0.0
    %8299 = vmatprep.subr.mxu0 0.0
    %8300 = vmatpush2.xpose.msra.mxu0 0.0
    %8301 = vmatprep.subr.mxu0 0.0
    %8302 = vmatpush2.xpose.msra.mxu0 0.0
    %8303 = vmatprep.subr.mxu0 0.0
    %8304 = vmatpush2.xpose.msra.mxu0 0.0
    %8305 = vmatprep.subr.mxu0 0.0
    %8306 = vmatpush2.xpose.msra.mxu0 0.0
    %8307 = vmatprep.subr.mxu0 0.0
    %8308 = vmatpush2.xpose.msra.mxu0 0.0
    %8309 = vmatprep.subr.mxu0 0.0
    %8310 = vmatpush2.xpose.msra.mxu0 0.0
    %8311 = vmatprep.subr.mxu0 0.0
    %8312 = vmatpush2.xpose.msra.mxu0 0.0
    %8313 = vmatprep.subr.mxu0 0.0
    %8314 = vmatpush2.xpose.msra.mxu0 0.0
    %8315 = vmatprep.subr.mxu0 0.0
    %8316 = vmatpush2.xpose.msra.mxu0 0.0
    %8317 = vmatprep.subr.mxu0 0.0
    %8318 = vmatpush2.xpose.msra.mxu0 0.0
    %8319 = vmatprep.subr.mxu0 0.0
    %8320 = vmatpush2.xpose.msra.mxu0 0.0
    %8321 = vmatprep.subr.mxu0 0.0
    %8322 = vmatpush2.xpose.msra.mxu0 0.0
    %8323 = vmatprep.subr.mxu0 0.0
    %8324 = vmatpush2.xpose.msra.mxu0 0.0
    %8325 = vmatprep.mubr.f32.mxu0 0.0
    %8326 = vmatmul.mubr.f32.gmra.mxu0 %v8245
    %v8327 = vpop.f32.mrf.mxu0
    %v8328 = vadd.f32 0.0, %v8327
    %v8329 = vpop.f32.mrf.mxu0
    %8330 = vmatprep.mubr.f32.mxu0 0.0
    %8331 = vmatmul.mubr.f32.gmra.mxu0 %v8247
    %v8332 = vpop.f32.mrf.mxu0
    %v8333 = vadd.f32 0.0, %v8332
    %v8334 = vpop.f32.mrf.mxu0
    %8335 = vmatprep.mubr.f32.mxu0 0.0
    %8336 = vmatmul.mubr.f32.gmra.mxu0 %v8249
    %v8337 = vpop.f32.mrf.mxu0
    %v8338 = vadd.f32 0.0, %v8337
    %v8339 = vpop.f32.mrf.mxu0
    %8340 = vmatprep.mubr.f32.mxu0 0.0
    %8341 = vmatmul.mubr.f32.gmra.mxu0 %v8251
    %v8342 = vpop.f32.mrf.mxu0
    %v8343 = vadd.f32 0.0, %v8342
    %v8344 = vpop.f32.mrf.mxu0
    %8345 = vdwg.mxu0
    %v8346 = vmul.f32 %v8328, 0.25
    %v8347 = vmul.f32 %v8333, 0.25
    %v8348 = vmul.f32 %v8338, 0.25
    %v8349 = vmul.f32 %v8343, 0.25
    %v8350 = vadd.f32 %v8346, %v68
    %v8351 = vadd.f32 %v8347, %v69
    %v8352 = vadd.f32 %v8348, %v70
    %v8353 = vadd.f32 %v8349, %v71
    %v8354 = vsel %vm124, %v8350, -inf
    %8355 = vmax.xlane.f32.xlu0 %v8354
    %v8356 = vpop.xlane.xlu0 %8355
    %v8357 = vsel %vm124, %v8351, -inf
    %8358 = vmax.xlane.f32.xlu0 %v8357
    %v8359 = vpop.xlane.xlu0 %8358
    %v8360 = vsel %vm124, %v8352, -inf
    %8361 = vmax.xlane.f32.xlu0 %v8360
    %v8362 = vpop.xlane.xlu0 %8361
    %v8363 = vsel %vm124, %v8353, -inf
    %8364 = vmax.xlane.f32.xlu0 %v8363
    %v8365 = vpop.xlane.xlu0 %8364
    %v8366 = vsub.f32 %v8350, %v8356
    %v8367 = vsub.f32 %v8351, %v8359
    %v8368 = vsub.f32 %v8352, %v8362
    %v8369 = vsub.f32 %v8353, %v8365
    %v8370 = vmul.f32 %v8366, 1.442695
    %v8371 = vpow.pop %v8370
    %v8372 = vmul.f32 %v8367, 1.442695
    %v8373 = vpow.pop %v8372
    %v8374 = vmul.f32 %v8368, 1.442695
    %v8375 = vpow.pop %v8374
    %v8376 = vmul.f32 %v8369, 1.442695
    %v8377 = vpow.pop %v8376
    %v8378 = vsel %vm124, %v8371, 0.0
    %8379 = vadd.xlane.f32.xlu0 %v8378
    %v8380 = vpop.xlane.xlu0 %8379
    %v8381 = vsel %vm124, %v8373, 0.0
    %8382 = vadd.xlane.f32.xlu0 %v8381
    %v8383 = vpop.xlane.xlu0 %8382
    %v8384 = vsel %vm124, %v8375, 0.0
    %8385 = vadd.xlane.f32.xlu0 %v8384
    %v8386 = vpop.xlane.xlu0 %8385
    %v8387 = vsel %vm124, %v8377, 0.0
    %8388 = vadd.xlane.f32.xlu0 %v8387
    %v8389 = vpop.xlane.xlu0 %8388
    %v8390 = vrcp.pop %v8380
    %v8391 = vmul.f32 %v8371, %v8390
    %v8392 = vrcp.pop %v8383
    %v8393 = vmul.f32 %v8373, %v8392
    %v8394 = vrcp.pop %v8386
    %v8395 = vmul.f32 %v8375, %v8394
    %v8396 = vrcp.pop %v8389
    %v8397 = vmul.f32 %v8377, %v8396
    %8398 = vrot.lane.b32.xlu0 %v7473, 96
    %v8399 = vpop.permute.xlu0 %8398
    %8400 = vrot.lane.b32.xlu0 %v7478, 96
    %v8401 = vpop.permute.xlu0 %8400
    %8402 = vrot.lane.b32.xlu0 %v7483, 96
    %v8403 = vpop.permute.xlu0 %8402
    %8404 = vrot.lane.b32.xlu0 %v7488, 96
    %v8405 = vpop.permute.xlu0 %8404
    %v8411 = vsel %vm124, %v8391, 0
    %v8414 = vsel %vm124, %v8393, 0
    %v8417 = vsel %vm124, %v8395, 0
    %v8420 = vsel %vm124, %v8397, 0
    %8422 = vmatprep.subr.mxu0 0.0
    %8423 = vmatpush1.msra.mxu0 0.0
    %8424 = vmatprep.subr.mxu0 0.0
    %8425 = vmatpush1.msra.mxu0 0.0
    %8426 = vmatprep.subr.mxu0 0.0
    %8427 = vmatpush1.msra.mxu0 0.0
    %8428 = vmatprep.subr.mxu0 0.0
    %8429 = vmatpush1.msra.mxu0 0.0
    %8430 = vmatprep.subr.mxu0 0.0
    %8431 = vmatpush1.msra.mxu0 0.0
    %8432 = vmatprep.subr.mxu0 0.0
    %8433 = vmatpush1.msra.mxu0 0.0
    %8434 = vmatprep.subr.mxu0 0.0
    %8435 = vmatpush1.msra.mxu0 0.0
    %8436 = vmatprep.subr.mxu0 0.0
    %8437 = vmatpush1.msra.mxu0 0.0
    %8438 = vmatprep.subr.mxu0 0.0
    %8439 = vmatpush1.msra.mxu0 0.0
    %8440 = vmatprep.subr.mxu0 0.0
    %8441 = vmatpush1.msra.mxu0 0.0
    %8442 = vmatprep.subr.mxu0 0.0
    %8443 = vmatpush1.msra.mxu0 0.0
    %8444 = vmatprep.subr.mxu0 0.0
    %8445 = vmatpush1.msra.mxu0 0.0
    %8446 = vmatprep.subr.mxu0 0.0
    %8447 = vmatpush1.msra.mxu0 %v8405
    %8448 = vmatprep.subr.mxu0 0.0
    %8449 = vmatpush1.msra.mxu0 %v8403
    %8450 = vmatprep.subr.mxu0 0.0
    %8451 = vmatpush1.msra.mxu0 %v8401
    %8452 = vmatprep.subr.mxu0 0.0
    %8453 = vmatpush1.msra.mxu0 %v8399
    %8454 = vmatprep.subr.mxu0 0.0
    %8455 = vmatpush2.msra.mxu0 0.0
    %8456 = vmatprep.subr.mxu0 0.0
    %8457 = vmatpush2.msra.mxu0 0.0
    %8458 = vmatprep.subr.mxu0 0.0
    %8459 = vmatpush2.msra.mxu0 0.0
    %8460 = vmatprep.subr.mxu0 0.0
    %8461 = vmatpush2.msra.mxu0 0.0
    %8462 = vmatprep.subr.mxu0 0.0
    %8463 = vmatpush2.msra.mxu0 0.0
    %8464 = vmatprep.subr.mxu0 0.0
    %8465 = vmatpush2.msra.mxu0 0.0
    %8466 = vmatprep.subr.mxu0 0.0
    %8467 = vmatpush2.msra.mxu0 0.0
    %8468 = vmatprep.subr.mxu0 0.0
    %8469 = vmatpush2.msra.mxu0 0.0
    %8470 = vmatprep.subr.mxu0 0.0
    %8471 = vmatpush2.msra.mxu0 0.0
    %8472 = vmatprep.subr.mxu0 0.0
    %8473 = vmatpush2.msra.mxu0 0.0
    %8474 = vmatprep.subr.mxu0 0.0
    %8475 = vmatpush2.msra.mxu0 0.0
    %8476 = vmatprep.subr.mxu0 0.0
    %8477 = vmatpush2.msra.mxu0 0.0
    %8478 = vmatprep.subr.mxu0 0.0
    %8479 = vmatpush2.msra.mxu0 0.0
    %8480 = vmatprep.subr.mxu0 0.0
    %8481 = vmatpush2.msra.mxu0 0.0
    %8482 = vmatprep.subr.mxu0 0.0
    %8483 = vmatpush2.msra.mxu0 0.0
    %8484 = vmatprep.subr.mxu0 0.0
    %8485 = vmatpush2.msra.mxu0 0.0
    %8486 = vmatprep.mubr.f32.mxu0 0.0
    %8487 = vmatmul.mubr.f32.gmra.mxu0 %v8411
    %v8488 = vpop.f32.mrf.mxu0
    %v8489 = vadd.f32 0.0, %v8488
    %v8490 = vpop.f32.mrf.mxu0
    %8491 = vmatprep.mubr.f32.mxu0 0.0
    %8492 = vmatmul.mubr.f32.gmra.mxu0 %v8414
    %v8493 = vpop.f32.mrf.mxu0
    %v8494 = vadd.f32 0.0, %v8493
    %v8495 = vpop.f32.mrf.mxu0
    %8496 = vmatprep.mubr.f32.mxu0 0.0
    %8497 = vmatmul.mubr.f32.gmra.mxu0 %v8417
    %v8498 = vpop.f32.mrf.mxu0
    %v8499 = vadd.f32 0.0, %v8498
    %v8500 = vpop.f32.mrf.mxu0
    %8501 = vmatprep.mubr.f32.mxu0 0.0
    %8502 = vmatmul.mubr.f32.gmra.mxu0 %v8420
    %v8503 = vpop.f32.mrf.mxu0
    %v8504 = vadd.f32 0.0, %v8503
    %v8505 = vpop.f32.mrf.mxu0
    %8506 = vdwg.mxu0
    %v8507 = vld [vmem:[%s13 + $0x20] sm:$0xff]
    %v8508 = vld [vmem:[%s13 + $0x28] sm:$0xff]
    %v8510 = vsel %vm614, %v8489, 0
    %v8513 = vsel %vm614, %v8494, 0
    %v8516 = vsel %vm614, %v8499, 0
    %v8519 = vsel %vm614, %v8504, 0
    %8521 = vmatprep.subr.mxu0 0.0
    %8522 = vmatpush1.msra.mxu0 0.0
    %8523 = vmatprep.subr.mxu0 0.0
    %8524 = vmatpush1.msra.mxu0 0.0
    %8525 = vmatprep.subr.mxu0 0.0
    %8526 = vmatpush1.msra.mxu0 0.0
    %8527 = vmatprep.subr.mxu0 0.0
    %8528 = vmatpush1.msra.mxu0 0.0
    %8529 = vmatprep.subr.mxu0 0.0
    %8530 = vmatpush1.msra.mxu0 0.0
    %8531 = vmatprep.subr.mxu0 0.0
    %8532 = vmatpush1.msra.mxu0 0.0
    %8533 = vmatprep.subr.mxu0 0.0
    %8534 = vmatpush1.msra.mxu0 0.0
    %8535 = vmatprep.subr.mxu0 0.0
    %8536 = vmatpush1.msra.mxu0 0.0
    %8537 = vmatprep.subr.mxu0 0.0
    %8538 = vmatpush1.msra.mxu0 0.0
    %8539 = vmatprep.subr.mxu0 0.0
    %8540 = vmatpush1.msra.mxu0 0.0
    %8541 = vmatprep.subr.mxu0 0.0
    %8542 = vmatpush1.msra.mxu0 0.0
    %8543 = vmatprep.subr.mxu0 0.0
    %8544 = vmatpush1.msra.mxu0 0.0
    %8545 = vmatprep.subr.mxu0 0.0
    %8546 = vmatpush1.msra.mxu0 0.0
    %8547 = vmatprep.subr.mxu0 0.0
    %8548 = vmatpush1.msra.mxu0 0.0
    %8549 = vmatprep.subr.mxu0 0.0
    %8550 = vmatpush1.msra.mxu0 %v8508
    %8551 = vmatprep.subr.mxu0 0.0
    %8552 = vmatpush1.msra.mxu0 %v8507
    %8553 = vmatprep.subr.mxu0 0.0
    %8554 = vmatpush2.msra.mxu0 0.0
    %8555 = vmatprep.subr.mxu0 0.0
    %8556 = vmatpush2.msra.mxu0 0.0
    %8557 = vmatprep.subr.mxu0 0.0
    %8558 = vmatpush2.msra.mxu0 0.0
    %8559 = vmatprep.subr.mxu0 0.0
    %8560 = vmatpush2.msra.mxu0 0.0
    %8561 = vmatprep.subr.mxu0 0.0
    %8562 = vmatpush2.msra.mxu0 0.0
    %8563 = vmatprep.subr.mxu0 0.0
    %8564 = vmatpush2.msra.mxu0 0.0
    %8565 = vmatprep.subr.mxu0 0.0
    %8566 = vmatpush2.msra.mxu0 0.0
    %8567 = vmatprep.subr.mxu0 0.0
    %8568 = vmatpush2.msra.mxu0 0.0
    %8569 = vmatprep.subr.mxu0 0.0
    %8570 = vmatpush2.msra.mxu0 0.0
    %8571 = vmatprep.subr.mxu0 0.0
    %8572 = vmatpush2.msra.mxu0 0.0
    %8573 = vmatprep.subr.mxu0 0.0
    %8574 = vmatpush2.msra.mxu0 0.0
    %8575 = vmatprep.subr.mxu0 0.0
    %8576 = vmatpush2.msra.mxu0 0.0
    %8577 = vmatprep.subr.mxu0 0.0
    %8578 = vmatpush2.msra.mxu0 0.0
    %8579 = vmatprep.subr.mxu0 0.0
    %8580 = vmatpush2.msra.mxu0 0.0
    %8581 = vmatprep.subr.mxu0 0.0
    %8582 = vmatpush2.msra.mxu0 0.0
    %8583 = vmatprep.subr.mxu0 0.0
    %8584 = vmatpush2.msra.mxu0 0.0
    %8585 = vmatprep.mubr.f32.mxu0 0.0
    %8586 = vmatmul.mubr.f32.gmra.mxu0 %v8510
    %v8587 = vpop.f32.mrf.mxu0
    %v8588 = vadd.f32 0.0, %v8587
    %v8589 = vpop.f32.mrf.mxu0
    %8590 = vmatprep.mubr.f32.mxu0 0.0
    %8591 = vmatmul.mubr.f32.gmra.mxu0 %v8513
    %v8592 = vpop.f32.mrf.mxu0
    %v8593 = vadd.f32 0.0, %v8592
    %v8594 = vpop.f32.mrf.mxu0
    %8595 = vmatprep.mubr.f32.mxu0 0.0
    %8596 = vmatmul.mubr.f32.gmra.mxu0 %v8516
    %v8597 = vpop.f32.mrf.mxu0
    %v8598 = vadd.f32 0.0, %v8597
    %v8599 = vpop.f32.mrf.mxu0
    %8600 = vmatprep.mubr.f32.mxu0 0.0
    %8601 = vmatmul.mubr.f32.gmra.mxu0 %v8519
    %v8602 = vpop.f32.mrf.mxu0
    %v8603 = vadd.f32 0.0, %v8602
    %v8604 = vpop.f32.mrf.mxu0
    %8605 = vdwg.mxu0
    %v8606 = vadd.f32 %v8211, %v8588
    %v8607 = vadd.f32 %v8216, %v8593
    %v8608 = vadd.f32 %v8221, %v8598
    %v8609 = vadd.f32 %v8226, %v8603
    %8610 = vrot.lane.b32.xlu0 %v7273, 80
    %v8611 = vpop.permute.xlu0 %8610
    %8612 = vrot.lane.b32.xlu0 %v7278, 80
    %v8613 = vpop.permute.xlu0 %8612
    %8614 = vrot.lane.b32.xlu0 %v7283, 80
    %v8615 = vpop.permute.xlu0 %8614
    %8616 = vrot.lane.b32.xlu0 %v7288, 80
    %v8617 = vpop.permute.xlu0 %8616
    %8618 = vrot.lane.b32.xlu0 %v7373, 80
    %v8619 = vpop.permute.xlu0 %8618
    %8620 = vrot.lane.b32.xlu0 %v7378, 80
    %v8621 = vpop.permute.xlu0 %8620
    %8622 = vrot.lane.b32.xlu0 %v7383, 80
    %v8623 = vpop.permute.xlu0 %8622
    %8624 = vrot.lane.b32.xlu0 %v7388, 80
    %v8625 = vpop.permute.xlu0 %8624
    %v8626 = vsel %vm614, %v8611, 0
    %v8628 = vsel %vm614, %v8613, 0
    %v8630 = vsel %vm614, %v8615, 0
    %v8632 = vsel %vm614, %v8617, 0
    %v8634 = vsel %vm614, %v8619, 0
    %v8636 = vsel %vm614, %v8621, 0
    %v8638 = vsel %vm614, %v8623, 0
    %v8640 = vsel %vm614, %v8625, 0
    %8642 = vmatprep.subr.mxu0 0.0
    %8643 = vmatpush1.xpose.msra.mxu0 0.0
    %8644 = vmatprep.subr.mxu0 0.0
    %8645 = vmatpush1.xpose.msra.mxu0 0.0
    %8646 = vmatprep.subr.mxu0 0.0
    %8647 = vmatpush1.xpose.msra.mxu0 0.0
    %8648 = vmatprep.subr.mxu0 0.0
    %8649 = vmatpush1.xpose.msra.mxu0 0.0
    %8650 = vmatprep.subr.mxu0 0.0
    %8651 = vmatpush1.xpose.msra.mxu0 0.0
    %8652 = vmatprep.subr.mxu0 0.0
    %8653 = vmatpush1.xpose.msra.mxu0 0.0
    %8654 = vmatprep.subr.mxu0 0.0
    %8655 = vmatpush1.xpose.msra.mxu0 0.0
    %8656 = vmatprep.subr.mxu0 0.0
    %8657 = vmatpush1.xpose.msra.mxu0 0.0
    %8658 = vmatprep.subr.mxu0 0.0
    %8659 = vmatpush1.xpose.msra.mxu0 0.0
    %8660 = vmatprep.subr.mxu0 0.0
    %8661 = vmatpush1.xpose.msra.mxu0 0.0
    %8662 = vmatprep.subr.mxu0 0.0
    %8663 = vmatpush1.xpose.msra.mxu0 0.0
    %8664 = vmatprep.subr.mxu0 0.0
    %8665 = vmatpush1.xpose.msra.mxu0 0.0
    %8666 = vmatprep.subr.mxu0 0.0
    %8667 = vmatpush1.xpose.msra.mxu0 %v8640
    %8668 = vmatprep.subr.mxu0 0.0
    %8669 = vmatpush1.xpose.msra.mxu0 %v8638
    %8670 = vmatprep.subr.mxu0 0.0
    %8671 = vmatpush1.xpose.msra.mxu0 %v8636
    %8672 = vmatprep.subr.mxu0 0.0
    %8673 = vmatpush1.xpose.msra.mxu0 %v8634
    %8674 = vmatprep.subr.mxu0 0.0
    %8675 = vmatpush2.xpose.msra.mxu0 0.0
    %8676 = vmatprep.subr.mxu0 0.0
    %8677 = vmatpush2.xpose.msra.mxu0 0.0
    %8678 = vmatprep.subr.mxu0 0.0
    %8679 = vmatpush2.xpose.msra.mxu0 0.0
    %8680 = vmatprep.subr.mxu0 0.0
    %8681 = vmatpush2.xpose.msra.mxu0 0.0
    %8682 = vmatprep.subr.mxu0 0.0
    %8683 = vmatpush2.xpose.msra.mxu0 0.0
    %8684 = vmatprep.subr.mxu0 0.0
    %8685 = vmatpush2.xpose.msra.mxu0 0.0
    %8686 = vmatprep.subr.mxu0 0.0
    %8687 = vmatpush2.xpose.msra.mxu0 0.0
    %8688 = vmatprep.subr.mxu0 0.0
    %8689 = vmatpush2.xpose.msra.mxu0 0.0
    %8690 = vmatprep.subr.mxu0 0.0
    %8691 = vmatpush2.xpose.msra.mxu0 0.0
    %8692 = vmatprep.subr.mxu0 0.0
    %8693 = vmatpush2.xpose.msra.mxu0 0.0
    %8694 = vmatprep.subr.mxu0 0.0
    %8695 = vmatpush2.xpose.msra.mxu0 0.0
    %8696 = vmatprep.subr.mxu0 0.0
    %8697 = vmatpush2.xpose.msra.mxu0 0.0
    %8698 = vmatprep.subr.mxu0 0.0
    %8699 = vmatpush2.xpose.msra.mxu0 0.0
    %8700 = vmatprep.subr.mxu0 0.0
    %8701 = vmatpush2.xpose.msra.mxu0 0.0
    %8702 = vmatprep.subr.mxu0 0.0
    %8703 = vmatpush2.xpose.msra.mxu0 0.0
    %8704 = vmatprep.subr.mxu0 0.0
    %8705 = vmatpush2.xpose.msra.mxu0 0.0
    %8706 = vmatprep.mubr.f32.mxu0 0.0
    %8707 = vmatmul.mubr.f32.gmra.mxu0 %v8626
    %v8708 = vpop.f32.mrf.mxu0
    %v8709 = vadd.f32 0.0, %v8708
    %v8710 = vpop.f32.mrf.mxu0
    %8711 = vmatprep.mubr.f32.mxu0 0.0
    %8712 = vmatmul.mubr.f32.gmra.mxu0 %v8628
    %v8713 = vpop.f32.mrf.mxu0
    %v8714 = vadd.f32 0.0, %v8713
    %v8715 = vpop.f32.mrf.mxu0
    %8716 = vmatprep.mubr.f32.mxu0 0.0
    %8717 = vmatmul.mubr.f32.gmra.mxu0 %v8630
    %v8718 = vpop.f32.mrf.mxu0
    %v8719 = vadd.f32 0.0, %v8718
    %v8720 = vpop.f32.mrf.mxu0
    %8721 = vmatprep.mubr.f32.mxu0 0.0
    %8722 = vmatmul.mubr.f32.gmra.mxu0 %v8632
    %v8723 = vpop.f32.mrf.mxu0
    %v8724 = vadd.f32 0.0, %v8723
    %v8725 = vpop.f32.mrf.mxu0
    %8726 = vdwg.mxu0
    %v8727 = vmul.f32 %v8709, 0.25
    %v8728 = vmul.f32 %v8714, 0.25
    %v8729 = vmul.f32 %v8719, 0.25
    %v8730 = vmul.f32 %v8724, 0.25
    %v8731 = vadd.f32 %v8727, %v68
    %v8732 = vadd.f32 %v8728, %v69
    %v8733 = vadd.f32 %v8729, %v70
    %v8734 = vadd.f32 %v8730, %v71
    %v8735 = vsel %vm124, %v8731, -inf
    %8736 = vmax.xlane.f32.xlu0 %v8735
    %v8737 = vpop.xlane.xlu0 %8736
    %v8738 = vsel %vm124, %v8732, -inf
    %8739 = vmax.xlane.f32.xlu0 %v8738
    %v8740 = vpop.xlane.xlu0 %8739
    %v8741 = vsel %vm124, %v8733, -inf
    %8742 = vmax.xlane.f32.xlu0 %v8741
    %v8743 = vpop.xlane.xlu0 %8742
    %v8744 = vsel %vm124, %v8734, -inf
    %8745 = vmax.xlane.f32.xlu0 %v8744
    %v8746 = vpop.xlane.xlu0 %8745
    %v8747 = vsub.f32 %v8731, %v8737
    %v8748 = vsub.f32 %v8732, %v8740
    %v8749 = vsub.f32 %v8733, %v8743
    %v8750 = vsub.f32 %v8734, %v8746
    %v8751 = vmul.f32 %v8747, 1.442695
    %v8752 = vpow.pop %v8751
    %v8753 = vmul.f32 %v8748, 1.442695
    %v8754 = vpow.pop %v8753
    %v8755 = vmul.f32 %v8749, 1.442695
    %v8756 = vpow.pop %v8755
    %v8757 = vmul.f32 %v8750, 1.442695
    %v8758 = vpow.pop %v8757
    %v8759 = vsel %vm124, %v8752, 0.0
    %8760 = vadd.xlane.f32.xlu0 %v8759
    %v8761 = vpop.xlane.xlu0 %8760
    %v8762 = vsel %vm124, %v8754, 0.0
    %8763 = vadd.xlane.f32.xlu0 %v8762
    %v8764 = vpop.xlane.xlu0 %8763
    %v8765 = vsel %vm124, %v8756, 0.0
    %8766 = vadd.xlane.f32.xlu0 %v8765
    %v8767 = vpop.xlane.xlu0 %8766
    %v8768 = vsel %vm124, %v8758, 0.0
    %8769 = vadd.xlane.f32.xlu0 %v8768
    %v8770 = vpop.xlane.xlu0 %8769
    %v8771 = vrcp.pop %v8761
    %v8772 = vmul.f32 %v8752, %v8771
    %v8773 = vrcp.pop %v8764
    %v8774 = vmul.f32 %v8754, %v8773
    %v8775 = vrcp.pop %v8767
    %v8776 = vmul.f32 %v8756, %v8775
    %v8777 = vrcp.pop %v8770
    %v8778 = vmul.f32 %v8758, %v8777
    %8779 = vrot.lane.b32.xlu0 %v7473, 80
    %v8780 = vpop.permute.xlu0 %8779
    %8781 = vrot.lane.b32.xlu0 %v7478, 80
    %v8782 = vpop.permute.xlu0 %8781
    %8783 = vrot.lane.b32.xlu0 %v7483, 80
    %v8784 = vpop.permute.xlu0 %8783
    %8785 = vrot.lane.b32.xlu0 %v7488, 80
    %v8786 = vpop.permute.xlu0 %8785
    %v8792 = vsel %vm124, %v8772, 0
    %v8795 = vsel %vm124, %v8774, 0
    %v8798 = vsel %vm124, %v8776, 0
    %v8801 = vsel %vm124, %v8778, 0
    %8803 = vmatprep.subr.mxu0 0.0
    %8804 = vmatpush1.msra.mxu0 0.0
    %8805 = vmatprep.subr.mxu0 0.0
    %8806 = vmatpush1.msra.mxu0 0.0
    %8807 = vmatprep.subr.mxu0 0.0
    %8808 = vmatpush1.msra.mxu0 0.0
    %8809 = vmatprep.subr.mxu0 0.0
    %8810 = vmatpush1.msra.mxu0 0.0
    %8811 = vmatprep.subr.mxu0 0.0
    %8812 = vmatpush1.msra.mxu0 0.0
    %8813 = vmatprep.subr.mxu0 0.0
    %8814 = vmatpush1.msra.mxu0 0.0
    %8815 = vmatprep.subr.mxu0 0.0
    %8816 = vmatpush1.msra.mxu0 0.0
    %8817 = vmatprep.subr.mxu0 0.0
    %8818 = vmatpush1.msra.mxu0 0.0
    %8819 = vmatprep.subr.mxu0 0.0
    %8820 = vmatpush1.msra.mxu0 0.0
    %8821 = vmatprep.subr.mxu0 0.0
    %8822 = vmatpush1.msra.mxu0 0.0
    %8823 = vmatprep.subr.mxu0 0.0
    %8824 = vmatpush1.msra.mxu0 0.0
    %8825 = vmatprep.subr.mxu0 0.0
    %8826 = vmatpush1.msra.mxu0 0.0
    %8827 = vmatprep.subr.mxu0 0.0
    %8828 = vmatpush1.msra.mxu0 %v8786
    %8829 = vmatprep.subr.mxu0 0.0
    %8830 = vmatpush1.msra.mxu0 %v8784
    %8831 = vmatprep.subr.mxu0 0.0
    %8832 = vmatpush1.msra.mxu0 %v8782
    %8833 = vmatprep.subr.mxu0 0.0
    %8834 = vmatpush1.msra.mxu0 %v8780
    %8835 = vmatprep.subr.mxu0 0.0
    %8836 = vmatpush2.msra.mxu0 0.0
    %8837 = vmatprep.subr.mxu0 0.0
    %8838 = vmatpush2.msra.mxu0 0.0
    %8839 = vmatprep.subr.mxu0 0.0
    %8840 = vmatpush2.msra.mxu0 0.0
    %8841 = vmatprep.subr.mxu0 0.0
    %8842 = vmatpush2.msra.mxu0 0.0
    %8843 = vmatprep.subr.mxu0 0.0
    %8844 = vmatpush2.msra.mxu0 0.0
    %8845 = vmatprep.subr.mxu0 0.0
    %8846 = vmatpush2.msra.mxu0 0.0
    %8847 = vmatprep.subr.mxu0 0.0
    %8848 = vmatpush2.msra.mxu0 0.0
    %8849 = vmatprep.subr.mxu0 0.0
    %8850 = vmatpush2.msra.mxu0 0.0
    %8851 = vmatprep.subr.mxu0 0.0
    %8852 = vmatpush2.msra.mxu0 0.0
    %8853 = vmatprep.subr.mxu0 0.0
    %8854 = vmatpush2.msra.mxu0 0.0
    %8855 = vmatprep.subr.mxu0 0.0
    %8856 = vmatpush2.msra.mxu0 0.0
    %8857 = vmatprep.subr.mxu0 0.0
    %8858 = vmatpush2.msra.mxu0 0.0
    %8859 = vmatprep.subr.mxu0 0.0
    %8860 = vmatpush2.msra.mxu0 0.0
    %8861 = vmatprep.subr.mxu0 0.0
    %8862 = vmatpush2.msra.mxu0 0.0
    %8863 = vmatprep.subr.mxu0 0.0
    %8864 = vmatpush2.msra.mxu0 0.0
    %8865 = vmatprep.subr.mxu0 0.0
    %8866 = vmatpush2.msra.mxu0 0.0
    %8867 = vmatprep.mubr.f32.mxu0 0.0
    %8868 = vmatmul.mubr.f32.gmra.mxu0 %v8792
    %v8869 = vpop.f32.mrf.mxu0
    %v8870 = vadd.f32 0.0, %v8869
    %v8871 = vpop.f32.mrf.mxu0
    %8872 = vmatprep.mubr.f32.mxu0 0.0
    %8873 = vmatmul.mubr.f32.gmra.mxu0 %v8795
    %v8874 = vpop.f32.mrf.mxu0
    %v8875 = vadd.f32 0.0, %v8874
    %v8876 = vpop.f32.mrf.mxu0
    %8877 = vmatprep.mubr.f32.mxu0 0.0
    %8878 = vmatmul.mubr.f32.gmra.mxu0 %v8798
    %v8879 = vpop.f32.mrf.mxu0
    %v8880 = vadd.f32 0.0, %v8879
    %v8881 = vpop.f32.mrf.mxu0
    %8882 = vmatprep.mubr.f32.mxu0 0.0
    %8883 = vmatmul.mubr.f32.gmra.mxu0 %v8801
    %v8884 = vpop.f32.mrf.mxu0
    %v8885 = vadd.f32 0.0, %v8884
    %v8886 = vpop.f32.mrf.mxu0
    %8887 = vdwg.mxu0
    %v8888 = vld [vmem:[%s13 + $0x30] sm:$0xff]
    %v8889 = vld [vmem:[%s13 + $0x38] sm:$0xff]
    %v8891 = vsel %vm614, %v8870, 0
    %v8894 = vsel %vm614, %v8875, 0
    %v8897 = vsel %vm614, %v8880, 0
    %v8900 = vsel %vm614, %v8885, 0
    %8902 = vmatprep.subr.mxu0 0.0
    %8903 = vmatpush1.msra.mxu0 0.0
    %8904 = vmatprep.subr.mxu0 0.0
    %8905 = vmatpush1.msra.mxu0 0.0
    %8906 = vmatprep.subr.mxu0 0.0
    %8907 = vmatpush1.msra.mxu0 0.0
    %8908 = vmatprep.subr.mxu0 0.0
    %8909 = vmatpush1.msra.mxu0 0.0
    %8910 = vmatprep.subr.mxu0 0.0
    %8911 = vmatpush1.msra.mxu0 0.0
    %8912 = vmatprep.subr.mxu0 0.0
    %8913 = vmatpush1.msra.mxu0 0.0
    %8914 = vmatprep.subr.mxu0 0.0
    %8915 = vmatpush1.msra.mxu0 0.0
    %8916 = vmatprep.subr.mxu0 0.0
    %8917 = vmatpush1.msra.mxu0 0.0
    %8918 = vmatprep.subr.mxu0 0.0
    %8919 = vmatpush1.msra.mxu0 0.0
    %8920 = vmatprep.subr.mxu0 0.0
    %8921 = vmatpush1.msra.mxu0 0.0
    %8922 = vmatprep.subr.mxu0 0.0
    %8923 = vmatpush1.msra.mxu0 0.0
    %8924 = vmatprep.subr.mxu0 0.0
    %8925 = vmatpush1.msra.mxu0 0.0
    %8926 = vmatprep.subr.mxu0 0.0
    %8927 = vmatpush1.msra.mxu0 0.0
    %8928 = vmatprep.subr.mxu0 0.0
    %8929 = vmatpush1.msra.mxu0 0.0
    %8930 = vmatprep.subr.mxu0 0.0
    %8931 = vmatpush1.msra.mxu0 %v8889
    %8932 = vmatprep.subr.mxu0 0.0
    %8933 = vmatpush1.msra.mxu0 %v8888
    %8934 = vmatprep.subr.mxu0 0.0
    %8935 = vmatpush2.msra.mxu0 0.0
    %8936 = vmatprep.subr.mxu0 0.0
    %8937 = vmatpush2.msra.mxu0 0.0
    %8938 = vmatprep.subr.mxu0 0.0
    %8939 = vmatpush2.msra.mxu0 0.0
    %8940 = vmatprep.subr.mxu0 0.0
    %8941 = vmatpush2.msra.mxu0 0.0
    %8942 = vmatprep.subr.mxu0 0.0
    %8943 = vmatpush2.msra.mxu0 0.0
    %8944 = vmatprep.subr.mxu0 0.0
    %8945 = vmatpush2.msra.mxu0 0.0
    %8946 = vmatprep.subr.mxu0 0.0
    %8947 = vmatpush2.msra.mxu0 0.0
    %8948 = vmatprep.subr.mxu0 0.0
    %8949 = vmatpush2.msra.mxu0 0.0
    %8950 = vmatprep.subr.mxu0 0.0
    %8951 = vmatpush2.msra.mxu0 0.0
    %8952 = vmatprep.subr.mxu0 0.0
    %8953 = vmatpush2.msra.mxu0 0.0
    %8954 = vmatprep.subr.mxu0 0.0
    %8955 = vmatpush2.msra.mxu0 0.0
    %8956 = vmatprep.subr.mxu0 0.0
    %8957 = vmatpush2.msra.mxu0 0.0
    %8958 = vmatprep.subr.mxu0 0.0
    %8959 = vmatpush2.msra.mxu0 0.0
    %8960 = vmatprep.subr.mxu0 0.0
    %8961 = vmatpush2.msra.mxu0 0.0
    %8962 = vmatprep.subr.mxu0 0.0
    %8963 = vmatpush2.msra.mxu0 0.0
    %8964 = vmatprep.subr.mxu0 0.0
    %8965 = vmatpush2.msra.mxu0 0.0
    %8966 = vmatprep.mubr.f32.mxu0 0.0
    %8967 = vmatmul.mubr.f32.gmra.mxu0 %v8891
    %v8968 = vpop.f32.mrf.mxu0
    %v8969 = vadd.f32 0.0, %v8968
    %v8970 = vpop.f32.mrf.mxu0
    %8971 = vmatprep.mubr.f32.mxu0 0.0
    %8972 = vmatmul.mubr.f32.gmra.mxu0 %v8894
    %v8973 = vpop.f32.mrf.mxu0
    %v8974 = vadd.f32 0.0, %v8973
    %v8975 = vpop.f32.mrf.mxu0
    %8976 = vmatprep.mubr.f32.mxu0 0.0
    %8977 = vmatmul.mubr.f32.gmra.mxu0 %v8897
    %v8978 = vpop.f32.mrf.mxu0
    %v8979 = vadd.f32 0.0, %v8978
    %v8980 = vpop.f32.mrf.mxu0
    %8981 = vmatprep.mubr.f32.mxu0 0.0
    %8982 = vmatmul.mubr.f32.gmra.mxu0 %v8900
    %v8983 = vpop.f32.mrf.mxu0
    %v8984 = vadd.f32 0.0, %v8983
    %v8985 = vpop.f32.mrf.mxu0
    %8986 = vdwg.mxu0
    %v8987 = vadd.f32 %v8606, %v8969
    %v8988 = vadd.f32 %v8607, %v8974
    %v8989 = vadd.f32 %v8608, %v8979
    %v8990 = vadd.f32 %v8609, %v8984
    %v8991 = vld [vmem:[%s14] sm:$0x1]
    %v8993 = vlaneseq
    %v8994 = vshrl.u32 %v8993, 7
    %v8995 = vsub.s32 0, %v8994
    %v8996 = vrot.slane %v8991, %v8995
    %v8998 = vadd.f32 %v8987, %v8996
    %v8999 = vadd.f32 %v8988, %v8996
    %v9000 = vadd.f32 %v8989, %v8996
    %v9001 = vadd.f32 %v8990, %v8996
    %v9002 = vmul.f32 %v86, %v8998
    %v9003 = vmul.f32 %v87, %v8999
    %v9004 = vmul.f32 %v88, %v9000
    %v9005 = vmul.f32 %v89, %v9001
    %v9006 = vadd.f32 %v7115, %v9002
    %v9007 = vadd.f32 %v7116, %v9003
    %v9008 = vadd.f32 %v7117, %v9004
    %v9009 = vadd.f32 %v7118, %v9005
    %v9010 = vsel %vm240, %v9006, 0.0
    %9011 = vadd.xlane.f32.xlu0 %v9010
    %v9012 = vpop.xlane.xlu0 %9011
    %v9013 = vsel %vm240, %v9007, 0.0
    %9014 = vadd.xlane.f32.xlu0 %v9013
    %v9015 = vpop.xlane.xlu0 %9014
    %v9016 = vsel %vm240, %v9008, 0.0
    %9017 = vadd.xlane.f32.xlu0 %v9016
    %v9018 = vpop.xlane.xlu0 %9017
    %v9019 = vsel %vm240, %v9009, 0.0
    %9020 = vadd.xlane.f32.xlu0 %v9019
    %v9021 = vpop.xlane.xlu0 %9020
    %v9022 = vmul.f32 %v9012, %v253
    %v9023 = vmul.f32 %v9015, %v253
    %v9024 = vmul.f32 %v9018, %v253
    %v9025 = vmul.f32 %v9021, %v253
    %v9026 = vsub.f32 %v9006, %v9022
    %v9027 = vsub.f32 %v9007, %v9023
    %v9028 = vsub.f32 %v9008, %v9024
    %v9029 = vsub.f32 %v9009, %v9025
    %v9030 = vmul.f32 %v9026, %v9026
    %v9031 = vmul.f32 %v9027, %v9027
    %v9032 = vmul.f32 %v9028, %v9028
    %v9033 = vmul.f32 %v9029, %v9029
    %v9034 = vsel %vm240, %v9030, 0.0
    %9035 = vadd.xlane.f32.xlu0 %v9034
    %v9036 = vpop.xlane.xlu0 %9035
    %v9037 = vsel %vm240, %v9031, 0.0
    %9038 = vadd.xlane.f32.xlu0 %v9037
    %v9039 = vpop.xlane.xlu0 %9038
    %v9040 = vsel %vm240, %v9032, 0.0
    %9041 = vadd.xlane.f32.xlu0 %v9040
    %v9042 = vpop.xlane.xlu0 %9041
    %v9043 = vsel %vm240, %v9033, 0.0
    %9044 = vadd.xlane.f32.xlu0 %v9043
    %v9045 = vpop.xlane.xlu0 %9044
    %v9046 = vmul.f32 %v9036, %v253
    %v9047 = vmul.f32 %v9039, %v253
    %v9048 = vmul.f32 %v9042, %v253
    %v9049 = vmul.f32 %v9045, %v253
    %v9050 = vadd.f32 %v9046, 1e-06
    %v9051 = vadd.f32 %v9047, 1e-06
    %v9052 = vadd.f32 %v9048, 1e-06
    %v9053 = vadd.f32 %v9049, 1e-06
    %v9054 = vrsqrt.pop %v9050
    %v9055 = vrsqrt.pop %v9051
    %v9056 = vrsqrt.pop %v9052
    %v9057 = vrsqrt.pop %v9053
    %v9058 = vmul.f32 %v9026, %v9054
    %v9059 = vmul.f32 %v9027, %v9055
    %v9060 = vmul.f32 %v9028, %v9056
    %v9061 = vmul.f32 %v9029, %v9057
    %v9062 = vmul.f32 %v9058, %v100
    %v9063 = vmul.f32 %v9059, %v101
    %v9064 = vmul.f32 %v9060, %v102
    %v9065 = vmul.f32 %v9061, %v103
    %v9066 = vadd.f32 %v9062, %v91
    %v9067 = vadd.f32 %v9063, %v92
    %v9068 = vadd.f32 %v9064, %v93
    %v9069 = vadd.f32 %v9065, %v94
    %v9070 = vld [vmem:[%s15] sm:$0xff]
    %v9071 = vld [vmem:[%s15 + $0x8] sm:$0xff]
    %v9072 = vld [vmem:[%s15 + $0x10] sm:$0xff]
    %v9073 = vld [vmem:[%s15 + $0x18] sm:$0xff]
    %v9074 = vld [vmem:[%s15 + $0x20] sm:$0xff]
    %v9075 = vld [vmem:[%s15 + $0x28] sm:$0xff]
    %v9076 = vld [vmem:[%s15 + $0x30] sm:$0xff]
    %v9077 = vld [vmem:[%s15 + $0x38] sm:$0xff]
    %v9078 = vld [vmem:[%s15 + $0x40] sm:$0xff]
    %v9079 = vld [vmem:[%s15 + $0x48] sm:$0xff]
    %v9080 = vld [vmem:[%s15 + $0x50] sm:$0xff]
    %v9081 = vld [vmem:[%s15 + $0x58] sm:$0xff]
    %v9082 = vld [vmem:[%s15 + $0x60] sm:$0xff]
    %v9083 = vld [vmem:[%s15 + $0x68] sm:$0xff]
    %v9084 = vld [vmem:[%s15 + $0x70] sm:$0xff]
    %v9085 = vld [vmem:[%s15 + $0x78] sm:$0xff]
    %v9086 = vld [vmem:[%s16] sm:$0x3]
    %v9088 = vlaneseq
    %v9089 = vshrl.u32 %v9088, 7
    %v9090 = vsub.s32 0, %v9089
    %v9091 = vrot.slane %v9086, %v9090
    %v9092 = vlaneseq
    %v9093 = vshrl.u32 %v9092, 7
    %v9094 = vsub.s32 1, %v9093
    %v9095 = vrot.slane %v9086, %v9094
    %v9099 = vsel %vm240, %v9066, 0
    %v9102 = vsel %vm240, %v9067, 0
    %v9105 = vsel %vm240, %v9068, 0
    %v9108 = vsel %vm240, %v9069, 0
    %9110 = vmatprep.subr.mxu0 0.0
    %9111 = vmatpush1.msra.mxu0 0.0
    %9112 = vmatprep.subr.mxu0 0.0
    %9113 = vmatpush1.msra.mxu0 0.0
    %9114 = vmatprep.subr.mxu0 0.0
    %9115 = vmatpush1.msra.mxu0 0.0
    %9116 = vmatprep.subr.mxu0 0.0
    %9117 = vmatpush1.msra.mxu0 0.0
    %9118 = vmatprep.subr.mxu0 0.0
    %9119 = vmatpush1.msra.mxu0 0.0
    %9120 = vmatprep.subr.mxu0 0.0
    %9121 = vmatpush1.msra.mxu0 0.0
    %9122 = vmatprep.subr.mxu0 0.0
    %9123 = vmatpush1.msra.mxu0 0.0
    %9124 = vmatprep.subr.mxu0 0.0
    %9125 = vmatpush1.msra.mxu0 0.0
    %9126 = vmatprep.subr.mxu0 %v9085
    %9127 = vmatpush1.msra.mxu0 %v9084
    %9128 = vmatprep.subr.mxu0 %v9083
    %9129 = vmatpush1.msra.mxu0 %v9082
    %9130 = vmatprep.subr.mxu0 %v9081
    %9131 = vmatpush1.msra.mxu0 %v9080
    %9132 = vmatprep.subr.mxu0 %v9079
    %9133 = vmatpush1.msra.mxu0 %v9078
    %9134 = vmatprep.subr.mxu0 %v9077
    %9135 = vmatpush1.msra.mxu0 %v9076
    %9136 = vmatprep.subr.mxu0 %v9075
    %9137 = vmatpush1.msra.mxu0 %v9074
    %9138 = vmatprep.subr.mxu0 %v9073
    %9139 = vmatpush1.msra.mxu0 %v9072
    %9140 = vmatprep.subr.mxu0 %v9071
    %9141 = vmatpush1.msra.mxu0 %v9070
    %9142 = vmatprep.subr.mxu0 0.0
    %9143 = vmatpush2.msra.mxu0 0.0
    %9144 = vmatprep.subr.mxu0 0.0
    %9145 = vmatpush2.msra.mxu0 0.0
    %9146 = vmatprep.subr.mxu0 0.0
    %9147 = vmatpush2.msra.mxu0 0.0
    %9148 = vmatprep.subr.mxu0 0.0
    %9149 = vmatpush2.msra.mxu0 0.0
    %9150 = vmatprep.subr.mxu0 0.0
    %9151 = vmatpush2.msra.mxu0 0.0
    %9152 = vmatprep.subr.mxu0 0.0
    %9153 = vmatpush2.msra.mxu0 0.0
    %9154 = vmatprep.subr.mxu0 0.0
    %9155 = vmatpush2.msra.mxu0 0.0
    %9156 = vmatprep.subr.mxu0 0.0
    %9157 = vmatpush2.msra.mxu0 0.0
    %9158 = vmatprep.subr.mxu0 0.0
    %9159 = vmatpush2.msra.mxu0 0.0
    %9160 = vmatprep.subr.mxu0 0.0
    %9161 = vmatpush2.msra.mxu0 0.0
    %9162 = vmatprep.subr.mxu0 0.0
    %9163 = vmatpush2.msra.mxu0 0.0
    %9164 = vmatprep.subr.mxu0 0.0
    %9165 = vmatpush2.msra.mxu0 0.0
    %9166 = vmatprep.subr.mxu0 0.0
    %9167 = vmatpush2.msra.mxu0 0.0
    %9168 = vmatprep.subr.mxu0 0.0
    %9169 = vmatpush2.msra.mxu0 0.0
    %9170 = vmatprep.subr.mxu0 0.0
    %9171 = vmatpush2.msra.mxu0 0.0
    %9172 = vmatprep.subr.mxu0 0.0
    %9173 = vmatpush2.msra.mxu0 0.0
    %9174 = vmatprep.mubr.f32.mxu0 0.0
    %9175 = vmatmul.mubr.f32.gmra.mxu0 %v9099
    %v9176 = vpop.f32.mrf.mxu0
    %v9177 = vadd.f32 %v9091, %v9176
    %v9178 = vpop.f32.mrf.mxu0
    %v9179 = vadd.f32 %v9095, %v9178
    %9180 = vmatprep.mubr.f32.mxu0 0.0
    %9181 = vmatmul.mubr.f32.gmra.mxu0 %v9102
    %v9182 = vpop.f32.mrf.mxu0
    %v9183 = vadd.f32 %v9091, %v9182
    %v9184 = vpop.f32.mrf.mxu0
    %v9185 = vadd.f32 %v9095, %v9184
    %9186 = vmatprep.mubr.f32.mxu0 0.0
    %9187 = vmatmul.mubr.f32.gmra.mxu0 %v9105
    %v9188 = vpop.f32.mrf.mxu0
    %v9189 = vadd.f32 %v9091, %v9188
    %v9190 = vpop.f32.mrf.mxu0
    %v9191 = vadd.f32 %v9095, %v9190
    %9192 = vmatprep.mubr.f32.mxu0 0.0
    %9193 = vmatmul.mubr.f32.gmra.mxu0 %v9108
    %v9194 = vpop.f32.mrf.mxu0
    %v9195 = vadd.f32 %v9091, %v9194
    %v9196 = vpop.f32.mrf.mxu0
    %v9197 = vadd.f32 %v9095, %v9196
    %9198 = vdwg.mxu0
    %v9199 = vmul.f32 %v9177, 0.5
    %v9200 = vmul.f32 %v9179, 0.5
    %v9201 = vmul.f32 %v9183, 0.5
    %v9202 = vmul.f32 %v9185, 0.5
    %v9203 = vmul.f32 %v9189, 0.5
    %v9204 = vmul.f32 %v9191, 0.5
    %v9205 = vmul.f32 %v9195, 0.5
    %v9206 = vmul.f32 %v9197, 0.5
    %v9207 = vmul.f32 %v9177, 0.044715
    %v9208 = vmul.f32 %v9179, 0.044715
    %v9209 = vmul.f32 %v9183, 0.044715
    %v9210 = vmul.f32 %v9185, 0.044715
    %v9211 = vmul.f32 %v9189, 0.044715
    %v9212 = vmul.f32 %v9191, 0.044715
    %v9213 = vmul.f32 %v9195, 0.044715
    %v9214 = vmul.f32 %v9197, 0.044715
    %v9215 = vmul.f32 %v9207, %v9177
    %v9216 = vmul.f32 %v9208, %v9179
    %v9217 = vmul.f32 %v9209, %v9183
    %v9218 = vmul.f32 %v9210, %v9185
    %v9219 = vmul.f32 %v9211, %v9189
    %v9220 = vmul.f32 %v9212, %v9191
    %v9221 = vmul.f32 %v9213, %v9195
    %v9222 = vmul.f32 %v9214, %v9197
    %v9223 = vmul.f32 %v9215, %v9177
    %v9224 = vmul.f32 %v9216, %v9179
    %v9225 = vmul.f32 %v9217, %v9183
    %v9226 = vmul.f32 %v9218, %v9185
    %v9227 = vmul.f32 %v9219, %v9189
    %v9228 = vmul.f32 %v9220, %v9191
    %v9229 = vmul.f32 %v9221, %v9195
    %v9230 = vmul.f32 %v9222, %v9197
    %v9231 = vadd.f32 %v9177, %v9223
    %v9232 = vadd.f32 %v9179, %v9224
    %v9233 = vadd.f32 %v9183, %v9225
    %v9234 = vadd.f32 %v9185, %v9226
    %v9235 = vadd.f32 %v9189, %v9227
    %v9236 = vadd.f32 %v9191, %v9228
    %v9237 = vadd.f32 %v9195, %v9229
    %v9238 = vadd.f32 %v9197, %v9230
    %v9239 = vmul.f32 %v9231, 0.7978846
    %v9240 = vmul.f32 %v9232, 0.7978846
    %v9241 = vmul.f32 %v9233, 0.7978846
    %v9242 = vmul.f32 %v9234, 0.7978846
    %v9243 = vmul.f32 %v9235, 0.7978846
    %v9244 = vmul.f32 %v9236, 0.7978846
    %v9245 = vmul.f32 %v9237, 0.7978846
    %v9246 = vmul.f32 %v9238, 0.7978846
    %v9247 = vtanh.pop %v9239
    %v9248 = vtanh.pop %v9240
    %v9249 = vtanh.pop %v9241
    %v9250 = vtanh.pop %v9242
    %v9251 = vtanh.pop %v9243
    %v9252 = vtanh.pop %v9244
    %v9253 = vtanh.pop %v9245
    %v9254 = vtanh.pop %v9246
    %v9255 = vadd.f32 %v9247, 1.0
    %v9256 = vadd.f32 %v9248, 1.0
    %v9257 = vadd.f32 %v9249, 1.0
    %v9258 = vadd.f32 %v9250, 1.0
    %v9259 = vadd.f32 %v9251, 1.0
    %v9260 = vadd.f32 %v9252, 1.0
    %v9261 = vadd.f32 %v9253, 1.0
    %v9262 = vadd.f32 %v9254, 1.0
    %v9263 = vmul.f32 %v9199, %v9255
    %v9264 = vmul.f32 %v9200, %v9256
    %v9265 = vmul.f32 %v9201, %v9257
    %v9266 = vmul.f32 %v9202, %v9258
    %v9267 = vmul.f32 %v9203, %v9259
    %v9268 = vmul.f32 %v9204, %v9260
    %v9269 = vmul.f32 %v9205, %v9261
    %v9270 = vmul.f32 %v9206, %v9262
    %v9271 = vld [vmem:[%s17] sm:$0xff]
    %v9272 = vld [vmem:[%s17 + $0x8] sm:$0xff]
    %v9273 = vld [vmem:[%s17 + $0x10] sm:$0xff]
    %v9274 = vld [vmem:[%s17 + $0x18] sm:$0xff]
    %v9275 = vld [vmem:[%s17 + $0x20] sm:$0xff]
    %v9276 = vld [vmem:[%s17 + $0x28] sm:$0xff]
    %v9277 = vld [vmem:[%s17 + $0x30] sm:$0xff]
    %v9278 = vld [vmem:[%s17 + $0x38] sm:$0xff]
    %v9279 = vld [vmem:[%s17 + $0x40] sm:$0xff]
    %v9280 = vld [vmem:[%s17 + $0x48] sm:$0xff]
    %v9281 = vld [vmem:[%s17 + $0x50] sm:$0xff]
    %v9282 = vld [vmem:[%s17 + $0x58] sm:$0xff]
    %v9283 = vld [vmem:[%s17 + $0x60] sm:$0xff]
    %v9284 = vld [vmem:[%s17 + $0x68] sm:$0xff]
    %v9285 = vld [vmem:[%s17 + $0x70] sm:$0xff]
    %v9286 = vld [vmem:[%s17 + $0x78] sm:$0xff]
    %v9287 = vld [vmem:[%s17 + $0x80] sm:$0xff]
    %v9288 = vld [vmem:[%s17 + $0x88] sm:$0xff]
    %v9289 = vld [vmem:[%s17 + $0x90] sm:$0xff]
    %v9290 = vld [vmem:[%s17 + $0x98] sm:$0xff]
    %v9291 = vld [vmem:[%s17 + $0xa0] sm:$0xff]
    %v9292 = vld [vmem:[%s17 + $0xa8] sm:$0xff]
    %v9293 = vld [vmem:[%s17 + $0xb0] sm:$0xff]
    %v9294 = vld [vmem:[%s17 + $0xb8] sm:$0xff]
    %v9295 = vld [vmem:[%s17 + $0xc0] sm:$0xff]
    %v9296 = vld [vmem:[%s17 + $0xc8] sm:$0xff]
    %v9297 = vld [vmem:[%s17 + $0xd0] sm:$0xff]
    %v9298 = vld [vmem:[%s17 + $0xd8] sm:$0xff]
    %v9299 = vld [vmem:[%s17 + $0xe0] sm:$0xff]
    %v9300 = vld [vmem:[%s17 + $0xe8] sm:$0xff]
    %v9301 = vld [vmem:[%s17 + $0xf0] sm:$0xff]
    %v9302 = vld [vmem:[%s17 + $0xf8] sm:$0xff]
    %v9303 = vld [vmem:[%s18] sm:$0x1]
    %v9305 = vlaneseq
    %v9306 = vshrl.u32 %v9305, 7
    %v9307 = vsub.s32 0, %v9306
    %v9308 = vrot.slane %v9303, %v9307
    %9310 = vmatprep.subr.mxu0 0.0
    %9311 = vmatpush1.msra.mxu0 %v9286
    %9312 = vmatprep.subr.mxu0 0.0
    %9313 = vmatpush1.msra.mxu0 %v9285
    %9314 = vmatprep.subr.mxu0 0.0
    %9315 = vmatpush1.msra.mxu0 %v9284
    %9316 = vmatprep.subr.mxu0 0.0
    %9317 = vmatpush1.msra.mxu0 %v9283
    %9318 = vmatprep.subr.mxu0 0.0
    %9319 = vmatpush1.msra.mxu0 %v9282
    %9320 = vmatprep.subr.mxu0 0.0
    %9321 = vmatpush1.msra.mxu0 %v9281
    %9322 = vmatprep.subr.mxu0 0.0
    %9323 = vmatpush1.msra.mxu0 %v9280
    %9324 = vmatprep.subr.mxu0 0.0
    %9325 = vmatpush1.msra.mxu0 %v9279
    %9326 = vmatprep.subr.mxu0 0.0
    %9327 = vmatpush1.msra.mxu0 %v9278
    %9328 = vmatprep.subr.mxu0 0.0
    %9329 = vmatpush1.msra.mxu0 %v9277
    %9330 = vmatprep.subr.mxu0 0.0
    %9331 = vmatpush1.msra.mxu0 %v9276
    %9332 = vmatprep.subr.mxu0 0.0
    %9333 = vmatpush1.msra.mxu0 %v9275
    %9334 = vmatprep.subr.mxu0 0.0
    %9335 = vmatpush1.msra.mxu0 %v9274
    %9336 = vmatprep.subr.mxu0 0.0
    %9337 = vmatpush1.msra.mxu0 %v9273
    %9338 = vmatprep.subr.mxu0 0.0
    %9339 = vmatpush1.msra.mxu0 %v9272
    %9340 = vmatprep.subr.mxu0 0.0
    %9341 = vmatpush1.msra.mxu0 %v9271
    %9342 = vmatprep.subr.mxu0 0.0
    %9343 = vmatpush2.msra.mxu0 %v9302
    %9344 = vmatprep.subr.mxu0 0.0
    %9345 = vmatpush2.msra.mxu0 %v9301
    %9346 = vmatprep.subr.mxu0 0.0
    %9347 = vmatpush2.msra.mxu0 %v9300
    %9348 = vmatprep.subr.mxu0 0.0
    %9349 = vmatpush2.msra.mxu0 %v9299
    %9350 = vmatprep.subr.mxu0 0.0
    %9351 = vmatpush2.msra.mxu0 %v9298
    %9352 = vmatprep.subr.mxu0 0.0
    %9353 = vmatpush2.msra.mxu0 %v9297
    %9354 = vmatprep.subr.mxu0 0.0
    %9355 = vmatpush2.msra.mxu0 %v9296
    %9356 = vmatprep.subr.mxu0 0.0
    %9357 = vmatpush2.msra.mxu0 %v9295
    %9358 = vmatprep.subr.mxu0 0.0
    %9359 = vmatpush2.msra.mxu0 %v9294
    %9360 = vmatprep.subr.mxu0 0.0
    %9361 = vmatpush2.msra.mxu0 %v9293
    %9362 = vmatprep.subr.mxu0 0.0
    %9363 = vmatpush2.msra.mxu0 %v9292
    %9364 = vmatprep.subr.mxu0 0.0
    %9365 = vmatpush2.msra.mxu0 %v9291
    %9366 = vmatprep.subr.mxu0 0.0
    %9367 = vmatpush2.msra.mxu0 %v9290
    %9368 = vmatprep.subr.mxu0 0.0
    %9369 = vmatpush2.msra.mxu0 %v9289
    %9370 = vmatprep.subr.mxu0 0.0
    %9371 = vmatpush2.msra.mxu0 %v9288
    %9372 = vmatprep.subr.mxu0 0.0
    %9373 = vmatpush2.msra.mxu0 %v9287
    %9374 = vmatprep.mubr.f32.mxu0 %v9264
    %9375 = vmatmul.mubr.f32.gmra.mxu0 %v9263
    %v9376 = vpop.f32.mrf.mxu0
    %v9377 = vadd.f32 %v9308, %v9376
    %v9378 = vpop.f32.mrf.mxu0
    %9379 = vmatprep.mubr.f32.mxu0 %v9266
    %9380 = vmatmul.mubr.f32.gmra.mxu0 %v9265
    %v9381 = vpop.f32.mrf.mxu0
    %v9382 = vadd.f32 %v9308, %v9381
    %v9383 = vpop.f32.mrf.mxu0
    %9384 = vmatprep.mubr.f32.mxu0 %v9268
    %9385 = vmatmul.mubr.f32.gmra.mxu0 %v9267
    %v9386 = vpop.f32.mrf.mxu0
    %v9387 = vadd.f32 %v9308, %v9386
    %v9388 = vpop.f32.mrf.mxu0
    %9389 = vmatprep.mubr.f32.mxu0 %v9270
    %9390 = vmatmul.mubr.f32.gmra.mxu0 %v9269
    %v9391 = vpop.f32.mrf.mxu0
    %v9392 = vadd.f32 %v9308, %v9391
    %v9393 = vpop.f32.mrf.mxu0
    %9394 = vdwg.mxu0
    %v9395 = vmul.f32 %v105, %v9377
    %v9396 = vmul.f32 %v106, %v9382
    %v9397 = vmul.f32 %v107, %v9387
    %v9398 = vmul.f32 %v108, %v9392
    %v9399 = vadd.f32 %v9006, %v9395
    %v9400 = vadd.f32 %v9007, %v9396
    %v9401 = vadd.f32 %v9008, %v9397
    %v9402 = vadd.f32 %v9009, %v9398
    %v9403 = vmul.f32 %v4815, 2.0
    %v9404 = vmul.f32 %v4816, 2.0
    %v9405 = vmul.f32 %v4817, 2.0
    %v9406 = vmul.f32 %v4818, 2.0
    %v9407 = vadd.f32 %v2523, %v9403
    %v9408 = vadd.f32 %v2524, %v9404
    %v9409 = vadd.f32 %v2525, %v9405
    %v9410 = vadd.f32 %v2526, %v9406
    %v9411 = vmul.f32 %v7107, 2.0
    %v9412 = vmul.f32 %v7108, 2.0
    %v9413 = vmul.f32 %v7109, 2.0
    %v9414 = vmul.f32 %v7110, 2.0
    %v9415 = vadd.f32 %v9407, %v9411
    %v9416 = vadd.f32 %v9408, %v9412
    %v9417 = vadd.f32 %v9409, %v9413
    %v9418 = vadd.f32 %v9410, %v9414
    %v9419 = vadd.f32 %v9415, %v9399
    %v9420 = vadd.f32 %v9416, %v9400
    %v9421 = vadd.f32 %v9417, %v9401
    %v9422 = vadd.f32 %v9418, %v9402
    %v9423 = vmul.f32 %v9419, 0.010416667
    %v9424 = vmul.f32 %v9420, 0.010416667
    %v9425 = vmul.f32 %v9421, 0.010416667
    %v9426 = vmul.f32 %v9422, 0.010416667
    %v9427 = vadd.f32 %v236, %v9423
    %v9428 = vadd.f32 %v237, %v9424
    %v9429 = vadd.f32 %v238, %v9425
    %v9430 = vadd.f32 %v239, %v9426
  $region90: #{_lambda_.1} parent=0 // loop_footer
    %s235 = sadd.s32 1, %s231
  $region91: #{_lambda_.1} parent=0 // loop_footer_branch
    %230 = sbr.rel target = $region87
  $region92: #{_lambda_.1} parent=0 // loop_exit
    _
  %vm9431 = vcmask 523264
  %v9432 = vsel %vm9431, %v236, 0.0
  %9433 = vadd.xlane.f32.xlu0 %v9432
  %v9434 = vpop.xlane.xlu0 %9433
  %v9435 = vsel %vm9431, %v237, 0.0
  %9436 = vadd.xlane.f32.xlu0 %v9435
  %v9437 = vpop.xlane.xlu0 %9436
  %v9438 = vsel %vm9431, %v238, 0.0
  %9439 = vadd.xlane.f32.xlu0 %v9438
  %v9440 = vpop.xlane.xlu0 %9439
  %v9441 = vsel %vm9431, %v239, 0.0
  %9442 = vadd.xlane.f32.xlu0 %v9441
  %v9443 = vpop.xlane.xlu0 %9442
  %v9444 = vrcp.pop 64.0
  %v9445 = vmul.f32 %v9434, %v9444
  %v9446 = vmul.f32 %v9437, %v9444
  %v9447 = vmul.f32 %v9440, %v9444
  %v9448 = vmul.f32 %v9443, %v9444
  %v9449 = vsub.f32 %v236, %v9445
  %v9450 = vsub.f32 %v237, %v9446
  %v9451 = vsub.f32 %v238, %v9447
  %v9452 = vsub.f32 %v239, %v9448
  %v9453 = vmul.f32 %v9449, %v9449
  %v9454 = vmul.f32 %v9450, %v9450
  %v9455 = vmul.f32 %v9451, %v9451
  %v9456 = vmul.f32 %v9452, %v9452
  %v9457 = vsel %vm9431, %v9453, 0.0
  %9458 = vadd.xlane.f32.xlu0 %v9457
  %v9459 = vpop.xlane.xlu0 %9458
  %v9460 = vsel %vm9431, %v9454, 0.0
  %9461 = vadd.xlane.f32.xlu0 %v9460
  %v9462 = vpop.xlane.xlu0 %9461
  %v9463 = vsel %vm9431, %v9455, 0.0
  %9464 = vadd.xlane.f32.xlu0 %v9463
  %v9465 = vpop.xlane.xlu0 %9464
  %v9466 = vsel %vm9431, %v9456, 0.0
  %9467 = vadd.xlane.f32.xlu0 %v9466
  %v9468 = vpop.xlane.xlu0 %9467
  %v9469 = vmul.f32 %v9459, %v9444
  %v9470 = vmul.f32 %v9462, %v9444
  %v9471 = vmul.f32 %v9465, %v9444
  %v9472 = vmul.f32 %v9468, %v9444
  %v9473 = vadd.f32 %v9469, 1e-06
  %v9474 = vadd.f32 %v9470, 1e-06
  %v9475 = vadd.f32 %v9471, 1e-06
  %v9476 = vadd.f32 %v9472, 1e-06
  %v9477 = vrsqrt.pop %v9473
  %v9478 = vrsqrt.pop %v9474
  %v9479 = vrsqrt.pop %v9475
  %v9480 = vrsqrt.pop %v9476
  %v9481 = vmul.f32 %v9449, %v9477
  %v9482 = vmul.f32 %v9450, %v9478
  %v9483 = vmul.f32 %v9451, %v9479
  %v9484 = vmul.f32 %v9452, %v9480
  %s9485 = scalar_lea.vmem %s4, 32
  %v9486 = vld [vmem:[%s9485] sm:$0xff]
  %v9487 = vld [vmem:[%s9485 + $0x8] sm:$0xff]
  %v9488 = vld [vmem:[%s9485 + $0x10] sm:$0xff]
  %v9489 = vld [vmem:[%s9485 + $0x18] sm:$0xff]
  %v9490 = vadd.f32 %v9486, 1.0
  %v9491 = vadd.f32 %v9487, 1.0
  %v9492 = vadd.f32 %v9488, 1.0
  %v9493 = vadd.f32 %v9489, 1.0
  %v9494 = vmul.f32 %v9481, %v9490
  %v9495 = vmul.f32 %v9482, %v9491
  %v9496 = vmul.f32 %v9483, %v9492
  %v9497 = vmul.f32 %v9484, %v9493
  %v9498 = vld [vmem:[%s4] sm:$0xff]
  %v9499 = vld [vmem:[%s4 + $0x8] sm:$0xff]
  %v9500 = vld [vmem:[%s4 + $0x10] sm:$0xff]
  %v9501 = vld [vmem:[%s4 + $0x18] sm:$0xff]
  %v9502 = vadd.f32 %v9494, %v9498
  %v9503 = vadd.f32 %v9495, %v9499
  %v9504 = vadd.f32 %v9496, %v9500
  %v9505 = vadd.f32 %v9497, %v9501
  %v9506 = vld [vmem:[%s19] sm:$0xff]
  %v9507 = vld [vmem:[%s19 + $0x8] sm:$0xff]
  %v9508 = vld [vmem:[%s19 + $0x10] sm:$0xff]
  %v9509 = vld [vmem:[%s19 + $0x18] sm:$0xff]
  %v9510 = vld [vmem:[%s19 + $0x20] sm:$0xff]
  %v9511 = vld [vmem:[%s19 + $0x28] sm:$0xff]
  %v9512 = vld [vmem:[%s19 + $0x30] sm:$0xff]
  %v9513 = vld [vmem:[%s19 + $0x38] sm:$0xff]
  %v9514 = vld [vmem:[%s20] sm:$0x1]
  %v9516 = vlaneseq
  %v9517 = vshrl.u32 %v9516, 7
  %v9518 = vsub.s32 0, %v9517
  %v9519 = vrot.slane %v9514, %v9518
  %v9522 = vsel %vm9431, %v9502, 0
  %v9525 = vsel %vm9431, %v9503, 0
  %v9528 = vsel %vm9431, %v9504, 0
  %v9531 = vsel %vm9431, %v9505, 0
  %9533 = vmatprep.subr.mxu0 0.0
  %9534 = vmatpush1.msra.mxu0 0.0
  %9535 = vmatprep.subr.mxu0 0.0
  %9536 = vmatpush1.msra.mxu0 0.0
  %9537 = vmatprep.subr.mxu0 0.0
  %9538 = vmatpush1.msra.mxu0 0.0
  %9539 = vmatprep.subr.mxu0 0.0
  %9540 = vmatpush1.msra.mxu0 0.0
  %9541 = vmatprep.subr.mxu0 0.0
  %9542 = vmatpush1.msra.mxu0 0.0
  %9543 = vmatprep.subr.mxu0 0.0
  %9544 = vmatpush1.msra.mxu0 0.0
  %9545 = vmatprep.subr.mxu0 0.0
  %9546 = vmatpush1.msra.mxu0 0.0
  %9547 = vmatprep.subr.mxu0 0.0
  %9548 = vmatpush1.msra.mxu0 0.0
  %9549 = vmatprep.subr.mxu0 0.0
  %9550 = vmatpush1.msra.mxu0 %v9513
  %9551 = vmatprep.subr.mxu0 0.0
  %9552 = vmatpush1.msra.mxu0 %v9512
  %9553 = vmatprep.subr.mxu0 0.0
  %9554 = vmatpush1.msra.mxu0 %v9511
  %9555 = vmatprep.subr.mxu0 0.0
  %9556 = vmatpush1.msra.mxu0 %v9510
  %9557 = vmatprep.subr.mxu0 0.0
  %9558 = vmatpush1.msra.mxu0 %v9509
  %9559 = vmatprep.subr.mxu0 0.0
  %9560 = vmatpush1.msra.mxu0 %v9508
  %9561 = vmatprep.subr.mxu0 0.0
  %9562 = vmatpush1.msra.mxu0 %v9507
  %9563 = vmatprep.subr.mxu0 0.0
  %9564 = vmatpush1.msra.mxu0 %v9506
  %9565 = vmatprep.subr.mxu0 0.0
  %9566 = vmatpush2.msra.mxu0 0.0
  %9567 = vmatprep.subr.mxu0 0.0
  %9568 = vmatpush2.msra.mxu0 0.0
  %9569 = vmatprep.subr.mxu0 0.0
  %9570 = vmatpush2.msra.mxu0 0.0
  %9571 = vmatprep.subr.mxu0 0.0
  %9572 = vmatpush2.msra.mxu0 0.0
  %9573 = vmatprep.subr.mxu0 0.0
  %9574 = vmatpush2.msra.mxu0 0.0
  %9575 = vmatprep.subr.mxu0 0.0
  %9576 = vmatpush2.msra.mxu0 0.0
  %9577 = vmatprep.subr.mxu0 0.0
  %9578 = vmatpush2.msra.mxu0 0.0
  %9579 = vmatprep.subr.mxu0 0.0
  %9580 = vmatpush2.msra.mxu0 0.0
  %9581 = vmatprep.subr.mxu0 0.0
  %9582 = vmatpush2.msra.mxu0 0.0
  %9583 = vmatprep.subr.mxu0 0.0
  %9584 = vmatpush2.msra.mxu0 0.0
  %9585 = vmatprep.subr.mxu0 0.0
  %9586 = vmatpush2.msra.mxu0 0.0
  %9587 = vmatprep.subr.mxu0 0.0
  %9588 = vmatpush2.msra.mxu0 0.0
  %9589 = vmatprep.subr.mxu0 0.0
  %9590 = vmatpush2.msra.mxu0 0.0
  %9591 = vmatprep.subr.mxu0 0.0
  %9592 = vmatpush2.msra.mxu0 0.0
  %9593 = vmatprep.subr.mxu0 0.0
  %9594 = vmatpush2.msra.mxu0 0.0
  %9595 = vmatprep.subr.mxu0 0.0
  %9596 = vmatpush2.msra.mxu0 0.0
  %9597 = vmatprep.mubr.f32.mxu0 0.0
  %9598 = vmatmul.mubr.f32.gmra.mxu0 %v9522
  %v9599 = vpop.f32.mrf.mxu0
  %v9600 = vadd.f32 %v9519, %v9599
  %v9601 = vpop.f32.mrf.mxu0
  %9602 = vmatprep.mubr.f32.mxu0 0.0
  %9603 = vmatmul.mubr.f32.gmra.mxu0 %v9525
  %v9604 = vpop.f32.mrf.mxu0
  %v9605 = vadd.f32 %v9519, %v9604
  %v9606 = vpop.f32.mrf.mxu0
  %9607 = vmatprep.mubr.f32.mxu0 0.0
  %9608 = vmatmul.mubr.f32.gmra.mxu0 %v9528
  %v9609 = vpop.f32.mrf.mxu0
  %v9610 = vadd.f32 %v9519, %v9609
  %v9611 = vpop.f32.mrf.mxu0
  %9612 = vmatprep.mubr.f32.mxu0 0.0
  %9613 = vmatmul.mubr.f32.gmra.mxu0 %v9531
  %v9614 = vpop.f32.mrf.mxu0
  %v9615 = vadd.f32 %v9519, %v9614
  %v9616 = vpop.f32.mrf.mxu0
  %9617 = vdwg.mxu0
  %9618 = vst.msk [vmem:[%s21] sm:$0xff] %vm9431, %v9600
  %9619 = vst.msk [vmem:[%s21 + $0x8] sm:$0xff] %vm9431, %v9605
  %9620 = vst.msk [vmem:[%s21 + $0x10] sm:$0xff] %vm9431, %v9610
  %9621 = vst.msk [vmem:[%s21 + $0x18] sm:$0xff] %vm9431, %v9615
  // Predicated region
  $region93: #{_lambda_.1} parent=0 // pred_check
    _
  $region94: #{_lambda_.1} parent=0 // pred_check_branch
    %9623 = sbr.rel (0) target = $region96
  $region95: #{_lambda_.1} parent=0 // pred_region
    _
  $region96: #{_lambda_.1} parent=0 // pred_fallthru
    _
  // Predicated region
  $region97: #{_lambda_.1} parent=0 // pred_check
    _
  $region98: #{_lambda_.1} parent=0 // pred_check_branch
    %9625 = sbr.rel (0) target = $region100
  $region99: #{_lambda_.1} parent=0 // pred_region
    _
  $region100: #{_lambda_.1} parent=0 // pred_fallthru
    _

</llo_original>
